<compile_context>
chip_gen: v6e
topology: v6e:2x2x1
jax: 0.10.0
libtpu: 0.0.40
codegen_flags: <defaults>
</compile_context>

<pallas_src>
import functools

import jax
import jax.numpy as jnp
from jax.experimental import pallas as pl
from jax.experimental.pallas import tpu as pltpu


TILE_O = 8          # biaffine output channels per grid step


def _round_up(x, m):
    return ((x + m - 1) // m) * m


def _vmem_limit(resident_bytes):
    """Scoped-VMEM budget: resident blocks + headroom, capped at v7x physical."""
    return int(min(64 * 1024 * 1024,
                   max(32 * 1024 * 1024, resident_bytes + (4 << 20))))


# ----------------------------------------------------------------------------
# Pallas kernels
# ----------------------------------------------------------------------------
def lstm_chunk_kernel(x_ref, wih_ref, whh_ref, b_ref, lens_ref, o_ref,
                      h_sc, c_sc, xg_sc, *, t_chunk, n_chunks, batch, hidden):
    """One (direction, time-chunk) grid step of the bidirectional LSTM.

    x_ref   : (t_chunk*B_pad, n_in) time-major flattened chunk (row = t*B_pad+b)
    wih_ref : (1, n_in, 4*Hp)   bf16 pre-transposed input weights (this dir)
    whh_ref : (1, Hp, 4*Hp)     bf16 pre-transposed recurrent weights
    b_ref   : (1, 1, 4*Hp)      f32 folded bias (b_ih + b_hh)
    lens_ref: (B_pad, 1)        int32 sequence lengths
    o_ref   : (t_chunk*B_pad, Hp) column block (fwd or bwd half) of the
              (S_pad*B_pad, 2*Hp) layer output — written directly, lane-dense.
    h_sc/c_sc: (B_pad, Hp) recurrent state carried across the chunk axis
              (scratch is per-TensorCore, so the "parallel" direction axis on
              v7x gives each core its own state).
    xg_sc   : (t_chunk*B_pad, 4*Hp) staged input projection for the chunk.
    """
    d = pl.program_id(0)          # direction: 0 = fwd, 1 = bwd
    c = pl.program_id(1)          # chunk index (bwd walks mirrored chunks)

    @pl.when(c == 0)
    def _():
        h_sc[...] = jnp.zeros_like(h_sc)
        c_sc[...] = jnp.zeros_like(c_sc)

    Hp = hidden
    w_hh = whh_ref[0]             # (Hp, 4*Hp) bf16
    lens = lens_ref[...]          # (B_pad, 1) int32

    # Bulk input projection + folded bias for the whole chunk: one wide bf16
    # MXU matmul with f32 accumulation, staged in VMEM for dynamic row reads.
    xg_sc[...] = (jnp.dot(x_ref[...].astype(jnp.bfloat16), wih_ref[0],
                          preferred_element_type=jnp.float32)
                  + b_ref[0])

    # Global chunk index handled at this grid step (bwd reads mirrored chunks).
    chunk_idx = d * (n_chunks - 1) + (1 - 2 * d) * c
    t_base = chunk_idx * t_chunk

    def step(lt, carry):
        h, cst = carry
        # local time within the chunk (bwd walks the chunk in reverse)
        lt_eff = jnp.where(d == 1, t_chunk - 1 - lt, lt)
        row = pl.multiple_of(lt_eff * batch, 8)
        gates = (xg_sc[pl.ds(row, batch), :]
                 + jnp.dot(h.astype(jnp.bfloat16), w_hh,
                           preferred_element_type=jnp.float32))
        # gate slices are whole 128-lane blocks (Hp is a multiple of 128)
        ig = jax.nn.sigmoid(gates[:, 0 * Hp:1 * Hp])
        fg = jax.nn.sigmoid(gates[:, 1 * Hp:2 * Hp])
        gg = jnp.tanh(gates[:, 2 * Hp:3 * Hp])
        og = jax.nn.sigmoid(gates[:, 3 * Hp:4 * Hp])
        c_new = fg * cst + ig * gg
        h_new = og * jnp.tanh(c_new)
        valid = lens > (t_base + lt_eff)               # (B_pad, 1) bool
        # pack_padded semantics: zero output, freeze state at padded steps
        o_ref[pl.ds(row, batch), :] = jnp.where(valid, h_new, 0.0)
        h = jnp.where(valid, h_new, h)
        cst = jnp.where(valid, c_new, cst)
        return h, cst

    h, cst = jax.lax.fori_loop(0, t_chunk, step, (h_sc[...], c_sc[...]),
                               unroll=True)
    h_sc[...] = h
    c_sc[...] = cst


def mlp_fused_kernel(x_ref, w_ref, b_ref, o_ref):
    """Fused Linear+LeakyReLU(0.1) for all four MLPs (lane-dense output)."""
    y = (jnp.dot(x_ref[...].astype(jnp.bfloat16), w_ref[...],
                 preferred_element_type=jnp.float32) + b_ref[...])
    o_ref[...] = jnp.where(y >= 0, y, 0.1 * y)


def biaffine_kernel(x_ref, wt_ref, y_ref, o_ref, *, tile_o, d1p):
    """s[b, o, i, j] = xb[b, i] @ W[o] @ yb[b, j]^T for one (batch, n_out-tile).

    wt_ref is a (d1p, tile_o*d1p) bf16 slice of W arranged (d1p, n_out_pad*d1p)
    so every per-channel slice of `tmp` is lane-aligned.
    """
    xb = x_ref[0].astype(jnp.bfloat16)       # (N_pad, d1p)
    yb = y_ref[0].astype(jnp.bfloat16)       # (N_pad, d1p)
    tmp = jnp.dot(xb, wt_ref[...], preferred_element_type=jnp.float32)
    for oc in range(tile_o):                 # small static chunk (grid scales n_out)
        t_o = tmp[:, oc * d1p:(oc + 1) * d1p].astype(jnp.bfloat16)
        o_ref[0, oc] = jax.lax.dot_general(
            t_o, yb, (((1,), (1,)), ((), ())),
            preferred_element_type=jnp.float32)        # (N_pad, N_pad), no y.T copy


# ----------------------------------------------------------------------------
# Wrappers
# ----------------------------------------------------------------------------
def lstm_layer(x_flat, w_ih, w_hh, b, lens2, *, t_chunk, n_chunks, batch, hidden):
    """x_flat: (S_pad*B_pad, n_in); returns (S_pad*B_pad, 2*Hp) = [fwd | bwd]."""
    TB = t_chunk * batch
    SB, n_in = x_flat.shape
    Hp = hidden
    tmap = lambda d, c: d * (n_chunks - 1) + (1 - 2 * d) * c   # mirrored for bwd

    blocks = (TB * n_in * 4 + n_in * 4 * Hp * 2 + Hp * 4 * Hp * 2
              + 4 * Hp * 4 + batch * 4 + TB * Hp * 4)
    scratch = 2 * batch * Hp * 4 + TB * 4 * Hp * 4

    return pl.pallas_call(
        functools.partial(lstm_chunk_kernel, t_chunk=t_chunk,
                          n_chunks=n_chunks, batch=batch, hidden=Hp),
        out_shape=jax.ShapeDtypeStruct((SB, 2 * Hp), jnp.float32),
        grid=(2, n_chunks),
        in_specs=[
            pl.BlockSpec((TB, n_in), lambda d, c: (tmap(d, c), 0)),
            pl.BlockSpec((1, n_in, 4 * Hp), lambda d, c: (d, 0, 0)),
            pl.BlockSpec((1, Hp, 4 * Hp), lambda d, c: (d, 0, 0)),
            pl.BlockSpec((1, 1, 4 * Hp), lambda d, c: (d, 0, 0)),
            pl.BlockSpec((batch, 1), lambda d, c: (0, 0)),
        ],
        # direction selects the column block of the concatenated output
        out_specs=pl.BlockSpec((TB, Hp), lambda d, c: (tmap(d, c), d)),
        scratch_shapes=[pltpu.VMEM((batch, Hp), jnp.float32),
                        pltpu.VMEM((batch, Hp), jnp.float32),
                        pltpu.VMEM((TB, 4 * Hp), jnp.float32)],
        compiler_params=pltpu.CompilerParams(
            dimension_semantics=("parallel", "arbitrary"),
            vmem_limit_bytes=_vmem_limit(2 * blocks + scratch)),
    )(x_flat, w_ih, w_hh, b, lens2)


def bilstm(embed, lens, lstm_params, *, t_chunk=32):
    """embed: (B, S, n_in). Returns per-layer outputs in batch-major
    (B, S, 2*Hp) layout (zeros at padded positions and padded lanes)."""
    B, S, _ = embed.shape
    Hp = lstm_params[0]["w_hh"].shape[1]
    B_pad = _round_up(B, 8)
    t_chunk = min(t_chunk, _round_up(S, 8))
    S_pad = _round_up(S, t_chunk)
    n_chunks = S_pad // t_chunk

    x = jnp.transpose(embed, (1, 0, 2))                   # (S, B, n_in)
    x = jnp.pad(x, ((0, S_pad - S), (0, B_pad - B), (0, 0)))
    x = x.reshape(S_pad * B_pad, x.shape[-1])              # row = t*B_pad + b
    lens2 = jnp.pad(lens.astype(jnp.int32), (0, B_pad - B)).reshape(B_pad, 1)

    layer_outs = []
    for layer in lstm_params:
        x = lstm_layer(x, layer["w_ih"], layer["w_hh"], layer["b"], lens2,
                       t_chunk=t_chunk, n_chunks=n_chunks, batch=B_pad,
                       hidden=Hp)                           # (S_pad*B_pad, 2*Hp)
        layer_outs.append(x)

    def to_batch_major(flat):
        y = flat.reshape(S_pad, B_pad, 2 * Hp)[:S, :B]
        return jnp.transpose(y, (1, 0, 2))                  # (B, S, 2*Hp)

    outs_bm = [to_batch_major(o) for o in layer_outs]
    return outs_bm[-1], outs_bm


def fused_mlps(n_x, w_all, b_all, out_dims):
    """Four MLPs fused into one Linear+LeakyReLU with concatenated columns.
    n_x uses the lane-padded [fwd(Hp) | bwd(Hp)] feature layout; w_all's
    output width is already padded to a multiple of 128."""
    B, N, F = n_x.shape
    M = B * N
    x_flat = n_x.reshape(M, F)
    tile_m = min(512, _round_up(M, 8))
    M_pad = _round_up(M, tile_m)
    if M_pad > M:
        x_flat = jnp.pad(x_flat, ((0, M_pad - M), (0, 0)))
    n_out_pad = w_all.shape[1]
    n_out_total = sum(out_dims)

    blocks = (tile_m * F * 4 + F * n_out_pad * 2 + n_out_pad * 4
              + tile_m * n_out_pad * 4)
    y = pl.pallas_call(
        mlp_fused_kernel,
        out_shape=jax.ShapeDtypeStruct((M_pad, n_out_pad), jnp.float32),
        grid=(M_pad // tile_m,),
        in_specs=[pl.BlockSpec((tile_m, F), lambda i: (i, 0)),
                  pl.BlockSpec((F, n_out_pad), lambda i: (0, 0)),
                  pl.BlockSpec((1, n_out_pad), lambda i: (0, 0))],
        out_specs=pl.BlockSpec((tile_m, n_out_pad), lambda i: (i, 0)),
        compiler_params=pltpu.CompilerParams(
            dimension_semantics=("parallel",),
            vmem_limit_bytes=_vmem_limit(2 * blocks)),
    )(x_flat, w_all, b_all)
    y = y[:M, :n_out_total]

    offsets, acc = [], 0
    for dsz in out_dims[:-1]:
        acc += dsz
        offsets.append(acc)
    parts = jnp.split(y, offsets, axis=1)
    return [p.reshape(B, N, dsz) for p, dsz in zip(parts, out_dims)]


def biaffine(x, y, w_t, n_out):
    """supar Biaffine with bias_x=bias_y=True.
    x, y: (B, N, d) f32; w_t: (d1p, n_out_pad*d1p) bf16 kernel-ready layout.
    Returns (B, n_out, N, N) f32."""
    B, N, d = x.shape
    d1 = d + 1
    d1p = _round_up(d1, 128)
    n_out_pad = w_t.shape[1] // d1p
    N_pad = _round_up(N, 128)          # lane-dense (N_pad, N_pad) channel stores

    ones = jnp.ones((B, N, 1), x.dtype)

    def prep(v):
        vb = jnp.concatenate([v, ones], axis=-1)
        return jnp.pad(vb, ((0, 0), (0, N_pad - N), (0, d1p - d1)))

    xb = prep(x)                       # (B, N_pad, d1p)
    yb = prep(y)

    blocks = (2 * N_pad * d1p * 4 + d1p * TILE_O * d1p * 2
              + TILE_O * N_pad * N_pad * 4)
    tmp_bytes = N_pad * TILE_O * d1p * 4

    out = pl.pallas_call(
        functools.partial(biaffine_kernel, tile_o=TILE_O, d1p=d1p),
        out_shape=jax.ShapeDtypeStruct((B, n_out_pad, N_pad, N_pad), jnp.float32),
        grid=(B, n_out_pad // TILE_O),
        in_specs=[
            pl.BlockSpec((1, N_pad, d1p), lambda b, o: (b, 0, 0)),
            pl.BlockSpec((d1p, TILE_O * d1p), lambda b, o: (0, o)),
            pl.BlockSpec((1, N_pad, d1p), lambda b, o: (b, 0, 0)),
        ],
        out_specs=pl.BlockSpec((1, TILE_O, N_pad, N_pad),
                               lambda b, o: (b, o, 0, 0)),
        compiler_params=pltpu.CompilerParams(
            dimension_semantics=("parallel", "parallel"),
            vmem_limit_bytes=_vmem_limit(2 * blocks + tmp_bytes)),
    )(xb, w_t, yb)
    return out[:, :n_out, :N, :N]


# ----------------------------------------------------------------------------
# JParser forward (feat=None branch, inference)
# ----------------------------------------------------------------------------
def jparser_forward(chars, params, cfg):
    B, S = chars.shape
    H = cfg["n_lstm_hidden"]
    Hp = _round_up(H, 128)
    mask = chars != cfg["pad_index"]
    lens = mask.sum(axis=1).astype(jnp.int32)

    # embedding lookup (gather) stays in glue
    char_embed = jnp.take(params["char_embed"], chars, axis=0)   # (B, S, E)
    embed = char_embed  # embed_dropout is identity at inference

    x_pad, layer_outs_pad = bilstm(embed, lens, params["lstm"])  # (B, S, 2*Hp)
    # lstm_dropout is identity at inference

    def gather_real(v):        # drop padded hidden lanes: (..., 2*Hp)->(..., 2H)
        return jnp.concatenate([v[..., :H], v[..., Hp:Hp + H]], axis=-1)

    x = gather_real(x_pad)                                        # (B, S, 2H)
    each_layer_out = jnp.stack([gather_real(o) for o in layer_outs_pad])

    # n_x stays in the lane-padded layout (padded lanes are exactly zero), so
    # the fused MLP needs no column gather.
    n_x_pad = jnp.concatenate([x_pad[:, :-1, :Hp], x_pad[:, 1:, Hp:]], axis=-1)

    n_span, n_label = cfg["n_mlp_span"], cfg["n_mlp_label"]
    span_l, span_r, label_l, label_r = fused_mlps(
        n_x_pad, params["mlp_w"], params["mlp_b"],
        (n_span, n_span, n_label, n_label))

    # TODO(synk): the final (0,2,3,1) permute is a full HBM relayout done in
    # XLA glue; emitting (B, N, N, n_out) straight from the biaffine kernel
    # would need in-kernel minor-dim transposes.
    s_span = jnp.transpose(
        biaffine(span_l, span_r, params["span_attn_wt"], cfg["n_sublabels"]),
        (0, 2, 3, 1))                                             # (B, N, N, n_sublabels)
    s_label = jnp.transpose(
        biaffine(label_l, label_r, params["label_attn_wt"], cfg["n_labels"]),
        (0, 2, 3, 1))                                             # (B, N, N, n_labels)

    return s_span, s_label, x, each_layer_out


# ----------------------------------------------------------------------------
# Deterministic parameter init (stored in kernel-friendly padded layouts)
# ----------------------------------------------------------------------------
def init_params(key, cfg):
    E = cfg["n_embed"]
    H = cfg["n_lstm_hidden"]
    Hp = _round_up(H, 128)
    L = cfg["n_lstm_layers"]

    def nrm(k, shape, scale=0.1, dtype=jnp.float32):
        return (scale * jax.random.normal(k, shape, dtype=jnp.float32)).astype(dtype)

    keys = iter(jax.random.split(key, 64))
    params = {"char_embed": nrm(next(keys), (cfg["n_chars"], E))}

    # zero the padded gate columns so the padded hidden lanes stay exactly 0
    gate_mask = ((jnp.arange(4 * Hp) % Hp) < H).astype(jnp.float32)

    lstm = []
    for layer in range(L):
        n_in = E if layer == 0 else 2 * Hp
        lstm.append({
            # pre-transposed (x @ W) layouts, stacked [fwd, bwd], bf16 weights
            "w_ih": (nrm(next(keys), (2, n_in, 4 * Hp)) * gate_mask
                     ).astype(jnp.bfloat16),
            "w_hh": (nrm(next(keys), (2, Hp, 4 * Hp)) * gate_mask
                     ).astype(jnp.bfloat16),
            "b":    nrm(next(keys), (2, 1, 4 * Hp)) * gate_mask,  # b_ih+b_hh folded
        })
    params["lstm"] = lstm

    n_span, n_label = cfg["n_mlp_span"], cfg["n_mlp_label"]
    n_out_total = 2 * n_span + 2 * n_label
    n_out_pad = _round_up(n_out_total, 128)
    # rows follow the lane-padded [fwd(Hp) | bwd(Hp)] LSTM layout (padded rows
    # only ever multiply exact zeros); padded columns are sliced off.
    params["mlp_w"] = nrm(next(keys), (2 * Hp, n_out_pad), dtype=jnp.bfloat16)
    params["mlp_b"] = nrm(next(keys), (1, n_out_pad))

    def biaffine_w(k, n_out, d):
        d1p = _round_up(d + 1, 128)
        n_out_p = _round_up(n_out, TILE_O)
        w = nrm(k, (n_out_p, d1p, d1p))
        # kernel-ready (d1p, n_out_p*d1p): channel o occupies a lane-aligned
        # d1p-wide column block; padded feature rows/cols only meet zeros.
        return (jnp.transpose(w, (1, 0, 2))
                .reshape(d1p, n_out_p * d1p).astype(jnp.bfloat16))

    params["span_attn_wt"] = biaffine_w(next(keys), cfg["n_sublabels"], n_span)
    params["label_attn_wt"] = biaffine_w(next(keys), cfg["n_labels"], n_label)
    return params


# ----------------------------------------------------------------------------
if __name__ == "__main__":
    cfg = dict(
        n_chars=100,
        n_embed=32,
        n_lstm_hidden=32,
        n_lstm_layers=2,
        n_mlp_span=32,
        n_mlp_label=32,
        n_sublabels=4,
        n_labels=8,
        pad_index=0,
        unk_index=1,
    )
    B, S = 2, 8

    key = jax.random.PRNGKey(0)
    k_par, k_chars = jax.random.split(key)
    params = init_params(k_par, cfg)

    chars = jax.random.randint(k_chars, (B, S), 2, cfg["n_chars"], dtype=jnp.int32)
    # second sequence is shorter: pad its tail
    chars = chars.at[1, 6:].set(cfg["pad_index"])

    fwd = jax.jit(functools.partial(jparser_forward, cfg=cfg))
    s_span, s_label, x, each_layer_out = fwd(chars, params)
    jax.block_until_ready((s_span, s_label, x, each_layer_out))

    assert s_span.shape == (B, S - 1, S - 1, cfg["n_sublabels"])
    assert s_label.shape == (B, S - 1, S - 1, cfg["n_labels"])
    assert x.shape == (B, S, 2 * cfg["n_lstm_hidden"])
    assert each_layer_out.shape == (cfg["n_lstm_layers"], B, S, 2 * cfg["n_lstm_hidden"])

    print("KERNEL_OK")
</pallas_src>

<mosaic_0001>
module attributes {stable_mosaic.version = 11 : i64} {
  func.func @lstm_chunk_kernel(%arg0: i32, %arg1: i32, %arg2: memref<64x32xf32, #tpu.memory_space<vmem>>, %arg3: memref<1x32x512xbf16, #tpu.memory_space<vmem>>, %arg4: memref<1x128x512xbf16, #tpu.memory_space<vmem>>, %arg5: memref<1x1x512xf32, #tpu.memory_space<vmem>>, %arg6: memref<8x1xi32, #tpu.memory_space<vmem>>, %arg7: memref<64x128xf32, #tpu.memory_space<vmem>>, %arg8: memref<8x128xf32, #tpu.memory_space<vmem>>, %arg9: memref<8x128xf32, #tpu.memory_space<vmem>>, %arg10: memref<64x512xf32, #tpu.memory_space<vmem>>) attributes {dimension_semantics = [#tpu.dimension_semantics<parallel>, #tpu.dimension_semantics<arbitrary>], iteration_bounds = array<i64: 2, 1>, scalar_prefetch = 0 : i64, scratch_operands = 3 : i64, tpu.core_type = #tpu.core_type<tc>, window_params = [{transform_indices = @transform_0, window_bounds = array<i64: 64, 32>}, {transform_indices = @transform_1, window_bounds = array<i64: 1, 32, 512>}, {transform_indices = @transform_2, window_bounds = array<i64: 1, 128, 512>}, {transform_indices = @transform_3, window_bounds = array<i64: 1, 1, 512>}, {pipeline_mode = #tpu.pipeline_mode<synchronous>, transform_indices = @transform_4, window_bounds = array<i64: 8, 1>}, {transform_indices = @transform_5, window_bounds = array<i64: 64, 128>}]} {
    %c0_i32 = arith.constant 0 : i32
    %0 = arith.cmpi eq, %arg1, %c0_i32 : i32
    %1 = arith.extui %0 : i1 to i32
    %c0_i32_0 = arith.constant 0 : i32
    %2 = arith.cmpi ne, %1, %c0_i32_0 : i32
    scf.if %2 {
      %cst_108 = arith.constant 0.000000e+00 : f32
      %426 = vector.broadcast %cst_108 : f32 to vector<8x128xf32>
      %c0_109 = arith.constant 0 : index
      %c0_110 = arith.constant 0 : index
      %427 = vector.load %arg8[%c0_109, %c0_110] : memref<8x128xf32, #tpu.memory_space<vmem>>, vector<8x128xf32>
      tpu.vector_store %arg8[%c0_109, %c0_110], %426 {strides = array<i32>} : memref<8x128xf32, #tpu.memory_space<vmem>>, vector<8x128xf32>,
      %cst_111 = arith.constant 0.000000e+00 : f32
      %428 = vector.broadcast %cst_111 : f32 to vector<8x128xf32>
      %c0_112 = arith.constant 0 : index
      %c0_113 = arith.constant 0 : index
      %429 = vector.load %arg9[%c0_112, %c0_113] : memref<8x128xf32, #tpu.memory_space<vmem>>, vector<8x128xf32>
      tpu.vector_store %arg9[%c0_112, %c0_113], %428 {strides = array<i32>} : memref<8x128xf32, #tpu.memory_space<vmem>>, vector<8x128xf32>,
    } else {
    }
    %c0 = arith.constant 0 : index
    %c0_1 = arith.constant 0 : index
    %c0_2 = arith.constant 0 : index
    %3 = vector.load %arg4[%c0, %c0_1, %c0_2] : memref<1x128x512xbf16, #tpu.memory_space<vmem>>, vector<1x128x512xbf16>
    %4 = vector.shape_cast %3 : vector<1x128x512xbf16> to vector<128x512xbf16>
    %c0_3 = arith.constant 0 : index
    %c0_4 = arith.constant 0 : index
    %5 = vector.load %arg6[%c0_3, %c0_4] : memref<8x1xi32, #tpu.memory_space<vmem>>, vector<8x1xi32>
    %c0_5 = arith.constant 0 : index
    %c0_6 = arith.constant 0 : index
    %6 = vector.load %arg2[%c0_5, %c0_6] : memref<64x32xf32, #tpu.memory_space<vmem>>, vector<64x32xf32>
    %7 = arith.truncf %6 : vector<64x32xf32> to vector<64x32xbf16>
    %c0_7 = arith.constant 0 : index
    %c0_8 = arith.constant 0 : index
    %c0_9 = arith.constant 0 : index
    %8 = vector.load %arg3[%c0_7, %c0_8, %c0_9] : memref<1x32x512xbf16, #tpu.memory_space<vmem>>, vector<1x32x512xbf16>
    %9 = vector.shape_cast %8 : vector<1x32x512xbf16> to vector<32x512xbf16>
    %cst = arith.constant dense<0.000000e+00> : vector<64x512xf32>
    %10 = tpu.matmul %7, %9, %cst {dimension_numbers = #tpu.dot_dimension_numbers<[1], [0], [0], [1], [0, 0, 1, 1], [], []>} : vector<64x32xbf16>, vector<32x512xbf16>, vector<64x512xf32> -> vector<64x512xf32>
    %c0_10 = arith.constant 0 : index
    %c0_11 = arith.constant 0 : index
    %c0_12 = arith.constant 0 : index
    %11 = vector.load %arg5[%c0_10, %c0_11, %c0_12] : memref<1x1x512xf32, #tpu.memory_space<vmem>>, vector<1x1x512xf32>
    %12 = vector.shape_cast %11 : vector<1x1x512xf32> to vector<1x512xf32>
    %13 = vector.broadcast %12 : vector<1x512xf32> to vector<64x512xf32>
    %14 = arith.addf %10, %13 : vector<64x512xf32>
    %c0_13 = arith.constant 0 : index
    %c0_14 = arith.constant 0 : index
    %15 = vector.load %arg10[%c0_13, %c0_14] : memref<64x512xf32, #tpu.memory_space<vmem>>, vector<64x512xf32>
    tpu.vector_store %arg10[%c0_13, %c0_14], %14 {strides = array<i32>} : memref<64x512xf32, #tpu.memory_space<vmem>>, vector<64x512xf32>,
    %c0_i32_15 = arith.constant 0 : i32
    %16 = arith.muli %arg0, %c0_i32_15 : i32
    %c2_i32 = arith.constant 2 : i32
    %17 = arith.muli %c2_i32, %arg0 : i32
    %c1_i32 = arith.constant 1 : i32
    %18 = arith.subi %c1_i32, %17 : i32
    %19 = arith.muli %18, %arg1 : i32
    %20 = arith.addi %16, %19 : i32
    %c8_i32 = arith.constant 8 : i32
    %21 = arith.muli %20, %c8_i32 : i32
    %c0_16 = arith.constant 0 : index
    %c0_17 = arith.constant 0 : index
    %22 = vector.load %arg8[%c0_16, %c0_17] : memref<8x128xf32, #tpu.memory_space<vmem>>, vector<8x128xf32>
    %c0_18 = arith.constant 0 : index
    %c0_19 = arith.constant 0 : index
    %23 = vector.load %arg9[%c0_18, %c0_19] : memref<8x128xf32, #tpu.memory_space<vmem>>, vector<8x128xf32>
    %c0_i32_20 = arith.constant 0 : i32
    %c1_i32_21 = arith.constant 1 : i32
    %24 = arith.cmpi eq, %arg0, %c1_i32_21 : i32
    %c7_i32 = arith.constant 7 : i32
    %25 = arith.subi %c7_i32, %c0_i32_20 : i32
    %26 = arith.select %24, %25, %c0_i32_20 : i32
    %c8_i32_22 = arith.constant 8 : i32
    %27 = arith.muli %26, %c8_i32_22 : i32
    %28 = tpu.assume_multiple %27, 8 : i32
    %29 = arith.index_cast %28 : i32 to index
    %c0_23 = arith.constant 0 : index
    %30 = vector.load %arg10[%29, %c0_23] : memref<64x512xf32, #tpu.memory_space<vmem>>, vector<8x512xf32>
    %31 = arith.truncf %22 : vector<8x128xf32> to vector<8x128xbf16>
    %cst_24 = arith.constant dense<0.000000e+00> : vector<8x512xf32>
    %32 = tpu.matmul %31, %4, %cst_24 {dimension_numbers = #tpu.dot_dimension_numbers<[1], [0], [0], [1], [0, 0, 1, 1], [], []>} : vector<8x128xbf16>, vector<128x512xbf16>, vector<8x512xf32> -> vector<8x512xf32>
    %33 = arith.addf %30, %32 : vector<8x512xf32>
    %34 = vector.extract_strided_slice %33 {offsets = [0, 0], sizes = [8, 128], strides = [1, 1]} : vector<8x512xf32> to vector<8x128xf32>
    %35 = arith.negf %34 : vector<8x128xf32>
    %36 = math.exp %35 : vector<8x128xf32>
    %cst_25 = arith.constant 1.000000e+00 : f32
    %37 = vector.broadcast %cst_25 : f32 to vector<8x128xf32>
    %38 = arith.addf %37, %36 : vector<8x128xf32>
    %39 = arith.divf %37, %38 : vector<8x128xf32>
    %40 = vector.extract_strided_slice %33 {offsets = [0, 128], sizes = [8, 128], strides = [1, 1]} : vector<8x512xf32> to vector<8x128xf32>
    %41 = arith.negf %40 : vector<8x128xf32>
    %42 = math.exp %41 : vector<8x128xf32>
    %cst_26 = arith.constant 1.000000e+00 : f32
    %43 = vector.broadcast %cst_26 : f32 to vector<8x128xf32>
    %44 = arith.addf %43, %42 : vector<8x128xf32>
    %45 = arith.divf %43, %44 : vector<8x128xf32>
    %46 = vector.extract_strided_slice %33 {offsets = [0, 256], sizes = [8, 128], strides = [1, 1]} : vector<8x512xf32> to vector<8x128xf32>
    %47 = math.tanh %46 : vector<8x128xf32>
    %48 = vector.extract_strided_slice %33 {offsets = [0, 384], sizes = [8, 128], strides = [1, 1]} : vector<8x512xf32> to vector<8x128xf32>
    %49 = arith.negf %48 : vector<8x128xf32>
    %50 = math.exp %49 : vector<8x128xf32>
    %cst_27 = arith.constant 1.000000e+00 : f32
    %51 = vector.broadcast %cst_27 : f32 to vector<8x128xf32>
    %52 = arith.addf %51, %50 : vector<8x128xf32>
    %53 = arith.divf %51, %52 : vector<8x128xf32>
    %54 = arith.mulf %45, %23 : vector<8x128xf32>
    %55 = arith.mulf %39, %47 : vector<8x128xf32>
    %56 = arith.addf %54, %55 : vector<8x128xf32>
    %57 = math.tanh %56 : vector<8x128xf32>
    %58 = arith.mulf %53, %57 : vector<8x128xf32>
    %59 = arith.addi %21, %26 : i32
    %60 = vector.broadcast %59 : i32 to vector<8x1xi32>
    %61 = arith.cmpi sgt, %5, %60 : vector<8x1xi32>
    %cst_28 = arith.constant 0.000000e+00 : f32
    %62 = vector.shape_cast %61 : vector<8x1xi1> to vector<8x1xi1>
    %63 = vector.broadcast %62 : vector<8x1xi1> to vector<8x128xi1>
    %64 = vector.broadcast %cst_28 : f32 to vector<8x128xf32>
    %65 = arith.select %63, %58, %64 : vector<8x128xi1>, vector<8x128xf32>
    %66 = arith.index_cast %28 : i32 to index
    %c0_29 = arith.constant 0 : index
    %67 = vector.load %arg7[%66, %c0_29] : memref<64x128xf32, #tpu.memory_space<vmem>>, vector<8x128xf32>
    tpu.vector_store %arg7[%66, %c0_29], %65 {strides = array<i32>} : memref<64x128xf32, #tpu.memory_space<vmem>>, vector<8x128xf32>,
    %68 = vector.shape_cast %61 : vector<8x1xi1> to vector<8x1xi1>
    %69 = vector.broadcast %68 : vector<8x1xi1> to vector<8x128xi1>
    %70 = arith.select %69, %58, %22 : vector<8x128xi1>, vector<8x128xf32>
    %71 = vector.shape_cast %61 : vector<8x1xi1> to vector<8x1xi1>
    %72 = vector.broadcast %71 : vector<8x1xi1> to vector<8x128xi1>
    %73 = arith.select %72, %56, %23 : vector<8x128xi1>, vector<8x128xf32>
    %c1_i32_30 = arith.constant 1 : i32
    %c1_i32_31 = arith.constant 1 : i32
    %74 = arith.cmpi eq, %arg0, %c1_i32_31 : i32
    %c7_i32_32 = arith.constant 7 : i32
    %75 = arith.subi %c7_i32_32, %c1_i32_30 : i32
    %76 = arith.select %74, %75, %c1_i32_30 : i32
    %c8_i32_33 = arith.constant 8 : i32
    %77 = arith.muli %76, %c8_i32_33 : i32
    %78 = tpu.assume_multiple %77, 8 : i32
    %79 = arith.index_cast %78 : i32 to index
    %c0_34 = arith.constant 0 : index
    %80 = vector.load %arg10[%79, %c0_34] : memref<64x512xf32, #tpu.memory_space<vmem>>, vector<8x512xf32>
    %81 = arith.truncf %70 : vector<8x128xf32> to vector<8x128xbf16>
    %cst_35 = arith.constant dense<0.000000e+00> : vector<8x512xf32>
    %82 = tpu.matmul %81, %4, %cst_35 {dimension_numbers = #tpu.dot_dimension_numbers<[1], [0], [0], [1], [0, 0, 1, 1], [], []>} : vector<8x128xbf16>, vector<128x512xbf16>, vector<8x512xf32> -> vector<8x512xf32>
    %83 = arith.addf %80, %82 : vector<8x512xf32>
    %84 = vector.extract_strided_slice %83 {offsets = [0, 0], sizes = [8, 128], strides = [1, 1]} : vector<8x512xf32> to vector<8x128xf32>
    %85 = arith.negf %84 : vector<8x128xf32>
    %86 = math.exp %85 : vector<8x128xf32>
    %cst_36 = arith.constant 1.000000e+00 : f32
    %87 = vector.broadcast %cst_36 : f32 to vector<8x128xf32>
    %88 = arith.addf %87, %86 : vector<8x128xf32>
    %89 = arith.divf %87, %88 : vector<8x128xf32>
    %90 = vector.extract_strided_slice %83 {offsets = [0, 128], sizes = [8, 128], strides = [1, 1]} : vector<8x512xf32> to vector<8x128xf32>
    %91 = arith.negf %90 : vector<8x128xf32>
    %92 = math.exp %91 : vector<8x128xf32>
    %cst_37 = arith.constant 1.000000e+00 : f32
    %93 = vector.broadcast %cst_37 : f32 to vector<8x128xf32>
    %94 = arith.addf %93, %92 : vector<8x128xf32>
    %95 = arith.divf %93, %94 : vector<8x128xf32>
    %96 = vector.extract_strided_slice %83 {offsets = [0, 256], sizes = [8, 128], strides = [1, 1]} : vector<8x512xf32> to vector<8x128xf32>
    %97 = math.tanh %96 : vector<8x128xf32>
    %98 = vector.extract_strided_slice %83 {offsets = [0, 384], sizes = [8, 128], strides = [1, 1]} : vector<8x512xf32> to vector<8x128xf32>
    %99 = arith.negf %98 : vector<8x128xf32>
    %100 = math.exp %99 : vector<8x128xf32>
    %cst_38 = arith.constant 1.000000e+00 : f32
    %101 = vector.broadcast %cst_38 : f32 to vector<8x128xf32>
    %102 = arith.addf %101, %100 : vector<8x128xf32>
    %103 = arith.divf %101, %102 : vector<8x128xf32>
    %104 = arith.mulf %95, %73 : vector<8x128xf32>
    %105 = arith.mulf %89, %97 : vector<8x128xf32>
    %106 = arith.addf %104, %105 : vector<8x128xf32>
    %107 = math.tanh %106 : vector<8x128xf32>
    %108 = arith.mulf %103, %107 : vector<8x128xf32>
    %109 = arith.addi %21, %76 : i32
    %110 = vector.broadcast %109 : i32 to vector<8x1xi32>
    %111 = arith.cmpi sgt, %5, %110 : vector<8x1xi32>
    %cst_39 = arith.constant 0.000000e+00 : f32
    %112 = vector.shape_cast %111 : vector<8x1xi1> to vector<8x1xi1>
    %113 = vector.broadcast %112 : vector<8x1xi1> to vector<8x128xi1>
    %114 = vector.broadcast %cst_39 : f32 to vector<8x128xf32>
    %115 = arith.select %113, %108, %114 : vector<8x128xi1>, vector<8x128xf32>
    %116 = arith.index_cast %78 : i32 to index
    %c0_40 = arith.constant 0 : index
    %117 = vector.load %arg7[%116, %c0_40] : memref<64x128xf32, #tpu.memory_space<vmem>>, vector<8x128xf32>
    tpu.vector_store %arg7[%116, %c0_40], %115 {strides = array<i32>} : memref<64x128xf32, #tpu.memory_space<vmem>>, vector<8x128xf32>,
    %118 = vector.shape_cast %111 : vector<8x1xi1> to vector<8x1xi1>
    %119 = vector.broadcast %118 : vector<8x1xi1> to vector<8x128xi1>
    %120 = arith.select %119, %108, %70 : vector<8x128xi1>, vector<8x128xf32>
    %121 = vector.shape_cast %111 : vector<8x1xi1> to vector<8x1xi1>
    %122 = vector.broadcast %121 : vector<8x1xi1> to vector<8x128xi1>
    %123 = arith.select %122, %106, %73 : vector<8x128xi1>, vector<8x128xf32>
    %c2_i32_41 = arith.constant 2 : i32
    %c1_i32_42 = arith.constant 1 : i32
    %124 = arith.cmpi eq, %arg0, %c1_i32_42 : i32
    %c7_i32_43 = arith.constant 7 : i32
    %125 = arith.subi %c7_i32_43, %c2_i32_41 : i32
    %126 = arith.select %124, %125, %c2_i32_41 : i32
    %c8_i32_44 = arith.constant 8 : i32
    %127 = arith.muli %126, %c8_i32_44 : i32
    %128 = tpu.assume_multiple %127, 8 : i32
    %129 = arith.index_cast %128 : i32 to index
    %c0_45 = arith.constant 0 : index
    %130 = vector.load %arg10[%129, %c0_45] : memref<64x512xf32, #tpu.memory_space<vmem>>, vector<8x512xf32>
    %131 = arith.truncf %120 : vector<8x128xf32> to vector<8x128xbf16>
    %cst_46 = arith.constant dense<0.000000e+00> : vector<8x512xf32>
    %132 = tpu.matmul %131, %4, %cst_46 {dimension_numbers = #tpu.dot_dimension_numbers<[1], [0], [0], [1], [0, 0, 1, 1], [], []>} : vector<8x128xbf16>, vector<128x512xbf16>, vector<8x512xf32> -> vector<8x512xf32>
    %133 = arith.addf %130, %132 : vector<8x512xf32>
    %134 = vector.extract_strided_slice %133 {offsets = [0, 0], sizes = [8, 128], strides = [1, 1]} : vector<8x512xf32> to vector<8x128xf32>
    %135 = arith.negf %134 : vector<8x128xf32>
    %136 = math.exp %135 : vector<8x128xf32>
    %cst_47 = arith.constant 1.000000e+00 : f32
    %137 = vector.broadcast %cst_47 : f32 to vector<8x128xf32>
    %138 = arith.addf %137, %136 : vector<8x128xf32>
    %139 = arith.divf %137, %138 : vector<8x128xf32>
    %140 = vector.extract_strided_slice %133 {offsets = [0, 128], sizes = [8, 128], strides = [1, 1]} : vector<8x512xf32> to vector<8x128xf32>
    %141 = arith.negf %140 : vector<8x128xf32>
    %142 = math.exp %141 : vector<8x128xf32>
    %cst_48 = arith.constant 1.000000e+00 : f32
    %143 = vector.broadcast %cst_48 : f32 to vector<8x128xf32>
    %144 = arith.addf %143, %142 : vector<8x128xf32>
    %145 = arith.divf %143, %144 : vector<8x128xf32>
    %146 = vector.extract_strided_slice %133 {offsets = [0, 256], sizes = [8, 128], strides = [1, 1]} : vector<8x512xf32> to vector<8x128xf32>
    %147 = math.tanh %146 : vector<8x128xf32>
    %148 = vector.extract_strided_slice %133 {offsets = [0, 384], sizes = [8, 128], strides = [1, 1]} : vector<8x512xf32> to vector<8x128xf32>
    %149 = arith.negf %148 : vector<8x128xf32>
    %150 = math.exp %149 : vector<8x128xf32>
    %cst_49 = arith.constant 1.000000e+00 : f32
    %151 = vector.broadcast %cst_49 : f32 to vector<8x128xf32>
    %152 = arith.addf %151, %150 : vector<8x128xf32>
    %153 = arith.divf %151, %152 : vector<8x128xf32>
    %154 = arith.mulf %145, %123 : vector<8x128xf32>
    %155 = arith.mulf %139, %147 : vector<8x128xf32>
    %156 = arith.addf %154, %155 : vector<8x128xf32>
    %157 = math.tanh %156 : vector<8x128xf32>
    %158 = arith.mulf %153, %157 : vector<8x128xf32>
    %159 = arith.addi %21, %126 : i32
    %160 = vector.broadcast %159 : i32 to vector<8x1xi32>
    %161 = arith.cmpi sgt, %5, %160 : vector<8x1xi32>
    %cst_50 = arith.constant 0.000000e+00 : f32
    %162 = vector.shape_cast %161 : vector<8x1xi1> to vector<8x1xi1>
    %163 = vector.broadcast %162 : vector<8x1xi1> to vector<8x128xi1>
    %164 = vector.broadcast %cst_50 : f32 to vector<8x128xf32>
    %165 = arith.select %163, %158, %164 : vector<8x128xi1>, vector<8x128xf32>
    %166 = arith.index_cast %128 : i32 to index
    %c0_51 = arith.constant 0 : index
    %167 = vector.load %arg7[%166, %c0_51] : memref<64x128xf32, #tpu.memory_space<vmem>>, vector<8x128xf32>
    tpu.vector_store %arg7[%166, %c0_51], %165 {strides = array<i32>} : memref<64x128xf32, #tpu.memory_space<vmem>>, vector<8x128xf32>,
    %168 = vector.shape_cast %161 : vector<8x1xi1> to vector<8x1xi1>
    %169 = vector.broadcast %168 : vector<8x1xi1> to vector<8x128xi1>
    %170 = arith.select %169, %158, %120 : vector<8x128xi1>, vector<8x128xf32>
    %171 = vector.shape_cast %161 : vector<8x1xi1> to vector<8x1xi1>
    %172 = vector.broadcast %171 : vector<8x1xi1> to vector<8x128xi1>
    %173 = arith.select %172, %156, %123 : vector<8x128xi1>, vector<8x128xf32>
    %c3_i32 = arith.constant 3 : i32
    %c1_i32_52 = arith.constant 1 : i32
    %174 = arith.cmpi eq, %arg0, %c1_i32_52 : i32
    %c7_i32_53 = arith.constant 7 : i32
    %175 = arith.subi %c7_i32_53, %c3_i32 : i32
    %176 = arith.select %174, %175, %c3_i32 : i32
    %c8_i32_54 = arith.constant 8 : i32
    %177 = arith.muli %176, %c8_i32_54 : i32
    %178 = tpu.assume_multiple %177, 8 : i32
    %179 = arith.index_cast %178 : i32 to index
    %c0_55 = arith.constant 0 : index
    %180 = vector.load %arg10[%179, %c0_55] : memref<64x512xf32, #tpu.memory_space<vmem>>, vector<8x512xf32>
    %181 = arith.truncf %170 : vector<8x128xf32> to vector<8x128xbf16>
    %cst_56 = arith.constant dense<0.000000e+00> : vector<8x512xf32>
    %182 = tpu.matmul %181, %4, %cst_56 {dimension_numbers = #tpu.dot_dimension_numbers<[1], [0], [0], [1], [0, 0, 1, 1], [], []>} : vector<8x128xbf16>, vector<128x512xbf16>, vector<8x512xf32> -> vector<8x512xf32>
    %183 = arith.addf %180, %182 : vector<8x512xf32>
    %184 = vector.extract_strided_slice %183 {offsets = [0, 0], sizes = [8, 128], strides = [1, 1]} : vector<8x512xf32> to vector<8x128xf32>
    %185 = arith.negf %184 : vector<8x128xf32>
    %186 = math.exp %185 : vector<8x128xf32>
    %cst_57 = arith.constant 1.000000e+00 : f32
    %187 = vector.broadcast %cst_57 : f32 to vector<8x128xf32>
    %188 = arith.addf %187, %186 : vector<8x128xf32>
    %189 = arith.divf %187, %188 : vector<8x128xf32>
    %190 = vector.extract_strided_slice %183 {offsets = [0, 128], sizes = [8, 128], strides = [1, 1]} : vector<8x512xf32> to vector<8x128xf32>
    %191 = arith.negf %190 : vector<8x128xf32>
    %192 = math.exp %191 : vector<8x128xf32>
    %cst_58 = arith.constant 1.000000e+00 : f32
    %193 = vector.broadcast %cst_58 : f32 to vector<8x128xf32>
    %194 = arith.addf %193, %192 : vector<8x128xf32>
    %195 = arith.divf %193, %194 : vector<8x128xf32>
    %196 = vector.extract_strided_slice %183 {offsets = [0, 256], sizes = [8, 128], strides = [1, 1]} : vector<8x512xf32> to vector<8x128xf32>
    %197 = math.tanh %196 : vector<8x128xf32>
    %198 = vector.extract_strided_slice %183 {offsets = [0, 384], sizes = [8, 128], strides = [1, 1]} : vector<8x512xf32> to vector<8x128xf32>
    %199 = arith.negf %198 : vector<8x128xf32>
    %200 = math.exp %199 : vector<8x128xf32>
    %cst_59 = arith.constant 1.000000e+00 : f32
    %201 = vector.broadcast %cst_59 : f32 to vector<8x128xf32>
    %202 = arith.addf %201, %200 : vector<8x128xf32>
    %203 = arith.divf %201, %202 : vector<8x128xf32>
    %204 = arith.mulf %195, %173 : vector<8x128xf32>
    %205 = arith.mulf %189, %197 : vector<8x128xf32>
    %206 = arith.addf %204, %205 : vector<8x128xf32>
    %207 = math.tanh %206 : vector<8x128xf32>
    %208 = arith.mulf %203, %207 : vector<8x128xf32>
    %209 = arith.addi %21, %176 : i32
    %210 = vector.broadcast %209 : i32 to vector<8x1xi32>
    %211 = arith.cmpi sgt, %5, %210 : vector<8x1xi32>
    %cst_60 = arith.constant 0.000000e+00 : f32
    %212 = vector.shape_cast %211 : vector<8x1xi1> to vector<8x1xi1>
    %213 = vector.broadcast %212 : vector<8x1xi1> to vector<8x128xi1>
    %214 = vector.broadcast %cst_60 : f32 to vector<8x128xf32>
    %215 = arith.select %213, %208, %214 : vector<8x128xi1>, vector<8x128xf32>
    %216 = arith.index_cast %178 : i32 to index
    %c0_61 = arith.constant 0 : index
    %217 = vector.load %arg7[%216, %c0_61] : memref<64x128xf32, #tpu.memory_space<vmem>>, vector<8x128xf32>
    tpu.vector_store %arg7[%216, %c0_61], %215 {strides = array<i32>} : memref<64x128xf32, #tpu.memory_space<vmem>>, vector<8x128xf32>,
    %218 = vector.shape_cast %211 : vector<8x1xi1> to vector<8x1xi1>
    %219 = vector.broadcast %218 : vector<8x1xi1> to vector<8x128xi1>
    %220 = arith.select %219, %208, %170 : vector<8x128xi1>, vector<8x128xf32>
    %221 = vector.shape_cast %211 : vector<8x1xi1> to vector<8x1xi1>
    %222 = vector.broadcast %221 : vector<8x1xi1> to vector<8x128xi1>
    %223 = arith.select %222, %206, %173 : vector<8x128xi1>, vector<8x128xf32>
    %c4_i32 = arith.constant 4 : i32
    %c1_i32_62 = arith.constant 1 : i32
    %224 = arith.cmpi eq, %arg0, %c1_i32_62 : i32
    %c7_i32_63 = arith.constant 7 : i32
    %225 = arith.subi %c7_i32_63, %c4_i32 : i32
    %226 = arith.select %224, %225, %c4_i32 : i32
    %c8_i32_64 = arith.constant 8 : i32
    %227 = arith.muli %226, %c8_i32_64 : i32
    %228 = tpu.assume_multiple %227, 8 : i32
    %229 = arith.index_cast %228 : i32 to index
    %c0_65 = arith.constant 0 : index
    %230 = vector.load %arg10[%229, %c0_65] : memref<64x512xf32, #tpu.memory_space<vmem>>, vector<8x512xf32>
    %231 = arith.truncf %220 : vector<8x128xf32> to vector<8x128xbf16>
    %cst_66 = arith.constant dense<0.000000e+00> : vector<8x512xf32>
    %232 = tpu.matmul %231, %4, %cst_66 {dimension_numbers = #tpu.dot_dimension_numbers<[1], [0], [0], [1], [0, 0, 1, 1], [], []>} : vector<8x128xbf16>, vector<128x512xbf16>, vector<8x512xf32> -> vector<8x512xf32>
    %233 = arith.addf %230, %232 : vector<8x512xf32>
    %234 = vector.extract_strided_slice %233 {offsets = [0, 0], sizes = [8, 128], strides = [1, 1]} : vector<8x512xf32> to vector<8x128xf32>
    %235 = arith.negf %234 : vector<8x128xf32>
    %236 = math.exp %235 : vector<8x128xf32>
    %cst_67 = arith.constant 1.000000e+00 : f32
    %237 = vector.broadcast %cst_67 : f32 to vector<8x128xf32>
    %238 = arith.addf %237, %236 : vector<8x128xf32>
    %239 = arith.divf %237, %238 : vector<8x128xf32>
    %240 = vector.extract_strided_slice %233 {offsets = [0, 128], sizes = [8, 128], strides = [1, 1]} : vector<8x512xf32> to vector<8x128xf32>
    %241 = arith.negf %240 : vector<8x128xf32>
    %242 = math.exp %241 : vector<8x128xf32>
    %cst_68 = arith.constant 1.000000e+00 : f32
    %243 = vector.broadcast %cst_68 : f32 to vector<8x128xf32>
    %244 = arith.addf %243, %242 : vector<8x128xf32>
    %245 = arith.divf %243, %244 : vector<8x128xf32>
    %246 = vector.extract_strided_slice %233 {offsets = [0, 256], sizes = [8, 128], strides = [1, 1]} : vector<8x512xf32> to vector<8x128xf32>
    %247 = math.tanh %246 : vector<8x128xf32>
    %248 = vector.extract_strided_slice %233 {offsets = [0, 384], sizes = [8, 128], strides = [1, 1]} : vector<8x512xf32> to vector<8x128xf32>
    %249 = arith.negf %248 : vector<8x128xf32>
    %250 = math.exp %249 : vector<8x128xf32>
    %cst_69 = arith.constant 1.000000e+00 : f32
    %251 = vector.broadcast %cst_69 : f32 to vector<8x128xf32>
    %252 = arith.addf %251, %250 : vector<8x128xf32>
    %253 = arith.divf %251, %252 : vector<8x128xf32>
    %254 = arith.mulf %245, %223 : vector<8x128xf32>
    %255 = arith.mulf %239, %247 : vector<8x128xf32>
    %256 = arith.addf %254, %255 : vector<8x128xf32>
    %257 = math.tanh %256 : vector<8x128xf32>
    %258 = arith.mulf %253, %257 : vector<8x128xf32>
    %259 = arith.addi %21, %226 : i32
    %260 = vector.broadcast %259 : i32 to vector<8x1xi32>
    %261 = arith.cmpi sgt, %5, %260 : vector<8x1xi32>
    %cst_70 = arith.constant 0.000000e+00 : f32
    %262 = vector.shape_cast %261 : vector<8x1xi1> to vector<8x1xi1>
    %263 = vector.broadcast %262 : vector<8x1xi1> to vector<8x128xi1>
    %264 = vector.broadcast %cst_70 : f32 to vector<8x128xf32>
    %265 = arith.select %263, %258, %264 : vector<8x128xi1>, vector<8x128xf32>
    %266 = arith.index_cast %228 : i32 to index
    %c0_71 = arith.constant 0 : index
    %267 = vector.load %arg7[%266, %c0_71] : memref<64x128xf32, #tpu.memory_space<vmem>>, vector<8x128xf32>
    tpu.vector_store %arg7[%266, %c0_71], %265 {strides = array<i32>} : memref<64x128xf32, #tpu.memory_space<vmem>>, vector<8x128xf32>,
    %268 = vector.shape_cast %261 : vector<8x1xi1> to vector<8x1xi1>
    %269 = vector.broadcast %268 : vector<8x1xi1> to vector<8x128xi1>
    %270 = arith.select %269, %258, %220 : vector<8x128xi1>, vector<8x128xf32>
    %271 = vector.shape_cast %261 : vector<8x1xi1> to vector<8x1xi1>
    %272 = vector.broadcast %271 : vector<8x1xi1> to vector<8x128xi1>
    %273 = arith.select %272, %256, %223 : vector<8x128xi1>, vector<8x128xf32>
    %c5_i32 = arith.constant 5 : i32
    %c1_i32_72 = arith.constant 1 : i32
    %274 = arith.cmpi eq, %arg0, %c1_i32_72 : i32
    %c7_i32_73 = arith.constant 7 : i32
    %275 = arith.subi %c7_i32_73, %c5_i32 : i32
    %276 = arith.select %274, %275, %c5_i32 : i32
    %c8_i32_74 = arith.constant 8 : i32
    %277 = arith.muli %276, %c8_i32_74 : i32
    %278 = tpu.assume_multiple %277, 8 : i32
    %279 = arith.index_cast %278 : i32 to index
    %c0_75 = arith.constant 0 : index
    %280 = vector.load %arg10[%279, %c0_75] : memref<64x512xf32, #tpu.memory_space<vmem>>, vector<8x512xf32>
    %281 = arith.truncf %270 : vector<8x128xf32> to vector<8x128xbf16>
    %cst_76 = arith.constant dense<0.000000e+00> : vector<8x512xf32>
    %282 = tpu.matmul %281, %4, %cst_76 {dimension_numbers = #tpu.dot_dimension_numbers<[1], [0], [0], [1], [0, 0, 1, 1], [], []>} : vector<8x128xbf16>, vector<128x512xbf16>, vector<8x512xf32> -> vector<8x512xf32>
    %283 = arith.addf %280, %282 : vector<8x512xf32>
    %284 = vector.extract_strided_slice %283 {offsets = [0, 0], sizes = [8, 128], strides = [1, 1]} : vector<8x512xf32> to vector<8x128xf32>
    %285 = arith.negf %284 : vector<8x128xf32>
    %286 = math.exp %285 : vector<8x128xf32>
    %cst_77 = arith.constant 1.000000e+00 : f32
    %287 = vector.broadcast %cst_77 : f32 to vector<8x128xf32>
    %288 = arith.addf %287, %286 : vector<8x128xf32>
    %289 = arith.divf %287, %288 : vector<8x128xf32>
    %290 = vector.extract_strided_slice %283 {offsets = [0, 128], sizes = [8, 128], strides = [1, 1]} : vector<8x512xf32> to vector<8x128xf32>
    %291 = arith.negf %290 : vector<8x128xf32>
    %292 = math.exp %291 : vector<8x128xf32>
    %cst_78 = arith.constant 1.000000e+00 : f32
    %293 = vector.broadcast %cst_78 : f32 to vector<8x128xf32>
    %294 = arith.addf %293, %292 : vector<8x128xf32>
    %295 = arith.divf %293, %294 : vector<8x128xf32>
    %296 = vector.extract_strided_slice %283 {offsets = [0, 256], sizes = [8, 128], strides = [1, 1]} : vector<8x512xf32> to vector<8x128xf32>
    %297 = math.tanh %296 : vector<8x128xf32>
    %298 = vector.extract_strided_slice %283 {offsets = [0, 384], sizes = [8, 128], strides = [1, 1]} : vector<8x512xf32> to vector<8x128xf32>
    %299 = arith.negf %298 : vector<8x128xf32>
    %300 = math.exp %299 : vector<8x128xf32>
    %cst_79 = arith.constant 1.000000e+00 : f32
    %301 = vector.broadcast %cst_79 : f32 to vector<8x128xf32>
    %302 = arith.addf %301, %300 : vector<8x128xf32>
    %303 = arith.divf %301, %302 : vector<8x128xf32>
    %304 = arith.mulf %295, %273 : vector<8x128xf32>
    %305 = arith.mulf %289, %297 : vector<8x128xf32>
    %306 = arith.addf %304, %305 : vector<8x128xf32>
    %307 = math.tanh %306 : vector<8x128xf32>
    %308 = arith.mulf %303, %307 : vector<8x128xf32>
    %309 = arith.addi %21, %276 : i32
    %310 = vector.broadcast %309 : i32 to vector<8x1xi32>
    %311 = arith.cmpi sgt, %5, %310 : vector<8x1xi32>
    %cst_80 = arith.constant 0.000000e+00 : f32
    %312 = vector.shape_cast %311 : vector<8x1xi1> to vector<8x1xi1>
    %313 = vector.broadcast %312 : vector<8x1xi1> to vector<8x128xi1>
    %314 = vector.broadcast %cst_80 : f32 to vector<8x128xf32>
    %315 = arith.select %313, %308, %314 : vector<8x128xi1>, vector<8x128xf32>
    %316 = arith.index_cast %278 : i32 to index
    %c0_81 = arith.constant 0 : index
    %317 = vector.load %arg7[%316, %c0_81] : memref<64x128xf32, #tpu.memory_space<vmem>>, vector<8x128xf32>
    tpu.vector_store %arg7[%316, %c0_81], %315 {strides = array<i32>} : memref<64x128xf32, #tpu.memory_space<vmem>>, vector<8x128xf32>,
    %318 = vector.shape_cast %311 : vector<8x1xi1> to vector<8x1xi1>
    %319 = vector.broadcast %318 : vector<8x1xi1> to vector<8x128xi1>
    %320 = arith.select %319, %308, %270 : vector<8x128xi1>, vector<8x128xf32>
    %321 = vector.shape_cast %311 : vector<8x1xi1> to vector<8x1xi1>
    %322 = vector.broadcast %321 : vector<8x1xi1> to vector<8x128xi1>
    %323 = arith.select %322, %306, %273 : vector<8x128xi1>, vector<8x128xf32>
    %c6_i32 = arith.constant 6 : i32
    %c1_i32_82 = arith.constant 1 : i32
    %324 = arith.cmpi eq, %arg0, %c1_i32_82 : i32
    %c7_i32_83 = arith.constant 7 : i32
    %325 = arith.subi %c7_i32_83, %c6_i32 : i32
    %326 = arith.select %324, %325, %c6_i32 : i32
    %c8_i32_84 = arith.constant 8 : i32
    %327 = arith.muli %326, %c8_i32_84 : i32
    %328 = tpu.assume_multiple %327, 8 : i32
    %329 = arith.index_cast %328 : i32 to index
    %c0_85 = arith.constant 0 : index
    %330 = vector.load %arg10[%329, %c0_85] : memref<64x512xf32, #tpu.memory_space<vmem>>, vector<8x512xf32>
    %331 = arith.truncf %320 : vector<8x128xf32> to vector<8x128xbf16>
    %cst_86 = arith.constant dense<0.000000e+00> : vector<8x512xf32>
    %332 = tpu.matmul %331, %4, %cst_86 {dimension_numbers = #tpu.dot_dimension_numbers<[1], [0], [0], [1], [0, 0, 1, 1], [], []>} : vector<8x128xbf16>, vector<128x512xbf16>, vector<8x512xf32> -> vector<8x512xf32>
    %333 = arith.addf %330, %332 : vector<8x512xf32>
    %334 = vector.extract_strided_slice %333 {offsets = [0, 0], sizes = [8, 128], strides = [1, 1]} : vector<8x512xf32> to vector<8x128xf32>
    %335 = arith.negf %334 : vector<8x128xf32>
    %336 = math.exp %335 : vector<8x128xf32>
    %cst_87 = arith.constant 1.000000e+00 : f32
    %337 = vector.broadcast %cst_87 : f32 to vector<8x128xf32>
    %338 = arith.addf %337, %336 : vector<8x128xf32>
    %339 = arith.divf %337, %338 : vector<8x128xf32>
    %340 = vector.extract_strided_slice %333 {offsets = [0, 128], sizes = [8, 128], strides = [1, 1]} : vector<8x512xf32> to vector<8x128xf32>
    %341 = arith.negf %340 : vector<8x128xf32>
    %342 = math.exp %341 : vector<8x128xf32>
    %cst_88 = arith.constant 1.000000e+00 : f32
    %343 = vector.broadcast %cst_88 : f32 to vector<8x128xf32>
    %344 = arith.addf %343, %342 : vector<8x128xf32>
    %345 = arith.divf %343, %344 : vector<8x128xf32>
    %346 = vector.extract_strided_slice %333 {offsets = [0, 256], sizes = [8, 128], strides = [1, 1]} : vector<8x512xf32> to vector<8x128xf32>
    %347 = math.tanh %346 : vector<8x128xf32>
    %348 = vector.extract_strided_slice %333 {offsets = [0, 384], sizes = [8, 128], strides = [1, 1]} : vector<8x512xf32> to vector<8x128xf32>
    %349 = arith.negf %348 : vector<8x128xf32>
    %350 = math.exp %349 : vector<8x128xf32>
    %cst_89 = arith.constant 1.000000e+00 : f32
    %351 = vector.broadcast %cst_89 : f32 to vector<8x128xf32>
    %352 = arith.addf %351, %350 : vector<8x128xf32>
    %353 = arith.divf %351, %352 : vector<8x128xf32>
    %354 = arith.mulf %345, %323 : vector<8x128xf32>
    %355 = arith.mulf %339, %347 : vector<8x128xf32>
    %356 = arith.addf %354, %355 : vector<8x128xf32>
    %357 = math.tanh %356 : vector<8x128xf32>
    %358 = arith.mulf %353, %357 : vector<8x128xf32>
    %359 = arith.addi %21, %326 : i32
    %360 = vector.broadcast %359 : i32 to vector<8x1xi32>
    %361 = arith.cmpi sgt, %5, %360 : vector<8x1xi32>
    %cst_90 = arith.constant 0.000000e+00 : f32
    %362 = vector.shape_cast %361 : vector<8x1xi1> to vector<8x1xi1>
    %363 = vector.broadcast %362 : vector<8x1xi1> to vector<8x128xi1>
    %364 = vector.broadcast %cst_90 : f32 to vector<8x128xf32>
    %365 = arith.select %363, %358, %364 : vector<8x128xi1>, vector<8x128xf32>
    %366 = arith.index_cast %328 : i32 to index
    %c0_91 = arith.constant 0 : index
    %367 = vector.load %arg7[%366, %c0_91] : memref<64x128xf32, #tpu.memory_space<vmem>>, vector<8x128xf32>
    tpu.vector_store %arg7[%366, %c0_91], %365 {strides = array<i32>} : memref<64x128xf32, #tpu.memory_space<vmem>>, vector<8x128xf32>,
    %368 = vector.shape_cast %361 : vector<8x1xi1> to vector<8x1xi1>
    %369 = vector.broadcast %368 : vector<8x1xi1> to vector<8x128xi1>
    %370 = arith.select %369, %358, %320 : vector<8x128xi1>, vector<8x128xf32>
    %371 = vector.shape_cast %361 : vector<8x1xi1> to vector<8x1xi1>
    %372 = vector.broadcast %371 : vector<8x1xi1> to vector<8x128xi1>
    %373 = arith.select %372, %356, %323 : vector<8x128xi1>, vector<8x128xf32>
    %c7_i32_92 = arith.constant 7 : i32
    %c1_i32_93 = arith.constant 1 : i32
    %374 = arith.cmpi eq, %arg0, %c1_i32_93 : i32
    %c7_i32_94 = arith.constant 7 : i32
    %375 = arith.subi %c7_i32_94, %c7_i32_92 : i32
    %376 = arith.select %374, %375, %c7_i32_92 : i32
    %c8_i32_95 = arith.constant 8 : i32
    %377 = arith.muli %376, %c8_i32_95 : i32
    %378 = tpu.assume_multiple %377, 8 : i32
    %379 = arith.index_cast %378 : i32 to index
    %c0_96 = arith.constant 0 : index
    %380 = vector.load %arg10[%379, %c0_96] : memref<64x512xf32, #tpu.memory_space<vmem>>, vector<8x512xf32>
    %381 = arith.truncf %370 : vector<8x128xf32> to vector<8x128xbf16>
    %cst_97 = arith.constant dense<0.000000e+00> : vector<8x512xf32>
    %382 = tpu.matmul %381, %4, %cst_97 {dimension_numbers = #tpu.dot_dimension_numbers<[1], [0], [0], [1], [0, 0, 1, 1], [], []>} : vector<8x128xbf16>, vector<128x512xbf16>, vector<8x512xf32> -> vector<8x512xf32>
    %383 = arith.addf %380, %382 : vector<8x512xf32>
    %384 = vector.extract_strided_slice %383 {offsets = [0, 0], sizes = [8, 128], strides = [1, 1]} : vector<8x512xf32> to vector<8x128xf32>
    %385 = arith.negf %384 : vector<8x128xf32>
    %386 = math.exp %385 : vector<8x128xf32>
    %cst_98 = arith.constant 1.000000e+00 : f32
    %387 = vector.broadcast %cst_98 : f32 to vector<8x128xf32>
    %388 = arith.addf %387, %386 : vector<8x128xf32>
    %389 = arith.divf %387, %388 : vector<8x128xf32>
    %390 = vector.extract_strided_slice %383 {offsets = [0, 128], sizes = [8, 128], strides = [1, 1]} : vector<8x512xf32> to vector<8x128xf32>
    %391 = arith.negf %390 : vector<8x128xf32>
    %392 = math.exp %391 : vector<8x128xf32>
    %cst_99 = arith.constant 1.000000e+00 : f32
    %393 = vector.broadcast %cst_99 : f32 to vector<8x128xf32>
    %394 = arith.addf %393, %392 : vector<8x128xf32>
    %395 = arith.divf %393, %394 : vector<8x128xf32>
    %396 = vector.extract_strided_slice %383 {offsets = [0, 256], sizes = [8, 128], strides = [1, 1]} : vector<8x512xf32> to vector<8x128xf32>
    %397 = math.tanh %396 : vector<8x128xf32>
    %398 = vector.extract_strided_slice %383 {offsets = [0, 384], sizes = [8, 128], strides = [1, 1]} : vector<8x512xf32> to vector<8x128xf32>
    %399 = arith.negf %398 : vector<8x128xf32>
    %400 = math.exp %399 : vector<8x128xf32>
    %cst_100 = arith.constant 1.000000e+00 : f32
    %401 = vector.broadcast %cst_100 : f32 to vector<8x128xf32>
    %402 = arith.addf %401, %400 : vector<8x128xf32>
    %403 = arith.divf %401, %402 : vector<8x128xf32>
    %404 = arith.mulf %395, %373 : vector<8x128xf32>
    %405 = arith.mulf %389, %397 : vector<8x128xf32>
    %406 = arith.addf %404, %405 : vector<8x128xf32>
    %407 = math.tanh %406 : vector<8x128xf32>
    %408 = arith.mulf %403, %407 : vector<8x128xf32>
    %409 = arith.addi %21, %376 : i32
    %410 = vector.broadcast %409 : i32 to vector<8x1xi32>
    %411 = arith.cmpi sgt, %5, %410 : vector<8x1xi32>
    %cst_101 = arith.constant 0.000000e+00 : f32
    %412 = vector.shape_cast %411 : vector<8x1xi1> to vector<8x1xi1>
    %413 = vector.broadcast %412 : vector<8x1xi1> to vector<8x128xi1>
    %414 = vector.broadcast %cst_101 : f32 to vector<8x128xf32>
    %415 = arith.select %413, %408, %414 : vector<8x128xi1>, vector<8x128xf32>
    %416 = arith.index_cast %378 : i32 to index
    %c0_102 = arith.constant 0 : index
    %417 = vector.load %arg7[%416, %c0_102] : memref<64x128xf32, #tpu.memory_space<vmem>>, vector<8x128xf32>
    tpu.vector_store %arg7[%416, %c0_102], %415 {strides = array<i32>} : memref<64x128xf32, #tpu.memory_space<vmem>>, vector<8x128xf32>,
    %418 = vector.shape_cast %411 : vector<8x1xi1> to vector<8x1xi1>
    %419 = vector.broadcast %418 : vector<8x1xi1> to vector<8x128xi1>
    %420 = arith.select %419, %408, %370 : vector<8x128xi1>, vector<8x128xf32>
    %421 = vector.shape_cast %411 : vector<8x1xi1> to vector<8x1xi1>
    %422 = vector.broadcast %421 : vector<8x1xi1> to vector<8x128xi1>
    %423 = arith.select %422, %406, %373 : vector<8x128xi1>, vector<8x128xf32>
    %c8_i32_103 = arith.constant 8 : i32
    %c0_104 = arith.constant 0 : index
    %c0_105 = arith.constant 0 : index
    %424 = vector.load %arg8[%c0_104, %c0_105] : memref<8x128xf32, #tpu.memory_space<vmem>>, vector<8x128xf32>
    tpu.vector_store %arg8[%c0_104, %c0_105], %420 {strides = array<i32>} : memref<8x128xf32, #tpu.memory_space<vmem>>, vector<8x128xf32>,
    %c0_106 = arith.constant 0 : index
    %c0_107 = arith.constant 0 : index
    %425 = vector.load %arg9[%c0_106, %c0_107] : memref<8x128xf32, #tpu.memory_space<vmem>>, vector<8x128xf32>
    tpu.vector_store %arg9[%c0_106, %c0_107], %423 {strides = array<i32>} : memref<8x128xf32, #tpu.memory_space<vmem>>, vector<8x128xf32>,
    return
  }
  func.func @transform_0(%arg0: i32, %arg1: i32) -> (i32, i32) {
    %c0_i32 = arith.constant 0 : i32
    %0 = arith.muli %arg0, %c0_i32 : i32
    %c2_i32 = arith.constant 2 : i32
    %1 = arith.muli %c2_i32, %arg0 : i32
    %c1_i32 = arith.constant 1 : i32
    %2 = arith.subi %c1_i32, %1 : i32
    %3 = arith.muli %2, %arg1 : i32
    %4 = arith.addi %0, %3 : i32
    %c0_i32_0 = arith.constant 0 : i32
    %c0_i32_1 = arith.constant 0 : i32
    return %4, %c0_i32_0 : i32, i32
  }
  func.func @transform_1(%arg0: i32, %arg1: i32) -> (i32, i32, i32) {
    %c0_i32 = arith.constant 0 : i32
    %c0_i32_0 = arith.constant 0 : i32
    %c0_i32_1 = arith.constant 0 : i32
    return %arg0, %c0_i32, %c0_i32_0 : i32, i32, i32
  }
  func.func @transform_2(%arg0: i32, %arg1: i32) -> (i32, i32, i32) {
    %c0_i32 = arith.constant 0 : i32
    %c0_i32_0 = arith.constant 0 : i32
    %c0_i32_1 = arith.constant 0 : i32
    return %arg0, %c0_i32, %c0_i32_0 : i32, i32, i32
  }
  func.func @transform_3(%arg0: i32, %arg1: i32) -> (i32, i32, i32) {
    %c0_i32 = arith.constant 0 : i32
    %c0_i32_0 = arith.constant 0 : i32
    %c0_i32_1 = arith.constant 0 : i32
    return %arg0, %c0_i32, %c0_i32_0 : i32, i32, i32
  }
  func.func @transform_4(%arg0: i32, %arg1: i32) -> (i32, i32) {
    %c0_i32 = arith.constant 0 : i32
    %c0_i32_0 = arith.constant 0 : i32
    %c0_i32_1 = arith.constant 0 : i32
    return %c0_i32, %c0_i32_0 : i32, i32
  }
  func.func @transform_5(%arg0: i32, %arg1: i32) -> (i32, i32) {
    %c0_i32 = arith.constant 0 : i32
    %0 = arith.muli %arg0, %c0_i32 : i32
    %c2_i32 = arith.constant 2 : i32
    %1 = arith.muli %c2_i32, %arg0 : i32
    %c1_i32 = arith.constant 1 : i32
    %2 = arith.subi %c1_i32, %1 : i32
    %3 = arith.muli %2, %arg1 : i32
    %4 = arith.addi %0, %3 : i32
    %c0_i32_0 = arith.constant 0 : i32
    return %4, %arg0 : i32, i32
  }
}

module attributes {stable_mosaic.version = 11 : i64} {
  func.func @lstm_chunk_kernel(%arg0: i32, %arg1: i32, %arg2: memref<64x256xf32, #tpu.memory_space<vmem>>, %arg3: memref<1x256x512xbf16, #tpu.memory_space<vmem>>, %arg4: memref<1x128x512xbf16, #tpu.memory_space<vmem>>, %arg5: memref<1x1x512xf32, #tpu.memory_space<vmem>>, %arg6: memref<8x1xi32, #tpu.memory_space<vmem>>, %arg7: memref<64x128xf32, #tpu.memory_space<vmem>>, %arg8: memref<8x128xf32, #tpu.memory_space<vmem>>, %arg9: memref<8x128xf32, #tpu.memory_space<vmem>>, %arg10: memref<64x512xf32, #tpu.memory_space<vmem>>) attributes {dimension_semantics = [#tpu.dimension_semantics<parallel>, #tpu.dimension_semantics<arbitrary>], iteration_bounds = array<i64: 2, 1>, scalar_prefetch = 0 : i64, scratch_operands = 3 : i64, tpu.core_type = #tpu.core_type<tc>, window_params = [{transform_indices = @transform_0, window_bounds = array<i64: 64, 256>}, {transform_indices = @transform_1, window_bounds = array<i64: 1, 256, 512>}, {transform_indices = @transform_2, window_bounds = array<i64: 1, 128, 512>}, {transform_indices = @transform_3, window_bounds = array<i64: 1, 1, 512>}, {pipeline_mode = #tpu.pipeline_mode<synchronous>, transform_indices = @transform_4, window_bounds = array<i64: 8, 1>}, {transform_indices = @transform_5, window_bounds = array<i64: 64, 128>}]} {
    %c0_i32 = arith.constant 0 : i32
    %0 = arith.cmpi eq, %arg1, %c0_i32 : i32
    %1 = arith.extui %0 : i1 to i32
    %c0_i32_0 = arith.constant 0 : i32
    %2 = arith.cmpi ne, %1, %c0_i32_0 : i32
    scf.if %2 {
      %cst_108 = arith.constant 0.000000e+00 : f32
      %426 = vector.broadcast %cst_108 : f32 to vector<8x128xf32>
      %c0_109 = arith.constant 0 : index
      %c0_110 = arith.constant 0 : index
      %427 = vector.load %arg8[%c0_109, %c0_110] : memref<8x128xf32, #tpu.memory_space<vmem>>, vector<8x128xf32>
      tpu.vector_store %arg8[%c0_109, %c0_110], %426 {strides = array<i32>} : memref<8x128xf32, #tpu.memory_space<vmem>>, vector<8x128xf32>,
      %cst_111 = arith.constant 0.000000e+00 : f32
      %428 = vector.broadcast %cst_111 : f32 to vector<8x128xf32>
      %c0_112 = arith.constant 0 : index
      %c0_113 = arith.constant 0 : index
      %429 = vector.load %arg9[%c0_112, %c0_113] : memref<8x128xf32, #tpu.memory_space<vmem>>, vector<8x128xf32>
      tpu.vector_store %arg9[%c0_112, %c0_113], %428 {strides = array<i32>} : memref<8x128xf32, #tpu.memory_space<vmem>>, vector<8x128xf32>,
    } else {
    }
    %c0 = arith.constant 0 : index
    %c0_1 = arith.constant 0 : index
    %c0_2 = arith.constant 0 : index
    %3 = vector.load %arg4[%c0, %c0_1, %c0_2] : memref<1x128x512xbf16, #tpu.memory_space<vmem>>, vector<1x128x512xbf16>
    %4 = vector.shape_cast %3 : vector<1x128x512xbf16> to vector<128x512xbf16>
    %c0_3 = arith.constant 0 : index
    %c0_4 = arith.constant 0 : index
    %5 = vector.load %arg6[%c0_3, %c0_4] : memref<8x1xi32, #tpu.memory_space<vmem>>, vector<8x1xi32>
    %c0_5 = arith.constant 0 : index
    %c0_6 = arith.constant 0 : index
    %6 = vector.load %arg2[%c0_5, %c0_6] : memref<64x256xf32, #tpu.memory_space<vmem>>, vector<64x256xf32>
    %7 = arith.truncf %6 : vector<64x256xf32> to vector<64x256xbf16>
    %c0_7 = arith.constant 0 : index
    %c0_8 = arith.constant 0 : index
    %c0_9 = arith.constant 0 : index
    %8 = vector.load %arg3[%c0_7, %c0_8, %c0_9] : memref<1x256x512xbf16, #tpu.memory_space<vmem>>, vector<1x256x512xbf16>
    %9 = vector.shape_cast %8 : vector<1x256x512xbf16> to vector<256x512xbf16>
    %cst = arith.constant dense<0.000000e+00> : vector<64x512xf32>
    %10 = tpu.matmul %7, %9, %cst {dimension_numbers = #tpu.dot_dimension_numbers<[1], [0], [0], [1], [0, 0, 1, 1], [], []>} : vector<64x256xbf16>, vector<256x512xbf16>, vector<64x512xf32> -> vector<64x512xf32>
    %c0_10 = arith.constant 0 : index
    %c0_11 = arith.constant 0 : index
    %c0_12 = arith.constant 0 : index
    %11 = vector.load %arg5[%c0_10, %c0_11, %c0_12] : memref<1x1x512xf32, #tpu.memory_space<vmem>>, vector<1x1x512xf32>
    %12 = vector.shape_cast %11 : vector<1x1x512xf32> to vector<1x512xf32>
    %13 = vector.broadcast %12 : vector<1x512xf32> to vector<64x512xf32>
    %14 = arith.addf %10, %13 : vector<64x512xf32>
    %c0_13 = arith.constant 0 : index
    %c0_14 = arith.constant 0 : index
    %15 = vector.load %arg10[%c0_13, %c0_14] : memref<64x512xf32, #tpu.memory_space<vmem>>, vector<64x512xf32>
    tpu.vector_store %arg10[%c0_13, %c0_14], %14 {strides = array<i32>} : memref<64x512xf32, #tpu.memory_space<vmem>>, vector<64x512xf32>,
    %c0_i32_15 = arith.constant 0 : i32
    %16 = arith.muli %arg0, %c0_i32_15 : i32
    %c2_i32 = arith.constant 2 : i32
    %17 = arith.muli %c2_i32, %arg0 : i32
    %c1_i32 = arith.constant 1 : i32
    %18 = arith.subi %c1_i32, %17 : i32
    %19 = arith.muli %18, %arg1 : i32
    %20 = arith.addi %16, %19 : i32
    %c8_i32 = arith.constant 8 : i32
    %21 = arith.muli %20, %c8_i32 : i32
    %c0_16 = arith.constant 0 : index
    %c0_17 = arith.constant 0 : index
    %22 = vector.load %arg8[%c0_16, %c0_17] : memref<8x128xf32, #tpu.memory_space<vmem>>, vector<8x128xf32>
    %c0_18 = arith.constant 0 : index
    %c0_19 = arith.constant 0 : index
    %23 = vector.load %arg9[%c0_18, %c0_19] : memref<8x128xf32, #tpu.memory_space<vmem>>, vector<8x128xf32>
    %c0_i32_20 = arith.constant 0 : i32
    %c1_i32_21 = arith.constant 1 : i32
    %24 = arith.cmpi eq, %arg0, %c1_i32_21 : i32
    %c7_i32 = arith.constant 7 : i32
    %25 = arith.subi %c7_i32, %c0_i32_20 : i32
    %26 = arith.select %24, %25, %c0_i32_20 : i32
    %c8_i32_22 = arith.constant 8 : i32
    %27 = arith.muli %26, %c8_i32_22 : i32
    %28 = tpu.assume_multiple %27, 8 : i32
    %29 = arith.index_cast %28 : i32 to index
    %c0_23 = arith.constant 0 : index
    %30 = vector.load %arg10[%29, %c0_23] : memref<64x512xf32, #tpu.memory_space<vmem>>, vector<8x512xf32>
    %31 = arith.truncf %22 : vector<8x128xf32> to vector<8x128xbf16>
    %cst_24 = arith.constant dense<0.000000e+00> : vector<8x512xf32>
    %32 = tpu.matmul %31, %4, %cst_24 {dimension_numbers = #tpu.dot_dimension_numbers<[1], [0], [0], [1], [0, 0, 1, 1], [], []>} : vector<8x128xbf16>, vector<128x512xbf16>, vector<8x512xf32> -> vector<8x512xf32>
    %33 = arith.addf %30, %32 : vector<8x512xf32>
    %34 = vector.extract_strided_slice %33 {offsets = [0, 0], sizes = [8, 128], strides = [1, 1]} : vector<8x512xf32> to vector<8x128xf32>
    %35 = arith.negf %34 : vector<8x128xf32>
    %36 = math.exp %35 : vector<8x128xf32>
    %cst_25 = arith.constant 1.000000e+00 : f32
    %37 = vector.broadcast %cst_25 : f32 to vector<8x128xf32>
    %38 = arith.addf %37, %36 : vector<8x128xf32>
    %39 = arith.divf %37, %38 : vector<8x128xf32>
    %40 = vector.extract_strided_slice %33 {offsets = [0, 128], sizes = [8, 128], strides = [1, 1]} : vector<8x512xf32> to vector<8x128xf32>
    %41 = arith.negf %40 : vector<8x128xf32>
    %42 = math.exp %41 : vector<8x128xf32>
    %cst_26 = arith.constant 1.000000e+00 : f32
    %43 = vector.broadcast %cst_26 : f32 to vector<8x128xf32>
    %44 = arith.addf %43, %42 : vector<8x128xf32>
    %45 = arith.divf %43, %44 : vector<8x128xf32>
    %46 = vector.extract_strided_slice %33 {offsets = [0, 256], sizes = [8, 128], strides = [1, 1]} : vector<8x512xf32> to vector<8x128xf32>
    %47 = math.tanh %46 : vector<8x128xf32>
    %48 = vector.extract_strided_slice %33 {offsets = [0, 384], sizes = [8, 128], strides = [1, 1]} : vector<8x512xf32> to vector<8x128xf32>
    %49 = arith.negf %48 : vector<8x128xf32>
    %50 = math.exp %49 : vector<8x128xf32>
    %cst_27 = arith.constant 1.000000e+00 : f32
    %51 = vector.broadcast %cst_27 : f32 to vector<8x128xf32>
    %52 = arith.addf %51, %50 : vector<8x128xf32>
    %53 = arith.divf %51, %52 : vector<8x128xf32>
    %54 = arith.mulf %45, %23 : vector<8x128xf32>
    %55 = arith.mulf %39, %47 : vector<8x128xf32>
    %56 = arith.addf %54, %55 : vector<8x128xf32>
    %57 = math.tanh %56 : vector<8x128xf32>
    %58 = arith.mulf %53, %57 : vector<8x128xf32>
    %59 = arith.addi %21, %26 : i32
    %60 = vector.broadcast %59 : i32 to vector<8x1xi32>
    %61 = arith.cmpi sgt, %5, %60 : vector<8x1xi32>
    %cst_28 = arith.constant 0.000000e+00 : f32
    %62 = vector.shape_cast %61 : vector<8x1xi1> to vector<8x1xi1>
    %63 = vector.broadcast %62 : vector<8x1xi1> to vector<8x128xi1>
    %64 = vector.broadcast %cst_28 : f32 to vector<8x128xf32>
    %65 = arith.select %63, %58, %64 : vector<8x128xi1>, vector<8x128xf32>
    %66 = arith.index_cast %28 : i32 to index
    %c0_29 = arith.constant 0 : index
    %67 = vector.load %arg7[%66, %c0_29] : memref<64x128xf32, #tpu.memory_space<vmem>>, vector<8x128xf32>
    tpu.vector_store %arg7[%66, %c0_29], %65 {strides = array<i32>} : memref<64x128xf32, #tpu.memory_space<vmem>>, vector<8x128xf32>,
    %68 = vector.shape_cast %61 : vector<8x1xi1> to vector<8x1xi1>
    %69 = vector.broadcast %68 : vector<8x1xi1> to vector<8x128xi1>
    %70 = arith.select %69, %58, %22 : vector<8x128xi1>, vector<8x128xf32>
    %71 = vector.shape_cast %61 : vector<8x1xi1> to vector<8x1xi1>
    %72 = vector.broadcast %71 : vector<8x1xi1> to vector<8x128xi1>
    %73 = arith.select %72, %56, %23 : vector<8x128xi1>, vector<8x128xf32>
    %c1_i32_30 = arith.constant 1 : i32
    %c1_i32_31 = arith.constant 1 : i32
    %74 = arith.cmpi eq, %arg0, %c1_i32_31 : i32
    %c7_i32_32 = arith.constant 7 : i32
    %75 = arith.subi %c7_i32_32, %c1_i32_30 : i32
    %76 = arith.select %74, %75, %c1_i32_30 : i32
    %c8_i32_33 = arith.constant 8 : i32
    %77 = arith.muli %76, %c8_i32_33 : i32
    %78 = tpu.assume_multiple %77, 8 : i32
    %79 = arith.index_cast %78 : i32 to index
    %c0_34 = arith.constant 0 : index
    %80 = vector.load %arg10[%79, %c0_34] : memref<64x512xf32, #tpu.memory_space<vmem>>, vector<8x512xf32>
    %81 = arith.truncf %70 : vector<8x128xf32> to vector<8x128xbf16>
    %cst_35 = arith.constant dense<0.000000e+00> : vector<8x512xf32>
    %82 = tpu.matmul %81, %4, %cst_35 {dimension_numbers = #tpu.dot_dimension_numbers<[1], [0], [0], [1], [0, 0, 1, 1], [], []>} : vector<8x128xbf16>, vector<128x512xbf16>, vector<8x512xf32> -> vector<8x512xf32>
    %83 = arith.addf %80, %82 : vector<8x512xf32>
    %84 = vector.extract_strided_slice %83 {offsets = [0, 0], sizes = [8, 128], strides = [1, 1]} : vector<8x512xf32> to vector<8x128xf32>
    %85 = arith.negf %84 : vector<8x128xf32>
    %86 = math.exp %85 : vector<8x128xf32>
    %cst_36 = arith.constant 1.000000e+00 : f32
    %87 = vector.broadcast %cst_36 : f32 to vector<8x128xf32>
    %88 = arith.addf %87, %86 : vector<8x128xf32>
    %89 = arith.divf %87, %88 : vector<8x128xf32>
    %90 = vector.extract_strided_slice %83 {offsets = [0, 128], sizes = [8, 128], strides = [1, 1]} : vector<8x512xf32> to vector<8x128xf32>
    %91 = arith.negf %90 : vector<8x128xf32>
    %92 = math.exp %91 : vector<8x128xf32>
    %cst_37 = arith.constant 1.000000e+00 : f32
    %93 = vector.broadcast %cst_37 : f32 to vector<8x128xf32>
    %94 = arith.addf %93, %92 : vector<8x128xf32>
    %95 = arith.divf %93, %94 : vector<8x128xf32>
    %96 = vector.extract_strided_slice %83 {offsets = [0, 256], sizes = [8, 128], strides = [1, 1]} : vector<8x512xf32> to vector<8x128xf32>
    %97 = math.tanh %96 : vector<8x128xf32>
    %98 = vector.extract_strided_slice %83 {offsets = [0, 384], sizes = [8, 128], strides = [1, 1]} : vector<8x512xf32> to vector<8x128xf32>
    %99 = arith.negf %98 : vector<8x128xf32>
    %100 = math.exp %99 : vector<8x128xf32>
    %cst_38 = arith.constant 1.000000e+00 : f32
    %101 = vector.broadcast %cst_38 : f32 to vector<8x128xf32>
    %102 = arith.addf %101, %100 : vector<8x128xf32>
    %103 = arith.divf %101, %102 : vector<8x128xf32>
    %104 = arith.mulf %95, %73 : vector<8x128xf32>
    %105 = arith.mulf %89, %97 : vector<8x128xf32>
    %106 = arith.addf %104, %105 : vector<8x128xf32>
    %107 = math.tanh %106 : vector<8x128xf32>
    %108 = arith.mulf %103, %107 : vector<8x128xf32>
    %109 = arith.addi %21, %76 : i32
    %110 = vector.broadcast %109 : i32 to vector<8x1xi32>
    %111 = arith.cmpi sgt, %5, %110 : vector<8x1xi32>
    %cst_39 = arith.constant 0.000000e+00 : f32
    %112 = vector.shape_cast %111 : vector<8x1xi1> to vector<8x1xi1>
    %113 = vector.broadcast %112 : vector<8x1xi1> to vector<8x128xi1>
    %114 = vector.broadcast %cst_39 : f32 to vector<8x128xf32>
    %115 = arith.select %113, %108, %114 : vector<8x128xi1>, vector<8x128xf32>
    %116 = arith.index_cast %78 : i32 to index
    %c0_40 = arith.constant 0 : index
    %117 = vector.load %arg7[%116, %c0_40] : memref<64x128xf32, #tpu.memory_space<vmem>>, vector<8x128xf32>
    tpu.vector_store %arg7[%116, %c0_40], %115 {strides = array<i32>} : memref<64x128xf32, #tpu.memory_space<vmem>>, vector<8x128xf32>,
    %118 = vector.shape_cast %111 : vector<8x1xi1> to vector<8x1xi1>
    %119 = vector.broadcast %118 : vector<8x1xi1> to vector<8x128xi1>
    %120 = arith.select %119, %108, %70 : vector<8x128xi1>, vector<8x128xf32>
    %121 = vector.shape_cast %111 : vector<8x1xi1> to vector<8x1xi1>
    %122 = vector.broadcast %121 : vector<8x1xi1> to vector<8x128xi1>
    %123 = arith.select %122, %106, %73 : vector<8x128xi1>, vector<8x128xf32>
    %c2_i32_41 = arith.constant 2 : i32
    %c1_i32_42 = arith.constant 1 : i32
    %124 = arith.cmpi eq, %arg0, %c1_i32_42 : i32
    %c7_i32_43 = arith.constant 7 : i32
    %125 = arith.subi %c7_i32_43, %c2_i32_41 : i32
    %126 = arith.select %124, %125, %c2_i32_41 : i32
    %c8_i32_44 = arith.constant 8 : i32
    %127 = arith.muli %126, %c8_i32_44 : i32
    %128 = tpu.assume_multiple %127, 8 : i32
    %129 = arith.index_cast %128 : i32 to index
    %c0_45 = arith.constant 0 : index
    %130 = vector.load %arg10[%129, %c0_45] : memref<64x512xf32, #tpu.memory_space<vmem>>, vector<8x512xf32>
    %131 = arith.truncf %120 : vector<8x128xf32> to vector<8x128xbf16>
    %cst_46 = arith.constant dense<0.000000e+00> : vector<8x512xf32>
    %132 = tpu.matmul %131, %4, %cst_46 {dimension_numbers = #tpu.dot_dimension_numbers<[1], [0], [0], [1], [0, 0, 1, 1], [], []>} : vector<8x128xbf16>, vector<128x512xbf16>, vector<8x512xf32> -> vector<8x512xf32>
    %133 = arith.addf %130, %132 : vector<8x512xf32>
    %134 = vector.extract_strided_slice %133 {offsets = [0, 0], sizes = [8, 128], strides = [1, 1]} : vector<8x512xf32> to vector<8x128xf32>
    %135 = arith.negf %134 : vector<8x128xf32>
    %136 = math.exp %135 : vector<8x128xf32>
    %cst_47 = arith.constant 1.000000e+00 : f32
    %137 = vector.broadcast %cst_47 : f32 to vector<8x128xf32>
    %138 = arith.addf %137, %136 : vector<8x128xf32>
    %139 = arith.divf %137, %138 : vector<8x128xf32>
    %140 = vector.extract_strided_slice %133 {offsets = [0, 128], sizes = [8, 128], strides = [1, 1]} : vector<8x512xf32> to vector<8x128xf32>
    %141 = arith.negf %140 : vector<8x128xf32>
    %142 = math.exp %141 : vector<8x128xf32>
    %cst_48 = arith.constant 1.000000e+00 : f32
    %143 = vector.broadcast %cst_48 : f32 to vector<8x128xf32>
    %144 = arith.addf %143, %142 : vector<8x128xf32>
    %145 = arith.divf %143, %144 : vector<8x128xf32>
    %146 = vector.extract_strided_slice %133 {offsets = [0, 256], sizes = [8, 128], strides = [1, 1]} : vector<8x512xf32> to vector<8x128xf32>
    %147 = math.tanh %146 : vector<8x128xf32>
    %148 = vector.extract_strided_slice %133 {offsets = [0, 384], sizes = [8, 128], strides = [1, 1]} : vector<8x512xf32> to vector<8x128xf32>
    %149 = arith.negf %148 : vector<8x128xf32>
    %150 = math.exp %149 : vector<8x128xf32>
    %cst_49 = arith.constant 1.000000e+00 : f32
    %151 = vector.broadcast %cst_49 : f32 to vector<8x128xf32>
    %152 = arith.addf %151, %150 : vector<8x128xf32>
    %153 = arith.divf %151, %152 : vector<8x128xf32>
    %154 = arith.mulf %145, %123 : vector<8x128xf32>
    %155 = arith.mulf %139, %147 : vector<8x128xf32>
    %156 = arith.addf %154, %155 : vector<8x128xf32>
    %157 = math.tanh %156 : vector<8x128xf32>
    %158 = arith.mulf %153, %157 : vector<8x128xf32>
    %159 = arith.addi %21, %126 : i32
    %160 = vector.broadcast %159 : i32 to vector<8x1xi32>
    %161 = arith.cmpi sgt, %5, %160 : vector<8x1xi32>
    %cst_50 = arith.constant 0.000000e+00 : f32
    %162 = vector.shape_cast %161 : vector<8x1xi1> to vector<8x1xi1>
    %163 = vector.broadcast %162 : vector<8x1xi1> to vector<8x128xi1>
    %164 = vector.broadcast %cst_50 : f32 to vector<8x128xf32>
    %165 = arith.select %163, %158, %164 : vector<8x128xi1>, vector<8x128xf32>
    %166 = arith.index_cast %128 : i32 to index
    %c0_51 = arith.constant 0 : index
    %167 = vector.load %arg7[%166, %c0_51] : memref<64x128xf32, #tpu.memory_space<vmem>>, vector<8x128xf32>
    tpu.vector_store %arg7[%166, %c0_51], %165 {strides = array<i32>} : memref<64x128xf32, #tpu.memory_space<vmem>>, vector<8x128xf32>,
    %168 = vector.shape_cast %161 : vector<8x1xi1> to vector<8x1xi1>
    %169 = vector.broadcast %168 : vector<8x1xi1> to vector<8x128xi1>
    %170 = arith.select %169, %158, %120 : vector<8x128xi1>, vector<8x128xf32>
    %171 = vector.shape_cast %161 : vector<8x1xi1> to vector<8x1xi1>
    %172 = vector.broadcast %171 : vector<8x1xi1> to vector<8x128xi1>
    %173 = arith.select %172, %156, %123 : vector<8x128xi1>, vector<8x128xf32>
    %c3_i32 = arith.constant 3 : i32
    %c1_i32_52 = arith.constant 1 : i32
    %174 = arith.cmpi eq, %arg0, %c1_i32_52 : i32
    %c7_i32_53 = arith.constant 7 : i32
    %175 = arith.subi %c7_i32_53, %c3_i32 : i32
    %176 = arith.select %174, %175, %c3_i32 : i32
    %c8_i32_54 = arith.constant 8 : i32
    %177 = arith.muli %176, %c8_i32_54 : i32
    %178 = tpu.assume_multiple %177, 8 : i32
    %179 = arith.index_cast %178 : i32 to index
    %c0_55 = arith.constant 0 : index
    %180 = vector.load %arg10[%179, %c0_55] : memref<64x512xf32, #tpu.memory_space<vmem>>, vector<8x512xf32>
    %181 = arith.truncf %170 : vector<8x128xf32> to vector<8x128xbf16>
    %cst_56 = arith.constant dense<0.000000e+00> : vector<8x512xf32>
    %182 = tpu.matmul %181, %4, %cst_56 {dimension_numbers = #tpu.dot_dimension_numbers<[1], [0], [0], [1], [0, 0, 1, 1], [], []>} : vector<8x128xbf16>, vector<128x512xbf16>, vector<8x512xf32> -> vector<8x512xf32>
    %183 = arith.addf %180, %182 : vector<8x512xf32>
    %184 = vector.extract_strided_slice %183 {offsets = [0, 0], sizes = [8, 128], strides = [1, 1]} : vector<8x512xf32> to vector<8x128xf32>
    %185 = arith.negf %184 : vector<8x128xf32>
    %186 = math.exp %185 : vector<8x128xf32>
    %cst_57 = arith.constant 1.000000e+00 : f32
    %187 = vector.broadcast %cst_57 : f32 to vector<8x128xf32>
    %188 = arith.addf %187, %186 : vector<8x128xf32>
    %189 = arith.divf %187, %188 : vector<8x128xf32>
    %190 = vector.extract_strided_slice %183 {offsets = [0, 128], sizes = [8, 128], strides = [1, 1]} : vector<8x512xf32> to vector<8x128xf32>
    %191 = arith.negf %190 : vector<8x128xf32>
    %192 = math.exp %191 : vector<8x128xf32>
    %cst_58 = arith.constant 1.000000e+00 : f32
    %193 = vector.broadcast %cst_58 : f32 to vector<8x128xf32>
    %194 = arith.addf %193, %192 : vector<8x128xf32>
    %195 = arith.divf %193, %194 : vector<8x128xf32>
    %196 = vector.extract_strided_slice %183 {offsets = [0, 256], sizes = [8, 128], strides = [1, 1]} : vector<8x512xf32> to vector<8x128xf32>
    %197 = math.tanh %196 : vector<8x128xf32>
    %198 = vector.extract_strided_slice %183 {offsets = [0, 384], sizes = [8, 128], strides = [1, 1]} : vector<8x512xf32> to vector<8x128xf32>
    %199 = arith.negf %198 : vector<8x128xf32>
    %200 = math.exp %199 : vector<8x128xf32>
    %cst_59 = arith.constant 1.000000e+00 : f32
    %201 = vector.broadcast %cst_59 : f32 to vector<8x128xf32>
    %202 = arith.addf %201, %200 : vector<8x128xf32>
    %203 = arith.divf %201, %202 : vector<8x128xf32>
    %204 = arith.mulf %195, %173 : vector<8x128xf32>
    %205 = arith.mulf %189, %197 : vector<8x128xf32>
    %206 = arith.addf %204, %205 : vector<8x128xf32>
    %207 = math.tanh %206 : vector<8x128xf32>
    %208 = arith.mulf %203, %207 : vector<8x128xf32>
    %209 = arith.addi %21, %176 : i32
    %210 = vector.broadcast %209 : i32 to vector<8x1xi32>
    %211 = arith.cmpi sgt, %5, %210 : vector<8x1xi32>
    %cst_60 = arith.constant 0.000000e+00 : f32
    %212 = vector.shape_cast %211 : vector<8x1xi1> to vector<8x1xi1>
    %213 = vector.broadcast %212 : vector<8x1xi1> to vector<8x128xi1>
    %214 = vector.broadcast %cst_60 : f32 to vector<8x128xf32>
    %215 = arith.select %213, %208, %214 : vector<8x128xi1>, vector<8x128xf32>
    %216 = arith.index_cast %178 : i32 to index
    %c0_61 = arith.constant 0 : index
    %217 = vector.load %arg7[%216, %c0_61] : memref<64x128xf32, #tpu.memory_space<vmem>>, vector<8x128xf32>
    tpu.vector_store %arg7[%216, %c0_61], %215 {strides = array<i32>} : memref<64x128xf32, #tpu.memory_space<vmem>>, vector<8x128xf32>,
    %218 = vector.shape_cast %211 : vector<8x1xi1> to vector<8x1xi1>
    %219 = vector.broadcast %218 : vector<8x1xi1> to vector<8x128xi1>
    %220 = arith.select %219, %208, %170 : vector<8x128xi1>, vector<8x128xf32>
    %221 = vector.shape_cast %211 : vector<8x1xi1> to vector<8x1xi1>
    %222 = vector.broadcast %221 : vector<8x1xi1> to vector<8x128xi1>
    %223 = arith.select %222, %206, %173 : vector<8x128xi1>, vector<8x128xf32>
    %c4_i32 = arith.constant 4 : i32
    %c1_i32_62 = arith.constant 1 : i32
    %224 = arith.cmpi eq, %arg0, %c1_i32_62 : i32
    %c7_i32_63 = arith.constant 7 : i32
    %225 = arith.subi %c7_i32_63, %c4_i32 : i32
    %226 = arith.select %224, %225, %c4_i32 : i32
    %c8_i32_64 = arith.constant 8 : i32
    %227 = arith.muli %226, %c8_i32_64 : i32
    %228 = tpu.assume_multiple %227, 8 : i32
    %229 = arith.index_cast %228 : i32 to index
    %c0_65 = arith.constant 0 : index
    %230 = vector.load %arg10[%229, %c0_65] : memref<64x512xf32, #tpu.memory_space<vmem>>, vector<8x512xf32>
    %231 = arith.truncf %220 : vector<8x128xf32> to vector<8x128xbf16>
    %cst_66 = arith.constant dense<0.000000e+00> : vector<8x512xf32>
    %232 = tpu.matmul %231, %4, %cst_66 {dimension_numbers = #tpu.dot_dimension_numbers<[1], [0], [0], [1], [0, 0, 1, 1], [], []>} : vector<8x128xbf16>, vector<128x512xbf16>, vector<8x512xf32> -> vector<8x512xf32>
    %233 = arith.addf %230, %232 : vector<8x512xf32>
    %234 = vector.extract_strided_slice %233 {offsets = [0, 0], sizes = [8, 128], strides = [1, 1]} : vector<8x512xf32> to vector<8x128xf32>
    %235 = arith.negf %234 : vector<8x128xf32>
    %236 = math.exp %235 : vector<8x128xf32>
    %cst_67 = arith.constant 1.000000e+00 : f32
    %237 = vector.broadcast %cst_67 : f32 to vector<8x128xf32>
    %238 = arith.addf %237, %236 : vector<8x128xf32>
    %239 = arith.divf %237, %238 : vector<8x128xf32>
    %240 = vector.extract_strided_slice %233 {offsets = [0, 128], sizes = [8, 128], strides = [1, 1]} : vector<8x512xf32> to vector<8x128xf32>
    %241 = arith.negf %240 : vector<8x128xf32>
    %242 = math.exp %241 : vector<8x128xf32>
    %cst_68 = arith.constant 1.000000e+00 : f32
    %243 = vector.broadcast %cst_68 : f32 to vector<8x128xf32>
    %244 = arith.addf %243, %242 : vector<8x128xf32>
    %245 = arith.divf %243, %244 : vector<8x128xf32>
    %246 = vector.extract_strided_slice %233 {offsets = [0, 256], sizes = [8, 128], strides = [1, 1]} : vector<8x512xf32> to vector<8x128xf32>
    %247 = math.tanh %246 : vector<8x128xf32>
    %248 = vector.extract_strided_slice %233 {offsets = [0, 384], sizes = [8, 128], strides = [1, 1]} : vector<8x512xf32> to vector<8x128xf32>
    %249 = arith.negf %248 : vector<8x128xf32>
    %250 = math.exp %249 : vector<8x128xf32>
    %cst_69 = arith.constant 1.000000e+00 : f32
    %251 = vector.broadcast %cst_69 : f32 to vector<8x128xf32>
    %252 = arith.addf %251, %250 : vector<8x128xf32>
    %253 = arith.divf %251, %252 : vector<8x128xf32>
    %254 = arith.mulf %245, %223 : vector<8x128xf32>
    %255 = arith.mulf %239, %247 : vector<8x128xf32>
    %256 = arith.addf %254, %255 : vector<8x128xf32>
    %257 = math.tanh %256 : vector<8x128xf32>
    %258 = arith.mulf %253, %257 : vector<8x128xf32>
    %259 = arith.addi %21, %226 : i32
    %260 = vector.broadcast %259 : i32 to vector<8x1xi32>
    %261 = arith.cmpi sgt, %5, %260 : vector<8x1xi32>
    %cst_70 = arith.constant 0.000000e+00 : f32
    %262 = vector.shape_cast %261 : vector<8x1xi1> to vector<8x1xi1>
    %263 = vector.broadcast %262 : vector<8x1xi1> to vector<8x128xi1>
    %264 = vector.broadcast %cst_70 : f32 to vector<8x128xf32>
    %265 = arith.select %263, %258, %264 : vector<8x128xi1>, vector<8x128xf32>
    %266 = arith.index_cast %228 : i32 to index
    %c0_71 = arith.constant 0 : index
    %267 = vector.load %arg7[%266, %c0_71] : memref<64x128xf32, #tpu.memory_space<vmem>>, vector<8x128xf32>
    tpu.vector_store %arg7[%266, %c0_71], %265 {strides = array<i32>} : memref<64x128xf32, #tpu.memory_space<vmem>>, vector<8x128xf32>,
    %268 = vector.shape_cast %261 : vector<8x1xi1> to vector<8x1xi1>
    %269 = vector.broadcast %268 : vector<8x1xi1> to vector<8x128xi1>
    %270 = arith.select %269, %258, %220 : vector<8x128xi1>, vector<8x128xf32>
    %271 = vector.shape_cast %261 : vector<8x1xi1> to vector<8x1xi1>
    %272 = vector.broadcast %271 : vector<8x1xi1> to vector<8x128xi1>
    %273 = arith.select %272, %256, %223 : vector<8x128xi1>, vector<8x128xf32>
    %c5_i32 = arith.constant 5 : i32
    %c1_i32_72 = arith.constant 1 : i32
    %274 = arith.cmpi eq, %arg0, %c1_i32_72 : i32
    %c7_i32_73 = arith.constant 7 : i32
    %275 = arith.subi %c7_i32_73, %c5_i32 : i32
    %276 = arith.select %274, %275, %c5_i32 : i32
    %c8_i32_74 = arith.constant 8 : i32
    %277 = arith.muli %276, %c8_i32_74 : i32
    %278 = tpu.assume_multiple %277, 8 : i32
    %279 = arith.index_cast %278 : i32 to index
    %c0_75 = arith.constant 0 : index
    %280 = vector.load %arg10[%279, %c0_75] : memref<64x512xf32, #tpu.memory_space<vmem>>, vector<8x512xf32>
    %281 = arith.truncf %270 : vector<8x128xf32> to vector<8x128xbf16>
    %cst_76 = arith.constant dense<0.000000e+00> : vector<8x512xf32>
    %282 = tpu.matmul %281, %4, %cst_76 {dimension_numbers = #tpu.dot_dimension_numbers<[1], [0], [0], [1], [0, 0, 1, 1], [], []>} : vector<8x128xbf16>, vector<128x512xbf16>, vector<8x512xf32> -> vector<8x512xf32>
    %283 = arith.addf %280, %282 : vector<8x512xf32>
    %284 = vector.extract_strided_slice %283 {offsets = [0, 0], sizes = [8, 128], strides = [1, 1]} : vector<8x512xf32> to vector<8x128xf32>
    %285 = arith.negf %284 : vector<8x128xf32>
    %286 = math.exp %285 : vector<8x128xf32>
    %cst_77 = arith.constant 1.000000e+00 : f32
    %287 = vector.broadcast %cst_77 : f32 to vector<8x128xf32>
    %288 = arith.addf %287, %286 : vector<8x128xf32>
    %289 = arith.divf %287, %288 : vector<8x128xf32>
    %290 = vector.extract_strided_slice %283 {offsets = [0, 128], sizes = [8, 128], strides = [1, 1]} : vector<8x512xf32> to vector<8x128xf32>
    %291 = arith.negf %290 : vector<8x128xf32>
    %292 = math.exp %291 : vector<8x128xf32>
    %cst_78 = arith.constant 1.000000e+00 : f32
    %293 = vector.broadcast %cst_78 : f32 to vector<8x128xf32>
    %294 = arith.addf %293, %292 : vector<8x128xf32>
    %295 = arith.divf %293, %294 : vector<8x128xf32>
    %296 = vector.extract_strided_slice %283 {offsets = [0, 256], sizes = [8, 128], strides = [1, 1]} : vector<8x512xf32> to vector<8x128xf32>
    %297 = math.tanh %296 : vector<8x128xf32>
    %298 = vector.extract_strided_slice %283 {offsets = [0, 384], sizes = [8, 128], strides = [1, 1]} : vector<8x512xf32> to vector<8x128xf32>
    %299 = arith.negf %298 : vector<8x128xf32>
    %300 = math.exp %299 : vector<8x128xf32>
    %cst_79 = arith.constant 1.000000e+00 : f32
    %301 = vector.broadcast %cst_79 : f32 to vector<8x128xf32>
    %302 = arith.addf %301, %300 : vector<8x128xf32>
    %303 = arith.divf %301, %302 : vector<8x128xf32>
    %304 = arith.mulf %295, %273 : vector<8x128xf32>
    %305 = arith.mulf %289, %297 : vector<8x128xf32>
    %306 = arith.addf %304, %305 : vector<8x128xf32>
    %307 = math.tanh %306 : vector<8x128xf32>
    %308 = arith.mulf %303, %307 : vector<8x128xf32>
    %309 = arith.addi %21, %276 : i32
    %310 = vector.broadcast %309 : i32 to vector<8x1xi32>
    %311 = arith.cmpi sgt, %5, %310 : vector<8x1xi32>
    %cst_80 = arith.constant 0.000000e+00 : f32
    %312 = vector.shape_cast %311 : vector<8x1xi1> to vector<8x1xi1>
    %313 = vector.broadcast %312 : vector<8x1xi1> to vector<8x128xi1>
    %314 = vector.broadcast %cst_80 : f32 to vector<8x128xf32>
    %315 = arith.select %313, %308, %314 : vector<8x128xi1>, vector<8x128xf32>
    %316 = arith.index_cast %278 : i32 to index
    %c0_81 = arith.constant 0 : index
    %317 = vector.load %arg7[%316, %c0_81] : memref<64x128xf32, #tpu.memory_space<vmem>>, vector<8x128xf32>
    tpu.vector_store %arg7[%316, %c0_81], %315 {strides = array<i32>} : memref<64x128xf32, #tpu.memory_space<vmem>>, vector<8x128xf32>,
    %318 = vector.shape_cast %311 : vector<8x1xi1> to vector<8x1xi1>
    %319 = vector.broadcast %318 : vector<8x1xi1> to vector<8x128xi1>
    %320 = arith.select %319, %308, %270 : vector<8x128xi1>, vector<8x128xf32>
    %321 = vector.shape_cast %311 : vector<8x1xi1> to vector<8x1xi1>
    %322 = vector.broadcast %321 : vector<8x1xi1> to vector<8x128xi1>
    %323 = arith.select %322, %306, %273 : vector<8x128xi1>, vector<8x128xf32>
    %c6_i32 = arith.constant 6 : i32
    %c1_i32_82 = arith.constant 1 : i32
    %324 = arith.cmpi eq, %arg0, %c1_i32_82 : i32
    %c7_i32_83 = arith.constant 7 : i32
    %325 = arith.subi %c7_i32_83, %c6_i32 : i32
    %326 = arith.select %324, %325, %c6_i32 : i32
    %c8_i32_84 = arith.constant 8 : i32
    %327 = arith.muli %326, %c8_i32_84 : i32
    %328 = tpu.assume_multiple %327, 8 : i32
    %329 = arith.index_cast %328 : i32 to index
    %c0_85 = arith.constant 0 : index
    %330 = vector.load %arg10[%329, %c0_85] : memref<64x512xf32, #tpu.memory_space<vmem>>, vector<8x512xf32>
    %331 = arith.truncf %320 : vector<8x128xf32> to vector<8x128xbf16>
    %cst_86 = arith.constant dense<0.000000e+00> : vector<8x512xf32>
    %332 = tpu.matmul %331, %4, %cst_86 {dimension_numbers = #tpu.dot_dimension_numbers<[1], [0], [0], [1], [0, 0, 1, 1], [], []>} : vector<8x128xbf16>, vector<128x512xbf16>, vector<8x512xf32> -> vector<8x512xf32>
    %333 = arith.addf %330, %332 : vector<8x512xf32>
    %334 = vector.extract_strided_slice %333 {offsets = [0, 0], sizes = [8, 128], strides = [1, 1]} : vector<8x512xf32> to vector<8x128xf32>
    %335 = arith.negf %334 : vector<8x128xf32>
    %336 = math.exp %335 : vector<8x128xf32>
    %cst_87 = arith.constant 1.000000e+00 : f32
    %337 = vector.broadcast %cst_87 : f32 to vector<8x128xf32>
    %338 = arith.addf %337, %336 : vector<8x128xf32>
    %339 = arith.divf %337, %338 : vector<8x128xf32>
    %340 = vector.extract_strided_slice %333 {offsets = [0, 128], sizes = [8, 128], strides = [1, 1]} : vector<8x512xf32> to vector<8x128xf32>
    %341 = arith.negf %340 : vector<8x128xf32>
    %342 = math.exp %341 : vector<8x128xf32>
    %cst_88 = arith.constant 1.000000e+00 : f32
    %343 = vector.broadcast %cst_88 : f32 to vector<8x128xf32>
    %344 = arith.addf %343, %342 : vector<8x128xf32>
    %345 = arith.divf %343, %344 : vector<8x128xf32>
    %346 = vector.extract_strided_slice %333 {offsets = [0, 256], sizes = [8, 128], strides = [1, 1]} : vector<8x512xf32> to vector<8x128xf32>
    %347 = math.tanh %346 : vector<8x128xf32>
    %348 = vector.extract_strided_slice %333 {offsets = [0, 384], sizes = [8, 128], strides = [1, 1]} : vector<8x512xf32> to vector<8x128xf32>
    %349 = arith.negf %348 : vector<8x128xf32>
    %350 = math.exp %349 : vector<8x128xf32>
    %cst_89 = arith.constant 1.000000e+00 : f32
    %351 = vector.broadcast %cst_89 : f32 to vector<8x128xf32>
    %352 = arith.addf %351, %350 : vector<8x128xf32>
    %353 = arith.divf %351, %352 : vector<8x128xf32>
    %354 = arith.mulf %345, %323 : vector<8x128xf32>
    %355 = arith.mulf %339, %347 : vector<8x128xf32>
    %356 = arith.addf %354, %355 : vector<8x128xf32>
    %357 = math.tanh %356 : vector<8x128xf32>
    %358 = arith.mulf %353, %357 : vector<8x128xf32>
    %359 = arith.addi %21, %326 : i32
    %360 = vector.broadcast %359 : i32 to vector<8x1xi32>
    %361 = arith.cmpi sgt, %5, %360 : vector<8x1xi32>
    %cst_90 = arith.constant 0.000000e+00 : f32
    %362 = vector.shape_cast %361 : vector<8x1xi1> to vector<8x1xi1>
    %363 = vector.broadcast %362 : vector<8x1xi1> to vector<8x128xi1>
    %364 = vector.broadcast %cst_90 : f32 to vector<8x128xf32>
    %365 = arith.select %363, %358, %364 : vector<8x128xi1>, vector<8x128xf32>
    %366 = arith.index_cast %328 : i32 to index
    %c0_91 = arith.constant 0 : index
    %367 = vector.load %arg7[%366, %c0_91] : memref<64x128xf32, #tpu.memory_space<vmem>>, vector<8x128xf32>
    tpu.vector_store %arg7[%366, %c0_91], %365 {strides = array<i32>} : memref<64x128xf32, #tpu.memory_space<vmem>>, vector<8x128xf32>,
    %368 = vector.shape_cast %361 : vector<8x1xi1> to vector<8x1xi1>
    %369 = vector.broadcast %368 : vector<8x1xi1> to vector<8x128xi1>
    %370 = arith.select %369, %358, %320 : vector<8x128xi1>, vector<8x128xf32>
    %371 = vector.shape_cast %361 : vector<8x1xi1> to vector<8x1xi1>
    %372 = vector.broadcast %371 : vector<8x1xi1> to vector<8x128xi1>
    %373 = arith.select %372, %356, %323 : vector<8x128xi1>, vector<8x128xf32>
    %c7_i32_92 = arith.constant 7 : i32
    %c1_i32_93 = arith.constant 1 : i32
    %374 = arith.cmpi eq, %arg0, %c1_i32_93 : i32
    %c7_i32_94 = arith.constant 7 : i32
    %375 = arith.subi %c7_i32_94, %c7_i32_92 : i32
    %376 = arith.select %374, %375, %c7_i32_92 : i32
    %c8_i32_95 = arith.constant 8 : i32
    %377 = arith.muli %376, %c8_i32_95 : i32
    %378 = tpu.assume_multiple %377, 8 : i32
    %379 = arith.index_cast %378 : i32 to index
    %c0_96 = arith.constant 0 : index
    %380 = vector.load %arg10[%379, %c0_96] : memref<64x512xf32, #tpu.memory_space<vmem>>, vector<8x512xf32>
    %381 = arith.truncf %370 : vector<8x128xf32> to vector<8x128xbf16>
    %cst_97 = arith.constant dense<0.000000e+00> : vector<8x512xf32>
    %382 = tpu.matmul %381, %4, %cst_97 {dimension_numbers = #tpu.dot_dimension_numbers<[1], [0], [0], [1], [0, 0, 1, 1], [], []>} : vector<8x128xbf16>, vector<128x512xbf16>, vector<8x512xf32> -> vector<8x512xf32>
    %383 = arith.addf %380, %382 : vector<8x512xf32>
    %384 = vector.extract_strided_slice %383 {offsets = [0, 0], sizes = [8, 128], strides = [1, 1]} : vector<8x512xf32> to vector<8x128xf32>
    %385 = arith.negf %384 : vector<8x128xf32>
    %386 = math.exp %385 : vector<8x128xf32>
    %cst_98 = arith.constant 1.000000e+00 : f32
    %387 = vector.broadcast %cst_98 : f32 to vector<8x128xf32>
    %388 = arith.addf %387, %386 : vector<8x128xf32>
    %389 = arith.divf %387, %388 : vector<8x128xf32>
    %390 = vector.extract_strided_slice %383 {offsets = [0, 128], sizes = [8, 128], strides = [1, 1]} : vector<8x512xf32> to vector<8x128xf32>
    %391 = arith.negf %390 : vector<8x128xf32>
    %392 = math.exp %391 : vector<8x128xf32>
    %cst_99 = arith.constant 1.000000e+00 : f32
    %393 = vector.broadcast %cst_99 : f32 to vector<8x128xf32>
    %394 = arith.addf %393, %392 : vector<8x128xf32>
    %395 = arith.divf %393, %394 : vector<8x128xf32>
    %396 = vector.extract_strided_slice %383 {offsets = [0, 256], sizes = [8, 128], strides = [1, 1]} : vector<8x512xf32> to vector<8x128xf32>
    %397 = math.tanh %396 : vector<8x128xf32>
    %398 = vector.extract_strided_slice %383 {offsets = [0, 384], sizes = [8, 128], strides = [1, 1]} : vector<8x512xf32> to vector<8x128xf32>
    %399 = arith.negf %398 : vector<8x128xf32>
    %400 = math.exp %399 : vector<8x128xf32>
    %cst_100 = arith.constant 1.000000e+00 : f32
    %401 = vector.broadcast %cst_100 : f32 to vector<8x128xf32>
    %402 = arith.addf %401, %400 : vector<8x128xf32>
    %403 = arith.divf %401, %402 : vector<8x128xf32>
    %404 = arith.mulf %395, %373 : vector<8x128xf32>
    %405 = arith.mulf %389, %397 : vector<8x128xf32>
    %406 = arith.addf %404, %405 : vector<8x128xf32>
    %407 = math.tanh %406 : vector<8x128xf32>
    %408 = arith.mulf %403, %407 : vector<8x128xf32>
    %409 = arith.addi %21, %376 : i32
    %410 = vector.broadcast %409 : i32 to vector<8x1xi32>
    %411 = arith.cmpi sgt, %5, %410 : vector<8x1xi32>
    %cst_101 = arith.constant 0.000000e+00 : f32
    %412 = vector.shape_cast %411 : vector<8x1xi1> to vector<8x1xi1>
    %413 = vector.broadcast %412 : vector<8x1xi1> to vector<8x128xi1>
    %414 = vector.broadcast %cst_101 : f32 to vector<8x128xf32>
    %415 = arith.select %413, %408, %414 : vector<8x128xi1>, vector<8x128xf32>
    %416 = arith.index_cast %378 : i32 to index
    %c0_102 = arith.constant 0 : index
    %417 = vector.load %arg7[%416, %c0_102] : memref<64x128xf32, #tpu.memory_space<vmem>>, vector<8x128xf32>
    tpu.vector_store %arg7[%416, %c0_102], %415 {strides = array<i32>} : memref<64x128xf32, #tpu.memory_space<vmem>>, vector<8x128xf32>,
    %418 = vector.shape_cast %411 : vector<8x1xi1> to vector<8x1xi1>
    %419 = vector.broadcast %418 : vector<8x1xi1> to vector<8x128xi1>
    %420 = arith.select %419, %408, %370 : vector<8x128xi1>, vector<8x128xf32>
    %421 = vector.shape_cast %411 : vector<8x1xi1> to vector<8x1xi1>
    %422 = vector.broadcast %421 : vector<8x1xi1> to vector<8x128xi1>
    %423 = arith.select %422, %406, %373 : vector<8x128xi1>, vector<8x128xf32>
    %c8_i32_103 = arith.constant 8 : i32
    %c0_104 = arith.constant 0 : index
    %c0_105 = arith.constant 0 : index
    %424 = vector.load %arg8[%c0_104, %c0_105] : memref<8x128xf32, #tpu.memory_space<vmem>>, vector<8x128xf32>
    tpu.vector_store %arg8[%c0_104, %c0_105], %420 {strides = array<i32>} : memref<8x128xf32, #tpu.memory_space<vmem>>, vector<8x128xf32>,
    %c0_106 = arith.constant 0 : index
    %c0_107 = arith.constant 0 : index
    %425 = vector.load %arg9[%c0_106, %c0_107] : memref<8x128xf32, #tpu.memory_space<vmem>>, vector<8x128xf32>
    tpu.vector_store %arg9[%c0_106, %c0_107], %423 {strides = array<i32>} : memref<8x128xf32, #tpu.memory_space<vmem>>, vector<8x128xf32>,
    return
  }
  func.func @transform_0(%arg0: i32, %arg1: i32) -> (i32, i32) {
    %c0_i32 = arith.constant 0 : i32
    %0 = arith.muli %arg0, %c0_i32 : i32
    %c2_i32 = arith.constant 2 : i32
    %1 = arith.muli %c2_i32, %arg0 : i32
    %c1_i32 = arith.constant 1 : i32
    %2 = arith.subi %c1_i32, %1 : i32
    %3 = arith.muli %2, %arg1 : i32
    %4 = arith.addi %0, %3 : i32
    %c0_i32_0 = arith.constant 0 : i32
    %c0_i32_1 = arith.constant 0 : i32
    return %4, %c0_i32_0 : i32, i32
  }
  func.func @transform_1(%arg0: i32, %arg1: i32) -> (i32, i32, i32) {
    %c0_i32 = arith.constant 0 : i32
    %c0_i32_0 = arith.constant 0 : i32
    %c0_i32_1 = arith.constant 0 : i32
    return %arg0, %c0_i32, %c0_i32_0 : i32, i32, i32
  }
  func.func @transform_2(%arg0: i32, %arg1: i32) -> (i32, i32, i32) {
    %c0_i32 = arith.constant 0 : i32
    %c0_i32_0 = arith.constant 0 : i32
    %c0_i32_1 = arith.constant 0 : i32
    return %arg0, %c0_i32, %c0_i32_0 : i32, i32, i32
  }
  func.func @transform_3(%arg0: i32, %arg1: i32) -> (i32, i32, i32) {
    %c0_i32 = arith.constant 0 : i32
    %c0_i32_0 = arith.constant 0 : i32
    %c0_i32_1 = arith.constant 0 : i32
    return %arg0, %c0_i32, %c0_i32_0 : i32, i32, i32
  }
  func.func @transform_4(%arg0: i32, %arg1: i32) -> (i32, i32) {
    %c0_i32 = arith.constant 0 : i32
    %c0_i32_0 = arith.constant 0 : i32
    %c0_i32_1 = arith.constant 0 : i32
    return %c0_i32, %c0_i32_0 : i32, i32
  }
  func.func @transform_5(%arg0: i32, %arg1: i32) -> (i32, i32) {
    %c0_i32 = arith.constant 0 : i32
    %0 = arith.muli %arg0, %c0_i32 : i32
    %c2_i32 = arith.constant 2 : i32
    %1 = arith.muli %c2_i32, %arg0 : i32
    %c1_i32 = arith.constant 1 : i32
    %2 = arith.subi %c1_i32, %1 : i32
    %3 = arith.muli %2, %arg1 : i32
    %4 = arith.addi %0, %3 : i32
    %c0_i32_0 = arith.constant 0 : i32
    return %4, %arg0 : i32, i32
  }
}

module attributes {stable_mosaic.version = 11 : i64} {
  func.func @mlp_fused_kernel(%arg0: i32, %arg1: memref<16x256xf32, #tpu.memory_space<vmem>>, %arg2: memref<256x128xbf16, #tpu.memory_space<vmem>>, %arg3: memref<1x128xf32, #tpu.memory_space<vmem>>, %arg4: memref<16x128xf32, #tpu.memory_space<vmem>>) attributes {dimension_semantics = [#tpu.dimension_semantics<parallel>], iteration_bounds = array<i64: 1>, scalar_prefetch = 0 : i64, scratch_operands = 0 : i64, tpu.core_type = #tpu.core_type<tc>, window_params = [{transform_indices = @transform_0, window_bounds = array<i64: 16, 256>}, {pipeline_mode = #tpu.pipeline_mode<synchronous>, transform_indices = @transform_1, window_bounds = array<i64: 256, 128>}, {pipeline_mode = #tpu.pipeline_mode<synchronous>, transform_indices = @transform_2, window_bounds = array<i64: 1, 128>}, {transform_indices = @transform_3, window_bounds = array<i64: 16, 128>}]} {
    %c0 = arith.constant 0 : index
    %c0_0 = arith.constant 0 : index
    %0 = vector.load %arg1[%c0, %c0_0] : memref<16x256xf32, #tpu.memory_space<vmem>>, vector<16x256xf32>
    %1 = arith.truncf %0 : vector<16x256xf32> to vector<16x256xbf16>
    %c0_1 = arith.constant 0 : index
    %c0_2 = arith.constant 0 : index
    %2 = vector.load %arg2[%c0_1, %c0_2] : memref<256x128xbf16, #tpu.memory_space<vmem>>, vector<256x128xbf16>
    %cst = arith.constant dense<0.000000e+00> : vector<16x128xf32>
    %3 = tpu.matmul %1, %2, %cst {dimension_numbers = #tpu.dot_dimension_numbers<[1], [0], [0], [1], [0, 0, 1, 1], [], []>} : vector<16x256xbf16>, vector<256x128xbf16>, vector<16x128xf32> -> vector<16x128xf32>
    %c0_3 = arith.constant 0 : index
    %c0_4 = arith.constant 0 : index
    %4 = vector.load %arg3[%c0_3, %c0_4] : memref<1x128xf32, #tpu.memory_space<vmem>>, vector<1x128xf32>
    %5 = vector.broadcast %4 : vector<1x128xf32> to vector<16x128xf32>
    %6 = arith.addf %3, %5 : vector<16x128xf32>
    %cst_5 = arith.constant 0.000000e+00 : f32
    %7 = vector.broadcast %cst_5 : f32 to vector<16x128xf32>
    %8 = arith.cmpf oge, %6, %7 : vector<16x128xf32>
    %cst_6 = arith.constant 1.000000e-01 : f32
    %9 = vector.broadcast %cst_6 : f32 to vector<16x128xf32>
    %10 = arith.mulf %9, %6 : vector<16x128xf32>
    %11 = arith.select %8, %6, %10 : vector<16x128xi1>, vector<16x128xf32>
    %c0_7 = arith.constant 0 : index
    %c0_8 = arith.constant 0 : index
    %12 = vector.load %arg4[%c0_7, %c0_8] : memref<16x128xf32, #tpu.memory_space<vmem>>, vector<16x128xf32>
    tpu.vector_store %arg4[%c0_7, %c0_8], %11 {strides = array<i32>} : memref<16x128xf32, #tpu.memory_space<vmem>>, vector<16x128xf32>,
    return
  }
  func.func @transform_0(%arg0: i32) -> (i32, i32) {
    %c0_i32 = arith.constant 0 : i32
    %c0_i32_0 = arith.constant 0 : i32
    return %arg0, %c0_i32 : i32, i32
  }
  func.func @transform_1(%arg0: i32) -> (i32, i32) {
    %c0_i32 = arith.constant 0 : i32
    %c0_i32_0 = arith.constant 0 : i32
    %c0_i32_1 = arith.constant 0 : i32
    return %c0_i32, %c0_i32_0 : i32, i32
  }
  func.func @transform_2(%arg0: i32) -> (i32, i32) {
    %c0_i32 = arith.constant 0 : i32
    %c0_i32_0 = arith.constant 0 : i32
    %c0_i32_1 = arith.constant 0 : i32
    return %c0_i32, %c0_i32_0 : i32, i32
  }
  func.func @transform_3(%arg0: i32) -> (i32, i32) {
    %c0_i32 = arith.constant 0 : i32
    %c0_i32_0 = arith.constant 0 : i32
    return %arg0, %c0_i32 : i32, i32
  }
}

module attributes {stable_mosaic.version = 11 : i64} {
  func.func @biaffine_kernel(%arg0: i32, %arg1: i32, %arg2: memref<1x128x128xf32, #tpu.memory_space<vmem>>, %arg3: memref<128x1024xbf16, #tpu.memory_space<vmem>>, %arg4: memref<1x128x128xf32, #tpu.memory_space<vmem>>, %arg5: memref<1x8x128x128xf32, #tpu.memory_space<vmem>>) attributes {dimension_semantics = [#tpu.dimension_semantics<parallel>, #tpu.dimension_semantics<parallel>], iteration_bounds = array<i64: 2, 1>, scalar_prefetch = 0 : i64, scratch_operands = 0 : i64, tpu.core_type = #tpu.core_type<tc>, window_params = [{transform_indices = @transform_0, window_bounds = array<i64: 1, 128, 128>}, {transform_indices = @transform_1, window_bounds = array<i64: 128, 1024>}, {transform_indices = @transform_2, window_bounds = array<i64: 1, 128, 128>}, {transform_indices = @transform_3, window_bounds = array<i64: 1, 8, 128, 128>}]} {
    %c0 = arith.constant 0 : index
    %c0_0 = arith.constant 0 : index
    %c0_1 = arith.constant 0 : index
    %0 = vector.load %arg2[%c0, %c0_0, %c0_1] : memref<1x128x128xf32, #tpu.memory_space<vmem>>, vector<1x128x128xf32>
    %1 = vector.shape_cast %0 : vector<1x128x128xf32> to vector<128x128xf32>
    %2 = arith.truncf %1 : vector<128x128xf32> to vector<128x128xbf16>
    %c0_2 = arith.constant 0 : index
    %c0_3 = arith.constant 0 : index
    %c0_4 = arith.constant 0 : index
    %3 = vector.load %arg4[%c0_2, %c0_3, %c0_4] : memref<1x128x128xf32, #tpu.memory_space<vmem>>, vector<1x128x128xf32>
    %4 = vector.shape_cast %3 : vector<1x128x128xf32> to vector<128x128xf32>
    %5 = arith.truncf %4 : vector<128x128xf32> to vector<128x128xbf16>
    %c0_5 = arith.constant 0 : index
    %c0_6 = arith.constant 0 : index
    %6 = vector.load %arg3[%c0_5, %c0_6] : memref<128x1024xbf16, #tpu.memory_space<vmem>>, vector<128x1024xbf16>
    %cst = arith.constant dense<0.000000e+00> : vector<128x1024xf32>
    %7 = tpu.matmul %2, %6, %cst {dimension_numbers = #tpu.dot_dimension_numbers<[1], [0], [0], [1], [0, 0, 1, 1], [], []>} : vector<128x128xbf16>, vector<128x1024xbf16>, vector<128x1024xf32> -> vector<128x1024xf32>
    %8 = vector.extract_strided_slice %7 {offsets = [0, 0], sizes = [128, 128], strides = [1, 1]} : vector<128x1024xf32> to vector<128x128xf32>
    %9 = arith.truncf %8 : vector<128x128xf32> to vector<128x128xbf16>
    %cst_7 = arith.constant dense<0.000000e+00> : vector<128x128xf32>
    %10 = tpu.matmul %9, %5, %cst_7 {dimension_numbers = #tpu.dot_dimension_numbers<[1], [1], [0], [0], [0, 0, 1, 0], [], []>} : vector<128x128xbf16>, vector<128x128xbf16>, vector<128x128xf32> -> vector<128x128xf32>
    %c0_8 = arith.constant 0 : index
    %c0_9 = arith.constant 0 : index
    %c0_10 = arith.constant 0 : index
    %c0_11 = arith.constant 0 : index
    %11 = vector.load %arg5[%c0_8, %c0_9, %c0_10, %c0_11] : memref<1x8x128x128xf32, #tpu.memory_space<vmem>>, vector<1x1x128x128xf32>
    %12 = vector.shape_cast %11 : vector<1x1x128x128xf32> to vector<128x128xf32>
    %13 = vector.shape_cast %10 : vector<128x128xf32> to vector<1x1x128x128xf32>
    tpu.vector_store %arg5[%c0_8, %c0_9, %c0_10, %c0_11], %13 {strides = array<i32>} : memref<1x8x128x128xf32, #tpu.memory_space<vmem>>, vector<1x1x128x128xf32>,
    %14 = vector.extract_strided_slice %7 {offsets = [0, 128], sizes = [128, 128], strides = [1, 1]} : vector<128x1024xf32> to vector<128x128xf32>
    %15 = arith.truncf %14 : vector<128x128xf32> to vector<128x128xbf16>
    %cst_12 = arith.constant dense<0.000000e+00> : vector<128x128xf32>
    %16 = tpu.matmul %15, %5, %cst_12 {dimension_numbers = #tpu.dot_dimension_numbers<[1], [1], [0], [0], [0, 0, 1, 0], [], []>} : vector<128x128xbf16>, vector<128x128xbf16>, vector<128x128xf32> -> vector<128x128xf32>
    %c0_13 = arith.constant 0 : index
    %c1 = arith.constant 1 : index
    %c0_14 = arith.constant 0 : index
    %c0_15 = arith.constant 0 : index
    %17 = vector.load %arg5[%c0_13, %c1, %c0_14, %c0_15] : memref<1x8x128x128xf32, #tpu.memory_space<vmem>>, vector<1x1x128x128xf32>
    %18 = vector.shape_cast %17 : vector<1x1x128x128xf32> to vector<128x128xf32>
    %19 = vector.shape_cast %16 : vector<128x128xf32> to vector<1x1x128x128xf32>
    tpu.vector_store %arg5[%c0_13, %c1, %c0_14, %c0_15], %19 {strides = array<i32>} : memref<1x8x128x128xf32, #tpu.memory_space<vmem>>, vector<1x1x128x128xf32>,
    %20 = vector.extract_strided_slice %7 {offsets = [0, 256], sizes = [128, 128], strides = [1, 1]} : vector<128x1024xf32> to vector<128x128xf32>
    %21 = arith.truncf %20 : vector<128x128xf32> to vector<128x128xbf16>
    %cst_16 = arith.constant dense<0.000000e+00> : vector<128x128xf32>
    %22 = tpu.matmul %21, %5, %cst_16 {dimension_numbers = #tpu.dot_dimension_numbers<[1], [1], [0], [0], [0, 0, 1, 0], [], []>} : vector<128x128xbf16>, vector<128x128xbf16>, vector<128x128xf32> -> vector<128x128xf32>
    %c0_17 = arith.constant 0 : index
    %c2 = arith.constant 2 : index
    %c0_18 = arith.constant 0 : index
    %c0_19 = arith.constant 0 : index
    %23 = vector.load %arg5[%c0_17, %c2, %c0_18, %c0_19] : memref<1x8x128x128xf32, #tpu.memory_space<vmem>>, vector<1x1x128x128xf32>
    %24 = vector.shape_cast %23 : vector<1x1x128x128xf32> to vector<128x128xf32>
    %25 = vector.shape_cast %22 : vector<128x128xf32> to vector<1x1x128x128xf32>
    tpu.vector_store %arg5[%c0_17, %c2, %c0_18, %c0_19], %25 {strides = array<i32>} : memref<1x8x128x128xf32, #tpu.memory_space<vmem>>, vector<1x1x128x128xf32>,
    %26 = vector.extract_strided_slice %7 {offsets = [0, 384], sizes = [128, 128], strides = [1, 1]} : vector<128x1024xf32> to vector<128x128xf32>
    %27 = arith.truncf %26 : vector<128x128xf32> to vector<128x128xbf16>
    %cst_20 = arith.constant dense<0.000000e+00> : vector<128x128xf32>
    %28 = tpu.matmul %27, %5, %cst_20 {dimension_numbers = #tpu.dot_dimension_numbers<[1], [1], [0], [0], [0, 0, 1, 0], [], []>} : vector<128x128xbf16>, vector<128x128xbf16>, vector<128x128xf32> -> vector<128x128xf32>
    %c0_21 = arith.constant 0 : index
    %c3 = arith.constant 3 : index
    %c0_22 = arith.constant 0 : index
    %c0_23 = arith.constant 0 : index
    %29 = vector.load %arg5[%c0_21, %c3, %c0_22, %c0_23] : memref<1x8x128x128xf32, #tpu.memory_space<vmem>>, vector<1x1x128x128xf32>
    %30 = vector.shape_cast %29 : vector<1x1x128x128xf32> to vector<128x128xf32>
    %31 = vector.shape_cast %28 : vector<128x128xf32> to vector<1x1x128x128xf32>
    tpu.vector_store %arg5[%c0_21, %c3, %c0_22, %c0_23], %31 {strides = array<i32>} : memref<1x8x128x128xf32, #tpu.memory_space<vmem>>, vector<1x1x128x128xf32>,
    %32 = vector.extract_strided_slice %7 {offsets = [0, 512], sizes = [128, 128], strides = [1, 1]} : vector<128x1024xf32> to vector<128x128xf32>
    %33 = arith.truncf %32 : vector<128x128xf32> to vector<128x128xbf16>
    %cst_24 = arith.constant dense<0.000000e+00> : vector<128x128xf32>
    %34 = tpu.matmul %33, %5, %cst_24 {dimension_numbers = #tpu.dot_dimension_numbers<[1], [1], [0], [0], [0, 0, 1, 0], [], []>} : vector<128x128xbf16>, vector<128x128xbf16>, vector<128x128xf32> -> vector<128x128xf32>
    %c0_25 = arith.constant 0 : index
    %c4 = arith.constant 4 : index
    %c0_26 = arith.constant 0 : index
    %c0_27 = arith.constant 0 : index
    %35 = vector.load %arg5[%c0_25, %c4, %c0_26, %c0_27] : memref<1x8x128x128xf32, #tpu.memory_space<vmem>>, vector<1x1x128x128xf32>
    %36 = vector.shape_cast %35 : vector<1x1x128x128xf32> to vector<128x128xf32>
    %37 = vector.shape_cast %34 : vector<128x128xf32> to vector<1x1x128x128xf32>
    tpu.vector_store %arg5[%c0_25, %c4, %c0_26, %c0_27], %37 {strides = array<i32>} : memref<1x8x128x128xf32, #tpu.memory_space<vmem>>, vector<1x1x128x128xf32>,
    %38 = vector.extract_strided_slice %7 {offsets = [0, 640], sizes = [128, 128], strides = [1, 1]} : vector<128x1024xf32> to vector<128x128xf32>
    %39 = arith.truncf %38 : vector<128x128xf32> to vector<128x128xbf16>
    %cst_28 = arith.constant dense<0.000000e+00> : vector<128x128xf32>
    %40 = tpu.matmul %39, %5, %cst_28 {dimension_numbers = #tpu.dot_dimension_numbers<[1], [1], [0], [0], [0, 0, 1, 0], [], []>} : vector<128x128xbf16>, vector<128x128xbf16>, vector<128x128xf32> -> vector<128x128xf32>
    %c0_29 = arith.constant 0 : index
    %c5 = arith.constant 5 : index
    %c0_30 = arith.constant 0 : index
    %c0_31 = arith.constant 0 : index
    %41 = vector.load %arg5[%c0_29, %c5, %c0_30, %c0_31] : memref<1x8x128x128xf32, #tpu.memory_space<vmem>>, vector<1x1x128x128xf32>
    %42 = vector.shape_cast %41 : vector<1x1x128x128xf32> to vector<128x128xf32>
    %43 = vector.shape_cast %40 : vector<128x128xf32> to vector<1x1x128x128xf32>
    tpu.vector_store %arg5[%c0_29, %c5, %c0_30, %c0_31], %43 {strides = array<i32>} : memref<1x8x128x128xf32, #tpu.memory_space<vmem>>, vector<1x1x128x128xf32>,
    %44 = vector.extract_strided_slice %7 {offsets = [0, 768], sizes = [128, 128], strides = [1, 1]} : vector<128x1024xf32> to vector<128x128xf32>
    %45 = arith.truncf %44 : vector<128x128xf32> to vector<128x128xbf16>
    %cst_32 = arith.constant dense<0.000000e+00> : vector<128x128xf32>
    %46 = tpu.matmul %45, %5, %cst_32 {dimension_numbers = #tpu.dot_dimension_numbers<[1], [1], [0], [0], [0, 0, 1, 0], [], []>} : vector<128x128xbf16>, vector<128x128xbf16>, vector<128x128xf32> -> vector<128x128xf32>
    %c0_33 = arith.constant 0 : index
    %c6 = arith.constant 6 : index
    %c0_34 = arith.constant 0 : index
    %c0_35 = arith.constant 0 : index
    %47 = vector.load %arg5[%c0_33, %c6, %c0_34, %c0_35] : memref<1x8x128x128xf32, #tpu.memory_space<vmem>>, vector<1x1x128x128xf32>
    %48 = vector.shape_cast %47 : vector<1x1x128x128xf32> to vector<128x128xf32>
    %49 = vector.shape_cast %46 : vector<128x128xf32> to vector<1x1x128x128xf32>
    tpu.vector_store %arg5[%c0_33, %c6, %c0_34, %c0_35], %49 {strides = array<i32>} : memref<1x8x128x128xf32, #tpu.memory_space<vmem>>, vector<1x1x128x128xf32>,
    %50 = vector.extract_strided_slice %7 {offsets = [0, 896], sizes = [128, 128], strides = [1, 1]} : vector<128x1024xf32> to vector<128x128xf32>
    %51 = arith.truncf %50 : vector<128x128xf32> to vector<128x128xbf16>
    %cst_36 = arith.constant dense<0.000000e+00> : vector<128x128xf32>
    %52 = tpu.matmul %51, %5, %cst_36 {dimension_numbers = #tpu.dot_dimension_numbers<[1], [1], [0], [0], [0, 0, 1, 0], [], []>} : vector<128x128xbf16>, vector<128x128xbf16>, vector<128x128xf32> -> vector<128x128xf32>
    %c0_37 = arith.constant 0 : index
    %c7 = arith.constant 7 : index
    %c0_38 = arith.constant 0 : index
    %c0_39 = arith.constant 0 : index
    %53 = vector.load %arg5[%c0_37, %c7, %c0_38, %c0_39] : memref<1x8x128x128xf32, #tpu.memory_space<vmem>>, vector<1x1x128x128xf32>
    %54 = vector.shape_cast %53 : vector<1x1x128x128xf32> to vector<128x128xf32>
    %55 = vector.shape_cast %52 : vector<128x128xf32> to vector<1x1x128x128xf32>
    tpu.vector_store %arg5[%c0_37, %c7, %c0_38, %c0_39], %55 {strides = array<i32>} : memref<1x8x128x128xf32, #tpu.memory_space<vmem>>, vector<1x1x128x128xf32>,
    return
  }
  func.func @transform_0(%arg0: i32, %arg1: i32) -> (i32, i32, i32) {
    %c0_i32 = arith.constant 0 : i32
    %c0_i32_0 = arith.constant 0 : i32
    %c0_i32_1 = arith.constant 0 : i32
    return %arg0, %c0_i32, %c0_i32_0 : i32, i32, i32
  }
  func.func @transform_1(%arg0: i32, %arg1: i32) -> (i32, i32) {
    %c0_i32 = arith.constant 0 : i32
    %c0_i32_0 = arith.constant 0 : i32
    return %c0_i32, %arg1 : i32, i32
  }
  func.func @transform_2(%arg0: i32, %arg1: i32) -> (i32, i32, i32) {
    %c0_i32 = arith.constant 0 : i32
    %c0_i32_0 = arith.constant 0 : i32
    %c0_i32_1 = arith.constant 0 : i32
    return %arg0, %c0_i32, %c0_i32_0 : i32, i32, i32
  }
  func.func @transform_3(%arg0: i32, %arg1: i32) -> (i32, i32, i32, i32) {
    %c0_i32 = arith.constant 0 : i32
    %c0_i32_0 = arith.constant 0 : i32
    %c0_i32_1 = arith.constant 0 : i32
    return %arg0, %arg1, %c0_i32, %c0_i32_0 : i32, i32, i32, i32
  }
}

</mosaic_0001>

<llo_original>
// kernel: jparser_forward.7
$region0: #{jparser_forward.7}
  #allocation0 [shape = 'u32[]', space=smem, size = 0x4, offset = 0x4, fixed_abs, tag = 'smem constant byte address 0x4 - core index']
  #allocation1 [shape = 'u32[144,128]{1,0:T(1,128)}', space=vmem, size = 0x12000, scoped, tag = 'internal scratch']
  %s0 = inlined_call_operand.vmem [shape: f32[16,256], index: 0, kind: input, shape index: {}]
  %s1 = inlined_call_operand.vmem [shape: bf16[256,128], index: 1, kind: input, shape index: {}]
  %s2 = inlined_call_operand.vmem [shape: f32[1,128], index: 2, kind: input, shape index: {}]
  %s3 = inlined_call_operand.vmem [shape: f32[16,128], index: 3, kind: output, shape index: {}]
  %s4 = sld [smem:[#allocation0]]
  $region22: #{jparser_forward.7} parent=0
    _
  %s6 = ssub.s32 1, %s4
  %s7 = scalar_select 0, %s6, %s4
  // Predicated region
  $region2: #{jparser_forward.7} parent=0 // pred_check
    _
  $region3: #{jparser_forward.7} parent=0 // pred_check_branch
    %9 = sbr.rel (0) target = $region5
  $region4: #{jparser_forward.7} parent=0 // pred_region
    _
  $region5: #{jparser_forward.7} parent=0 // pred_fallthru
    _
  // Predicated region
  $region6: #{jparser_forward.7} parent=0 // pred_check
    _
  $region7: #{jparser_forward.7} parent=0 // pred_check_branch
    %11 = sbr.rel (0) target = $region9
  $region8: #{jparser_forward.7} parent=0 // pred_region
    _
  $region9: #{jparser_forward.7} parent=0 // pred_fallthru
    _
  // Predicated region
  $region10: #{jparser_forward.7} parent=0 // pred_check
    _
  $region11: #{jparser_forward.7} parent=0 // pred_check_branch
    %13 = sbr.rel (0) target = $region13
  $region12: #{jparser_forward.7} parent=0 // pred_region
    _
  $region13: #{jparser_forward.7} parent=0 // pred_fallthru
    _
  %v15 = vld [vmem:[%s0] sm:$0xff]
  %v16 = vld [vmem:[%s0 + $0x8] sm:$0xff]
  %v17 = vld [vmem:[%s0 + $0x10] sm:$0xff]
  %v18 = vld [vmem:[%s0 + $0x18] sm:$0xff]
  %v19 = vpack.c.bf16 %v17, %v15
  %v20 = vpack.c.bf16 %v18, %v16
  %v21 = vld [vmem:[%s1] sm:$0xf]
  %v22 = vld [vmem:[%s1 + $0x4] sm:$0xf]
  %v23 = vld [vmem:[%s1 + $0x8] sm:$0xf]
  %v24 = vld [vmem:[%s1 + $0xc] sm:$0xf]
  %v25 = vld [vmem:[%s1 + $0x10] sm:$0xf]
  %v26 = vld [vmem:[%s1 + $0x14] sm:$0xf]
  %v27 = vld [vmem:[%s1 + $0x18] sm:$0xf]
  %v28 = vld [vmem:[%s1 + $0x1c] sm:$0xf]
  %v29 = vld [vmem:[%s1 + $0x20] sm:$0xf]
  %v30 = vld [vmem:[%s1 + $0x24] sm:$0xf]
  %v31 = vld [vmem:[%s1 + $0x28] sm:$0xf]
  %v32 = vld [vmem:[%s1 + $0x2c] sm:$0xf]
  %v33 = vld [vmem:[%s1 + $0x30] sm:$0xf]
  %v34 = vld [vmem:[%s1 + $0x34] sm:$0xf]
  %v35 = vld [vmem:[%s1 + $0x38] sm:$0xf]
  %v36 = vld [vmem:[%s1 + $0x3c] sm:$0xf]
  %v37 = vld [vmem:[%s1 + $0x40] sm:$0xf]
  %v38 = vld [vmem:[%s1 + $0x44] sm:$0xf]
  %v39 = vld [vmem:[%s1 + $0x48] sm:$0xf]
  %v40 = vld [vmem:[%s1 + $0x4c] sm:$0xf]
  %v41 = vld [vmem:[%s1 + $0x50] sm:$0xf]
  %v42 = vld [vmem:[%s1 + $0x54] sm:$0xf]
  %v43 = vld [vmem:[%s1 + $0x58] sm:$0xf]
  %v44 = vld [vmem:[%s1 + $0x5c] sm:$0xf]
  %v45 = vld [vmem:[%s1 + $0x60] sm:$0xf]
  %v46 = vld [vmem:[%s1 + $0x64] sm:$0xf]
  %v47 = vld [vmem:[%s1 + $0x68] sm:$0xf]
  %v48 = vld [vmem:[%s1 + $0x6c] sm:$0xf]
  %v49 = vld [vmem:[%s1 + $0x70] sm:$0xf]
  %v50 = vld [vmem:[%s1 + $0x74] sm:$0xf]
  %v51 = vld [vmem:[%s1 + $0x78] sm:$0xf]
  %v52 = vld [vmem:[%s1 + $0x7c] sm:$0xf]
  %v53 = vld [vmem:[%s2] sm:$0x1]
  %v55 = vlaneseq
  %v56 = vshrl.u32 %v55, 7
  %v57 = vsub.s32 0, %v56
  %v58 = vrot.slane %v53, %v57
  %v92 = vunpack.c.l.b16 %v21
  %v93 = vunpack.c.l.b16 %v22
  %v94 = vunpack.c.l.b16 %v23
  %v95 = vunpack.c.l.b16 %v24
  %v96 = vunpack.c.l.b16 %v25
  %v97 = vunpack.c.l.b16 %v26
  %v98 = vunpack.c.l.b16 %v27
  %v99 = vunpack.c.l.b16 %v28
  %v100 = vunpack.c.l.b16 %v29
  %v101 = vunpack.c.l.b16 %v30
  %v102 = vunpack.c.l.b16 %v31
  %v103 = vunpack.c.l.b16 %v32
  %v104 = vunpack.c.l.b16 %v33
  %v105 = vunpack.c.l.b16 %v34
  %v106 = vunpack.c.l.b16 %v35
  %v107 = vunpack.c.l.b16 %v36
  %v108 = vunpack.c.l.b16 %v37
  %v109 = vunpack.c.l.b16 %v38
  %v110 = vunpack.c.l.b16 %v39
  %v111 = vunpack.c.l.b16 %v40
  %v112 = vunpack.c.l.b16 %v41
  %v113 = vunpack.c.l.b16 %v42
  %v114 = vunpack.c.l.b16 %v43
  %v115 = vunpack.c.l.b16 %v44
  %v116 = vunpack.c.l.b16 %v45
  %v117 = vunpack.c.l.b16 %v46
  %v118 = vunpack.c.l.b16 %v47
  %v119 = vunpack.c.l.b16 %v48
  %v120 = vunpack.c.l.b16 %v49
  %v121 = vunpack.c.l.b16 %v50
  %v122 = vunpack.c.l.b16 %v51
  %v123 = vunpack.c.l.b16 %v52
  %v124 = vpack.c.b16 %v93, %v92
  %v125 = vpack.c.b16 %v95, %v94
  %v126 = vpack.c.b16 %v97, %v96
  %v127 = vpack.c.b16 %v99, %v98
  %v128 = vpack.c.b16 %v101, %v100
  %v129 = vpack.c.b16 %v103, %v102
  %v130 = vpack.c.b16 %v105, %v104
  %v131 = vpack.c.b16 %v107, %v106
  %v132 = vpack.c.b16 %v109, %v108
  %v133 = vpack.c.b16 %v111, %v110
  %v134 = vpack.c.b16 %v113, %v112
  %v135 = vpack.c.b16 %v115, %v114
  %v136 = vpack.c.b16 %v117, %v116
  %v137 = vpack.c.b16 %v119, %v118
  %v138 = vpack.c.b16 %v121, %v120
  %v139 = vpack.c.b16 %v123, %v122
  %156 = vmatprep.subr.bf16.mxu0 0
  %157 = vmatpush1.bf16.msra.mxu0 %v131
  %158 = vmatprep.subr.bf16.mxu0 0
  %159 = vmatpush1.bf16.msra.mxu0 %v130
  %160 = vmatprep.subr.bf16.mxu0 0
  %161 = vmatpush1.bf16.msra.mxu0 %v129
  %162 = vmatprep.subr.bf16.mxu0 0
  %163 = vmatpush1.bf16.msra.mxu0 %v128
  %164 = vmatprep.subr.bf16.mxu0 0
  %165 = vmatpush1.bf16.msra.mxu0 %v127
  %166 = vmatprep.subr.bf16.mxu0 0
  %167 = vmatpush1.bf16.msra.mxu0 %v126
  %168 = vmatprep.subr.bf16.mxu0 0
  %169 = vmatpush1.bf16.msra.mxu0 %v125
  %170 = vmatprep.subr.bf16.mxu0 0
  %171 = vmatpush1.bf16.msra.mxu0 %v124
  %172 = vmatprep.subr.bf16.mxu0 0
  %173 = vmatpush2.bf16.msra.mxu0 %v139
  %174 = vmatprep.subr.bf16.mxu0 0
  %175 = vmatpush2.bf16.msra.mxu0 %v138
  %176 = vmatprep.subr.bf16.mxu0 0
  %177 = vmatpush2.bf16.msra.mxu0 %v137
  %178 = vmatprep.subr.bf16.mxu0 0
  %179 = vmatpush2.bf16.msra.mxu0 %v136
  %180 = vmatprep.subr.bf16.mxu0 0
  %181 = vmatpush2.bf16.msra.mxu0 %v135
  %182 = vmatprep.subr.bf16.mxu0 0
  %183 = vmatpush2.bf16.msra.mxu0 %v134
  %184 = vmatprep.subr.bf16.mxu0 0
  %185 = vmatpush2.bf16.msra.mxu0 %v133
  %186 = vmatprep.subr.bf16.mxu0 0
  %187 = vmatpush2.bf16.msra.mxu0 %v132
  %188 = vmatprep.mubr.bf16.mxu0 %v20
  %189 = vmatmul.mubr.bf16.gmra.mxu0 %v19
  %v190 = vpop.f32.mrf.mxu0
  %v191 = vadd.f32 %v58, %v190
  %v192 = vpop.f32.mrf.mxu0
  %v193 = vpop.f32.mrf.mxu0
  %v194 = vadd.f32 %v58, %v193
  %v195 = vpop.f32.mrf.mxu0
  %196 = vdwg.mxu0
  %vm197 = vcmp.ge.f32.partialorder %v191, 0.0
  %vm198 = vcmp.ge.f32.partialorder %v194, 0.0
  %v199 = vmul.f32 %v191, 0.1
  %v200 = vmul.f32 %v194, 0.1
  %v201 = vsel %vm197, %v191, %v199
  %v202 = vsel %vm198, %v194, %v200
  %203 = vst [vmem:[%s3] sm:$0xff] %v201
  %204 = vst [vmem:[%s3 + $0x8] sm:$0xff] %v202
  // Predicated region
  $region14: #{jparser_forward.7} parent=0 // pred_check
    _
  $region15: #{jparser_forward.7} parent=0 // pred_check_branch
    %206 = sbr.rel (0) target = $region17
  $region16: #{jparser_forward.7} parent=0 // pred_region
    _
  $region17: #{jparser_forward.7} parent=0 // pred_fallthru
    _
  // Predicated region
  $region18: #{jparser_forward.7} parent=0 // pred_check
    _
  $region19: #{jparser_forward.7} parent=0 // pred_check_branch
    %208 = sbr.rel (0) target = $region21
  $region20: #{jparser_forward.7} parent=0 // pred_region
    _
  $region21: #{jparser_forward.7} parent=0 // pred_fallthru
    _

// kernel: jparser_forward.5
$region0: #{jparser_forward.5}
  #allocation0 [shape = 'u32[]', space=smem, size = 0x4, offset = 0x4, fixed_abs, tag = 'smem constant byte address 0x4 - core index']
  #allocation1 [shape = 'u32[144,128]{1,0:T(1,128)}', space=vmem, size = 0x12000, scoped, tag = 'internal scratch']
  #allocation2 [shape = 'f32[8,128]{1,0:T(8,128)}', space=vmem, size = 0x1000, scoped, tag = 'scratch operand']
  #allocation3 [shape = 'f32[8,128]{1,0:T(8,128)}', space=vmem, size = 0x1000, scoped, tag = 'scratch operand']
  #allocation4 [shape = 'f32[64,512]{1,0:T(8,128)}', space=vmem, size = 0x20000, scoped, tag = 'scratch operand']
  %s0 = inlined_call_operand.vmem [shape: f32[64,32], index: 0, kind: input, shape index: {}]
  %s1 = inlined_call_operand.vmem [shape: bf16[2,32,512], index: 1, kind: input, shape index: {}]
  %s2 = inlined_call_operand.hbm [shape: bf16[2,128,512], index: 2, kind: input, shape index: {}]
  %s3 = inlined_call_operand.hbm [shape: f32[2,1,512], index: 3, kind: input, shape index: {}]
  %s4 = inlined_call_operand.vmem [shape: s32[8,1], index: 4, kind: input, shape index: {}]
  %s5 = inlined_call_operand.vmem [shape: f32[64,256], index: 5, kind: output, shape index: {}]
  %s6 = sld [smem:[#allocation0]]
  $region99: #{jparser_forward.5} parent=0
    _
  %s8 = ssub.s32 1, %s6
  %s9 = scalar_select 0, %s8, %s6
  $region1: #{jparser_forward.5} parent=0
    #allocation5 [shape = 'u8[262144]{0}', space=vmem, size = 0x40000, scoped, tag = 'input window, operand 2']
    #allocation6 [shape = 's32[2]{0}', space=sflag, size = 0x8, scoped, tag = 'scoped memory for jparser_forward.5']
    #allocation7 [shape = 'u8[4096]{0}', space=vmem, size = 0x1000, scoped, tag = 'input window, operand 3']
    #allocation8 [shape = 's32[2]{0}', space=sflag, size = 0x8, scoped, tag = 'scoped memory for jparser_forward.5']
    #allocation9 [shape = 'u8[65536]{0}', space=vmem, size = 0x10000, scoped, tag = 'output window, operand 0']
    %10 = vsyncpa [#allocation6], 0
    %s11 = scalar_lea.sflag [#allocation6], 1
    %12 = vsyncpa %s11, 0
    %13 = vsyncpa [#allocation8], 0
    %s14 = scalar_lea.sflag [#allocation8], 1
    %15 = vsyncpa %s14, 0
    loop: start=0, step=1, limit=4
    $region2: #{jparser_forward.5} parent=1 // loop_pre_header
      _
    $region3: #{jparser_forward.5} parent=1 // loop_header
      %s17 = sphi 0, %s21
      %p18 = scmp.ge.s32.totalorder %s17, 4
      %s24 = sphi 0, %s36
      %s25 = sphi 0, %s32
      %s26 = sphi 0, %s24
      %s27 = sphi 0, %s25
      %s28 = sphi 0, %s26
      %s29 = sphi 0, %s27
      %s45 = sphi 0, %s47
      %s48 = sphi 0, %s45
      %s49 = sphi 0, %s48
      %s65 = sphi 0, %s49
      %s71 = sphi 0, %s73
      %s74 = sphi 0, %s71
      %s75 = sphi 0, %s74
      %s91 = sphi 0, %s75
      %s97 = sphi 0, %s99
      %s100 = sphi 0, %s97
      %s101 = sphi 0, %s100
      %s117 = sphi 0, %s101
      %s123 = sphi 0, %s125
      %s126 = sphi 0, %s123
      %s127 = sphi 0, %s126
      %s143 = sphi 0, %s127
      %s147 = sphi 0, %s147
      %s149 = sphi 0, %s147
      %s150 = sphi 0, %s149
      %s164 = sphi 0, %s150
      %s178 = sphi 0, %s180
      %s181 = sphi 0, %s178
      %s182 = sphi 0, %s181
      %s198 = sphi 0, %s182
    $region4: #{jparser_forward.5} parent=1 // loop_header_branch
      %20 = sbr.rel (%p18) target = $region8
    $region5: #{jparser_forward.5} parent=1 // loop_body
      %s22 = ssub.s32 %s17, 1
      %s23 = ssub.s32 %s17, 2
      %s30 = sadd.s32 1, %s25
      %p31 = scmp.ge.s32.totalorder %s30, 1
      %s32 = scalar_select %p31, 0, %s30
      %s33 = sadd.s32 1, %s24
      %s34 = scalar_select %p31, %s33, %s24
      %p35 = scmp.ge.s32.totalorder %s34, 2
      %s36 = scalar_select %p35, 0, %s34
      %s37 = smul.u32 %s24, 2
      %s38 = ssub.s32 1, %s37
      %s39 = smul.u32 %s38, %s25
      %s40 = smul.u32 %s36, 2
      %s41 = ssub.s32 1, %s40
      %s42 = smul.u32 %s41, %s32
      %s43 = ssub.s32 %s39, %s42
      %p44 = scmp.eq.s32.totalorder %s43, 0
      %s46 = sadd.s32 %s45, 1
      %s47 = scalar_select %p44, %s45, %s46
      %p50 = pneg %p44
      %p51 = scmp.eq.s32.totalorder %s17, 1
      %p52 = por %p50, %p51
      %p53 = scmp.ne.s32.totalorder %s45, %s48
      %p54 = scmp.eq.s32.totalorder %s17, 0
      %p55 = por %p53, %p54
      %p56 = scmp.ne.s32.totalorder %s45, %s48
      %p57 = scmp.eq.s32.totalorder %s22, 1
      %p58 = por %p56, %p57
      %p59 = scmp.ne.s32.totalorder %s48, %s49
      %p60 = scmp.eq.s32.totalorder %s22, 0
      %p61 = por %p59, %p60
      %p62 = scmp.ne.s32.totalorder %s48, %s49
      %p63 = scmp.eq.s32.totalorder %s23, 1
      %p64 = por %p62, %p63
      %p66 = scmp.ne.s32.totalorder %s49, %s65
      %p67 = scmp.eq.s32.totalorder %s23, 0
      %p68 = por %p66, %p67
      %s69 = ssub.s32 %s24, %s36
      %p70 = scmp.eq.s32.totalorder %s69, 0
      %s72 = sadd.s32 %s71, 1
      %s73 = scalar_select %p70, %s71, %s72
      %p76 = pneg %p70
      %p77 = scmp.eq.s32.totalorder %s17, 1
      %p78 = por %p76, %p77
      %p79 = scmp.ne.s32.totalorder %s71, %s74
      %p80 = scmp.eq.s32.totalorder %s17, 0
      %p81 = por %p79, %p80
      %p82 = scmp.ne.s32.totalorder %s71, %s74
      %p83 = scmp.eq.s32.totalorder %s22, 1
      %p84 = por %p82, %p83
      %p85 = scmp.ne.s32.totalorder %s74, %s75
      %p86 = scmp.eq.s32.totalorder %s22, 0
      %p87 = por %p85, %p86
      %p88 = scmp.ne.s32.totalorder %s74, %s75
      %p89 = scmp.eq.s32.totalorder %s23, 1
      %p90 = por %p88, %p89
      %p92 = scmp.ne.s32.totalorder %s75, %s91
      %p93 = scmp.eq.s32.totalorder %s23, 0
      %p94 = por %p92, %p93
      %s95 = ssub.s32 %s24, %s36
      %p96 = scmp.eq.s32.totalorder %s95, 0
      %s98 = sadd.s32 %s97, 1
      %s99 = scalar_select %p96, %s97, %s98
      %p102 = pneg %p96
      %p103 = scmp.eq.s32.totalorder %s17, 1
      %p104 = por %p102, %p103
      %p105 = scmp.ne.s32.totalorder %s97, %s100
      %p106 = scmp.eq.s32.totalorder %s17, 0
      %p107 = por %p105, %p106
      %p108 = scmp.ne.s32.totalorder %s97, %s100
      %p109 = scmp.eq.s32.totalorder %s22, 1
      %p110 = por %p108, %p109
      %p111 = scmp.ne.s32.totalorder %s100, %s101
      %p112 = scmp.eq.s32.totalorder %s22, 0
      %p113 = por %p111, %p112
      %p114 = scmp.ne.s32.totalorder %s100, %s101
      %p115 = scmp.eq.s32.totalorder %s23, 1
      %p116 = por %p114, %p115
      %p118 = scmp.ne.s32.totalorder %s101, %s117
      %p119 = scmp.eq.s32.totalorder %s23, 0
      %p120 = por %p118, %p119
      %s121 = ssub.s32 %s24, %s36
      %p122 = scmp.eq.s32.totalorder %s121, 0
      %s124 = sadd.s32 %s123, 1
      %s125 = scalar_select %p122, %s123, %s124
      %p128 = pneg %p122
      %p129 = scmp.eq.s32.totalorder %s17, 1
      %p130 = por %p128, %p129
      %p131 = scmp.ne.s32.totalorder %s123, %s126
      %p132 = scmp.eq.s32.totalorder %s17, 0
      %p133 = por %p131, %p132
      %p134 = scmp.ne.s32.totalorder %s123, %s126
      %p135 = scmp.eq.s32.totalorder %s22, 1
      %p136 = por %p134, %p135
      %p137 = scmp.ne.s32.totalorder %s126, %s127
      %p138 = scmp.eq.s32.totalorder %s22, 0
      %p139 = por %p137, %p138
      %p140 = scmp.ne.s32.totalorder %s126, %s127
      %p141 = scmp.eq.s32.totalorder %s23, 1
      %p142 = por %p140, %p141
      %p144 = scmp.ne.s32.totalorder %s127, %s143
      %p145 = scmp.eq.s32.totalorder %s23, 0
      %p146 = por %p144, %p145
      %s148 = sadd.s32 %s147, 1
      %p151 = scmp.eq.s32.totalorder %s17, 1
      %p152 = scmp.ne.s32.totalorder %s147, %s149
      %p153 = scmp.eq.s32.totalorder %s17, 0
      %p154 = por %p152, %p153
      %p155 = scmp.ne.s32.totalorder %s147, %s149
      %p156 = scmp.eq.s32.totalorder %s22, 1
      %p157 = por %p155, %p156
      %p158 = scmp.ne.s32.totalorder %s149, %s150
      %p159 = scmp.eq.s32.totalorder %s22, 0
      %p160 = por %p158, %p159
      %p161 = scmp.ne.s32.totalorder %s149, %s150
      %p162 = scmp.eq.s32.totalorder %s23, 1
      %p163 = por %p161, %p162
      %p165 = scmp.ne.s32.totalorder %s150, %s164
      %p166 = scmp.eq.s32.totalorder %s23, 0
      %p167 = por %p165, %p166
      %s168 = smul.u32 %s24, 2
      %s169 = ssub.s32 1, %s168
      %s170 = smul.u32 %s169, %s25
      %s171 = smul.u32 %s36, 2
      %s172 = ssub.s32 1, %s171
      %s173 = smul.u32 %s172, %s32
      %s174 = ssub.s32 %s170, %s173
      %s175 = ssub.s32 %s24, %s36
      %s176 = sor.u32 %s174, %s175
      %p177 = scmp.eq.s32.totalorder %s176, 0
      %s179 = sadd.s32 %s178, 1
      %s180 = scalar_select %p177, %s178, %s179
      %p183 = pneg %p177
      %p184 = scmp.eq.s32.totalorder %s17, 1
      %p185 = por %p183, %p184
      %p186 = scmp.ne.s32.totalorder %s178, %s181
      %p187 = scmp.eq.s32.totalorder %s17, 0
      %p188 = por %p186, %p187
      %p189 = scmp.ne.s32.totalorder %s178, %s181
      %p190 = scmp.eq.s32.totalorder %s22, 1
      %p191 = por %p189, %p190
      %p192 = scmp.ne.s32.totalorder %s181, %s182
      %p193 = scmp.eq.s32.totalorder %s22, 0
      %p194 = por %p192, %p193
      %p195 = scmp.ne.s32.totalorder %s181, %s182
      %p196 = scmp.eq.s32.totalorder %s23, 1
      %p197 = por %p195, %p196
      %p199 = scmp.ne.s32.totalorder %s182, %s198
      %p200 = scmp.eq.s32.totalorder %s23, 0
      %p201 = por %p199, %p200
      %p202 = scmp.le.s32.totalorder 1, %s17
      %p203 = scmp.lt.s32.totalorder %s17, 3
      %p204 = pnand %p202, %p203
      %p205 = pneg %p204
      // Predicated region
      $region9: #{jparser_forward.5} parent=5 // pred_check
        _
      $region10: #{jparser_forward.5} parent=5 // pred_check_branch
        %207 = sbr.rel (%p204) target = $region12
      $region11: #{jparser_forward.5} parent=5 // pred_region
        %s208 = ssub.s32 %s17, 1
        // Predicated region
        $region13: #{jparser_forward.5} parent=11 // pred_check
          %p209 = pneg %p160
        $region14: #{jparser_forward.5} parent=11 // pred_check_branch
          %211 = sbr.rel (%p209) target = $region16
        $region15: #{jparser_forward.5} parent=11 // pred_region
          _
        $region16: #{jparser_forward.5} parent=11 // pred_fallthru
          _
      $region12: #{jparser_forward.5} parent=5 // pred_fallthru
        _
      %p212 = scmp.lt.s32.totalorder %s17, 2
      // Predicated region
      $region17: #{jparser_forward.5} parent=5 // pred_check
        %p213 = pneg %p212
      $region18: #{jparser_forward.5} parent=5 // pred_check_branch
        %215 = sbr.rel (%p213) target = $region20
      $region19: #{jparser_forward.5} parent=5 // pred_region
        // Predicated region
        $region21: #{jparser_forward.5} parent=19 // pred_check
          %p216 = pneg %p55
        $region22: #{jparser_forward.5} parent=19 // pred_check_branch
          %218 = sbr.rel (%p216) target = $region24
        $region23: #{jparser_forward.5} parent=19 // pred_region
          %s219 = smul.u32 %s24, 2
          %s220 = ssub.s32 1, %s219
          %s221 = smul.u32 %s220, %s25
          %s222 = smul.u32 8, %s221
          %p223 = scmp.lt.s32.totalorder %s222, 7
          %s224 = scalar_select %p223, %s222, 7
          %s225 = smul.addr %s224, 8
          %s226 = scalar_lea.vmem %s0, %s225
          %s227 = smul.u32 %s24, 2
          %s228 = ssub.s32 1, %s227
          %s229 = smul.u32 %s228, %s25
          %s230 = smul.u32 8, %s229
        $region24: #{jparser_forward.5} parent=19 // pred_fallthru
          _
        // Predicated region
        $region25: #{jparser_forward.5} parent=19 // pred_check
          %p231 = pneg %p81
        $region26: #{jparser_forward.5} parent=19 // pred_check_branch
          %233 = sbr.rel (%p231) target = $region28
        $region27: #{jparser_forward.5} parent=19 // pred_region
          %p234 = scmp.lt.s32.totalorder %s24, 1
          %s235 = scalar_select %p234, %s24, 1
          %s236 = smul.addr %s235, 16
          %s237 = smul.addr %s236, 4
          %s238 = scalar_lea.vmem %s1, %s237
        $region28: #{jparser_forward.5} parent=19 // pred_fallthru
          _
        // Predicated region
        $region29: #{jparser_forward.5} parent=19 // pred_check
          %p239 = pneg %p107
        $region30: #{jparser_forward.5} parent=19 // pred_check_branch
          %241 = sbr.rel (%p239) target = $region32
        $region31: #{jparser_forward.5} parent=19 // pred_region
          %s242 = sand.u32 %s97, 1
          %s243 = scalar_lea.sflag [#allocation6], %s242
          %s244 = sand.u32 %s97, 1
          %s245 = smul.addr %s244, 256
          %s246 = scalar_lea.vmem [#allocation5], %s245
          %s248 = ssub.s32 4096, 4096
          %249 = vsyncadd %s243, %s248
          %s250 = smul.addr %s24, 64
          %s251 = smul.addr %s250, 64
          %s252 = scalar_lea.hbm %s2, %s251
          %s253 = sshll.u32 %s246, 4
          %s254 = int_to_ptr.vmem [resolvable:$true] %s253
          %259 = dma.hbm_to_vmem [thread:$0]  %s252, 4096, %s254, %s243, 256, 256, 16
        $region32: #{jparser_forward.5} parent=19 // pred_fallthru
          _
        // Predicated region
        $region33: #{jparser_forward.5} parent=19 // pred_check
          %p260 = pneg %p133
        $region34: #{jparser_forward.5} parent=19 // pred_check_branch
          %262 = sbr.rel (%p260) target = $region36
        $region35: #{jparser_forward.5} parent=19 // pred_region
          %s263 = sand.u32 %s123, 1
          %s264 = scalar_lea.sflag [#allocation8], %s263
          %s265 = sand.u32 %s123, 1
          %s266 = smul.addr %s265, 4
          %s267 = scalar_lea.vmem [#allocation7], %s266
          %s269 = ssub.s32 64, 64
          %270 = vsyncadd %s264, %s269
          %s271 = smul.addr %s24, 4
          %s272 = smul.addr %s271, 16
          %s273 = scalar_lea.hbm %s3, %s272
          %s275 = sshll.u32 %s267, 4
          %s276 = int_to_ptr.vmem [resolvable:$true] %s275
          %278 = dma.hbm_to_vmem [thread:$0]  %s273, 64, %s276, %s264
        $region36: #{jparser_forward.5} parent=19 // pred_fallthru
          _
      $region20: #{jparser_forward.5} parent=5 // pred_fallthru
        _
      %p279 = scmp.le.s32.totalorder 1, %s17
      %p280 = scmp.lt.s32.totalorder %s17, 3
      %p281 = pnand %p279, %p280
      %p282 = pneg %p281
      // Predicated region
      $region37: #{jparser_forward.5} parent=5 // pred_check
        _
      $region38: #{jparser_forward.5} parent=5 // pred_check_branch
        %284 = sbr.rel (%p281) target = $region40
      $region39: #{jparser_forward.5} parent=5 // pred_region
        %s285 = ssub.s32 %s17, 1
        %s286 = sand.u32 %s100, 1
        %s287 = scalar_lea.sflag [#allocation6], %s286
        %s288 = sand.u32 %s100, 1
        %s289 = smul.addr %s288, 256
        %s290 = scalar_lea.vmem [#allocation5], %s289
        // Predicated region
        $region41: #{jparser_forward.5} parent=39 // pred_check
          %p291 = pneg %p113
        $region42: #{jparser_forward.5} parent=39 // pred_check_branch
          %293 = sbr.rel (%p291) target = $region44
        $region43: #{jparser_forward.5} parent=39 // pred_region
          %294 = dma.done %s287, 4096
        $region44: #{jparser_forward.5} parent=39 // pred_fallthru
          _
        %s295 = sand.u32 %s126, 1
        %s296 = scalar_lea.sflag [#allocation8], %s295
        %s297 = sand.u32 %s126, 1
        %s298 = smul.addr %s297, 4
        %s299 = scalar_lea.vmem [#allocation7], %s298
        // Predicated region
        $region45: #{jparser_forward.5} parent=39 // pred_check
          %p300 = pneg %p139
        $region46: #{jparser_forward.5} parent=39 // pred_check_branch
          %302 = sbr.rel (%p300) target = $region48
        $region47: #{jparser_forward.5} parent=39 // pred_region
          %303 = dma.done %s296, 64
        $region48: #{jparser_forward.5} parent=39 // pred_fallthru
          _
        %s304 = smul.u32 %s26, 2
        %s305 = ssub.s32 1, %s304
        %s306 = smul.u32 %s305, %s27
        %s307 = smul.u32 8, %s306
        %p308 = scmp.lt.s32.totalorder %s307, 7
        %s309 = scalar_select %p308, %s307, 7
        %s310 = smul.addr %s309, 8
        %s311 = scalar_lea.vmem %s0, %s310
        %p312 = pneg %p61
        %p313 = pneg %p58
        %p314 = scmp.lt.s32.totalorder %s26, 1
        %s315 = scalar_select %p314, %s26, 1
        %s316 = smul.addr %s315, 16
        %s317 = smul.addr %s316, 4
        %s318 = scalar_lea.vmem %s1, %s317
        %p319 = pneg %p87
        %p320 = pneg %p84
        %s321 = sand.u32 %s100, 1
        %s322 = scalar_lea.sflag [#allocation6], %s321
        %s323 = sand.u32 %s100, 1
        %s324 = smul.addr %s323, 256
        %s325 = scalar_lea.vmem [#allocation5], %s324
        %p326 = pneg %p113
        %p327 = pneg %p110
        %s328 = sand.u32 %s126, 1
        %s329 = scalar_lea.sflag [#allocation8], %s328
        %s330 = sand.u32 %s126, 1
        %s331 = smul.addr %s330, 4
        %s332 = scalar_lea.vmem [#allocation7], %s331
        %p333 = pneg %p139
        %p334 = pneg %p136
        %p335 = pneg %p160
        %p336 = pneg %p157
        %p337 = pneg %p194
        %p338 = pneg %p191
        %s339 = sand.u32 %s181, 1
        %s340 = sand.u32 %s181, 1
        %s341 = smul.addr %s340, 64
        %s342 = scalar_lea.vmem [#allocation9], %s341
        %s343 = smul.u32 %s26, 2
        %s344 = ssub.s32 1, %s343
        %s345 = smul.u32 %s344, %s27
        %s346 = smul.u32 8, %s345
        %p347 = scmp.lt.s32.totalorder %s346, 7
        %s348 = scalar_select %p347, %s346, 7
        %s349 = smul.addr %s348, 8
        %s350 = scalar_lea.vmem %s0, %s349
        %s351 = smul.u32 %s26, 2
        %s352 = ssub.s32 1, %s351
        %s353 = smul.u32 %s352, %s27
        %s354 = smul.u32 8, %s353
        %p355 = scmp.lt.s32.totalorder %s26, 1
        %s356 = scalar_select %p355, %s26, 1
        %s357 = smul.addr %s356, 16
        %s358 = smul.addr %s357, 4
        %s359 = scalar_lea.vmem %s1, %s358
        %s360 = smul.u32 %s26, 2
        %s361 = ssub.s32 1, %s360
        %s362 = smul.u32 %s361, %s27
        %s363 = smul.u32 8, %s362
        %p365 = scmp.eq.s32.totalorder %s27, 0
        // Predicated region
        $region49: #{jparser_forward.5} parent=39 // pred_check
          %p366 = pneg %p365
        $region50: #{jparser_forward.5} parent=39 // pred_check_branch
          %368 = sbr.rel (%p366) target = $region52
        $region51: #{jparser_forward.5} parent=39 // pred_region
          %369 = vst [vmem:[#allocation2] sm:$0xff] 0.0
          %370 = vst [vmem:[#allocation3] sm:$0xff] 0.0
        $region52: #{jparser_forward.5} parent=39 // pred_fallthru
          _
        %v371 = vld [vmem:[%s290] sm:$0xff]
        %v372 = vld [vmem:[%s290 + $0x8] sm:$0xff]
        %v373 = vld [vmem:[%s290 + $0x10] sm:$0xff]
        %v374 = vld [vmem:[%s290 + $0x18] sm:$0xff]
        %v375 = vld [vmem:[%s290 + $0x20] sm:$0xff]
        %v376 = vld [vmem:[%s290 + $0x28] sm:$0xff]
        %v377 = vld [vmem:[%s290 + $0x30] sm:$0xff]
        %v378 = vld [vmem:[%s290 + $0x38] sm:$0xff]
        %v379 = vld [vmem:[%s290 + $0x40] sm:$0xff]
        %v380 = vld [vmem:[%s290 + $0x48] sm:$0xff]
        %v381 = vld [vmem:[%s290 + $0x50] sm:$0xff]
        %v382 = vld [vmem:[%s290 + $0x58] sm:$0xff]
        %v383 = vld [vmem:[%s290 + $0x60] sm:$0xff]
        %v384 = vld [vmem:[%s290 + $0x68] sm:$0xff]
        %v385 = vld [vmem:[%s290 + $0x70] sm:$0xff]
        %v386 = vld [vmem:[%s290 + $0x78] sm:$0xff]
        %v387 = vld [vmem:[%s290 + $0x80] sm:$0xff]
        %v388 = vld [vmem:[%s290 + $0x88] sm:$0xff]
        %v389 = vld [vmem:[%s290 + $0x90] sm:$0xff]
        %v390 = vld [vmem:[%s290 + $0x98] sm:$0xff]
        %v391 = vld [vmem:[%s290 + $0xa0] sm:$0xff]
        %v392 = vld [vmem:[%s290 + $0xa8] sm:$0xff]
        %v393 = vld [vmem:[%s290 + $0xb0] sm:$0xff]
        %v394 = vld [vmem:[%s290 + $0xb8] sm:$0xff]
        %v395 = vld [vmem:[%s290 + $0xc0] sm:$0xff]
        %v396 = vld [vmem:[%s290 + $0xc8] sm:$0xff]
        %v397 = vld [vmem:[%s290 + $0xd0] sm:$0xff]
        %v398 = vld [vmem:[%s290 + $0xd8] sm:$0xff]
        %v399 = vld [vmem:[%s290 + $0xe0] sm:$0xff]
        %v400 = vld [vmem:[%s290 + $0xe8] sm:$0xff]
        %v401 = vld [vmem:[%s290 + $0xf0] sm:$0xff]
        %v402 = vld [vmem:[%s290 + $0xf8] sm:$0xff]
        %v403 = vld [vmem:[%s4] sm:$0xff]
        %v404 = vld [vmem:[%s350] sm:$0xff]
        %v405 = vld [vmem:[%s350 + $0x8] sm:$0xff]
        %v406 = vld [vmem:[%s350 + $0x10] sm:$0xff]
        %v407 = vld [vmem:[%s350 + $0x18] sm:$0xff]
        %v408 = vld [vmem:[%s350 + $0x20] sm:$0xff]
        %v409 = vld [vmem:[%s350 + $0x28] sm:$0xff]
        %v410 = vld [vmem:[%s350 + $0x30] sm:$0xff]
        %v411 = vld [vmem:[%s350 + $0x38] sm:$0xff]
        %v412 = vpack.c.bf16 %v405, %v404
        %v413 = vpack.c.bf16 %v407, %v406
        %v414 = vpack.c.bf16 %v409, %v408
        %v415 = vpack.c.bf16 %v411, %v410
        %v416 = vld [vmem:[%s359] sm:$0xff]
        %v417 = vld [vmem:[%s359 + $0x8] sm:$0xff]
        %v418 = vld [vmem:[%s359 + $0x10] sm:$0xff]
        %v419 = vld [vmem:[%s359 + $0x18] sm:$0xff]
        %v420 = vld [vmem:[%s359 + $0x20] sm:$0xff]
        %v421 = vld [vmem:[%s359 + $0x28] sm:$0xff]
        %v422 = vld [vmem:[%s359 + $0x30] sm:$0xff]
        %v423 = vld [vmem:[%s359 + $0x38] sm:$0xff]
        %v424 = vld [vmem:[%s299] sm:$0xf]
        %v426 = vlaneseq
        %v427 = vshrl.u32 %v426, 7
        %v428 = vsub.s32 0, %v427
        %v429 = vrot.slane %v424, %v428
        %v430 = vlaneseq
        %v431 = vshrl.u32 %v430, 7
        %v432 = vsub.s32 1, %v431
        %v433 = vrot.slane %v424, %v432
        %v434 = vlaneseq
        %v435 = vshrl.u32 %v434, 7
        %v436 = vsub.s32 2, %v435
        %v437 = vrot.slane %v424, %v436
        %v438 = vlaneseq
        %v439 = vshrl.u32 %v438, 7
        %v440 = vsub.s32 3, %v439
        %v441 = vrot.slane %v424, %v440
        %v454 = vunpack.c.l.b16 %v416
        %v455 = vunpack.c.h.b16 %v416
        %v456 = vunpack.c.l.b16 %v417
        %v457 = vunpack.c.h.b16 %v417
        %v458 = vunpack.c.l.b16 %v418
        %v459 = vunpack.c.h.b16 %v418
        %v460 = vunpack.c.l.b16 %v419
        %v461 = vunpack.c.h.b16 %v419
        %v462 = vunpack.c.l.b16 %v420
        %v463 = vunpack.c.h.b16 %v420
        %v464 = vunpack.c.l.b16 %v421
        %v465 = vunpack.c.h.b16 %v421
        %v466 = vunpack.c.l.b16 %v422
        %v467 = vunpack.c.h.b16 %v422
        %v468 = vunpack.c.l.b16 %v423
        %v469 = vunpack.c.h.b16 %v423
        %v470 = vpack.c.b16 %v458, %v454
        %v471 = vpack.c.b16 %v459, %v455
        %v472 = vpack.c.b16 %v460, %v456
        %v473 = vpack.c.b16 %v461, %v457
        %v474 = vpack.c.b16 %v466, %v462
        %v475 = vpack.c.b16 %v467, %v463
        %v476 = vpack.c.b16 %v468, %v464
        %v477 = vpack.c.b16 %v469, %v465
        %vm486 = vcmask 261120
        %v488 = vsel %vm486, %v412, 0
        %v491 = vsel %vm486, %v413, 0
        %v494 = vsel %vm486, %v414, 0
        %v497 = vsel %vm486, %v415, 0
        %499 = vmatprep.subr.bf16.mxu0 0
        %500 = vmatpush1.bf16.msra.mxu0 0
        %501 = vmatprep.subr.bf16.mxu0 0
        %502 = vmatpush1.bf16.msra.mxu0 0
        %503 = vmatprep.subr.bf16.mxu0 0
        %504 = vmatpush1.bf16.msra.mxu0 0
        %505 = vmatprep.subr.bf16.mxu0 0
        %506 = vmatpush1.bf16.msra.mxu0 0
        %507 = vmatprep.subr.bf16.mxu0 0
        %508 = vmatpush1.bf16.msra.mxu0 0
        %509 = vmatprep.subr.bf16.mxu0 0
        %510 = vmatpush1.bf16.msra.mxu0 0
        %511 = vmatprep.subr.bf16.mxu0 %v475
        %512 = vmatpush1.bf16.msra.mxu0 %v474
        %513 = vmatprep.subr.bf16.mxu0 %v471
        %514 = vmatpush1.bf16.msra.mxu0 %v470
        %515 = vmatprep.subr.bf16.mxu0 0
        %516 = vmatpush2.bf16.msra.mxu0 0
        %517 = vmatprep.subr.bf16.mxu0 0
        %518 = vmatpush2.bf16.msra.mxu0 0
        %519 = vmatprep.subr.bf16.mxu0 0
        %520 = vmatpush2.bf16.msra.mxu0 0
        %521 = vmatprep.subr.bf16.mxu0 0
        %522 = vmatpush2.bf16.msra.mxu0 0
        %523 = vmatprep.subr.bf16.mxu0 0
        %524 = vmatpush2.bf16.msra.mxu0 0
        %525 = vmatprep.subr.bf16.mxu0 0
        %526 = vmatpush2.bf16.msra.mxu0 0
        %527 = vmatprep.subr.bf16.mxu0 0
        %528 = vmatpush2.bf16.msra.mxu0 0
        %529 = vmatprep.subr.bf16.mxu0 0
        %530 = vmatpush2.bf16.msra.mxu0 0
        %531 = vmatprep.mubr.bf16.mxu0 0
        %532 = vmatmul.mubr.bf16.gmra.mxu0 %v488
        %v533 = vpop.f32.mrf.mxu0
        %v534 = vadd.f32 %v429, %v533
        %v535 = vpop.f32.mrf.mxu0
        %v536 = vadd.f32 %v433, %v535
        %v537 = vpop.f32.mrf.mxu0
        %v538 = vadd.f32 %v429, %v537
        %v539 = vpop.f32.mrf.mxu0
        %v540 = vadd.f32 %v433, %v539
        %541 = vmatprep.mubr.bf16.mxu0 0
        %542 = vmatmul.mubr.bf16.gmra.mxu0 %v491
        %v543 = vpop.f32.mrf.mxu0
        %v544 = vadd.f32 %v429, %v543
        %v545 = vpop.f32.mrf.mxu0
        %v546 = vadd.f32 %v433, %v545
        %v547 = vpop.f32.mrf.mxu0
        %v548 = vadd.f32 %v429, %v547
        %v549 = vpop.f32.mrf.mxu0
        %v550 = vadd.f32 %v433, %v549
        %551 = vmatprep.mubr.bf16.mxu0 0
        %552 = vmatmul.mubr.bf16.gmra.mxu0 %v494
        %v553 = vpop.f32.mrf.mxu0
        %v554 = vadd.f32 %v429, %v553
        %v555 = vpop.f32.mrf.mxu0
        %v556 = vadd.f32 %v433, %v555
        %v557 = vpop.f32.mrf.mxu0
        %v558 = vadd.f32 %v429, %v557
        %v559 = vpop.f32.mrf.mxu0
        %v560 = vadd.f32 %v433, %v559
        %561 = vmatprep.mubr.bf16.mxu0 0
        %562 = vmatmul.mubr.bf16.gmra.mxu0 %v497
        %v563 = vpop.f32.mrf.mxu0
        %v564 = vadd.f32 %v429, %v563
        %v565 = vpop.f32.mrf.mxu0
        %v566 = vadd.f32 %v433, %v565
        %v567 = vpop.f32.mrf.mxu0
        %v568 = vadd.f32 %v429, %v567
        %v569 = vpop.f32.mrf.mxu0
        %v570 = vadd.f32 %v433, %v569
        %571 = vdwg.mxu0
        %572 = vmatprep.subr.bf16.mxu0 0
        %573 = vmatpush1.bf16.msra.mxu0 0
        %574 = vmatprep.subr.bf16.mxu0 0
        %575 = vmatpush1.bf16.msra.mxu0 0
        %576 = vmatprep.subr.bf16.mxu0 0
        %577 = vmatpush1.bf16.msra.mxu0 0
        %578 = vmatprep.subr.bf16.mxu0 0
        %579 = vmatpush1.bf16.msra.mxu0 0
        %580 = vmatprep.subr.bf16.mxu0 0
        %581 = vmatpush1.bf16.msra.mxu0 0
        %582 = vmatprep.subr.bf16.mxu0 0
        %583 = vmatpush1.bf16.msra.mxu0 0
        %584 = vmatprep.subr.bf16.mxu0 %v477
        %585 = vmatpush1.bf16.msra.mxu0 %v476
        %586 = vmatprep.subr.bf16.mxu0 %v473
        %587 = vmatpush1.bf16.msra.mxu0 %v472
        %588 = vmatprep.subr.bf16.mxu0 0
        %589 = vmatpush2.bf16.msra.mxu0 0
        %590 = vmatprep.subr.bf16.mxu0 0
        %591 = vmatpush2.bf16.msra.mxu0 0
        %592 = vmatprep.subr.bf16.mxu0 0
        %593 = vmatpush2.bf16.msra.mxu0 0
        %594 = vmatprep.subr.bf16.mxu0 0
        %595 = vmatpush2.bf16.msra.mxu0 0
        %596 = vmatprep.subr.bf16.mxu0 0
        %597 = vmatpush2.bf16.msra.mxu0 0
        %598 = vmatprep.subr.bf16.mxu0 0
        %599 = vmatpush2.bf16.msra.mxu0 0
        %600 = vmatprep.subr.bf16.mxu0 0
        %601 = vmatpush2.bf16.msra.mxu0 0
        %602 = vmatprep.subr.bf16.mxu0 0
        %603 = vmatpush2.bf16.msra.mxu0 0
        %604 = vmatprep.mubr.bf16.mxu0 0
        %605 = vmatmul.mubr.bf16.gmra.mxu0 %v488
        %v606 = vpop.f32.mrf.mxu0
        %v607 = vadd.f32 %v437, %v606
        %v608 = vpop.f32.mrf.mxu0
        %v609 = vadd.f32 %v441, %v608
        %v610 = vpop.f32.mrf.mxu0
        %v611 = vadd.f32 %v437, %v610
        %v612 = vpop.f32.mrf.mxu0
        %v613 = vadd.f32 %v441, %v612
        %614 = vmatprep.mubr.bf16.mxu0 0
        %615 = vmatmul.mubr.bf16.gmra.mxu0 %v491
        %v616 = vpop.f32.mrf.mxu0
        %v617 = vadd.f32 %v437, %v616
        %v618 = vpop.f32.mrf.mxu0
        %v619 = vadd.f32 %v441, %v618
        %v620 = vpop.f32.mrf.mxu0
        %v621 = vadd.f32 %v437, %v620
        %v622 = vpop.f32.mrf.mxu0
        %v623 = vadd.f32 %v441, %v622
        %624 = vmatprep.mubr.bf16.mxu0 0
        %625 = vmatmul.mubr.bf16.gmra.mxu0 %v494
        %v626 = vpop.f32.mrf.mxu0
        %v627 = vadd.f32 %v437, %v626
        %v628 = vpop.f32.mrf.mxu0
        %v629 = vadd.f32 %v441, %v628
        %v630 = vpop.f32.mrf.mxu0
        %v631 = vadd.f32 %v437, %v630
        %v632 = vpop.f32.mrf.mxu0
        %v633 = vadd.f32 %v441, %v632
        %634 = vmatprep.mubr.bf16.mxu0 0
        %635 = vmatmul.mubr.bf16.gmra.mxu0 %v497
        %v636 = vpop.f32.mrf.mxu0
        %v637 = vadd.f32 %v437, %v636
        %v638 = vpop.f32.mrf.mxu0
        %v639 = vadd.f32 %v441, %v638
        %v640 = vpop.f32.mrf.mxu0
        %v641 = vadd.f32 %v437, %v640
        %v642 = vpop.f32.mrf.mxu0
        %v643 = vadd.f32 %v441, %v642
        %644 = vdwg.mxu0
        %645 = vst [vmem:[#allocation4] sm:$0xff] %v534
        %646 = vst [vmem:[#allocation4 + $0x8] sm:$0xff] %v536
        %647 = vst [vmem:[#allocation4 + $0x10] sm:$0xff] %v607
        %648 = vst [vmem:[#allocation4 + $0x18] sm:$0xff] %v609
        %649 = vst [vmem:[#allocation4 + $0x20] sm:$0xff] %v538
        %650 = vst [vmem:[#allocation4 + $0x28] sm:$0xff] %v540
        %651 = vst [vmem:[#allocation4 + $0x30] sm:$0xff] %v611
        %652 = vst [vmem:[#allocation4 + $0x38] sm:$0xff] %v613
        %653 = vst [vmem:[#allocation4 + $0x40] sm:$0xff] %v544
        %654 = vst [vmem:[#allocation4 + $0x48] sm:$0xff] %v546
        %655 = vst [vmem:[#allocation4 + $0x50] sm:$0xff] %v617
        %656 = vst [vmem:[#allocation4 + $0x58] sm:$0xff] %v619
        %657 = vst [vmem:[#allocation4 + $0x60] sm:$0xff] %v548
        %658 = vst [vmem:[#allocation4 + $0x68] sm:$0xff] %v550
        %659 = vst [vmem:[#allocation4 + $0x70] sm:$0xff] %v621
        %660 = vst [vmem:[#allocation4 + $0x78] sm:$0xff] %v623
        %661 = vst [vmem:[#allocation4 + $0x80] sm:$0xff] %v554
        %662 = vst [vmem:[#allocation4 + $0x88] sm:$0xff] %v556
        %663 = vst [vmem:[#allocation4 + $0x90] sm:$0xff] %v627
        %664 = vst [vmem:[#allocation4 + $0x98] sm:$0xff] %v629
        %665 = vst [vmem:[#allocation4 + $0xa0] sm:$0xff] %v558
        %666 = vst [vmem:[#allocation4 + $0xa8] sm:$0xff] %v560
        %667 = vst [vmem:[#allocation4 + $0xb0] sm:$0xff] %v631
        %668 = vst [vmem:[#allocation4 + $0xb8] sm:$0xff] %v633
        %669 = vst [vmem:[#allocation4 + $0xc0] sm:$0xff] %v564
        %670 = vst [vmem:[#allocation4 + $0xc8] sm:$0xff] %v566
        %671 = vst [vmem:[#allocation4 + $0xd0] sm:$0xff] %v637
        %672 = vst [vmem:[#allocation4 + $0xd8] sm:$0xff] %v639
        %673 = vst [vmem:[#allocation4 + $0xe0] sm:$0xff] %v568
        %674 = vst [vmem:[#allocation4 + $0xe8] sm:$0xff] %v570
        %675 = vst [vmem:[#allocation4 + $0xf0] sm:$0xff] %v641
        %676 = vst [vmem:[#allocation4 + $0xf8] sm:$0xff] %v643
        %s677 = smul.u32 %s26, 2
        %s678 = ssub.s32 1, %s677
        %s679 = smul.u32 %s678, %s27
        %s680 = smul.u32 %s679, 8
        %v681 = vld [vmem:[#allocation2] sm:$0xff]
        %v682 = vld [vmem:[#allocation3] sm:$0xff]
        %p683 = scmp.eq.s32.totalorder %s26, 1
        %s684 = scalar_select %p683, 7, 0
        %s685 = smul.u32 %s684, 8
        %s686 = sshra.s32 %s685, 3
        %s687 = sand.u32 %s685, 7
        %s688 = smul.u32 %s686, 4
        %s689 = smul.addr %s688, 8
        %s690 = scalar_lea.vmem [#allocation4], %s689
        %v691 = vld [vmem:[%s690] sm:$0xff]
        %v692 = vld [vmem:[%s690 + $0x8] sm:$0xff]
        %v693 = vld [vmem:[%s690 + $0x10] sm:$0xff]
        %v694 = vld [vmem:[%s690 + $0x18] sm:$0xff]
        %v695 = vpack.c.bf16 %v681, %v681
        %v728 = vunpack.c.l.b16 %v371
        %v729 = vunpack.c.h.b16 %v371
        %v730 = vunpack.c.l.b16 %v372
        %v731 = vunpack.c.h.b16 %v372
        %v732 = vunpack.c.l.b16 %v373
        %v733 = vunpack.c.h.b16 %v373
        %v734 = vunpack.c.l.b16 %v374
        %v735 = vunpack.c.h.b16 %v374
        %v736 = vunpack.c.l.b16 %v375
        %v737 = vunpack.c.h.b16 %v375
        %v738 = vunpack.c.l.b16 %v376
        %v739 = vunpack.c.h.b16 %v376
        %v740 = vunpack.c.l.b16 %v377
        %v741 = vunpack.c.h.b16 %v377
        %v742 = vunpack.c.l.b16 %v378
        %v743 = vunpack.c.h.b16 %v378
        %v744 = vunpack.c.l.b16 %v379
        %v745 = vunpack.c.h.b16 %v379
        %v746 = vunpack.c.l.b16 %v380
        %v747 = vunpack.c.h.b16 %v380
        %v748 = vunpack.c.l.b16 %v381
        %v749 = vunpack.c.h.b16 %v381
        %v750 = vunpack.c.l.b16 %v382
        %v751 = vunpack.c.h.b16 %v382
        %v752 = vunpack.c.l.b16 %v383
        %v753 = vunpack.c.h.b16 %v383
        %v754 = vunpack.c.l.b16 %v384
        %v755 = vunpack.c.h.b16 %v384
        %v756 = vunpack.c.l.b16 %v385
        %v757 = vunpack.c.h.b16 %v385
        %v758 = vunpack.c.l.b16 %v386
        %v759 = vunpack.c.h.b16 %v386
        %v760 = vunpack.c.l.b16 %v387
        %v761 = vunpack.c.h.b16 %v387
        %v762 = vunpack.c.l.b16 %v388
        %v763 = vunpack.c.h.b16 %v388
        %v764 = vunpack.c.l.b16 %v389
        %v765 = vunpack.c.h.b16 %v389
        %v766 = vunpack.c.l.b16 %v390
        %v767 = vunpack.c.h.b16 %v390
        %v768 = vunpack.c.l.b16 %v391
        %v769 = vunpack.c.h.b16 %v391
        %v770 = vunpack.c.l.b16 %v392
        %v771 = vunpack.c.h.b16 %v392
        %v772 = vunpack.c.l.b16 %v393
        %v773 = vunpack.c.h.b16 %v393
        %v774 = vunpack.c.l.b16 %v394
        %v775 = vunpack.c.h.b16 %v394
        %v776 = vunpack.c.l.b16 %v395
        %v777 = vunpack.c.h.b16 %v395
        %v778 = vunpack.c.l.b16 %v396
        %v779 = vunpack.c.h.b16 %v396
        %v780 = vunpack.c.l.b16 %v397
        %v781 = vunpack.c.h.b16 %v397
        %v782 = vunpack.c.l.b16 %v398
        %v783 = vunpack.c.h.b16 %v398
        %v784 = vunpack.c.l.b16 %v399
        %v785 = vunpack.c.h.b16 %v399
        %v786 = vunpack.c.l.b16 %v400
        %v787 = vunpack.c.h.b16 %v400
        %v788 = vunpack.c.l.b16 %v401
        %v789 = vunpack.c.h.b16 %v401
        %v790 = vunpack.c.l.b16 %v402
        %v791 = vunpack.c.h.b16 %v402
        %v792 = vpack.c.b16 %v732, %v728
        %v793 = vpack.c.b16 %v733, %v729
        %v794 = vpack.c.b16 %v734, %v730
        %v795 = vpack.c.b16 %v735, %v731
        %v796 = vpack.c.b16 %v740, %v736
        %v797 = vpack.c.b16 %v741, %v737
        %v798 = vpack.c.b16 %v742, %v738
        %v799 = vpack.c.b16 %v743, %v739
        %v800 = vpack.c.b16 %v748, %v744
        %v801 = vpack.c.b16 %v749, %v745
        %v802 = vpack.c.b16 %v750, %v746
        %v803 = vpack.c.b16 %v751, %v747
        %v804 = vpack.c.b16 %v756, %v752
        %v805 = vpack.c.b16 %v757, %v753
        %v806 = vpack.c.b16 %v758, %v754
        %v807 = vpack.c.b16 %v759, %v755
        %v808 = vpack.c.b16 %v764, %v760
        %v809 = vpack.c.b16 %v765, %v761
        %v810 = vpack.c.b16 %v766, %v762
        %v811 = vpack.c.b16 %v767, %v763
        %v812 = vpack.c.b16 %v772, %v768
        %v813 = vpack.c.b16 %v773, %v769
        %v814 = vpack.c.b16 %v774, %v770
        %v815 = vpack.c.b16 %v775, %v771
        %v816 = vpack.c.b16 %v780, %v776
        %v817 = vpack.c.b16 %v781, %v777
        %v818 = vpack.c.b16 %v782, %v778
        %v819 = vpack.c.b16 %v783, %v779
        %v820 = vpack.c.b16 %v788, %v784
        %v821 = vpack.c.b16 %v789, %v785
        %v822 = vpack.c.b16 %v790, %v786
        %v823 = vpack.c.b16 %v791, %v787
        %856 = vmatprep.subr.bf16.mxu0 %v821
        %857 = vmatpush1.bf16.msra.mxu0 %v820
        %858 = vmatprep.subr.bf16.mxu0 %v817
        %859 = vmatpush1.bf16.msra.mxu0 %v816
        %860 = vmatprep.subr.bf16.mxu0 %v813
        %861 = vmatpush1.bf16.msra.mxu0 %v812
        %862 = vmatprep.subr.bf16.mxu0 %v809
        %863 = vmatpush1.bf16.msra.mxu0 %v808
        %864 = vmatprep.subr.bf16.mxu0 %v805
        %865 = vmatpush1.bf16.msra.mxu0 %v804
        %866 = vmatprep.subr.bf16.mxu0 %v801
        %867 = vmatpush1.bf16.msra.mxu0 %v800
        %868 = vmatprep.subr.bf16.mxu0 %v797
        %869 = vmatpush1.bf16.msra.mxu0 %v796
        %870 = vmatprep.subr.bf16.mxu0 %v793
        %871 = vmatpush1.bf16.msra.mxu0 %v792
        %872 = vmatprep.subr.bf16.mxu0 0
        %873 = vmatpush2.bf16.msra.mxu0 0
        %874 = vmatprep.subr.bf16.mxu0 0
        %875 = vmatpush2.bf16.msra.mxu0 0
        %876 = vmatprep.subr.bf16.mxu0 0
        %877 = vmatpush2.bf16.msra.mxu0 0
        %878 = vmatprep.subr.bf16.mxu0 0
        %879 = vmatpush2.bf16.msra.mxu0 0
        %880 = vmatprep.subr.bf16.mxu0 0
        %881 = vmatpush2.bf16.msra.mxu0 0
        %882 = vmatprep.subr.bf16.mxu0 0
        %883 = vmatpush2.bf16.msra.mxu0 0
        %884 = vmatprep.subr.bf16.mxu0 0
        %885 = vmatpush2.bf16.msra.mxu0 0
        %886 = vmatprep.subr.bf16.mxu0 0
        %887 = vmatpush2.bf16.msra.mxu0 0
        %888 = vmatprep.mubr.bf16.mxu0 0
        %889 = vmatmul.mubr.bf16.gmra.mxu0 %v695
        %v890 = vpop.f32.mrf.mxu0
        %v891 = vadd.f32 0.0, %v890
        %v892 = vpop.f32.mrf.mxu0
        %v893 = vadd.f32 0.0, %v892
        %v894 = vpop.f32.mrf.mxu0
        %v895 = vpop.f32.mrf.mxu0
        %896 = vdwg.mxu0
        %897 = vmatprep.subr.bf16.mxu0 %v823
        %898 = vmatpush1.bf16.msra.mxu0 %v822
        %899 = vmatprep.subr.bf16.mxu0 %v819
        %900 = vmatpush1.bf16.msra.mxu0 %v818
        %901 = vmatprep.subr.bf16.mxu0 %v815
        %902 = vmatpush1.bf16.msra.mxu0 %v814
        %903 = vmatprep.subr.bf16.mxu0 %v811
        %904 = vmatpush1.bf16.msra.mxu0 %v810
        %905 = vmatprep.subr.bf16.mxu0 %v807
        %906 = vmatpush1.bf16.msra.mxu0 %v806
        %907 = vmatprep.subr.bf16.mxu0 %v803
        %908 = vmatpush1.bf16.msra.mxu0 %v802
        %909 = vmatprep.subr.bf16.mxu0 %v799
        %910 = vmatpush1.bf16.msra.mxu0 %v798
        %911 = vmatprep.subr.bf16.mxu0 %v795
        %912 = vmatpush1.bf16.msra.mxu0 %v794
        %913 = vmatprep.subr.bf16.mxu0 0
        %914 = vmatpush2.bf16.msra.mxu0 0
        %915 = vmatprep.subr.bf16.mxu0 0
        %916 = vmatpush2.bf16.msra.mxu0 0
        %917 = vmatprep.subr.bf16.mxu0 0
        %918 = vmatpush2.bf16.msra.mxu0 0
        %919 = vmatprep.subr.bf16.mxu0 0
        %920 = vmatpush2.bf16.msra.mxu0 0
        %921 = vmatprep.subr.bf16.mxu0 0
        %922 = vmatpush2.bf16.msra.mxu0 0
        %923 = vmatprep.subr.bf16.mxu0 0
        %924 = vmatpush2.bf16.msra.mxu0 0
        %925 = vmatprep.subr.bf16.mxu0 0
        %926 = vmatpush2.bf16.msra.mxu0 0
        %927 = vmatprep.subr.bf16.mxu0 0
        %928 = vmatpush2.bf16.msra.mxu0 0
        %929 = vmatprep.mubr.bf16.mxu0 0
        %930 = vmatmul.mubr.bf16.gmra.mxu0 %v695
        %v931 = vpop.f32.mrf.mxu0
        %v932 = vadd.f32 0.0, %v931
        %v933 = vpop.f32.mrf.mxu0
        %v934 = vadd.f32 0.0, %v933
        %v935 = vpop.f32.mrf.mxu0
        %v936 = vpop.f32.mrf.mxu0
        %937 = vdwg.mxu0
        %v938 = vadd.f32 %v691, %v891
        %v939 = vadd.f32 %v692, %v893
        %v940 = vadd.f32 %v693, %v932
        %v941 = vadd.f32 %v694, %v934
        %v942 = vxor.u32 %v938, 2147483648
        %v943 = vmul.f32 %v942, 1.442695
        %v944 = vpow.pop %v943
        %v945 = vadd.f32 %v944, 1.0
        %v946 = vrcp.pop %v945
        %v947 = vmul.f32 1.0, %v946
        %v948 = vxor.u32 %v939, 2147483648
        %v949 = vmul.f32 %v948, 1.442695
        %v950 = vpow.pop %v949
        %v951 = vadd.f32 %v950, 1.0
        %v952 = vrcp.pop %v951
        %v953 = vmul.f32 1.0, %v952
        %v954 = vtanh.pop %v940
        %v955 = vxor.u32 %v941, 2147483648
        %v956 = vmul.f32 %v955, 1.442695
        %v957 = vpow.pop %v956
        %v958 = vadd.f32 %v957, 1.0
        %v959 = vrcp.pop %v958
        %v960 = vmul.f32 1.0, %v959
        %v961 = vmul.f32 %v953, %v682
        %v962 = vmul.f32 %v947, %v954
        %v963 = vadd.f32 %v961, %v962
        %v964 = vtanh.pop %v963
        %v965 = vmul.f32 %v960, %v964
        %s966 = sadd.s32 %s680, %s684
        %v967 = vstv %s966
        %vm968 = vcmp.gt.s32.totalorder %v403, %v967
        %v969 = vsel %vm968, 1, 0
        %970 = vset.pattern.permute.xlu0 0
        %971 = vperm.xlu0 %970, %v969
        %v972 = vpop.permute.xlu0 %971
        %vm973 = vcmp.eq.s32.totalorder %v972, 1
        %v974 = vsel %vm973, %v965, 0.0
        %s975 = scalar_lea.vmem %s342, %s685 [#allocation9]
        %976 = vst [vmem:[%s975] sm:$0xff] %v974
        %v977 = vsel %vm973, %v965, %v681
        %v978 = vsel %vm973, %v963, %v682
        %s979 = scalar_select %p683, 6, 1
        %s980 = smul.u32 %s979, 8
        %s981 = sshra.s32 %s980, 3
        %s982 = sand.u32 %s980, 7
        %s983 = smul.u32 %s981, 4
        %s984 = smul.addr %s983, 8
        %s985 = scalar_lea.vmem [#allocation4], %s984
        %v986 = vld [vmem:[%s985] sm:$0xff]
        %v987 = vld [vmem:[%s985 + $0x8] sm:$0xff]
        %v988 = vld [vmem:[%s985 + $0x10] sm:$0xff]
        %v989 = vld [vmem:[%s985 + $0x18] sm:$0xff]
        %v990 = vpack.c.bf16 %v977, %v977
        %991 = vmatprep.subr.bf16.mxu0 %v821
        %992 = vmatpush1.bf16.msra.mxu0 %v820
        %993 = vmatprep.subr.bf16.mxu0 %v817
        %994 = vmatpush1.bf16.msra.mxu0 %v816
        %995 = vmatprep.subr.bf16.mxu0 %v813
        %996 = vmatpush1.bf16.msra.mxu0 %v812
        %997 = vmatprep.subr.bf16.mxu0 %v809
        %998 = vmatpush1.bf16.msra.mxu0 %v808
        %999 = vmatprep.subr.bf16.mxu0 %v805
        %1000 = vmatpush1.bf16.msra.mxu0 %v804
        %1001 = vmatprep.subr.bf16.mxu0 %v801
        %1002 = vmatpush1.bf16.msra.mxu0 %v800
        %1003 = vmatprep.subr.bf16.mxu0 %v797
        %1004 = vmatpush1.bf16.msra.mxu0 %v796
        %1005 = vmatprep.subr.bf16.mxu0 %v793
        %1006 = vmatpush1.bf16.msra.mxu0 %v792
        %1007 = vmatprep.subr.bf16.mxu0 0
        %1008 = vmatpush2.bf16.msra.mxu0 0
        %1009 = vmatprep.subr.bf16.mxu0 0
        %1010 = vmatpush2.bf16.msra.mxu0 0
        %1011 = vmatprep.subr.bf16.mxu0 0
        %1012 = vmatpush2.bf16.msra.mxu0 0
        %1013 = vmatprep.subr.bf16.mxu0 0
        %1014 = vmatpush2.bf16.msra.mxu0 0
        %1015 = vmatprep.subr.bf16.mxu0 0
        %1016 = vmatpush2.bf16.msra.mxu0 0
        %1017 = vmatprep.subr.bf16.mxu0 0
        %1018 = vmatpush2.bf16.msra.mxu0 0
        %1019 = vmatprep.subr.bf16.mxu0 0
        %1020 = vmatpush2.bf16.msra.mxu0 0
        %1021 = vmatprep.subr.bf16.mxu0 0
        %1022 = vmatpush2.bf16.msra.mxu0 0
        %1023 = vmatprep.mubr.bf16.mxu0 0
        %1024 = vmatmul.mubr.bf16.gmra.mxu0 %v990
        %v1025 = vpop.f32.mrf.mxu0
        %v1026 = vadd.f32 0.0, %v1025
        %v1027 = vpop.f32.mrf.mxu0
        %v1028 = vadd.f32 0.0, %v1027
        %v1029 = vpop.f32.mrf.mxu0
        %v1030 = vpop.f32.mrf.mxu0
        %1031 = vdwg.mxu0
        %1032 = vmatprep.subr.bf16.mxu0 %v823
        %1033 = vmatpush1.bf16.msra.mxu0 %v822
        %1034 = vmatprep.subr.bf16.mxu0 %v819
        %1035 = vmatpush1.bf16.msra.mxu0 %v818
        %1036 = vmatprep.subr.bf16.mxu0 %v815
        %1037 = vmatpush1.bf16.msra.mxu0 %v814
        %1038 = vmatprep.subr.bf16.mxu0 %v811
        %1039 = vmatpush1.bf16.msra.mxu0 %v810
        %1040 = vmatprep.subr.bf16.mxu0 %v807
        %1041 = vmatpush1.bf16.msra.mxu0 %v806
        %1042 = vmatprep.subr.bf16.mxu0 %v803
        %1043 = vmatpush1.bf16.msra.mxu0 %v802
        %1044 = vmatprep.subr.bf16.mxu0 %v799
        %1045 = vmatpush1.bf16.msra.mxu0 %v798
        %1046 = vmatprep.subr.bf16.mxu0 %v795
        %1047 = vmatpush1.bf16.msra.mxu0 %v794
        %1048 = vmatprep.subr.bf16.mxu0 0
        %1049 = vmatpush2.bf16.msra.mxu0 0
        %1050 = vmatprep.subr.bf16.mxu0 0
        %1051 = vmatpush2.bf16.msra.mxu0 0
        %1052 = vmatprep.subr.bf16.mxu0 0
        %1053 = vmatpush2.bf16.msra.mxu0 0
        %1054 = vmatprep.subr.bf16.mxu0 0
        %1055 = vmatpush2.bf16.msra.mxu0 0
        %1056 = vmatprep.subr.bf16.mxu0 0
        %1057 = vmatpush2.bf16.msra.mxu0 0
        %1058 = vmatprep.subr.bf16.mxu0 0
        %1059 = vmatpush2.bf16.msra.mxu0 0
        %1060 = vmatprep.subr.bf16.mxu0 0
        %1061 = vmatpush2.bf16.msra.mxu0 0
        %1062 = vmatprep.subr.bf16.mxu0 0
        %1063 = vmatpush2.bf16.msra.mxu0 0
        %1064 = vmatprep.mubr.bf16.mxu0 0
        %1065 = vmatmul.mubr.bf16.gmra.mxu0 %v990
        %v1066 = vpop.f32.mrf.mxu0
        %v1067 = vadd.f32 0.0, %v1066
        %v1068 = vpop.f32.mrf.mxu0
        %v1069 = vadd.f32 0.0, %v1068
        %v1070 = vpop.f32.mrf.mxu0
        %v1071 = vpop.f32.mrf.mxu0
        %1072 = vdwg.mxu0
        %v1073 = vadd.f32 %v986, %v1026
        %v1074 = vadd.f32 %v987, %v1028
        %v1075 = vadd.f32 %v988, %v1067
        %v1076 = vadd.f32 %v989, %v1069
        %v1077 = vxor.u32 %v1073, 2147483648
        %v1078 = vmul.f32 %v1077, 1.442695
        %v1079 = vpow.pop %v1078
        %v1080 = vadd.f32 %v1079, 1.0
        %v1081 = vrcp.pop %v1080
        %v1082 = vmul.f32 1.0, %v1081
        %v1083 = vxor.u32 %v1074, 2147483648
        %v1084 = vmul.f32 %v1083, 1.442695
        %v1085 = vpow.pop %v1084
        %v1086 = vadd.f32 %v1085, 1.0
        %v1087 = vrcp.pop %v1086
        %v1088 = vmul.f32 1.0, %v1087
        %v1089 = vtanh.pop %v1075
        %v1090 = vxor.u32 %v1076, 2147483648
        %v1091 = vmul.f32 %v1090, 1.442695
        %v1092 = vpow.pop %v1091
        %v1093 = vadd.f32 %v1092, 1.0
        %v1094 = vrcp.pop %v1093
        %v1095 = vmul.f32 1.0, %v1094
        %v1096 = vmul.f32 %v1088, %v978
        %v1097 = vmul.f32 %v1082, %v1089
        %v1098 = vadd.f32 %v1096, %v1097
        %v1099 = vtanh.pop %v1098
        %v1100 = vmul.f32 %v1095, %v1099
        %s1101 = sadd.s32 %s680, %s979
        %v1102 = vstv %s1101
        %vm1103 = vcmp.gt.s32.totalorder %v403, %v1102
        %v1104 = vsel %vm1103, 1, 0
        %1105 = vset.pattern.permute.xlu0 0
        %1106 = vperm.xlu0 %1105, %v1104
        %v1107 = vpop.permute.xlu0 %1106
        %vm1108 = vcmp.eq.s32.totalorder %v1107, 1
        %v1109 = vsel %vm1108, %v1100, 0.0
        %s1110 = scalar_lea.vmem %s342, %s980 [#allocation9]
        %1111 = vst [vmem:[%s1110] sm:$0xff] %v1109
        %v1112 = vsel %vm1108, %v1100, %v977
        %v1113 = vsel %vm1108, %v1098, %v978
        %s1114 = scalar_select %p683, 5, 2
        %s1115 = smul.u32 %s1114, 8
        %s1116 = sshra.s32 %s1115, 3
        %s1117 = sand.u32 %s1115, 7
        %s1118 = smul.u32 %s1116, 4
        %s1119 = smul.addr %s1118, 8
        %s1120 = scalar_lea.vmem [#allocation4], %s1119
        %v1121 = vld [vmem:[%s1120] sm:$0xff]
        %v1122 = vld [vmem:[%s1120 + $0x8] sm:$0xff]
        %v1123 = vld [vmem:[%s1120 + $0x10] sm:$0xff]
        %v1124 = vld [vmem:[%s1120 + $0x18] sm:$0xff]
        %v1125 = vpack.c.bf16 %v1112, %v1112
        %1126 = vmatprep.subr.bf16.mxu0 %v821
        %1127 = vmatpush1.bf16.msra.mxu0 %v820
        %1128 = vmatprep.subr.bf16.mxu0 %v817
        %1129 = vmatpush1.bf16.msra.mxu0 %v816
        %1130 = vmatprep.subr.bf16.mxu0 %v813
        %1131 = vmatpush1.bf16.msra.mxu0 %v812
        %1132 = vmatprep.subr.bf16.mxu0 %v809
        %1133 = vmatpush1.bf16.msra.mxu0 %v808
        %1134 = vmatprep.subr.bf16.mxu0 %v805
        %1135 = vmatpush1.bf16.msra.mxu0 %v804
        %1136 = vmatprep.subr.bf16.mxu0 %v801
        %1137 = vmatpush1.bf16.msra.mxu0 %v800
        %1138 = vmatprep.subr.bf16.mxu0 %v797
        %1139 = vmatpush1.bf16.msra.mxu0 %v796
        %1140 = vmatprep.subr.bf16.mxu0 %v793
        %1141 = vmatpush1.bf16.msra.mxu0 %v792
        %1142 = vmatprep.subr.bf16.mxu0 0
        %1143 = vmatpush2.bf16.msra.mxu0 0
        %1144 = vmatprep.subr.bf16.mxu0 0
        %1145 = vmatpush2.bf16.msra.mxu0 0
        %1146 = vmatprep.subr.bf16.mxu0 0
        %1147 = vmatpush2.bf16.msra.mxu0 0
        %1148 = vmatprep.subr.bf16.mxu0 0
        %1149 = vmatpush2.bf16.msra.mxu0 0
        %1150 = vmatprep.subr.bf16.mxu0 0
        %1151 = vmatpush2.bf16.msra.mxu0 0
        %1152 = vmatprep.subr.bf16.mxu0 0
        %1153 = vmatpush2.bf16.msra.mxu0 0
        %1154 = vmatprep.subr.bf16.mxu0 0
        %1155 = vmatpush2.bf16.msra.mxu0 0
        %1156 = vmatprep.subr.bf16.mxu0 0
        %1157 = vmatpush2.bf16.msra.mxu0 0
        %1158 = vmatprep.mubr.bf16.mxu0 0
        %1159 = vmatmul.mubr.bf16.gmra.mxu0 %v1125
        %v1160 = vpop.f32.mrf.mxu0
        %v1161 = vadd.f32 0.0, %v1160
        %v1162 = vpop.f32.mrf.mxu0
        %v1163 = vadd.f32 0.0, %v1162
        %v1164 = vpop.f32.mrf.mxu0
        %v1165 = vpop.f32.mrf.mxu0
        %1166 = vdwg.mxu0
        %1167 = vmatprep.subr.bf16.mxu0 %v823
        %1168 = vmatpush1.bf16.msra.mxu0 %v822
        %1169 = vmatprep.subr.bf16.mxu0 %v819
        %1170 = vmatpush1.bf16.msra.mxu0 %v818
        %1171 = vmatprep.subr.bf16.mxu0 %v815
        %1172 = vmatpush1.bf16.msra.mxu0 %v814
        %1173 = vmatprep.subr.bf16.mxu0 %v811
        %1174 = vmatpush1.bf16.msra.mxu0 %v810
        %1175 = vmatprep.subr.bf16.mxu0 %v807
        %1176 = vmatpush1.bf16.msra.mxu0 %v806
        %1177 = vmatprep.subr.bf16.mxu0 %v803
        %1178 = vmatpush1.bf16.msra.mxu0 %v802
        %1179 = vmatprep.subr.bf16.mxu0 %v799
        %1180 = vmatpush1.bf16.msra.mxu0 %v798
        %1181 = vmatprep.subr.bf16.mxu0 %v795
        %1182 = vmatpush1.bf16.msra.mxu0 %v794
        %1183 = vmatprep.subr.bf16.mxu0 0
        %1184 = vmatpush2.bf16.msra.mxu0 0
        %1185 = vmatprep.subr.bf16.mxu0 0
        %1186 = vmatpush2.bf16.msra.mxu0 0
        %1187 = vmatprep.subr.bf16.mxu0 0
        %1188 = vmatpush2.bf16.msra.mxu0 0
        %1189 = vmatprep.subr.bf16.mxu0 0
        %1190 = vmatpush2.bf16.msra.mxu0 0
        %1191 = vmatprep.subr.bf16.mxu0 0
        %1192 = vmatpush2.bf16.msra.mxu0 0
        %1193 = vmatprep.subr.bf16.mxu0 0
        %1194 = vmatpush2.bf16.msra.mxu0 0
        %1195 = vmatprep.subr.bf16.mxu0 0
        %1196 = vmatpush2.bf16.msra.mxu0 0
        %1197 = vmatprep.subr.bf16.mxu0 0
        %1198 = vmatpush2.bf16.msra.mxu0 0
        %1199 = vmatprep.mubr.bf16.mxu0 0
        %1200 = vmatmul.mubr.bf16.gmra.mxu0 %v1125
        %v1201 = vpop.f32.mrf.mxu0
        %v1202 = vadd.f32 0.0, %v1201
        %v1203 = vpop.f32.mrf.mxu0
        %v1204 = vadd.f32 0.0, %v1203
        %v1205 = vpop.f32.mrf.mxu0
        %v1206 = vpop.f32.mrf.mxu0
        %1207 = vdwg.mxu0
        %v1208 = vadd.f32 %v1121, %v1161
        %v1209 = vadd.f32 %v1122, %v1163
        %v1210 = vadd.f32 %v1123, %v1202
        %v1211 = vadd.f32 %v1124, %v1204
        %v1212 = vxor.u32 %v1208, 2147483648
        %v1213 = vmul.f32 %v1212, 1.442695
        %v1214 = vpow.pop %v1213
        %v1215 = vadd.f32 %v1214, 1.0
        %v1216 = vrcp.pop %v1215
        %v1217 = vmul.f32 1.0, %v1216
        %v1218 = vxor.u32 %v1209, 2147483648
        %v1219 = vmul.f32 %v1218, 1.442695
        %v1220 = vpow.pop %v1219
        %v1221 = vadd.f32 %v1220, 1.0
        %v1222 = vrcp.pop %v1221
        %v1223 = vmul.f32 1.0, %v1222
        %v1224 = vtanh.pop %v1210
        %v1225 = vxor.u32 %v1211, 2147483648
        %v1226 = vmul.f32 %v1225, 1.442695
        %v1227 = vpow.pop %v1226
        %v1228 = vadd.f32 %v1227, 1.0
        %v1229 = vrcp.pop %v1228
        %v1230 = vmul.f32 1.0, %v1229
        %v1231 = vmul.f32 %v1223, %v1113
        %v1232 = vmul.f32 %v1217, %v1224
        %v1233 = vadd.f32 %v1231, %v1232
        %v1234 = vtanh.pop %v1233
        %v1235 = vmul.f32 %v1230, %v1234
        %s1236 = sadd.s32 %s680, %s1114
        %v1237 = vstv %s1236
        %vm1238 = vcmp.gt.s32.totalorder %v403, %v1237
        %v1239 = vsel %vm1238, 1, 0
        %1240 = vset.pattern.permute.xlu0 0
        %1241 = vperm.xlu0 %1240, %v1239
        %v1242 = vpop.permute.xlu0 %1241
        %vm1243 = vcmp.eq.s32.totalorder %v1242, 1
        %v1244 = vsel %vm1243, %v1235, 0.0
        %s1245 = scalar_lea.vmem %s342, %s1115 [#allocation9]
        %1246 = vst [vmem:[%s1245] sm:$0xff] %v1244
        %v1247 = vsel %vm1243, %v1235, %v1112
        %v1248 = vsel %vm1243, %v1233, %v1113
        %s1249 = scalar_select %p683, 4, 3
        %s1250 = smul.u32 %s1249, 8
        %s1251 = sshra.s32 %s1250, 3
        %s1252 = sand.u32 %s1250, 7
        %s1253 = smul.u32 %s1251, 4
        %s1254 = smul.addr %s1253, 8
        %s1255 = scalar_lea.vmem [#allocation4], %s1254
        %v1256 = vld [vmem:[%s1255] sm:$0xff]
        %v1257 = vld [vmem:[%s1255 + $0x8] sm:$0xff]
        %v1258 = vld [vmem:[%s1255 + $0x10] sm:$0xff]
        %v1259 = vld [vmem:[%s1255 + $0x18] sm:$0xff]
        %v1260 = vpack.c.bf16 %v1247, %v1247
        %1261 = vmatprep.subr.bf16.mxu0 %v821
        %1262 = vmatpush1.bf16.msra.mxu0 %v820
        %1263 = vmatprep.subr.bf16.mxu0 %v817
        %1264 = vmatpush1.bf16.msra.mxu0 %v816
        %1265 = vmatprep.subr.bf16.mxu0 %v813
        %1266 = vmatpush1.bf16.msra.mxu0 %v812
        %1267 = vmatprep.subr.bf16.mxu0 %v809
        %1268 = vmatpush1.bf16.msra.mxu0 %v808
        %1269 = vmatprep.subr.bf16.mxu0 %v805
        %1270 = vmatpush1.bf16.msra.mxu0 %v804
        %1271 = vmatprep.subr.bf16.mxu0 %v801
        %1272 = vmatpush1.bf16.msra.mxu0 %v800
        %1273 = vmatprep.subr.bf16.mxu0 %v797
        %1274 = vmatpush1.bf16.msra.mxu0 %v796
        %1275 = vmatprep.subr.bf16.mxu0 %v793
        %1276 = vmatpush1.bf16.msra.mxu0 %v792
        %1277 = vmatprep.subr.bf16.mxu0 0
        %1278 = vmatpush2.bf16.msra.mxu0 0
        %1279 = vmatprep.subr.bf16.mxu0 0
        %1280 = vmatpush2.bf16.msra.mxu0 0
        %1281 = vmatprep.subr.bf16.mxu0 0
        %1282 = vmatpush2.bf16.msra.mxu0 0
        %1283 = vmatprep.subr.bf16.mxu0 0
        %1284 = vmatpush2.bf16.msra.mxu0 0
        %1285 = vmatprep.subr.bf16.mxu0 0
        %1286 = vmatpush2.bf16.msra.mxu0 0
        %1287 = vmatprep.subr.bf16.mxu0 0
        %1288 = vmatpush2.bf16.msra.mxu0 0
        %1289 = vmatprep.subr.bf16.mxu0 0
        %1290 = vmatpush2.bf16.msra.mxu0 0
        %1291 = vmatprep.subr.bf16.mxu0 0
        %1292 = vmatpush2.bf16.msra.mxu0 0
        %1293 = vmatprep.mubr.bf16.mxu0 0
        %1294 = vmatmul.mubr.bf16.gmra.mxu0 %v1260
        %v1295 = vpop.f32.mrf.mxu0
        %v1296 = vadd.f32 0.0, %v1295
        %v1297 = vpop.f32.mrf.mxu0
        %v1298 = vadd.f32 0.0, %v1297
        %v1299 = vpop.f32.mrf.mxu0
        %v1300 = vpop.f32.mrf.mxu0
        %1301 = vdwg.mxu0
        %1302 = vmatprep.subr.bf16.mxu0 %v823
        %1303 = vmatpush1.bf16.msra.mxu0 %v822
        %1304 = vmatprep.subr.bf16.mxu0 %v819
        %1305 = vmatpush1.bf16.msra.mxu0 %v818
        %1306 = vmatprep.subr.bf16.mxu0 %v815
        %1307 = vmatpush1.bf16.msra.mxu0 %v814
        %1308 = vmatprep.subr.bf16.mxu0 %v811
        %1309 = vmatpush1.bf16.msra.mxu0 %v810
        %1310 = vmatprep.subr.bf16.mxu0 %v807
        %1311 = vmatpush1.bf16.msra.mxu0 %v806
        %1312 = vmatprep.subr.bf16.mxu0 %v803
        %1313 = vmatpush1.bf16.msra.mxu0 %v802
        %1314 = vmatprep.subr.bf16.mxu0 %v799
        %1315 = vmatpush1.bf16.msra.mxu0 %v798
        %1316 = vmatprep.subr.bf16.mxu0 %v795
        %1317 = vmatpush1.bf16.msra.mxu0 %v794
        %1318 = vmatprep.subr.bf16.mxu0 0
        %1319 = vmatpush2.bf16.msra.mxu0 0
        %1320 = vmatprep.subr.bf16.mxu0 0
        %1321 = vmatpush2.bf16.msra.mxu0 0
        %1322 = vmatprep.subr.bf16.mxu0 0
        %1323 = vmatpush2.bf16.msra.mxu0 0
        %1324 = vmatprep.subr.bf16.mxu0 0
        %1325 = vmatpush2.bf16.msra.mxu0 0
        %1326 = vmatprep.subr.bf16.mxu0 0
        %1327 = vmatpush2.bf16.msra.mxu0 0
        %1328 = vmatprep.subr.bf16.mxu0 0
        %1329 = vmatpush2.bf16.msra.mxu0 0
        %1330 = vmatprep.subr.bf16.mxu0 0
        %1331 = vmatpush2.bf16.msra.mxu0 0
        %1332 = vmatprep.subr.bf16.mxu0 0
        %1333 = vmatpush2.bf16.msra.mxu0 0
        %1334 = vmatprep.mubr.bf16.mxu0 0
        %1335 = vmatmul.mubr.bf16.gmra.mxu0 %v1260
        %v1336 = vpop.f32.mrf.mxu0
        %v1337 = vadd.f32 0.0, %v1336
        %v1338 = vpop.f32.mrf.mxu0
        %v1339 = vadd.f32 0.0, %v1338
        %v1340 = vpop.f32.mrf.mxu0
        %v1341 = vpop.f32.mrf.mxu0
        %1342 = vdwg.mxu0
        %v1343 = vadd.f32 %v1256, %v1296
        %v1344 = vadd.f32 %v1257, %v1298
        %v1345 = vadd.f32 %v1258, %v1337
        %v1346 = vadd.f32 %v1259, %v1339
        %v1347 = vxor.u32 %v1343, 2147483648
        %v1348 = vmul.f32 %v1347, 1.442695
        %v1349 = vpow.pop %v1348
        %v1350 = vadd.f32 %v1349, 1.0
        %v1351 = vrcp.pop %v1350
        %v1352 = vmul.f32 1.0, %v1351
        %v1353 = vxor.u32 %v1344, 2147483648
        %v1354 = vmul.f32 %v1353, 1.442695
        %v1355 = vpow.pop %v1354
        %v1356 = vadd.f32 %v1355, 1.0
        %v1357 = vrcp.pop %v1356
        %v1358 = vmul.f32 1.0, %v1357
        %v1359 = vtanh.pop %v1345
        %v1360 = vxor.u32 %v1346, 2147483648
        %v1361 = vmul.f32 %v1360, 1.442695
        %v1362 = vpow.pop %v1361
        %v1363 = vadd.f32 %v1362, 1.0
        %v1364 = vrcp.pop %v1363
        %v1365 = vmul.f32 1.0, %v1364
        %v1366 = vmul.f32 %v1358, %v1248
        %v1367 = vmul.f32 %v1352, %v1359
        %v1368 = vadd.f32 %v1366, %v1367
        %v1369 = vtanh.pop %v1368
        %v1370 = vmul.f32 %v1365, %v1369
        %s1371 = sadd.s32 %s680, %s1249
        %v1372 = vstv %s1371
        %vm1373 = vcmp.gt.s32.totalorder %v403, %v1372
        %v1374 = vsel %vm1373, 1, 0
        %1375 = vset.pattern.permute.xlu0 0
        %1376 = vperm.xlu0 %1375, %v1374
        %v1377 = vpop.permute.xlu0 %1376
        %vm1378 = vcmp.eq.s32.totalorder %v1377, 1
        %v1379 = vsel %vm1378, %v1370, 0.0
        %s1380 = scalar_lea.vmem %s342, %s1250 [#allocation9]
        %1381 = vst [vmem:[%s1380] sm:$0xff] %v1379
        %v1382 = vsel %vm1378, %v1370, %v1247
        %v1383 = vsel %vm1378, %v1368, %v1248
        %s1384 = scalar_select %p683, 3, 4
        %s1385 = smul.u32 %s1384, 8
        %s1386 = sshra.s32 %s1385, 3
        %s1387 = sand.u32 %s1385, 7
        %s1388 = smul.u32 %s1386, 4
        %s1389 = smul.addr %s1388, 8
        %s1390 = scalar_lea.vmem [#allocation4], %s1389
        %v1391 = vld [vmem:[%s1390] sm:$0xff]
        %v1392 = vld [vmem:[%s1390 + $0x8] sm:$0xff]
        %v1393 = vld [vmem:[%s1390 + $0x10] sm:$0xff]
        %v1394 = vld [vmem:[%s1390 + $0x18] sm:$0xff]
        %v1395 = vpack.c.bf16 %v1382, %v1382
        %1396 = vmatprep.subr.bf16.mxu0 %v821
        %1397 = vmatpush1.bf16.msra.mxu0 %v820
        %1398 = vmatprep.subr.bf16.mxu0 %v817
        %1399 = vmatpush1.bf16.msra.mxu0 %v816
        %1400 = vmatprep.subr.bf16.mxu0 %v813
        %1401 = vmatpush1.bf16.msra.mxu0 %v812
        %1402 = vmatprep.subr.bf16.mxu0 %v809
        %1403 = vmatpush1.bf16.msra.mxu0 %v808
        %1404 = vmatprep.subr.bf16.mxu0 %v805
        %1405 = vmatpush1.bf16.msra.mxu0 %v804
        %1406 = vmatprep.subr.bf16.mxu0 %v801
        %1407 = vmatpush1.bf16.msra.mxu0 %v800
        %1408 = vmatprep.subr.bf16.mxu0 %v797
        %1409 = vmatpush1.bf16.msra.mxu0 %v796
        %1410 = vmatprep.subr.bf16.mxu0 %v793
        %1411 = vmatpush1.bf16.msra.mxu0 %v792
        %1412 = vmatprep.subr.bf16.mxu0 0
        %1413 = vmatpush2.bf16.msra.mxu0 0
        %1414 = vmatprep.subr.bf16.mxu0 0
        %1415 = vmatpush2.bf16.msra.mxu0 0
        %1416 = vmatprep.subr.bf16.mxu0 0
        %1417 = vmatpush2.bf16.msra.mxu0 0
        %1418 = vmatprep.subr.bf16.mxu0 0
        %1419 = vmatpush2.bf16.msra.mxu0 0
        %1420 = vmatprep.subr.bf16.mxu0 0
        %1421 = vmatpush2.bf16.msra.mxu0 0
        %1422 = vmatprep.subr.bf16.mxu0 0
        %1423 = vmatpush2.bf16.msra.mxu0 0
        %1424 = vmatprep.subr.bf16.mxu0 0
        %1425 = vmatpush2.bf16.msra.mxu0 0
        %1426 = vmatprep.subr.bf16.mxu0 0
        %1427 = vmatpush2.bf16.msra.mxu0 0
        %1428 = vmatprep.mubr.bf16.mxu0 0
        %1429 = vmatmul.mubr.bf16.gmra.mxu0 %v1395
        %v1430 = vpop.f32.mrf.mxu0
        %v1431 = vadd.f32 0.0, %v1430
        %v1432 = vpop.f32.mrf.mxu0
        %v1433 = vadd.f32 0.0, %v1432
        %v1434 = vpop.f32.mrf.mxu0
        %v1435 = vpop.f32.mrf.mxu0
        %1436 = vdwg.mxu0
        %1437 = vmatprep.subr.bf16.mxu0 %v823
        %1438 = vmatpush1.bf16.msra.mxu0 %v822
        %1439 = vmatprep.subr.bf16.mxu0 %v819
        %1440 = vmatpush1.bf16.msra.mxu0 %v818
        %1441 = vmatprep.subr.bf16.mxu0 %v815
        %1442 = vmatpush1.bf16.msra.mxu0 %v814
        %1443 = vmatprep.subr.bf16.mxu0 %v811
        %1444 = vmatpush1.bf16.msra.mxu0 %v810
        %1445 = vmatprep.subr.bf16.mxu0 %v807
        %1446 = vmatpush1.bf16.msra.mxu0 %v806
        %1447 = vmatprep.subr.bf16.mxu0 %v803
        %1448 = vmatpush1.bf16.msra.mxu0 %v802
        %1449 = vmatprep.subr.bf16.mxu0 %v799
        %1450 = vmatpush1.bf16.msra.mxu0 %v798
        %1451 = vmatprep.subr.bf16.mxu0 %v795
        %1452 = vmatpush1.bf16.msra.mxu0 %v794
        %1453 = vmatprep.subr.bf16.mxu0 0
        %1454 = vmatpush2.bf16.msra.mxu0 0
        %1455 = vmatprep.subr.bf16.mxu0 0
        %1456 = vmatpush2.bf16.msra.mxu0 0
        %1457 = vmatprep.subr.bf16.mxu0 0
        %1458 = vmatpush2.bf16.msra.mxu0 0
        %1459 = vmatprep.subr.bf16.mxu0 0
        %1460 = vmatpush2.bf16.msra.mxu0 0
        %1461 = vmatprep.subr.bf16.mxu0 0
        %1462 = vmatpush2.bf16.msra.mxu0 0
        %1463 = vmatprep.subr.bf16.mxu0 0
        %1464 = vmatpush2.bf16.msra.mxu0 0
        %1465 = vmatprep.subr.bf16.mxu0 0
        %1466 = vmatpush2.bf16.msra.mxu0 0
        %1467 = vmatprep.subr.bf16.mxu0 0
        %1468 = vmatpush2.bf16.msra.mxu0 0
        %1469 = vmatprep.mubr.bf16.mxu0 0
        %1470 = vmatmul.mubr.bf16.gmra.mxu0 %v1395
        %v1471 = vpop.f32.mrf.mxu0
        %v1472 = vadd.f32 0.0, %v1471
        %v1473 = vpop.f32.mrf.mxu0
        %v1474 = vadd.f32 0.0, %v1473
        %v1475 = vpop.f32.mrf.mxu0
        %v1476 = vpop.f32.mrf.mxu0
        %1477 = vdwg.mxu0
        %v1478 = vadd.f32 %v1391, %v1431
        %v1479 = vadd.f32 %v1392, %v1433
        %v1480 = vadd.f32 %v1393, %v1472
        %v1481 = vadd.f32 %v1394, %v1474
        %v1482 = vxor.u32 %v1478, 2147483648
        %v1483 = vmul.f32 %v1482, 1.442695
        %v1484 = vpow.pop %v1483
        %v1485 = vadd.f32 %v1484, 1.0
        %v1486 = vrcp.pop %v1485
        %v1487 = vmul.f32 1.0, %v1486
        %v1488 = vxor.u32 %v1479, 2147483648
        %v1489 = vmul.f32 %v1488, 1.442695
        %v1490 = vpow.pop %v1489
        %v1491 = vadd.f32 %v1490, 1.0
        %v1492 = vrcp.pop %v1491
        %v1493 = vmul.f32 1.0, %v1492
        %v1494 = vtanh.pop %v1480
        %v1495 = vxor.u32 %v1481, 2147483648
        %v1496 = vmul.f32 %v1495, 1.442695
        %v1497 = vpow.pop %v1496
        %v1498 = vadd.f32 %v1497, 1.0
        %v1499 = vrcp.pop %v1498
        %v1500 = vmul.f32 1.0, %v1499
        %v1501 = vmul.f32 %v1493, %v1383
        %v1502 = vmul.f32 %v1487, %v1494
        %v1503 = vadd.f32 %v1501, %v1502
        %v1504 = vtanh.pop %v1503
        %v1505 = vmul.f32 %v1500, %v1504
        %s1506 = sadd.s32 %s680, %s1384
        %v1507 = vstv %s1506
        %vm1508 = vcmp.gt.s32.totalorder %v403, %v1507
        %v1509 = vsel %vm1508, 1, 0
        %1510 = vset.pattern.permute.xlu0 0
        %1511 = vperm.xlu0 %1510, %v1509
        %v1512 = vpop.permute.xlu0 %1511
        %vm1513 = vcmp.eq.s32.totalorder %v1512, 1
        %v1514 = vsel %vm1513, %v1505, 0.0
        %s1515 = scalar_lea.vmem %s342, %s1385 [#allocation9]
        %1516 = vst [vmem:[%s1515] sm:$0xff] %v1514
        %v1517 = vsel %vm1513, %v1505, %v1382
        %v1518 = vsel %vm1513, %v1503, %v1383
        %s1519 = scalar_select %p683, 2, 5
        %s1520 = smul.u32 %s1519, 8
        %s1521 = sshra.s32 %s1520, 3
        %s1522 = sand.u32 %s1520, 7
        %s1523 = smul.u32 %s1521, 4
        %s1524 = smul.addr %s1523, 8
        %s1525 = scalar_lea.vmem [#allocation4], %s1524
        %v1526 = vld [vmem:[%s1525] sm:$0xff]
        %v1527 = vld [vmem:[%s1525 + $0x8] sm:$0xff]
        %v1528 = vld [vmem:[%s1525 + $0x10] sm:$0xff]
        %v1529 = vld [vmem:[%s1525 + $0x18] sm:$0xff]
        %v1530 = vpack.c.bf16 %v1517, %v1517
        %1531 = vmatprep.subr.bf16.mxu0 %v821
        %1532 = vmatpush1.bf16.msra.mxu0 %v820
        %1533 = vmatprep.subr.bf16.mxu0 %v817
        %1534 = vmatpush1.bf16.msra.mxu0 %v816
        %1535 = vmatprep.subr.bf16.mxu0 %v813
        %1536 = vmatpush1.bf16.msra.mxu0 %v812
        %1537 = vmatprep.subr.bf16.mxu0 %v809
        %1538 = vmatpush1.bf16.msra.mxu0 %v808
        %1539 = vmatprep.subr.bf16.mxu0 %v805
        %1540 = vmatpush1.bf16.msra.mxu0 %v804
        %1541 = vmatprep.subr.bf16.mxu0 %v801
        %1542 = vmatpush1.bf16.msra.mxu0 %v800
        %1543 = vmatprep.subr.bf16.mxu0 %v797
        %1544 = vmatpush1.bf16.msra.mxu0 %v796
        %1545 = vmatprep.subr.bf16.mxu0 %v793
        %1546 = vmatpush1.bf16.msra.mxu0 %v792
        %1547 = vmatprep.subr.bf16.mxu0 0
        %1548 = vmatpush2.bf16.msra.mxu0 0
        %1549 = vmatprep.subr.bf16.mxu0 0
        %1550 = vmatpush2.bf16.msra.mxu0 0
        %1551 = vmatprep.subr.bf16.mxu0 0
        %1552 = vmatpush2.bf16.msra.mxu0 0
        %1553 = vmatprep.subr.bf16.mxu0 0
        %1554 = vmatpush2.bf16.msra.mxu0 0
        %1555 = vmatprep.subr.bf16.mxu0 0
        %1556 = vmatpush2.bf16.msra.mxu0 0
        %1557 = vmatprep.subr.bf16.mxu0 0
        %1558 = vmatpush2.bf16.msra.mxu0 0
        %1559 = vmatprep.subr.bf16.mxu0 0
        %1560 = vmatpush2.bf16.msra.mxu0 0
        %1561 = vmatprep.subr.bf16.mxu0 0
        %1562 = vmatpush2.bf16.msra.mxu0 0
        %1563 = vmatprep.mubr.bf16.mxu0 0
        %1564 = vmatmul.mubr.bf16.gmra.mxu0 %v1530
        %v1565 = vpop.f32.mrf.mxu0
        %v1566 = vadd.f32 0.0, %v1565
        %v1567 = vpop.f32.mrf.mxu0
        %v1568 = vadd.f32 0.0, %v1567
        %v1569 = vpop.f32.mrf.mxu0
        %v1570 = vpop.f32.mrf.mxu0
        %1571 = vdwg.mxu0
        %1572 = vmatprep.subr.bf16.mxu0 %v823
        %1573 = vmatpush1.bf16.msra.mxu0 %v822
        %1574 = vmatprep.subr.bf16.mxu0 %v819
        %1575 = vmatpush1.bf16.msra.mxu0 %v818
        %1576 = vmatprep.subr.bf16.mxu0 %v815
        %1577 = vmatpush1.bf16.msra.mxu0 %v814
        %1578 = vmatprep.subr.bf16.mxu0 %v811
        %1579 = vmatpush1.bf16.msra.mxu0 %v810
        %1580 = vmatprep.subr.bf16.mxu0 %v807
        %1581 = vmatpush1.bf16.msra.mxu0 %v806
        %1582 = vmatprep.subr.bf16.mxu0 %v803
        %1583 = vmatpush1.bf16.msra.mxu0 %v802
        %1584 = vmatprep.subr.bf16.mxu0 %v799
        %1585 = vmatpush1.bf16.msra.mxu0 %v798
        %1586 = vmatprep.subr.bf16.mxu0 %v795
        %1587 = vmatpush1.bf16.msra.mxu0 %v794
        %1588 = vmatprep.subr.bf16.mxu0 0
        %1589 = vmatpush2.bf16.msra.mxu0 0
        %1590 = vmatprep.subr.bf16.mxu0 0
        %1591 = vmatpush2.bf16.msra.mxu0 0
        %1592 = vmatprep.subr.bf16.mxu0 0
        %1593 = vmatpush2.bf16.msra.mxu0 0
        %1594 = vmatprep.subr.bf16.mxu0 0
        %1595 = vmatpush2.bf16.msra.mxu0 0
        %1596 = vmatprep.subr.bf16.mxu0 0
        %1597 = vmatpush2.bf16.msra.mxu0 0
        %1598 = vmatprep.subr.bf16.mxu0 0
        %1599 = vmatpush2.bf16.msra.mxu0 0
        %1600 = vmatprep.subr.bf16.mxu0 0
        %1601 = vmatpush2.bf16.msra.mxu0 0
        %1602 = vmatprep.subr.bf16.mxu0 0
        %1603 = vmatpush2.bf16.msra.mxu0 0
        %1604 = vmatprep.mubr.bf16.mxu0 0
        %1605 = vmatmul.mubr.bf16.gmra.mxu0 %v1530
        %v1606 = vpop.f32.mrf.mxu0
        %v1607 = vadd.f32 0.0, %v1606
        %v1608 = vpop.f32.mrf.mxu0
        %v1609 = vadd.f32 0.0, %v1608
        %v1610 = vpop.f32.mrf.mxu0
        %v1611 = vpop.f32.mrf.mxu0
        %1612 = vdwg.mxu0
        %v1613 = vadd.f32 %v1526, %v1566
        %v1614 = vadd.f32 %v1527, %v1568
        %v1615 = vadd.f32 %v1528, %v1607
        %v1616 = vadd.f32 %v1529, %v1609
        %v1617 = vxor.u32 %v1613, 2147483648
        %v1618 = vmul.f32 %v1617, 1.442695
        %v1619 = vpow.pop %v1618
        %v1620 = vadd.f32 %v1619, 1.0
        %v1621 = vrcp.pop %v1620
        %v1622 = vmul.f32 1.0, %v1621
        %v1623 = vxor.u32 %v1614, 2147483648
        %v1624 = vmul.f32 %v1623, 1.442695
        %v1625 = vpow.pop %v1624
        %v1626 = vadd.f32 %v1625, 1.0
        %v1627 = vrcp.pop %v1626
        %v1628 = vmul.f32 1.0, %v1627
        %v1629 = vtanh.pop %v1615
        %v1630 = vxor.u32 %v1616, 2147483648
        %v1631 = vmul.f32 %v1630, 1.442695
        %v1632 = vpow.pop %v1631
        %v1633 = vadd.f32 %v1632, 1.0
        %v1634 = vrcp.pop %v1633
        %v1635 = vmul.f32 1.0, %v1634
        %v1636 = vmul.f32 %v1628, %v1518
        %v1637 = vmul.f32 %v1622, %v1629
        %v1638 = vadd.f32 %v1636, %v1637
        %v1639 = vtanh.pop %v1638
        %v1640 = vmul.f32 %v1635, %v1639
        %s1641 = sadd.s32 %s680, %s1519
        %v1642 = vstv %s1641
        %vm1643 = vcmp.gt.s32.totalorder %v403, %v1642
        %v1644 = vsel %vm1643, 1, 0
        %1645 = vset.pattern.permute.xlu0 0
        %1646 = vperm.xlu0 %1645, %v1644
        %v1647 = vpop.permute.xlu0 %1646
        %vm1648 = vcmp.eq.s32.totalorder %v1647, 1
        %v1649 = vsel %vm1648, %v1640, 0.0
        %s1650 = scalar_lea.vmem %s342, %s1520 [#allocation9]
        %1651 = vst [vmem:[%s1650] sm:$0xff] %v1649
        %v1652 = vsel %vm1648, %v1640, %v1517
        %v1653 = vsel %vm1648, %v1638, %v1518
        %s1654 = scalar_select %p683, 1, 6
        %s1655 = smul.u32 %s1654, 8
        %s1656 = sshra.s32 %s1655, 3
        %s1657 = sand.u32 %s1655, 7
        %s1658 = smul.u32 %s1656, 4
        %s1659 = smul.addr %s1658, 8
        %s1660 = scalar_lea.vmem [#allocation4], %s1659
        %v1661 = vld [vmem:[%s1660] sm:$0xff]
        %v1662 = vld [vmem:[%s1660 + $0x8] sm:$0xff]
        %v1663 = vld [vmem:[%s1660 + $0x10] sm:$0xff]
        %v1664 = vld [vmem:[%s1660 + $0x18] sm:$0xff]
        %v1665 = vpack.c.bf16 %v1652, %v1652
        %1666 = vmatprep.subr.bf16.mxu0 %v821
        %1667 = vmatpush1.bf16.msra.mxu0 %v820
        %1668 = vmatprep.subr.bf16.mxu0 %v817
        %1669 = vmatpush1.bf16.msra.mxu0 %v816
        %1670 = vmatprep.subr.bf16.mxu0 %v813
        %1671 = vmatpush1.bf16.msra.mxu0 %v812
        %1672 = vmatprep.subr.bf16.mxu0 %v809
        %1673 = vmatpush1.bf16.msra.mxu0 %v808
        %1674 = vmatprep.subr.bf16.mxu0 %v805
        %1675 = vmatpush1.bf16.msra.mxu0 %v804
        %1676 = vmatprep.subr.bf16.mxu0 %v801
        %1677 = vmatpush1.bf16.msra.mxu0 %v800
        %1678 = vmatprep.subr.bf16.mxu0 %v797
        %1679 = vmatpush1.bf16.msra.mxu0 %v796
        %1680 = vmatprep.subr.bf16.mxu0 %v793
        %1681 = vmatpush1.bf16.msra.mxu0 %v792
        %1682 = vmatprep.subr.bf16.mxu0 0
        %1683 = vmatpush2.bf16.msra.mxu0 0
        %1684 = vmatprep.subr.bf16.mxu0 0
        %1685 = vmatpush2.bf16.msra.mxu0 0
        %1686 = vmatprep.subr.bf16.mxu0 0
        %1687 = vmatpush2.bf16.msra.mxu0 0
        %1688 = vmatprep.subr.bf16.mxu0 0
        %1689 = vmatpush2.bf16.msra.mxu0 0
        %1690 = vmatprep.subr.bf16.mxu0 0
        %1691 = vmatpush2.bf16.msra.mxu0 0
        %1692 = vmatprep.subr.bf16.mxu0 0
        %1693 = vmatpush2.bf16.msra.mxu0 0
        %1694 = vmatprep.subr.bf16.mxu0 0
        %1695 = vmatpush2.bf16.msra.mxu0 0
        %1696 = vmatprep.subr.bf16.mxu0 0
        %1697 = vmatpush2.bf16.msra.mxu0 0
        %1698 = vmatprep.mubr.bf16.mxu0 0
        %1699 = vmatmul.mubr.bf16.gmra.mxu0 %v1665
        %v1700 = vpop.f32.mrf.mxu0
        %v1701 = vadd.f32 0.0, %v1700
        %v1702 = vpop.f32.mrf.mxu0
        %v1703 = vadd.f32 0.0, %v1702
        %v1704 = vpop.f32.mrf.mxu0
        %v1705 = vpop.f32.mrf.mxu0
        %1706 = vdwg.mxu0
        %1707 = vmatprep.subr.bf16.mxu0 %v823
        %1708 = vmatpush1.bf16.msra.mxu0 %v822
        %1709 = vmatprep.subr.bf16.mxu0 %v819
        %1710 = vmatpush1.bf16.msra.mxu0 %v818
        %1711 = vmatprep.subr.bf16.mxu0 %v815
        %1712 = vmatpush1.bf16.msra.mxu0 %v814
        %1713 = vmatprep.subr.bf16.mxu0 %v811
        %1714 = vmatpush1.bf16.msra.mxu0 %v810
        %1715 = vmatprep.subr.bf16.mxu0 %v807
        %1716 = vmatpush1.bf16.msra.mxu0 %v806
        %1717 = vmatprep.subr.bf16.mxu0 %v803
        %1718 = vmatpush1.bf16.msra.mxu0 %v802
        %1719 = vmatprep.subr.bf16.mxu0 %v799
        %1720 = vmatpush1.bf16.msra.mxu0 %v798
        %1721 = vmatprep.subr.bf16.mxu0 %v795
        %1722 = vmatpush1.bf16.msra.mxu0 %v794
        %1723 = vmatprep.subr.bf16.mxu0 0
        %1724 = vmatpush2.bf16.msra.mxu0 0
        %1725 = vmatprep.subr.bf16.mxu0 0
        %1726 = vmatpush2.bf16.msra.mxu0 0
        %1727 = vmatprep.subr.bf16.mxu0 0
        %1728 = vmatpush2.bf16.msra.mxu0 0
        %1729 = vmatprep.subr.bf16.mxu0 0
        %1730 = vmatpush2.bf16.msra.mxu0 0
        %1731 = vmatprep.subr.bf16.mxu0 0
        %1732 = vmatpush2.bf16.msra.mxu0 0
        %1733 = vmatprep.subr.bf16.mxu0 0
        %1734 = vmatpush2.bf16.msra.mxu0 0
        %1735 = vmatprep.subr.bf16.mxu0 0
        %1736 = vmatpush2.bf16.msra.mxu0 0
        %1737 = vmatprep.subr.bf16.mxu0 0
        %1738 = vmatpush2.bf16.msra.mxu0 0
        %1739 = vmatprep.mubr.bf16.mxu0 0
        %1740 = vmatmul.mubr.bf16.gmra.mxu0 %v1665
        %v1741 = vpop.f32.mrf.mxu0
        %v1742 = vadd.f32 0.0, %v1741
        %v1743 = vpop.f32.mrf.mxu0
        %v1744 = vadd.f32 0.0, %v1743
        %v1745 = vpop.f32.mrf.mxu0
        %v1746 = vpop.f32.mrf.mxu0
        %1747 = vdwg.mxu0
        %v1748 = vadd.f32 %v1661, %v1701
        %v1749 = vadd.f32 %v1662, %v1703
        %v1750 = vadd.f32 %v1663, %v1742
        %v1751 = vadd.f32 %v1664, %v1744
        %v1752 = vxor.u32 %v1748, 2147483648
        %v1753 = vmul.f32 %v1752, 1.442695
        %v1754 = vpow.pop %v1753
        %v1755 = vadd.f32 %v1754, 1.0
        %v1756 = vrcp.pop %v1755
        %v1757 = vmul.f32 1.0, %v1756
        %v1758 = vxor.u32 %v1749, 2147483648
        %v1759 = vmul.f32 %v1758, 1.442695
        %v1760 = vpow.pop %v1759
        %v1761 = vadd.f32 %v1760, 1.0
        %v1762 = vrcp.pop %v1761
        %v1763 = vmul.f32 1.0, %v1762
        %v1764 = vtanh.pop %v1750
        %v1765 = vxor.u32 %v1751, 2147483648
        %v1766 = vmul.f32 %v1765, 1.442695
        %v1767 = vpow.pop %v1766
        %v1768 = vadd.f32 %v1767, 1.0
        %v1769 = vrcp.pop %v1768
        %v1770 = vmul.f32 1.0, %v1769
        %v1771 = vmul.f32 %v1763, %v1653
        %v1772 = vmul.f32 %v1757, %v1764
        %v1773 = vadd.f32 %v1771, %v1772
        %v1774 = vtanh.pop %v1773
        %v1775 = vmul.f32 %v1770, %v1774
        %s1776 = sadd.s32 %s680, %s1654
        %v1777 = vstv %s1776
        %vm1778 = vcmp.gt.s32.totalorder %v403, %v1777
        %v1779 = vsel %vm1778, 1, 0
        %1780 = vset.pattern.permute.xlu0 0
        %1781 = vperm.xlu0 %1780, %v1779
        %v1782 = vpop.permute.xlu0 %1781
        %vm1783 = vcmp.eq.s32.totalorder %v1782, 1
        %v1784 = vsel %vm1783, %v1775, 0.0
        %s1785 = scalar_lea.vmem %s342, %s1655 [#allocation9]
        %1786 = vst [vmem:[%s1785] sm:$0xff] %v1784
        %v1787 = vsel %vm1783, %v1775, %v1652
        %v1788 = vsel %vm1783, %v1773, %v1653
        %s1789 = scalar_select %p683, 0, 7
        %s1790 = smul.u32 %s1789, 8
        %s1791 = sshra.s32 %s1790, 3
        %s1792 = sand.u32 %s1790, 7
        %s1793 = smul.u32 %s1791, 4
        %s1794 = smul.addr %s1793, 8
        %s1795 = scalar_lea.vmem [#allocation4], %s1794
        %v1796 = vld [vmem:[%s1795] sm:$0xff]
        %v1797 = vld [vmem:[%s1795 + $0x8] sm:$0xff]
        %v1798 = vld [vmem:[%s1795 + $0x10] sm:$0xff]
        %v1799 = vld [vmem:[%s1795 + $0x18] sm:$0xff]
        %v1800 = vpack.c.bf16 %v1787, %v1787
        %1801 = vmatprep.subr.bf16.mxu0 %v821
        %1802 = vmatpush1.bf16.msra.mxu0 %v820
        %1803 = vmatprep.subr.bf16.mxu0 %v817
        %1804 = vmatpush1.bf16.msra.mxu0 %v816
        %1805 = vmatprep.subr.bf16.mxu0 %v813
        %1806 = vmatpush1.bf16.msra.mxu0 %v812
        %1807 = vmatprep.subr.bf16.mxu0 %v809
        %1808 = vmatpush1.bf16.msra.mxu0 %v808
        %1809 = vmatprep.subr.bf16.mxu0 %v805
        %1810 = vmatpush1.bf16.msra.mxu0 %v804
        %1811 = vmatprep.subr.bf16.mxu0 %v801
        %1812 = vmatpush1.bf16.msra.mxu0 %v800
        %1813 = vmatprep.subr.bf16.mxu0 %v797
        %1814 = vmatpush1.bf16.msra.mxu0 %v796
        %1815 = vmatprep.subr.bf16.mxu0 %v793
        %1816 = vmatpush1.bf16.msra.mxu0 %v792
        %1817 = vmatprep.subr.bf16.mxu0 0
        %1818 = vmatpush2.bf16.msra.mxu0 0
        %1819 = vmatprep.subr.bf16.mxu0 0
        %1820 = vmatpush2.bf16.msra.mxu0 0
        %1821 = vmatprep.subr.bf16.mxu0 0
        %1822 = vmatpush2.bf16.msra.mxu0 0
        %1823 = vmatprep.subr.bf16.mxu0 0
        %1824 = vmatpush2.bf16.msra.mxu0 0
        %1825 = vmatprep.subr.bf16.mxu0 0
        %1826 = vmatpush2.bf16.msra.mxu0 0
        %1827 = vmatprep.subr.bf16.mxu0 0
        %1828 = vmatpush2.bf16.msra.mxu0 0
        %1829 = vmatprep.subr.bf16.mxu0 0
        %1830 = vmatpush2.bf16.msra.mxu0 0
        %1831 = vmatprep.subr.bf16.mxu0 0
        %1832 = vmatpush2.bf16.msra.mxu0 0
        %1833 = vmatprep.mubr.bf16.mxu0 0
        %1834 = vmatmul.mubr.bf16.gmra.mxu0 %v1800
        %v1835 = vpop.f32.mrf.mxu0
        %v1836 = vadd.f32 0.0, %v1835
        %v1837 = vpop.f32.mrf.mxu0
        %v1838 = vadd.f32 0.0, %v1837
        %v1839 = vpop.f32.mrf.mxu0
        %v1840 = vpop.f32.mrf.mxu0
        %1841 = vdwg.mxu0
        %1842 = vmatprep.subr.bf16.mxu0 %v823
        %1843 = vmatpush1.bf16.msra.mxu0 %v822
        %1844 = vmatprep.subr.bf16.mxu0 %v819
        %1845 = vmatpush1.bf16.msra.mxu0 %v818
        %1846 = vmatprep.subr.bf16.mxu0 %v815
        %1847 = vmatpush1.bf16.msra.mxu0 %v814
        %1848 = vmatprep.subr.bf16.mxu0 %v811
        %1849 = vmatpush1.bf16.msra.mxu0 %v810
        %1850 = vmatprep.subr.bf16.mxu0 %v807
        %1851 = vmatpush1.bf16.msra.mxu0 %v806
        %1852 = vmatprep.subr.bf16.mxu0 %v803
        %1853 = vmatpush1.bf16.msra.mxu0 %v802
        %1854 = vmatprep.subr.bf16.mxu0 %v799
        %1855 = vmatpush1.bf16.msra.mxu0 %v798
        %1856 = vmatprep.subr.bf16.mxu0 %v795
        %1857 = vmatpush1.bf16.msra.mxu0 %v794
        %1858 = vmatprep.subr.bf16.mxu0 0
        %1859 = vmatpush2.bf16.msra.mxu0 0
        %1860 = vmatprep.subr.bf16.mxu0 0
        %1861 = vmatpush2.bf16.msra.mxu0 0
        %1862 = vmatprep.subr.bf16.mxu0 0
        %1863 = vmatpush2.bf16.msra.mxu0 0
        %1864 = vmatprep.subr.bf16.mxu0 0
        %1865 = vmatpush2.bf16.msra.mxu0 0
        %1866 = vmatprep.subr.bf16.mxu0 0
        %1867 = vmatpush2.bf16.msra.mxu0 0
        %1868 = vmatprep.subr.bf16.mxu0 0
        %1869 = vmatpush2.bf16.msra.mxu0 0
        %1870 = vmatprep.subr.bf16.mxu0 0
        %1871 = vmatpush2.bf16.msra.mxu0 0
        %1872 = vmatprep.subr.bf16.mxu0 0
        %1873 = vmatpush2.bf16.msra.mxu0 0
        %1874 = vmatprep.mubr.bf16.mxu0 0
        %1875 = vmatmul.mubr.bf16.gmra.mxu0 %v1800
        %v1876 = vpop.f32.mrf.mxu0
        %v1877 = vadd.f32 0.0, %v1876
        %v1878 = vpop.f32.mrf.mxu0
        %v1879 = vadd.f32 0.0, %v1878
        %v1880 = vpop.f32.mrf.mxu0
        %v1881 = vpop.f32.mrf.mxu0
        %1882 = vdwg.mxu0
        %v1883 = vadd.f32 %v1796, %v1836
        %v1884 = vadd.f32 %v1797, %v1838
        %v1885 = vadd.f32 %v1798, %v1877
        %v1886 = vadd.f32 %v1799, %v1879
        %v1887 = vxor.u32 %v1883, 2147483648
        %v1888 = vmul.f32 %v1887, 1.442695
        %v1889 = vpow.pop %v1888
        %v1890 = vadd.f32 %v1889, 1.0
        %v1891 = vrcp.pop %v1890
        %v1892 = vmul.f32 1.0, %v1891
        %v1893 = vxor.u32 %v1884, 2147483648
        %v1894 = vmul.f32 %v1893, 1.442695
        %v1895 = vpow.pop %v1894
        %v1896 = vadd.f32 %v1895, 1.0
        %v1897 = vrcp.pop %v1896
        %v1898 = vmul.f32 1.0, %v1897
        %v1899 = vtanh.pop %v1885
        %v1900 = vxor.u32 %v1886, 2147483648
        %v1901 = vmul.f32 %v1900, 1.442695
        %v1902 = vpow.pop %v1901
        %v1903 = vadd.f32 %v1902, 1.0
        %v1904 = vrcp.pop %v1903
        %v1905 = vmul.f32 1.0, %v1904
        %v1906 = vmul.f32 %v1898, %v1788
        %v1907 = vmul.f32 %v1892, %v1899
        %v1908 = vadd.f32 %v1906, %v1907
        %v1909 = vtanh.pop %v1908
        %v1910 = vmul.f32 %v1905, %v1909
        %s1911 = sadd.s32 %s680, %s1789
        %v1912 = vstv %s1911
        %vm1913 = vcmp.gt.s32.totalorder %v403, %v1912
        %v1914 = vsel %vm1913, 1, 0
        %1915 = vset.pattern.permute.xlu0 0
        %1916 = vperm.xlu0 %1915, %v1914
        %v1917 = vpop.permute.xlu0 %1916
        %vm1918 = vcmp.eq.s32.totalorder %v1917, 1
        %v1919 = vsel %vm1918, %v1910, 0.0
        %s1920 = scalar_lea.vmem %s342, %s1790 [#allocation9]
        %1921 = vst [vmem:[%s1920] sm:$0xff] %v1919
        %v1922 = vsel %vm1918, %v1910, %v1787
        %v1923 = vsel %vm1918, %v1908, %v1788
        %1924 = vst [vmem:[#allocation2] sm:$0xff] %v1922
        %1925 = vst [vmem:[#allocation3] sm:$0xff] %v1923
        %s1926 = sand.u32 %s181, 1
        %s1927 = sand.u32 %s181, 1
        %s1928 = smul.addr %s1927, 64
        %s1929 = scalar_lea.vmem [#allocation9], %s1928
        // Predicated region
        $region53: #{jparser_forward.5} parent=39 // pred_check
          %p1930 = pneg %p191
        $region54: #{jparser_forward.5} parent=39 // pred_check_branch
          %1932 = sbr.rel (%p1930) target = $region56
        $region55: #{jparser_forward.5} parent=39 // pred_region
          %s1933 = smul.u32 %s26, 2
          %s1934 = ssub.s32 1, %s1933
          %s1935 = smul.u32 %s1934, %s27
          %s1936 = smul.u32 8, %s1935
          %s1937 = smul.addr %s1936, 2
          %s1938 = sadd.s32 %s26, %s1937
          %s1939 = smul.addr %s1938, 8
          %s1940 = scalar_lea.vmem %s5, %s1939
          // Predicated region
          $region57: #{jparser_forward.5} parent=55 // pred_check
            _
          $region58: #{jparser_forward.5} parent=55 // pred_check_branch
            %1942 = sbr.rel (0) target = $region60
          $region59: #{jparser_forward.5} parent=55 // pred_region
            // Predicated region
            $region61: #{jparser_forward.5} parent=59 // pred_check
              _
            $region62: #{jparser_forward.5} parent=59 // pred_check_branch
              %1944 = sbr.rel (0) target = $region64
            $region63: #{jparser_forward.5} parent=59 // pred_region
              // Predicated region
              $region76: #{jparser_forward.5} parent=63 // pred_check
                _
              $region77: #{jparser_forward.5} parent=63 // pred_check_branch
                %1974 = sbr.rel (0) target = $region79
              $region78: #{jparser_forward.5} parent=63 // pred_region
                loop: start=0, step=1, limit=1
                $region80: #{jparser_forward.5} parent=78 // loop_pre_header
                  _
                $region81: #{jparser_forward.5} parent=78 // loop_header
                  %s1976 = sphi 0, %s1980
                  %p1977 = scmp.ge.s32.totalorder %s1976, 1
                  %s1981 = sphi %s1929, %s1929
                  %s1982 = sphi %s1940, %s1940
                $region82: #{jparser_forward.5} parent=78 // loop_header_branch
                  %1979 = sbr.rel (%p1977) target = $region86
                $region83: #{jparser_forward.5} parent=78 // loop_body
                  %v1983 = vld [vmem:[%s1981] sm:$0xff]
                  %1984 = vst [vmem:[%s1982] sm:$0xff] %v1983
                  %v1985 = vld [vmem:[%s1981 + $0x8] sm:$0xff]
                  %1986 = vst [vmem:[%s1982 + $0x10] sm:$0xff] %v1985
                  %v1987 = vld [vmem:[%s1981 + $0x10] sm:$0xff]
                  %1988 = vst [vmem:[%s1982 + $0x20] sm:$0xff] %v1987
                  %v1989 = vld [vmem:[%s1981 + $0x18] sm:$0xff]
                  %1990 = vst [vmem:[%s1982 + $0x30] sm:$0xff] %v1989
                  %v1991 = vld [vmem:[%s1981 + $0x20] sm:$0xff]
                  %1992 = vst [vmem:[%s1982 + $0x40] sm:$0xff] %v1991
                  %v1993 = vld [vmem:[%s1981 + $0x28] sm:$0xff]
                  %1994 = vst [vmem:[%s1982 + $0x50] sm:$0xff] %v1993
                  %v1995 = vld [vmem:[%s1981 + $0x30] sm:$0xff]
                  %1996 = vst [vmem:[%s1982 + $0x60] sm:$0xff] %v1995
                  %v1997 = vld [vmem:[%s1981 + $0x38] sm:$0xff]
                  %1998 = vst [vmem:[%s1982 + $0x70] sm:$0xff] %v1997
                $region84: #{jparser_forward.5} parent=78 // loop_footer
                  %s1980 = sadd.s32 1, %s1976
                $region85: #{jparser_forward.5} parent=78 // loop_footer_branch
                  %1975 = sbr.rel target = $region81
                $region86: #{jparser_forward.5} parent=78 // loop_exit
                  _
              $region79: #{jparser_forward.5} parent=63 // pred_fallthru
                _
              // Predicated region
              $region87: #{jparser_forward.5} parent=63 // pred_check
                _
              $region88: #{jparser_forward.5} parent=63 // pred_check_branch
                %2000 = sbr.rel target = $region90
              $region89: #{jparser_forward.5} parent=63 // pred_region
                _
              $region90: #{jparser_forward.5} parent=63 // pred_fallthru
                _
            $region64: #{jparser_forward.5} parent=59 // pred_fallthru
              _
            // Predicated region
            $region65: #{jparser_forward.5} parent=59 // pred_check
              _
            $region66: #{jparser_forward.5} parent=59 // pred_check_branch
              %1946 = sbr.rel target = $region68
            $region67: #{jparser_forward.5} parent=59 // pred_region
              %s1948 = ssub.s32 256, 1
              loop: start=0, step=1, limit=1
              $region69: #{jparser_forward.5} parent=67 // loop_pre_header
                _
              $region70: #{jparser_forward.5} parent=67 // loop_header
                %s1950 = sphi 0, %s1954
                %p1951 = scmp.ge.s32.totalorder %s1950, 1
                %s1955 = sphi %s1929, %s1929
                %s1956 = sphi %s1940, %s1940
              $region71: #{jparser_forward.5} parent=67 // loop_header_branch
                %1953 = sbr.rel (%p1951) target = $region75
              $region72: #{jparser_forward.5} parent=67 // loop_body
                %v1957 = vld [vmem:[%s1955] sm:%s1948]
                %1958 = vst [vmem:[%s1956] sm:%s1948] %v1957
                %v1959 = vld [vmem:[%s1955 + $0x8] sm:%s1948]
                %1960 = vst [vmem:[%s1956 + $0x10] sm:%s1948] %v1959
                %v1961 = vld [vmem:[%s1955 + $0x10] sm:%s1948]
                %1962 = vst [vmem:[%s1956 + $0x20] sm:%s1948] %v1961
                %v1963 = vld [vmem:[%s1955 + $0x18] sm:%s1948]
                %1964 = vst [vmem:[%s1956 + $0x30] sm:%s1948] %v1963
                %v1965 = vld [vmem:[%s1955 + $0x20] sm:%s1948]
                %1966 = vst [vmem:[%s1956 + $0x40] sm:%s1948] %v1965
                %v1967 = vld [vmem:[%s1955 + $0x28] sm:%s1948]
                %1968 = vst [vmem:[%s1956 + $0x50] sm:%s1948] %v1967
                %v1969 = vld [vmem:[%s1955 + $0x30] sm:%s1948]
                %1970 = vst [vmem:[%s1956 + $0x60] sm:%s1948] %v1969
                %v1971 = vld [vmem:[%s1955 + $0x38] sm:%s1948]
                %1972 = vst [vmem:[%s1956 + $0x70] sm:%s1948] %v1971
              $region73: #{jparser_forward.5} parent=67 // loop_footer
                %s1954 = sadd.s32 1, %s1950
              $region74: #{jparser_forward.5} parent=67 // loop_footer_branch
                %1949 = sbr.rel target = $region70
              $region75: #{jparser_forward.5} parent=67 // loop_exit
                _
            $region68: #{jparser_forward.5} parent=59 // pred_fallthru
              _
          $region60: #{jparser_forward.5} parent=55 // pred_fallthru
            _
          %2001 = vnop
        $region56: #{jparser_forward.5} parent=39 // pred_fallthru
          _
      $region40: #{jparser_forward.5} parent=5 // pred_fallthru
        _
      %p2002 = scmp.le.s32.totalorder 2, %s17
      // Predicated region
      $region91: #{jparser_forward.5} parent=5 // pred_check
        %p2003 = pneg %p2002
      $region92: #{jparser_forward.5} parent=5 // pred_check_branch
        %2005 = sbr.rel (%p2003) target = $region94
      $region93: #{jparser_forward.5} parent=5 // pred_region
        %s2006 = ssub.s32 %s17, 2
        // Predicated region
        $region95: #{jparser_forward.5} parent=93 // pred_check
          %p2007 = pneg %p197
        $region96: #{jparser_forward.5} parent=93 // pred_check_branch
          %2009 = sbr.rel (%p2007) target = $region98
        $region97: #{jparser_forward.5} parent=93 // pred_region
          %s2010 = sand.u32 %s182, 1
          %s2011 = sand.u32 %s182, 1
          %s2012 = smul.addr %s2011, 64
          %s2013 = scalar_lea.vmem [#allocation9], %s2012
        $region98: #{jparser_forward.5} parent=93 // pred_fallthru
          _
      $region94: #{jparser_forward.5} parent=5 // pred_fallthru
        _
    $region6: #{jparser_forward.5} parent=1 // loop_footer
      %s21 = sadd.s32 1, %s17
    $region7: #{jparser_forward.5} parent=1 // loop_footer_branch
      %16 = sbr.rel target = $region3
    $region8: #{jparser_forward.5} parent=1 // loop_exit
      _
    %2014 = vsyncpa [#allocation6], 1
    %s2015 = scalar_lea.sflag [#allocation6], 1
    %2016 = vsyncpa %s2015, 1
    %2017 = vsyncpa [#allocation8], 1
    %s2018 = scalar_lea.sflag [#allocation8], 1
    %2019 = vsyncpa %s2018, 1

// kernel: jparser_forward.8
$region0: #{jparser_forward.8}
  #allocation0 [shape = 'u32[]', space=smem, size = 0x4, offset = 0x4, fixed_abs, tag = 'smem constant byte address 0x4 - core index']
  #allocation1 [shape = 'u32[144,128]{1,0:T(1,128)}', space=vmem, size = 0x12000, scoped, tag = 'internal scratch']
  %s0 = inlined_call_operand.vmem [shape: f32[2,128,128], index: 0, kind: input, shape index: {}]
  %s1 = inlined_call_operand.vmem [shape: bf16[128,1024], index: 1, kind: input, shape index: {}]
  %s2 = inlined_call_operand.vmem [shape: f32[2,128,128], index: 2, kind: input, shape index: {}]
  %s3 = inlined_call_operand.vmem [shape: f32[2,8,128,128], index: 3, kind: output, shape index: {}]
  %s4 = sld [smem:[#allocation0]]
  $region45: #{jparser_forward.8} parent=0
    _
  %s6 = ssub.s32 1, %s4
  %s7 = scalar_select 0, %s6, %s4
  loop: start=0, step=1, limit=4
  $region2: #{jparser_forward.8} parent=0 // loop_pre_header
    _
  $region3: #{jparser_forward.8} parent=0 // loop_header
    %s9 = sphi 0, %s13
    %p10 = scmp.ge.s32.totalorder %s9, 4
    %s16 = sphi 0, %s28
    %s17 = sphi 0, %s24
    %s18 = sphi 0, %s16
    %s19 = sphi 0, %s17
    %s20 = sphi 0, %s18
    %s21 = sphi 0, %s19
    %s31 = sphi 0, %s33
    %s34 = sphi 0, %s31
    %s35 = sphi 0, %s34
    %s51 = sphi 0, %s35
    %s57 = sphi 0, %s59
    %s60 = sphi 0, %s57
    %s61 = sphi 0, %s60
    %s77 = sphi 0, %s61
    %s83 = sphi 0, %s85
    %s86 = sphi 0, %s83
    %s87 = sphi 0, %s86
    %s103 = sphi 0, %s87
    %s111 = sphi 0, %s113
    %s114 = sphi 0, %s111
    %s115 = sphi 0, %s114
    %s131 = sphi 0, %s115
  $region4: #{jparser_forward.8} parent=0 // loop_header_branch
    %12 = sbr.rel (%p10) target = $region8
  $region5: #{jparser_forward.8} parent=0 // loop_body
    %s14 = ssub.s32 %s9, 1
    %s15 = ssub.s32 %s9, 2
    %s22 = sadd.s32 1, %s17
    %p23 = scmp.ge.s32.totalorder %s22, 1
    %s24 = scalar_select %p23, 0, %s22
    %s25 = sadd.s32 1, %s16
    %s26 = scalar_select %p23, %s25, %s16
    %p27 = scmp.ge.s32.totalorder %s26, 2
    %s28 = scalar_select %p27, 0, %s26
    %s29 = ssub.s32 %s16, %s28
    %p30 = scmp.eq.s32.totalorder %s29, 0
    %s32 = sadd.s32 %s31, 1
    %s33 = scalar_select %p30, %s31, %s32
    %p36 = pneg %p30
    %p37 = scmp.eq.s32.totalorder %s9, 1
    %p38 = por %p36, %p37
    %p39 = scmp.ne.s32.totalorder %s31, %s34
    %p40 = scmp.eq.s32.totalorder %s9, 0
    %p41 = por %p39, %p40
    %p42 = scmp.ne.s32.totalorder %s31, %s34
    %p43 = scmp.eq.s32.totalorder %s14, 1
    %p44 = por %p42, %p43
    %p45 = scmp.ne.s32.totalorder %s34, %s35
    %p46 = scmp.eq.s32.totalorder %s14, 0
    %p47 = por %p45, %p46
    %p48 = scmp.ne.s32.totalorder %s34, %s35
    %p49 = scmp.eq.s32.totalorder %s15, 1
    %p50 = por %p48, %p49
    %p52 = scmp.ne.s32.totalorder %s35, %s51
    %p53 = scmp.eq.s32.totalorder %s15, 0
    %p54 = por %p52, %p53
    %s55 = ssub.s32 %s17, %s24
    %p56 = scmp.eq.s32.totalorder %s55, 0
    %s58 = sadd.s32 %s57, 1
    %s59 = scalar_select %p56, %s57, %s58
    %p62 = pneg %p56
    %p63 = scmp.eq.s32.totalorder %s9, 1
    %p64 = por %p62, %p63
    %p65 = scmp.ne.s32.totalorder %s57, %s60
    %p66 = scmp.eq.s32.totalorder %s9, 0
    %p67 = por %p65, %p66
    %p68 = scmp.ne.s32.totalorder %s57, %s60
    %p69 = scmp.eq.s32.totalorder %s14, 1
    %p70 = por %p68, %p69
    %p71 = scmp.ne.s32.totalorder %s60, %s61
    %p72 = scmp.eq.s32.totalorder %s14, 0
    %p73 = por %p71, %p72
    %p74 = scmp.ne.s32.totalorder %s60, %s61
    %p75 = scmp.eq.s32.totalorder %s15, 1
    %p76 = por %p74, %p75
    %p78 = scmp.ne.s32.totalorder %s61, %s77
    %p79 = scmp.eq.s32.totalorder %s15, 0
    %p80 = por %p78, %p79
    %s81 = ssub.s32 %s16, %s28
    %p82 = scmp.eq.s32.totalorder %s81, 0
    %s84 = sadd.s32 %s83, 1
    %s85 = scalar_select %p82, %s83, %s84
    %p88 = pneg %p82
    %p89 = scmp.eq.s32.totalorder %s9, 1
    %p90 = por %p88, %p89
    %p91 = scmp.ne.s32.totalorder %s83, %s86
    %p92 = scmp.eq.s32.totalorder %s9, 0
    %p93 = por %p91, %p92
    %p94 = scmp.ne.s32.totalorder %s83, %s86
    %p95 = scmp.eq.s32.totalorder %s14, 1
    %p96 = por %p94, %p95
    %p97 = scmp.ne.s32.totalorder %s86, %s87
    %p98 = scmp.eq.s32.totalorder %s14, 0
    %p99 = por %p97, %p98
    %p100 = scmp.ne.s32.totalorder %s86, %s87
    %p101 = scmp.eq.s32.totalorder %s15, 1
    %p102 = por %p100, %p101
    %p104 = scmp.ne.s32.totalorder %s87, %s103
    %p105 = scmp.eq.s32.totalorder %s15, 0
    %p106 = por %p104, %p105
    %s107 = ssub.s32 %s16, %s28
    %s108 = ssub.s32 %s17, %s24
    %s109 = sor.u32 %s107, %s108
    %p110 = scmp.eq.s32.totalorder %s109, 0
    %s112 = sadd.s32 %s111, 1
    %s113 = scalar_select %p110, %s111, %s112
    %p116 = pneg %p110
    %p117 = scmp.eq.s32.totalorder %s9, 1
    %p118 = por %p116, %p117
    %p119 = scmp.ne.s32.totalorder %s111, %s114
    %p120 = scmp.eq.s32.totalorder %s9, 0
    %p121 = por %p119, %p120
    %p122 = scmp.ne.s32.totalorder %s111, %s114
    %p123 = scmp.eq.s32.totalorder %s14, 1
    %p124 = por %p122, %p123
    %p125 = scmp.ne.s32.totalorder %s114, %s115
    %p126 = scmp.eq.s32.totalorder %s14, 0
    %p127 = por %p125, %p126
    %p128 = scmp.ne.s32.totalorder %s114, %s115
    %p129 = scmp.eq.s32.totalorder %s15, 1
    %p130 = por %p128, %p129
    %p132 = scmp.ne.s32.totalorder %s115, %s131
    %p133 = scmp.eq.s32.totalorder %s15, 0
    %p134 = por %p132, %p133
    %p135 = scmp.le.s32.totalorder 1, %s9
    %p136 = scmp.lt.s32.totalorder %s9, 3
    %p137 = pnand %p135, %p136
    %p138 = pneg %p137
    // Predicated region
    $region9: #{jparser_forward.8} parent=5 // pred_check
      _
    $region10: #{jparser_forward.8} parent=5 // pred_check_branch
      %140 = sbr.rel (%p137) target = $region12
    $region11: #{jparser_forward.8} parent=5 // pred_region
      %s141 = ssub.s32 %s9, 1
      // Predicated region
      $region13: #{jparser_forward.8} parent=11 // pred_check
        %p142 = pneg %p73
      $region14: #{jparser_forward.8} parent=11 // pred_check_branch
        %144 = sbr.rel (%p142) target = $region16
      $region15: #{jparser_forward.8} parent=11 // pred_region
        %s145 = smul.u32 8, %s19
        %p146 = scmp.lt.s32.totalorder %s145, 7
        %s147 = scalar_select %p146, %s145, 7
        %s148 = smul.addr %s147, 4
        %s149 = scalar_lea.vmem %s1, %s148
        %s150 = smul.u32 8, %s19
      $region16: #{jparser_forward.8} parent=11 // pred_fallthru
        _
    $region12: #{jparser_forward.8} parent=5 // pred_fallthru
      _
    %p151 = scmp.lt.s32.totalorder %s9, 2
    // Predicated region
    $region17: #{jparser_forward.8} parent=5 // pred_check
      %p152 = pneg %p151
    $region18: #{jparser_forward.8} parent=5 // pred_check_branch
      %154 = sbr.rel (%p152) target = $region20
    $region19: #{jparser_forward.8} parent=5 // pred_region
      // Predicated region
      $region21: #{jparser_forward.8} parent=19 // pred_check
        %p155 = pneg %p41
      $region22: #{jparser_forward.8} parent=19 // pred_check_branch
        %157 = sbr.rel (%p155) target = $region24
      $region23: #{jparser_forward.8} parent=19 // pred_region
        %p158 = scmp.lt.s32.totalorder %s16, 1
        %s159 = scalar_select %p158, %s16, 1
        %s160 = smul.addr %s159, 16
        %s161 = smul.addr %s160, 8
        %s162 = scalar_lea.vmem %s0, %s161
      $region24: #{jparser_forward.8} parent=19 // pred_fallthru
        _
      // Predicated region
      $region25: #{jparser_forward.8} parent=19 // pred_check
        %p163 = pneg %p93
      $region26: #{jparser_forward.8} parent=19 // pred_check_branch
        %165 = sbr.rel (%p163) target = $region28
      $region27: #{jparser_forward.8} parent=19 // pred_region
        %p166 = scmp.lt.s32.totalorder %s16, 1
        %s167 = scalar_select %p166, %s16, 1
        %s168 = smul.addr %s167, 16
        %s169 = smul.addr %s168, 8
        %s170 = scalar_lea.vmem %s2, %s169
      $region28: #{jparser_forward.8} parent=19 // pred_fallthru
        _
    $region20: #{jparser_forward.8} parent=5 // pred_fallthru
      _
    %p171 = scmp.le.s32.totalorder 1, %s9
    %p172 = scmp.lt.s32.totalorder %s9, 3
    %p173 = pnand %p171, %p172
    %p174 = pneg %p173
    // Predicated region
    $region29: #{jparser_forward.8} parent=5 // pred_check
      _
    $region30: #{jparser_forward.8} parent=5 // pred_check_branch
      %176 = sbr.rel (%p173) target = $region32
    $region31: #{jparser_forward.8} parent=5 // pred_region
      %s177 = ssub.s32 %s9, 1
      %p178 = scmp.lt.s32.totalorder %s18, 1
      %s179 = scalar_select %p178, %s18, 1
      %s180 = smul.addr %s179, 16
      %s181 = smul.addr %s180, 8
      %s182 = scalar_lea.vmem %s0, %s181
      %p183 = pneg %p47
      %p184 = pneg %p44
      %s185 = smul.u32 8, %s19
      %p186 = scmp.lt.s32.totalorder %s185, 7
      %s187 = scalar_select %p186, %s185, 7
      %s188 = smul.addr %s187, 4
      %s189 = scalar_lea.vmem %s1, %s188
      %p190 = pneg %p73
      %p191 = pneg %p70
      %p192 = scmp.lt.s32.totalorder %s18, 1
      %s193 = scalar_select %p192, %s18, 1
      %s194 = smul.addr %s193, 16
      %s195 = smul.addr %s194, 8
      %s196 = scalar_lea.vmem %s2, %s195
      %p197 = pneg %p99
      %p198 = pneg %p96
      %p199 = pneg %p127
      %p200 = pneg %p124
      %s201 = smul.u32 8, %s19
      %p202 = scmp.lt.s32.totalorder %s18, 1
      %s203 = scalar_select %p202, %s18, 1
      %p204 = scmp.lt.s32.totalorder %s201, 7
      %s205 = scalar_select %p204, %s201, 7
      %s206 = smul.addr %s205, 16
      %s207 = smul.addr %s203, 128
      %s208 = sadd.s32 %s206, %s207
      %s209 = smul.addr %s208, 8
      %s210 = scalar_lea.vmem %s3, %s209
      %p211 = scmp.lt.s32.totalorder %s18, 1
      %s212 = scalar_select %p211, %s18, 1
      %s213 = smul.addr %s212, 16
      %s214 = smul.addr %s213, 8
      %s215 = scalar_lea.vmem %s0, %s214
      %s216 = smul.u32 8, %s19
      %p217 = scmp.lt.s32.totalorder %s216, 7
      %s218 = scalar_select %p217, %s216, 7
      %s219 = smul.addr %s218, 4
      %s220 = scalar_lea.vmem %s1, %s219
      %s221 = smul.u32 8, %s19
      %p222 = scmp.lt.s32.totalorder %s18, 1
      %s223 = scalar_select %p222, %s18, 1
      %s224 = smul.addr %s223, 16
      %s225 = smul.addr %s224, 8
      %s226 = scalar_lea.vmem %s2, %s225
      %s227 = smul.u32 8, %s19
      %p228 = scmp.lt.s32.totalorder %s18, 1
      %s229 = scalar_select %p228, %s18, 1
      %p230 = scmp.lt.s32.totalorder %s227, 7
      %s231 = scalar_select %p230, %s227, 7
      %s232 = smul.addr %s231, 16
      %s233 = smul.addr %s229, 128
      %s234 = sadd.s32 %s232, %s233
      %s235 = smul.addr %s234, 8
      %s236 = scalar_lea.vmem %s3, %s235
      %s237 = smul.u32 8, %s19
      %v239 = vld [vmem:[%s215] sm:$0xff]
      %v240 = vld [vmem:[%s215 + $0x8] sm:$0xff]
      %v241 = vld [vmem:[%s215 + $0x10] sm:$0xff]
      %v242 = vld [vmem:[%s215 + $0x18] sm:$0xff]
      %v243 = vld [vmem:[%s215 + $0x20] sm:$0xff]
      %v244 = vld [vmem:[%s215 + $0x28] sm:$0xff]
      %v245 = vld [vmem:[%s215 + $0x30] sm:$0xff]
      %v246 = vld [vmem:[%s215 + $0x38] sm:$0xff]
      %v247 = vld [vmem:[%s215 + $0x40] sm:$0xff]
      %v248 = vld [vmem:[%s215 + $0x48] sm:$0xff]
      %v249 = vld [vmem:[%s215 + $0x50] sm:$0xff]
      %v250 = vld [vmem:[%s215 + $0x58] sm:$0xff]
      %v251 = vld [vmem:[%s215 + $0x60] sm:$0xff]
      %v252 = vld [vmem:[%s215 + $0x68] sm:$0xff]
      %v253 = vld [vmem:[%s215 + $0x70] sm:$0xff]
      %v254 = vld [vmem:[%s215 + $0x78] sm:$0xff]
      %v255 = vpack.c.bf16 %v240, %v239
      %v256 = vpack.c.bf16 %v242, %v241
      %v257 = vpack.c.bf16 %v244, %v243
      %v258 = vpack.c.bf16 %v246, %v245
      %v259 = vpack.c.bf16 %v248, %v247
      %v260 = vpack.c.bf16 %v250, %v249
      %v261 = vpack.c.bf16 %v252, %v251
      %v262 = vpack.c.bf16 %v254, %v253
      %v263 = vld [vmem:[%s226] sm:$0xff]
      %v264 = vld [vmem:[%s226 + $0x8] sm:$0xff]
      %v265 = vld [vmem:[%s226 + $0x10] sm:$0xff]
      %v266 = vld [vmem:[%s226 + $0x18] sm:$0xff]
      %v267 = vld [vmem:[%s226 + $0x20] sm:$0xff]
      %v268 = vld [vmem:[%s226 + $0x28] sm:$0xff]
      %v269 = vld [vmem:[%s226 + $0x30] sm:$0xff]
      %v270 = vld [vmem:[%s226 + $0x38] sm:$0xff]
      %v271 = vld [vmem:[%s226 + $0x40] sm:$0xff]
      %v272 = vld [vmem:[%s226 + $0x48] sm:$0xff]
      %v273 = vld [vmem:[%s226 + $0x50] sm:$0xff]
      %v274 = vld [vmem:[%s226 + $0x58] sm:$0xff]
      %v275 = vld [vmem:[%s226 + $0x60] sm:$0xff]
      %v276 = vld [vmem:[%s226 + $0x68] sm:$0xff]
      %v277 = vld [vmem:[%s226 + $0x70] sm:$0xff]
      %v278 = vld [vmem:[%s226 + $0x78] sm:$0xff]
      %v279 = vpack.c.bf16 %v264, %v263
      %v280 = vpack.c.bf16 %v266, %v265
      %v281 = vpack.c.bf16 %v268, %v267
      %v282 = vpack.c.bf16 %v270, %v269
      %v283 = vpack.c.bf16 %v272, %v271
      %v284 = vpack.c.bf16 %v274, %v273
      %v285 = vpack.c.bf16 %v276, %v275
      %v286 = vpack.c.bf16 %v278, %v277
      %v287 = vld [vmem:[%s220] sm:$0xff]
      %v288 = vld [vmem:[%s220 + $0x8] sm:$0xff]
      %v289 = vld [vmem:[%s220 + $0x10] sm:$0xff]
      %v290 = vld [vmem:[%s220 + $0x18] sm:$0xff]
      %v291 = vld [vmem:[%s220 + $0x20] sm:$0xff]
      %v292 = vld [vmem:[%s220 + $0x28] sm:$0xff]
      %v293 = vld [vmem:[%s220 + $0x30] sm:$0xff]
      %v294 = vld [vmem:[%s220 + $0x38] sm:$0xff]
      %v295 = vld [vmem:[%s220 + $0x40] sm:$0xff]
      %v296 = vld [vmem:[%s220 + $0x48] sm:$0xff]
      %v297 = vld [vmem:[%s220 + $0x50] sm:$0xff]
      %v298 = vld [vmem:[%s220 + $0x58] sm:$0xff]
      %v299 = vld [vmem:[%s220 + $0x60] sm:$0xff]
      %v300 = vld [vmem:[%s220 + $0x68] sm:$0xff]
      %v301 = vld [vmem:[%s220 + $0x70] sm:$0xff]
      %v302 = vld [vmem:[%s220 + $0x78] sm:$0xff]
      %v303 = vld [vmem:[%s220 + $0x80] sm:$0xff]
      %v304 = vld [vmem:[%s220 + $0x88] sm:$0xff]
      %v305 = vld [vmem:[%s220 + $0x90] sm:$0xff]
      %v306 = vld [vmem:[%s220 + $0x98] sm:$0xff]
      %v307 = vld [vmem:[%s220 + $0xa0] sm:$0xff]
      %v308 = vld [vmem:[%s220 + $0xa8] sm:$0xff]
      %v309 = vld [vmem:[%s220 + $0xb0] sm:$0xff]
      %v310 = vld [vmem:[%s220 + $0xb8] sm:$0xff]
      %v311 = vld [vmem:[%s220 + $0xc0] sm:$0xff]
      %v312 = vld [vmem:[%s220 + $0xc8] sm:$0xff]
      %v313 = vld [vmem:[%s220 + $0xd0] sm:$0xff]
      %v314 = vld [vmem:[%s220 + $0xd8] sm:$0xff]
      %v315 = vld [vmem:[%s220 + $0xe0] sm:$0xff]
      %v316 = vld [vmem:[%s220 + $0xe8] sm:$0xff]
      %v317 = vld [vmem:[%s220 + $0xf0] sm:$0xff]
      %v318 = vld [vmem:[%s220 + $0xf8] sm:$0xff]
      %v319 = vld [vmem:[%s220 + $0x100] sm:$0xff]
      %v320 = vld [vmem:[%s220 + $0x108] sm:$0xff]
      %v321 = vld [vmem:[%s220 + $0x110] sm:$0xff]
      %v322 = vld [vmem:[%s220 + $0x118] sm:$0xff]
      %v323 = vld [vmem:[%s220 + $0x120] sm:$0xff]
      %v324 = vld [vmem:[%s220 + $0x128] sm:$0xff]
      %v325 = vld [vmem:[%s220 + $0x130] sm:$0xff]
      %v326 = vld [vmem:[%s220 + $0x138] sm:$0xff]
      %v327 = vld [vmem:[%s220 + $0x140] sm:$0xff]
      %v328 = vld [vmem:[%s220 + $0x148] sm:$0xff]
      %v329 = vld [vmem:[%s220 + $0x150] sm:$0xff]
      %v330 = vld [vmem:[%s220 + $0x158] sm:$0xff]
      %v331 = vld [vmem:[%s220 + $0x160] sm:$0xff]
      %v332 = vld [vmem:[%s220 + $0x168] sm:$0xff]
      %v333 = vld [vmem:[%s220 + $0x170] sm:$0xff]
      %v334 = vld [vmem:[%s220 + $0x178] sm:$0xff]
      %v335 = vld [vmem:[%s220 + $0x180] sm:$0xff]
      %v336 = vld [vmem:[%s220 + $0x188] sm:$0xff]
      %v337 = vld [vmem:[%s220 + $0x190] sm:$0xff]
      %v338 = vld [vmem:[%s220 + $0x198] sm:$0xff]
      %v339 = vld [vmem:[%s220 + $0x1a0] sm:$0xff]
      %v340 = vld [vmem:[%s220 + $0x1a8] sm:$0xff]
      %v341 = vld [vmem:[%s220 + $0x1b0] sm:$0xff]
      %v342 = vld [vmem:[%s220 + $0x1b8] sm:$0xff]
      %v343 = vld [vmem:[%s220 + $0x1c0] sm:$0xff]
      %v344 = vld [vmem:[%s220 + $0x1c8] sm:$0xff]
      %v345 = vld [vmem:[%s220 + $0x1d0] sm:$0xff]
      %v346 = vld [vmem:[%s220 + $0x1d8] sm:$0xff]
      %v347 = vld [vmem:[%s220 + $0x1e0] sm:$0xff]
      %v348 = vld [vmem:[%s220 + $0x1e8] sm:$0xff]
      %v349 = vld [vmem:[%s220 + $0x1f0] sm:$0xff]
      %v350 = vld [vmem:[%s220 + $0x1f8] sm:$0xff]
      %v415 = vunpack.c.l.b16 %v287
      %v416 = vunpack.c.h.b16 %v287
      %v417 = vunpack.c.l.b16 %v288
      %v418 = vunpack.c.h.b16 %v288
      %v419 = vunpack.c.l.b16 %v289
      %v420 = vunpack.c.h.b16 %v289
      %v421 = vunpack.c.l.b16 %v290
      %v422 = vunpack.c.h.b16 %v290
      %v423 = vunpack.c.l.b16 %v291
      %v424 = vunpack.c.h.b16 %v291
      %v425 = vunpack.c.l.b16 %v292
      %v426 = vunpack.c.h.b16 %v292
      %v427 = vunpack.c.l.b16 %v293
      %v428 = vunpack.c.h.b16 %v293
      %v429 = vunpack.c.l.b16 %v294
      %v430 = vunpack.c.h.b16 %v294
      %v431 = vunpack.c.l.b16 %v295
      %v432 = vunpack.c.h.b16 %v295
      %v433 = vunpack.c.l.b16 %v296
      %v434 = vunpack.c.h.b16 %v296
      %v435 = vunpack.c.l.b16 %v297
      %v436 = vunpack.c.h.b16 %v297
      %v437 = vunpack.c.l.b16 %v298
      %v438 = vunpack.c.h.b16 %v298
      %v439 = vunpack.c.l.b16 %v299
      %v440 = vunpack.c.h.b16 %v299
      %v441 = vunpack.c.l.b16 %v300
      %v442 = vunpack.c.h.b16 %v300
      %v443 = vunpack.c.l.b16 %v301
      %v444 = vunpack.c.h.b16 %v301
      %v445 = vunpack.c.l.b16 %v302
      %v446 = vunpack.c.h.b16 %v302
      %v447 = vunpack.c.l.b16 %v303
      %v448 = vunpack.c.h.b16 %v303
      %v449 = vunpack.c.l.b16 %v304
      %v450 = vunpack.c.h.b16 %v304
      %v451 = vunpack.c.l.b16 %v305
      %v452 = vunpack.c.h.b16 %v305
      %v453 = vunpack.c.l.b16 %v306
      %v454 = vunpack.c.h.b16 %v306
      %v455 = vunpack.c.l.b16 %v307
      %v456 = vunpack.c.h.b16 %v307
      %v457 = vunpack.c.l.b16 %v308
      %v458 = vunpack.c.h.b16 %v308
      %v459 = vunpack.c.l.b16 %v309
      %v460 = vunpack.c.h.b16 %v309
      %v461 = vunpack.c.l.b16 %v310
      %v462 = vunpack.c.h.b16 %v310
      %v463 = vunpack.c.l.b16 %v311
      %v464 = vunpack.c.h.b16 %v311
      %v465 = vunpack.c.l.b16 %v312
      %v466 = vunpack.c.h.b16 %v312
      %v467 = vunpack.c.l.b16 %v313
      %v468 = vunpack.c.h.b16 %v313
      %v469 = vunpack.c.l.b16 %v314
      %v470 = vunpack.c.h.b16 %v314
      %v471 = vunpack.c.l.b16 %v315
      %v472 = vunpack.c.h.b16 %v315
      %v473 = vunpack.c.l.b16 %v316
      %v474 = vunpack.c.h.b16 %v316
      %v475 = vunpack.c.l.b16 %v317
      %v476 = vunpack.c.h.b16 %v317
      %v477 = vunpack.c.l.b16 %v318
      %v478 = vunpack.c.h.b16 %v318
      %v479 = vunpack.c.l.b16 %v319
      %v480 = vunpack.c.h.b16 %v319
      %v481 = vunpack.c.l.b16 %v320
      %v482 = vunpack.c.h.b16 %v320
      %v483 = vunpack.c.l.b16 %v321
      %v484 = vunpack.c.h.b16 %v321
      %v485 = vunpack.c.l.b16 %v322
      %v486 = vunpack.c.h.b16 %v322
      %v487 = vunpack.c.l.b16 %v323
      %v488 = vunpack.c.h.b16 %v323
      %v489 = vunpack.c.l.b16 %v324
      %v490 = vunpack.c.h.b16 %v324
      %v491 = vunpack.c.l.b16 %v325
      %v492 = vunpack.c.h.b16 %v325
      %v493 = vunpack.c.l.b16 %v326
      %v494 = vunpack.c.h.b16 %v326
      %v495 = vunpack.c.l.b16 %v327
      %v496 = vunpack.c.h.b16 %v327
      %v497 = vunpack.c.l.b16 %v328
      %v498 = vunpack.c.h.b16 %v328
      %v499 = vunpack.c.l.b16 %v329
      %v500 = vunpack.c.h.b16 %v329
      %v501 = vunpack.c.l.b16 %v330
      %v502 = vunpack.c.h.b16 %v330
      %v503 = vunpack.c.l.b16 %v331
      %v504 = vunpack.c.h.b16 %v331
      %v505 = vunpack.c.l.b16 %v332
      %v506 = vunpack.c.h.b16 %v332
      %v507 = vunpack.c.l.b16 %v333
      %v508 = vunpack.c.h.b16 %v333
      %v509 = vunpack.c.l.b16 %v334
      %v510 = vunpack.c.h.b16 %v334
      %v511 = vunpack.c.l.b16 %v335
      %v512 = vunpack.c.h.b16 %v335
      %v513 = vunpack.c.l.b16 %v336
      %v514 = vunpack.c.h.b16 %v336
      %v515 = vunpack.c.l.b16 %v337
      %v516 = vunpack.c.h.b16 %v337
      %v517 = vunpack.c.l.b16 %v338
      %v518 = vunpack.c.h.b16 %v338
      %v519 = vunpack.c.l.b16 %v339
      %v520 = vunpack.c.h.b16 %v339
      %v521 = vunpack.c.l.b16 %v340
      %v522 = vunpack.c.h.b16 %v340
      %v523 = vunpack.c.l.b16 %v341
      %v524 = vunpack.c.h.b16 %v341
      %v525 = vunpack.c.l.b16 %v342
      %v526 = vunpack.c.h.b16 %v342
      %v527 = vunpack.c.l.b16 %v343
      %v528 = vunpack.c.h.b16 %v343
      %v529 = vunpack.c.l.b16 %v344
      %v530 = vunpack.c.h.b16 %v344
      %v531 = vunpack.c.l.b16 %v345
      %v532 = vunpack.c.h.b16 %v345
      %v533 = vunpack.c.l.b16 %v346
      %v534 = vunpack.c.h.b16 %v346
      %v535 = vunpack.c.l.b16 %v347
      %v536 = vunpack.c.h.b16 %v347
      %v537 = vunpack.c.l.b16 %v348
      %v538 = vunpack.c.h.b16 %v348
      %v539 = vunpack.c.l.b16 %v349
      %v540 = vunpack.c.h.b16 %v349
      %v541 = vunpack.c.l.b16 %v350
      %v542 = vunpack.c.h.b16 %v350
      %v543 = vpack.c.b16 %v423, %v415
      %v544 = vpack.c.b16 %v424, %v416
      %v545 = vpack.c.b16 %v425, %v417
      %v546 = vpack.c.b16 %v426, %v418
      %v547 = vpack.c.b16 %v427, %v419
      %v548 = vpack.c.b16 %v428, %v420
      %v549 = vpack.c.b16 %v429, %v421
      %v550 = vpack.c.b16 %v430, %v422
      %v551 = vpack.c.b16 %v439, %v431
      %v552 = vpack.c.b16 %v440, %v432
      %v553 = vpack.c.b16 %v441, %v433
      %v554 = vpack.c.b16 %v442, %v434
      %v555 = vpack.c.b16 %v443, %v435
      %v556 = vpack.c.b16 %v444, %v436
      %v557 = vpack.c.b16 %v445, %v437
      %v558 = vpack.c.b16 %v446, %v438
      %v559 = vpack.c.b16 %v455, %v447
      %v560 = vpack.c.b16 %v456, %v448
      %v561 = vpack.c.b16 %v457, %v449
      %v562 = vpack.c.b16 %v458, %v450
      %v563 = vpack.c.b16 %v459, %v451
      %v564 = vpack.c.b16 %v460, %v452
      %v565 = vpack.c.b16 %v461, %v453
      %v566 = vpack.c.b16 %v462, %v454
      %v567 = vpack.c.b16 %v471, %v463
      %v568 = vpack.c.b16 %v472, %v464
      %v569 = vpack.c.b16 %v473, %v465
      %v570 = vpack.c.b16 %v474, %v466
      %v571 = vpack.c.b16 %v475, %v467
      %v572 = vpack.c.b16 %v476, %v468
      %v573 = vpack.c.b16 %v477, %v469
      %v574 = vpack.c.b16 %v478, %v470
      %v575 = vpack.c.b16 %v487, %v479
      %v576 = vpack.c.b16 %v488, %v480
      %v577 = vpack.c.b16 %v489, %v481
      %v578 = vpack.c.b16 %v490, %v482
      %v579 = vpack.c.b16 %v491, %v483
      %v580 = vpack.c.b16 %v492, %v484
      %v581 = vpack.c.b16 %v493, %v485
      %v582 = vpack.c.b16 %v494, %v486
      %v583 = vpack.c.b16 %v503, %v495
      %v584 = vpack.c.b16 %v504, %v496
      %v585 = vpack.c.b16 %v505, %v497
      %v586 = vpack.c.b16 %v506, %v498
      %v587 = vpack.c.b16 %v507, %v499
      %v588 = vpack.c.b16 %v508, %v500
      %v589 = vpack.c.b16 %v509, %v501
      %v590 = vpack.c.b16 %v510, %v502
      %v591 = vpack.c.b16 %v519, %v511
      %v592 = vpack.c.b16 %v520, %v512
      %v593 = vpack.c.b16 %v521, %v513
      %v594 = vpack.c.b16 %v522, %v514
      %v595 = vpack.c.b16 %v523, %v515
      %v596 = vpack.c.b16 %v524, %v516
      %v597 = vpack.c.b16 %v525, %v517
      %v598 = vpack.c.b16 %v526, %v518
      %v599 = vpack.c.b16 %v535, %v527
      %v600 = vpack.c.b16 %v536, %v528
      %v601 = vpack.c.b16 %v537, %v529
      %v602 = vpack.c.b16 %v538, %v530
      %v603 = vpack.c.b16 %v539, %v531
      %v604 = vpack.c.b16 %v540, %v532
      %v605 = vpack.c.b16 %v541, %v533
      %v606 = vpack.c.b16 %v542, %v534
      %671 = vmatprep.subr.bf16.mxu0 %v600
      %672 = vmatpush1.bf16.msra.mxu0 %v599
      %673 = vmatprep.subr.bf16.mxu0 %v592
      %674 = vmatpush1.bf16.msra.mxu0 %v591
      %675 = vmatprep.subr.bf16.mxu0 %v584
      %676 = vmatpush1.bf16.msra.mxu0 %v583
      %677 = vmatprep.subr.bf16.mxu0 %v576
      %678 = vmatpush1.bf16.msra.mxu0 %v575
      %679 = vmatprep.subr.bf16.mxu0 %v568
      %680 = vmatpush1.bf16.msra.mxu0 %v567
      %681 = vmatprep.subr.bf16.mxu0 %v560
      %682 = vmatpush1.bf16.msra.mxu0 %v559
      %683 = vmatprep.subr.bf16.mxu0 %v552
      %684 = vmatpush1.bf16.msra.mxu0 %v551
      %685 = vmatprep.subr.bf16.mxu0 %v544
      %686 = vmatpush1.bf16.msra.mxu0 %v543
      %687 = vmatprep.subr.bf16.mxu0 0
      %688 = vmatpush2.bf16.msra.mxu0 0
      %689 = vmatprep.subr.bf16.mxu0 0
      %690 = vmatpush2.bf16.msra.mxu0 0
      %691 = vmatprep.subr.bf16.mxu0 0
      %692 = vmatpush2.bf16.msra.mxu0 0
      %693 = vmatprep.subr.bf16.mxu0 0
      %694 = vmatpush2.bf16.msra.mxu0 0
      %695 = vmatprep.subr.bf16.mxu0 0
      %696 = vmatpush2.bf16.msra.mxu0 0
      %697 = vmatprep.subr.bf16.mxu0 0
      %698 = vmatpush2.bf16.msra.mxu0 0
      %699 = vmatprep.subr.bf16.mxu0 0
      %700 = vmatpush2.bf16.msra.mxu0 0
      %701 = vmatprep.subr.bf16.mxu0 0
      %702 = vmatpush2.bf16.msra.mxu0 0
      %703 = vmatprep.mubr.bf16.mxu0 0
      %704 = vmatmul.mubr.bf16.gmra.mxu0 %v255
      %v705 = vpop.f32.mrf.mxu0
      %v706 = vadd.f32 0.0, %v705
      %v707 = vpop.f32.mrf.mxu0
      %v708 = vadd.f32 0.0, %v707
      %v709 = vpop.f32.mrf.mxu0
      %v710 = vadd.f32 0.0, %v709
      %v711 = vpop.f32.mrf.mxu0
      %v712 = vadd.f32 0.0, %v711
      %713 = vmatprep.mubr.bf16.mxu0 0
      %714 = vmatmul.mubr.bf16.gmra.mxu0 %v256
      %v715 = vpop.f32.mrf.mxu0
      %v716 = vadd.f32 0.0, %v715
      %v717 = vpop.f32.mrf.mxu0
      %v718 = vadd.f32 0.0, %v717
      %v719 = vpop.f32.mrf.mxu0
      %v720 = vadd.f32 0.0, %v719
      %v721 = vpop.f32.mrf.mxu0
      %v722 = vadd.f32 0.0, %v721
      %723 = vmatprep.mubr.bf16.mxu0 0
      %724 = vmatmul.mubr.bf16.gmra.mxu0 %v257
      %v725 = vpop.f32.mrf.mxu0
      %v726 = vadd.f32 0.0, %v725
      %v727 = vpop.f32.mrf.mxu0
      %v728 = vadd.f32 0.0, %v727
      %v729 = vpop.f32.mrf.mxu0
      %v730 = vadd.f32 0.0, %v729
      %v731 = vpop.f32.mrf.mxu0
      %v732 = vadd.f32 0.0, %v731
      %733 = vmatprep.mubr.bf16.mxu0 0
      %734 = vmatmul.mubr.bf16.gmra.mxu0 %v258
      %v735 = vpop.f32.mrf.mxu0
      %v736 = vadd.f32 0.0, %v735
      %v737 = vpop.f32.mrf.mxu0
      %v738 = vadd.f32 0.0, %v737
      %v739 = vpop.f32.mrf.mxu0
      %v740 = vadd.f32 0.0, %v739
      %v741 = vpop.f32.mrf.mxu0
      %v742 = vadd.f32 0.0, %v741
      %743 = vmatprep.mubr.bf16.mxu0 0
      %744 = vmatmul.mubr.bf16.gmra.mxu0 %v259
      %v745 = vpop.f32.mrf.mxu0
      %v746 = vadd.f32 0.0, %v745
      %v747 = vpop.f32.mrf.mxu0
      %v748 = vadd.f32 0.0, %v747
      %v749 = vpop.f32.mrf.mxu0
      %v750 = vadd.f32 0.0, %v749
      %v751 = vpop.f32.mrf.mxu0
      %v752 = vadd.f32 0.0, %v751
      %753 = vmatprep.mubr.bf16.mxu0 0
      %754 = vmatmul.mubr.bf16.gmra.mxu0 %v260
      %v755 = vpop.f32.mrf.mxu0
      %v756 = vadd.f32 0.0, %v755
      %v757 = vpop.f32.mrf.mxu0
      %v758 = vadd.f32 0.0, %v757
      %v759 = vpop.f32.mrf.mxu0
      %v760 = vadd.f32 0.0, %v759
      %v761 = vpop.f32.mrf.mxu0
      %v762 = vadd.f32 0.0, %v761
      %763 = vmatprep.mubr.bf16.mxu0 0
      %764 = vmatmul.mubr.bf16.gmra.mxu0 %v261
      %v765 = vpop.f32.mrf.mxu0
      %v766 = vadd.f32 0.0, %v765
      %v767 = vpop.f32.mrf.mxu0
      %v768 = vadd.f32 0.0, %v767
      %v769 = vpop.f32.mrf.mxu0
      %v770 = vadd.f32 0.0, %v769
      %v771 = vpop.f32.mrf.mxu0
      %v772 = vadd.f32 0.0, %v771
      %773 = vmatprep.mubr.bf16.mxu0 0
      %774 = vmatmul.mubr.bf16.gmra.mxu0 %v262
      %v775 = vpop.f32.mrf.mxu0
      %v776 = vadd.f32 0.0, %v775
      %v777 = vpop.f32.mrf.mxu0
      %v778 = vadd.f32 0.0, %v777
      %v779 = vpop.f32.mrf.mxu0
      %v780 = vadd.f32 0.0, %v779
      %v781 = vpop.f32.mrf.mxu0
      %v782 = vadd.f32 0.0, %v781
      %783 = vdwg.mxu0
      %784 = vmatprep.subr.bf16.mxu0 %v602
      %785 = vmatpush1.bf16.msra.mxu0 %v601
      %786 = vmatprep.subr.bf16.mxu0 %v594
      %787 = vmatpush1.bf16.msra.mxu0 %v593
      %788 = vmatprep.subr.bf16.mxu0 %v586
      %789 = vmatpush1.bf16.msra.mxu0 %v585
      %790 = vmatprep.subr.bf16.mxu0 %v578
      %791 = vmatpush1.bf16.msra.mxu0 %v577
      %792 = vmatprep.subr.bf16.mxu0 %v570
      %793 = vmatpush1.bf16.msra.mxu0 %v569
      %794 = vmatprep.subr.bf16.mxu0 %v562
      %795 = vmatpush1.bf16.msra.mxu0 %v561
      %796 = vmatprep.subr.bf16.mxu0 %v554
      %797 = vmatpush1.bf16.msra.mxu0 %v553
      %798 = vmatprep.subr.bf16.mxu0 %v546
      %799 = vmatpush1.bf16.msra.mxu0 %v545
      %800 = vmatprep.subr.bf16.mxu0 0
      %801 = vmatpush2.bf16.msra.mxu0 0
      %802 = vmatprep.subr.bf16.mxu0 0
      %803 = vmatpush2.bf16.msra.mxu0 0
      %804 = vmatprep.subr.bf16.mxu0 0
      %805 = vmatpush2.bf16.msra.mxu0 0
      %806 = vmatprep.subr.bf16.mxu0 0
      %807 = vmatpush2.bf16.msra.mxu0 0
      %808 = vmatprep.subr.bf16.mxu0 0
      %809 = vmatpush2.bf16.msra.mxu0 0
      %810 = vmatprep.subr.bf16.mxu0 0
      %811 = vmatpush2.bf16.msra.mxu0 0
      %812 = vmatprep.subr.bf16.mxu0 0
      %813 = vmatpush2.bf16.msra.mxu0 0
      %814 = vmatprep.subr.bf16.mxu0 0
      %815 = vmatpush2.bf16.msra.mxu0 0
      %816 = vmatprep.mubr.bf16.mxu0 0
      %817 = vmatmul.mubr.bf16.gmra.mxu0 %v255
      %v818 = vpop.f32.mrf.mxu0
      %v819 = vadd.f32 0.0, %v818
      %v820 = vpop.f32.mrf.mxu0
      %v821 = vadd.f32 0.0, %v820
      %v822 = vpop.f32.mrf.mxu0
      %v823 = vadd.f32 0.0, %v822
      %v824 = vpop.f32.mrf.mxu0
      %v825 = vadd.f32 0.0, %v824
      %826 = vmatprep.mubr.bf16.mxu0 0
      %827 = vmatmul.mubr.bf16.gmra.mxu0 %v256
      %v828 = vpop.f32.mrf.mxu0
      %v829 = vadd.f32 0.0, %v828
      %v830 = vpop.f32.mrf.mxu0
      %v831 = vadd.f32 0.0, %v830
      %v832 = vpop.f32.mrf.mxu0
      %v833 = vadd.f32 0.0, %v832
      %v834 = vpop.f32.mrf.mxu0
      %v835 = vadd.f32 0.0, %v834
      %836 = vmatprep.mubr.bf16.mxu0 0
      %837 = vmatmul.mubr.bf16.gmra.mxu0 %v257
      %v838 = vpop.f32.mrf.mxu0
      %v839 = vadd.f32 0.0, %v838
      %v840 = vpop.f32.mrf.mxu0
      %v841 = vadd.f32 0.0, %v840
      %v842 = vpop.f32.mrf.mxu0
      %v843 = vadd.f32 0.0, %v842
      %v844 = vpop.f32.mrf.mxu0
      %v845 = vadd.f32 0.0, %v844
      %846 = vmatprep.mubr.bf16.mxu0 0
      %847 = vmatmul.mubr.bf16.gmra.mxu0 %v258
      %v848 = vpop.f32.mrf.mxu0
      %v849 = vadd.f32 0.0, %v848
      %v850 = vpop.f32.mrf.mxu0
      %v851 = vadd.f32 0.0, %v850
      %v852 = vpop.f32.mrf.mxu0
      %v853 = vadd.f32 0.0, %v852
      %v854 = vpop.f32.mrf.mxu0
      %v855 = vadd.f32 0.0, %v854
      %856 = vmatprep.mubr.bf16.mxu0 0
      %857 = vmatmul.mubr.bf16.gmra.mxu0 %v259
      %v858 = vpop.f32.mrf.mxu0
      %v859 = vadd.f32 0.0, %v858
      %v860 = vpop.f32.mrf.mxu0
      %v861 = vadd.f32 0.0, %v860
      %v862 = vpop.f32.mrf.mxu0
      %v863 = vadd.f32 0.0, %v862
      %v864 = vpop.f32.mrf.mxu0
      %v865 = vadd.f32 0.0, %v864
      %866 = vmatprep.mubr.bf16.mxu0 0
      %867 = vmatmul.mubr.bf16.gmra.mxu0 %v260
      %v868 = vpop.f32.mrf.mxu0
      %v869 = vadd.f32 0.0, %v868
      %v870 = vpop.f32.mrf.mxu0
      %v871 = vadd.f32 0.0, %v870
      %v872 = vpop.f32.mrf.mxu0
      %v873 = vadd.f32 0.0, %v872
      %v874 = vpop.f32.mrf.mxu0
      %v875 = vadd.f32 0.0, %v874
      %876 = vmatprep.mubr.bf16.mxu0 0
      %877 = vmatmul.mubr.bf16.gmra.mxu0 %v261
      %v878 = vpop.f32.mrf.mxu0
      %v879 = vadd.f32 0.0, %v878
      %v880 = vpop.f32.mrf.mxu0
      %v881 = vadd.f32 0.0, %v880
      %v882 = vpop.f32.mrf.mxu0
      %v883 = vadd.f32 0.0, %v882
      %v884 = vpop.f32.mrf.mxu0
      %v885 = vadd.f32 0.0, %v884
      %886 = vmatprep.mubr.bf16.mxu0 0
      %887 = vmatmul.mubr.bf16.gmra.mxu0 %v262
      %v888 = vpop.f32.mrf.mxu0
      %v889 = vadd.f32 0.0, %v888
      %v890 = vpop.f32.mrf.mxu0
      %v891 = vadd.f32 0.0, %v890
      %v892 = vpop.f32.mrf.mxu0
      %v893 = vadd.f32 0.0, %v892
      %v894 = vpop.f32.mrf.mxu0
      %v895 = vadd.f32 0.0, %v894
      %896 = vdwg.mxu0
      %897 = vmatprep.subr.bf16.mxu0 %v604
      %898 = vmatpush1.bf16.msra.mxu0 %v603
      %899 = vmatprep.subr.bf16.mxu0 %v596
      %900 = vmatpush1.bf16.msra.mxu0 %v595
      %901 = vmatprep.subr.bf16.mxu0 %v588
      %902 = vmatpush1.bf16.msra.mxu0 %v587
      %903 = vmatprep.subr.bf16.mxu0 %v580
      %904 = vmatpush1.bf16.msra.mxu0 %v579
      %905 = vmatprep.subr.bf16.mxu0 %v572
      %906 = vmatpush1.bf16.msra.mxu0 %v571
      %907 = vmatprep.subr.bf16.mxu0 %v564
      %908 = vmatpush1.bf16.msra.mxu0 %v563
      %909 = vmatprep.subr.bf16.mxu0 %v556
      %910 = vmatpush1.bf16.msra.mxu0 %v555
      %911 = vmatprep.subr.bf16.mxu0 %v548
      %912 = vmatpush1.bf16.msra.mxu0 %v547
      %913 = vmatprep.subr.bf16.mxu0 0
      %914 = vmatpush2.bf16.msra.mxu0 0
      %915 = vmatprep.subr.bf16.mxu0 0
      %916 = vmatpush2.bf16.msra.mxu0 0
      %917 = vmatprep.subr.bf16.mxu0 0
      %918 = vmatpush2.bf16.msra.mxu0 0
      %919 = vmatprep.subr.bf16.mxu0 0
      %920 = vmatpush2.bf16.msra.mxu0 0
      %921 = vmatprep.subr.bf16.mxu0 0
      %922 = vmatpush2.bf16.msra.mxu0 0
      %923 = vmatprep.subr.bf16.mxu0 0
      %924 = vmatpush2.bf16.msra.mxu0 0
      %925 = vmatprep.subr.bf16.mxu0 0
      %926 = vmatpush2.bf16.msra.mxu0 0
      %927 = vmatprep.subr.bf16.mxu0 0
      %928 = vmatpush2.bf16.msra.mxu0 0
      %929 = vmatprep.mubr.bf16.mxu0 0
      %930 = vmatmul.mubr.bf16.gmra.mxu0 %v255
      %v931 = vpop.f32.mrf.mxu0
      %v932 = vadd.f32 0.0, %v931
      %v933 = vpop.f32.mrf.mxu0
      %v934 = vadd.f32 0.0, %v933
      %v935 = vpop.f32.mrf.mxu0
      %v936 = vadd.f32 0.0, %v935
      %v937 = vpop.f32.mrf.mxu0
      %v938 = vadd.f32 0.0, %v937
      %939 = vmatprep.mubr.bf16.mxu0 0
      %940 = vmatmul.mubr.bf16.gmra.mxu0 %v256
      %v941 = vpop.f32.mrf.mxu0
      %v942 = vadd.f32 0.0, %v941
      %v943 = vpop.f32.mrf.mxu0
      %v944 = vadd.f32 0.0, %v943
      %v945 = vpop.f32.mrf.mxu0
      %v946 = vadd.f32 0.0, %v945
      %v947 = vpop.f32.mrf.mxu0
      %v948 = vadd.f32 0.0, %v947
      %949 = vmatprep.mubr.bf16.mxu0 0
      %950 = vmatmul.mubr.bf16.gmra.mxu0 %v257
      %v951 = vpop.f32.mrf.mxu0
      %v952 = vadd.f32 0.0, %v951
      %v953 = vpop.f32.mrf.mxu0
      %v954 = vadd.f32 0.0, %v953
      %v955 = vpop.f32.mrf.mxu0
      %v956 = vadd.f32 0.0, %v955
      %v957 = vpop.f32.mrf.mxu0
      %v958 = vadd.f32 0.0, %v957
      %959 = vmatprep.mubr.bf16.mxu0 0
      %960 = vmatmul.mubr.bf16.gmra.mxu0 %v258
      %v961 = vpop.f32.mrf.mxu0
      %v962 = vadd.f32 0.0, %v961
      %v963 = vpop.f32.mrf.mxu0
      %v964 = vadd.f32 0.0, %v963
      %v965 = vpop.f32.mrf.mxu0
      %v966 = vadd.f32 0.0, %v965
      %v967 = vpop.f32.mrf.mxu0
      %v968 = vadd.f32 0.0, %v967
      %969 = vmatprep.mubr.bf16.mxu0 0
      %970 = vmatmul.mubr.bf16.gmra.mxu0 %v259
      %v971 = vpop.f32.mrf.mxu0
      %v972 = vadd.f32 0.0, %v971
      %v973 = vpop.f32.mrf.mxu0
      %v974 = vadd.f32 0.0, %v973
      %v975 = vpop.f32.mrf.mxu0
      %v976 = vadd.f32 0.0, %v975
      %v977 = vpop.f32.mrf.mxu0
      %v978 = vadd.f32 0.0, %v977
      %979 = vmatprep.mubr.bf16.mxu0 0
      %980 = vmatmul.mubr.bf16.gmra.mxu0 %v260
      %v981 = vpop.f32.mrf.mxu0
      %v982 = vadd.f32 0.0, %v981
      %v983 = vpop.f32.mrf.mxu0
      %v984 = vadd.f32 0.0, %v983
      %v985 = vpop.f32.mrf.mxu0
      %v986 = vadd.f32 0.0, %v985
      %v987 = vpop.f32.mrf.mxu0
      %v988 = vadd.f32 0.0, %v987
      %989 = vmatprep.mubr.bf16.mxu0 0
      %990 = vmatmul.mubr.bf16.gmra.mxu0 %v261
      %v991 = vpop.f32.mrf.mxu0
      %v992 = vadd.f32 0.0, %v991
      %v993 = vpop.f32.mrf.mxu0
      %v994 = vadd.f32 0.0, %v993
      %v995 = vpop.f32.mrf.mxu0
      %v996 = vadd.f32 0.0, %v995
      %v997 = vpop.f32.mrf.mxu0
      %v998 = vadd.f32 0.0, %v997
      %999 = vmatprep.mubr.bf16.mxu0 0
      %1000 = vmatmul.mubr.bf16.gmra.mxu0 %v262
      %v1001 = vpop.f32.mrf.mxu0
      %v1002 = vadd.f32 0.0, %v1001
      %v1003 = vpop.f32.mrf.mxu0
      %v1004 = vadd.f32 0.0, %v1003
      %v1005 = vpop.f32.mrf.mxu0
      %v1006 = vadd.f32 0.0, %v1005
      %v1007 = vpop.f32.mrf.mxu0
      %v1008 = vadd.f32 0.0, %v1007
      %1009 = vdwg.mxu0
      %1010 = vmatprep.subr.bf16.mxu0 %v606
      %1011 = vmatpush1.bf16.msra.mxu0 %v605
      %1012 = vmatprep.subr.bf16.mxu0 %v598
      %1013 = vmatpush1.bf16.msra.mxu0 %v597
      %1014 = vmatprep.subr.bf16.mxu0 %v590
      %1015 = vmatpush1.bf16.msra.mxu0 %v589
      %1016 = vmatprep.subr.bf16.mxu0 %v582
      %1017 = vmatpush1.bf16.msra.mxu0 %v581
      %1018 = vmatprep.subr.bf16.mxu0 %v574
      %1019 = vmatpush1.bf16.msra.mxu0 %v573
      %1020 = vmatprep.subr.bf16.mxu0 %v566
      %1021 = vmatpush1.bf16.msra.mxu0 %v565
      %1022 = vmatprep.subr.bf16.mxu0 %v558
      %1023 = vmatpush1.bf16.msra.mxu0 %v557
      %1024 = vmatprep.subr.bf16.mxu0 %v550
      %1025 = vmatpush1.bf16.msra.mxu0 %v549
      %1026 = vmatprep.subr.bf16.mxu0 0
      %1027 = vmatpush2.bf16.msra.mxu0 0
      %1028 = vmatprep.subr.bf16.mxu0 0
      %1029 = vmatpush2.bf16.msra.mxu0 0
      %1030 = vmatprep.subr.bf16.mxu0 0
      %1031 = vmatpush2.bf16.msra.mxu0 0
      %1032 = vmatprep.subr.bf16.mxu0 0
      %1033 = vmatpush2.bf16.msra.mxu0 0
      %1034 = vmatprep.subr.bf16.mxu0 0
      %1035 = vmatpush2.bf16.msra.mxu0 0
      %1036 = vmatprep.subr.bf16.mxu0 0
      %1037 = vmatpush2.bf16.msra.mxu0 0
      %1038 = vmatprep.subr.bf16.mxu0 0
      %1039 = vmatpush2.bf16.msra.mxu0 0
      %1040 = vmatprep.subr.bf16.mxu0 0
      %1041 = vmatpush2.bf16.msra.mxu0 0
      %1042 = vmatprep.mubr.bf16.mxu0 0
      %1043 = vmatmul.mubr.bf16.gmra.mxu0 %v255
      %v1044 = vpop.f32.mrf.mxu0
      %v1045 = vadd.f32 0.0, %v1044
      %v1046 = vpop.f32.mrf.mxu0
      %v1047 = vadd.f32 0.0, %v1046
      %v1048 = vpop.f32.mrf.mxu0
      %v1049 = vadd.f32 0.0, %v1048
      %v1050 = vpop.f32.mrf.mxu0
      %v1051 = vadd.f32 0.0, %v1050
      %1052 = vmatprep.mubr.bf16.mxu0 0
      %1053 = vmatmul.mubr.bf16.gmra.mxu0 %v256
      %v1054 = vpop.f32.mrf.mxu0
      %v1055 = vadd.f32 0.0, %v1054
      %v1056 = vpop.f32.mrf.mxu0
      %v1057 = vadd.f32 0.0, %v1056
      %v1058 = vpop.f32.mrf.mxu0
      %v1059 = vadd.f32 0.0, %v1058
      %v1060 = vpop.f32.mrf.mxu0
      %v1061 = vadd.f32 0.0, %v1060
      %1062 = vmatprep.mubr.bf16.mxu0 0
      %1063 = vmatmul.mubr.bf16.gmra.mxu0 %v257
      %v1064 = vpop.f32.mrf.mxu0
      %v1065 = vadd.f32 0.0, %v1064
      %v1066 = vpop.f32.mrf.mxu0
      %v1067 = vadd.f32 0.0, %v1066
      %v1068 = vpop.f32.mrf.mxu0
      %v1069 = vadd.f32 0.0, %v1068
      %v1070 = vpop.f32.mrf.mxu0
      %v1071 = vadd.f32 0.0, %v1070
      %1072 = vmatprep.mubr.bf16.mxu0 0
      %1073 = vmatmul.mubr.bf16.gmra.mxu0 %v258
      %v1074 = vpop.f32.mrf.mxu0
      %v1075 = vadd.f32 0.0, %v1074
      %v1076 = vpop.f32.mrf.mxu0
      %v1077 = vadd.f32 0.0, %v1076
      %v1078 = vpop.f32.mrf.mxu0
      %v1079 = vadd.f32 0.0, %v1078
      %v1080 = vpop.f32.mrf.mxu0
      %v1081 = vadd.f32 0.0, %v1080
      %1082 = vmatprep.mubr.bf16.mxu0 0
      %1083 = vmatmul.mubr.bf16.gmra.mxu0 %v259
      %v1084 = vpop.f32.mrf.mxu0
      %v1085 = vadd.f32 0.0, %v1084
      %v1086 = vpop.f32.mrf.mxu0
      %v1087 = vadd.f32 0.0, %v1086
      %v1088 = vpop.f32.mrf.mxu0
      %v1089 = vadd.f32 0.0, %v1088
      %v1090 = vpop.f32.mrf.mxu0
      %v1091 = vadd.f32 0.0, %v1090
      %1092 = vmatprep.mubr.bf16.mxu0 0
      %1093 = vmatmul.mubr.bf16.gmra.mxu0 %v260
      %v1094 = vpop.f32.mrf.mxu0
      %v1095 = vadd.f32 0.0, %v1094
      %v1096 = vpop.f32.mrf.mxu0
      %v1097 = vadd.f32 0.0, %v1096
      %v1098 = vpop.f32.mrf.mxu0
      %v1099 = vadd.f32 0.0, %v1098
      %v1100 = vpop.f32.mrf.mxu0
      %v1101 = vadd.f32 0.0, %v1100
      %1102 = vmatprep.mubr.bf16.mxu0 0
      %1103 = vmatmul.mubr.bf16.gmra.mxu0 %v261
      %v1104 = vpop.f32.mrf.mxu0
      %v1105 = vadd.f32 0.0, %v1104
      %v1106 = vpop.f32.mrf.mxu0
      %v1107 = vadd.f32 0.0, %v1106
      %v1108 = vpop.f32.mrf.mxu0
      %v1109 = vadd.f32 0.0, %v1108
      %v1110 = vpop.f32.mrf.mxu0
      %v1111 = vadd.f32 0.0, %v1110
      %1112 = vmatprep.mubr.bf16.mxu0 0
      %1113 = vmatmul.mubr.bf16.gmra.mxu0 %v262
      %v1114 = vpop.f32.mrf.mxu0
      %v1115 = vadd.f32 0.0, %v1114
      %v1116 = vpop.f32.mrf.mxu0
      %v1117 = vadd.f32 0.0, %v1116
      %v1118 = vpop.f32.mrf.mxu0
      %v1119 = vadd.f32 0.0, %v1118
      %v1120 = vpop.f32.mrf.mxu0
      %v1121 = vadd.f32 0.0, %v1120
      %1122 = vdwg.mxu0
      %v1123 = vpack.c.bf16 %v710, %v706
      %v1124 = vpack.c.bf16 %v720, %v716
      %v1125 = vpack.c.bf16 %v730, %v726
      %v1126 = vpack.c.bf16 %v740, %v736
      %v1127 = vpack.c.bf16 %v750, %v746
      %v1128 = vpack.c.bf16 %v760, %v756
      %v1129 = vpack.c.bf16 %v770, %v766
      %v1130 = vpack.c.bf16 %v780, %v776
      %1131 = vmatprep.subr.bf16.mxu0 0
      %1132 = vmatpush1.bf16.xpose.msra.mxu0 %v286
      %1133 = vmatprep.subr.bf16.mxu0 0
      %1134 = vmatpush1.bf16.xpose.msra.mxu0 %v285
      %1135 = vmatprep.subr.bf16.mxu0 0
      %1136 = vmatpush1.bf16.xpose.msra.mxu0 %v284
      %1137 = vmatprep.subr.bf16.mxu0 0
      %1138 = vmatpush1.bf16.xpose.msra.mxu0 %v283
      %1139 = vmatprep.subr.bf16.mxu0 0
      %1140 = vmatpush1.bf16.xpose.msra.mxu0 %v282
      %1141 = vmatprep.subr.bf16.mxu0 0
      %1142 = vmatpush1.bf16.xpose.msra.mxu0 %v281
      %1143 = vmatprep.subr.bf16.mxu0 0
      %1144 = vmatpush1.bf16.xpose.msra.mxu0 %v280
      %1145 = vmatprep.subr.bf16.mxu0 0
      %1146 = vmatpush1.bf16.xpose.msra.mxu0 %v279
      %1147 = vmatprep.subr.bf16.mxu0 0
      %1148 = vmatpush2.bf16.xpose.msra.mxu0 0
      %1149 = vmatprep.subr.bf16.mxu0 0
      %1150 = vmatpush2.bf16.xpose.msra.mxu0 0
      %1151 = vmatprep.subr.bf16.mxu0 0
      %1152 = vmatpush2.bf16.xpose.msra.mxu0 0
      %1153 = vmatprep.subr.bf16.mxu0 0
      %1154 = vmatpush2.bf16.xpose.msra.mxu0 0
      %1155 = vmatprep.subr.bf16.mxu0 0
      %1156 = vmatpush2.bf16.xpose.msra.mxu0 0
      %1157 = vmatprep.subr.bf16.mxu0 0
      %1158 = vmatpush2.bf16.xpose.msra.mxu0 0
      %1159 = vmatprep.subr.bf16.mxu0 0
      %1160 = vmatpush2.bf16.xpose.msra.mxu0 0
      %1161 = vmatprep.subr.bf16.mxu0 0
      %1162 = vmatpush2.bf16.xpose.msra.mxu0 0
      %1163 = vmatprep.mubr.bf16.mxu0 0
      %1164 = vmatmul.mubr.bf16.gmra.mxu0 %v1123
      %v1165 = vpop.f32.mrf.mxu0
      %v1166 = vadd.f32 0.0, %v1165
      %v1167 = vpop.f32.mrf.mxu0
      %v1168 = vpop.f32.mrf.mxu0
      %v1169 = vadd.f32 0.0, %v1168
      %v1170 = vpop.f32.mrf.mxu0
      %1171 = vmatprep.mubr.bf16.mxu0 0
      %1172 = vmatmul.mubr.bf16.gmra.mxu0 %v1124
      %v1173 = vpop.f32.mrf.mxu0
      %v1174 = vadd.f32 0.0, %v1173
      %v1175 = vpop.f32.mrf.mxu0
      %v1176 = vpop.f32.mrf.mxu0
      %v1177 = vadd.f32 0.0, %v1176
      %v1178 = vpop.f32.mrf.mxu0
      %1179 = vmatprep.mubr.bf16.mxu0 0
      %1180 = vmatmul.mubr.bf16.gmra.mxu0 %v1125
      %v1181 = vpop.f32.mrf.mxu0
      %v1182 = vadd.f32 0.0, %v1181
      %v1183 = vpop.f32.mrf.mxu0
      %v1184 = vpop.f32.mrf.mxu0
      %v1185 = vadd.f32 0.0, %v1184
      %v1186 = vpop.f32.mrf.mxu0
      %1187 = vmatprep.mubr.bf16.mxu0 0
      %1188 = vmatmul.mubr.bf16.gmra.mxu0 %v1126
      %v1189 = vpop.f32.mrf.mxu0
      %v1190 = vadd.f32 0.0, %v1189
      %v1191 = vpop.f32.mrf.mxu0
      %v1192 = vpop.f32.mrf.mxu0
      %v1193 = vadd.f32 0.0, %v1192
      %v1194 = vpop.f32.mrf.mxu0
      %1195 = vmatprep.mubr.bf16.mxu0 0
      %1196 = vmatmul.mubr.bf16.gmra.mxu0 %v1127
      %v1197 = vpop.f32.mrf.mxu0
      %v1198 = vadd.f32 0.0, %v1197
      %v1199 = vpop.f32.mrf.mxu0
      %v1200 = vpop.f32.mrf.mxu0
      %v1201 = vadd.f32 0.0, %v1200
      %v1202 = vpop.f32.mrf.mxu0
      %1203 = vmatprep.mubr.bf16.mxu0 0
      %1204 = vmatmul.mubr.bf16.gmra.mxu0 %v1128
      %v1205 = vpop.f32.mrf.mxu0
      %v1206 = vadd.f32 0.0, %v1205
      %v1207 = vpop.f32.mrf.mxu0
      %v1208 = vpop.f32.mrf.mxu0
      %v1209 = vadd.f32 0.0, %v1208
      %v1210 = vpop.f32.mrf.mxu0
      %1211 = vmatprep.mubr.bf16.mxu0 0
      %1212 = vmatmul.mubr.bf16.gmra.mxu0 %v1129
      %v1213 = vpop.f32.mrf.mxu0
      %v1214 = vadd.f32 0.0, %v1213
      %v1215 = vpop.f32.mrf.mxu0
      %v1216 = vpop.f32.mrf.mxu0
      %v1217 = vadd.f32 0.0, %v1216
      %v1218 = vpop.f32.mrf.mxu0
      %1219 = vmatprep.mubr.bf16.mxu0 0
      %1220 = vmatmul.mubr.bf16.gmra.mxu0 %v1130
      %v1221 = vpop.f32.mrf.mxu0
      %v1222 = vadd.f32 0.0, %v1221
      %v1223 = vpop.f32.mrf.mxu0
      %v1224 = vpop.f32.mrf.mxu0
      %v1225 = vadd.f32 0.0, %v1224
      %v1226 = vpop.f32.mrf.mxu0
      %1227 = vdwg.mxu0
      %1228 = vst [vmem:[%s236] sm:$0xff] %v1166
      %1229 = vst [vmem:[%s236 + $0x8] sm:$0xff] %v1169
      %1230 = vst [vmem:[%s236 + $0x10] sm:$0xff] %v1174
      %1231 = vst [vmem:[%s236 + $0x18] sm:$0xff] %v1177
      %1232 = vst [vmem:[%s236 + $0x20] sm:$0xff] %v1182
      %1233 = vst [vmem:[%s236 + $0x28] sm:$0xff] %v1185
      %1234 = vst [vmem:[%s236 + $0x30] sm:$0xff] %v1190
      %1235 = vst [vmem:[%s236 + $0x38] sm:$0xff] %v1193
      %1236 = vst [vmem:[%s236 + $0x40] sm:$0xff] %v1198
      %1237 = vst [vmem:[%s236 + $0x48] sm:$0xff] %v1201
      %1238 = vst [vmem:[%s236 + $0x50] sm:$0xff] %v1206
      %1239 = vst [vmem:[%s236 + $0x58] sm:$0xff] %v1209
      %1240 = vst [vmem:[%s236 + $0x60] sm:$0xff] %v1214
      %1241 = vst [vmem:[%s236 + $0x68] sm:$0xff] %v1217
      %1242 = vst [vmem:[%s236 + $0x70] sm:$0xff] %v1222
      %1243 = vst [vmem:[%s236 + $0x78] sm:$0xff] %v1225
      %v1244 = vpack.c.bf16 %v712, %v708
      %v1245 = vpack.c.bf16 %v722, %v718
      %v1246 = vpack.c.bf16 %v732, %v728
      %v1247 = vpack.c.bf16 %v742, %v738
      %v1248 = vpack.c.bf16 %v752, %v748
      %v1249 = vpack.c.bf16 %v762, %v758
      %v1250 = vpack.c.bf16 %v772, %v768
      %v1251 = vpack.c.bf16 %v782, %v778
      %1252 = vmatprep.subr.bf16.mxu0 0
      %1253 = vmatpush1.bf16.xpose.msra.mxu0 %v286
      %1254 = vmatprep.subr.bf16.mxu0 0
      %1255 = vmatpush1.bf16.xpose.msra.mxu0 %v285
      %1256 = vmatprep.subr.bf16.mxu0 0
      %1257 = vmatpush1.bf16.xpose.msra.mxu0 %v284
      %1258 = vmatprep.subr.bf16.mxu0 0
      %1259 = vmatpush1.bf16.xpose.msra.mxu0 %v283
      %1260 = vmatprep.subr.bf16.mxu0 0
      %1261 = vmatpush1.bf16.xpose.msra.mxu0 %v282
      %1262 = vmatprep.subr.bf16.mxu0 0
      %1263 = vmatpush1.bf16.xpose.msra.mxu0 %v281
      %1264 = vmatprep.subr.bf16.mxu0 0
      %1265 = vmatpush1.bf16.xpose.msra.mxu0 %v280
      %1266 = vmatprep.subr.bf16.mxu0 0
      %1267 = vmatpush1.bf16.xpose.msra.mxu0 %v279
      %1268 = vmatprep.subr.bf16.mxu0 0
      %1269 = vmatpush2.bf16.xpose.msra.mxu0 0
      %1270 = vmatprep.subr.bf16.mxu0 0
      %1271 = vmatpush2.bf16.xpose.msra.mxu0 0
      %1272 = vmatprep.subr.bf16.mxu0 0
      %1273 = vmatpush2.bf16.xpose.msra.mxu0 0
      %1274 = vmatprep.subr.bf16.mxu0 0
      %1275 = vmatpush2.bf16.xpose.msra.mxu0 0
      %1276 = vmatprep.subr.bf16.mxu0 0
      %1277 = vmatpush2.bf16.xpose.msra.mxu0 0
      %1278 = vmatprep.subr.bf16.mxu0 0
      %1279 = vmatpush2.bf16.xpose.msra.mxu0 0
      %1280 = vmatprep.subr.bf16.mxu0 0
      %1281 = vmatpush2.bf16.xpose.msra.mxu0 0
      %1282 = vmatprep.subr.bf16.mxu0 0
      %1283 = vmatpush2.bf16.xpose.msra.mxu0 0
      %1284 = vmatprep.mubr.bf16.mxu0 0
      %1285 = vmatmul.mubr.bf16.gmra.mxu0 %v1244
      %v1286 = vpop.f32.mrf.mxu0
      %v1287 = vadd.f32 0.0, %v1286
      %v1288 = vpop.f32.mrf.mxu0
      %v1289 = vpop.f32.mrf.mxu0
      %v1290 = vadd.f32 0.0, %v1289
      %v1291 = vpop.f32.mrf.mxu0
      %1292 = vmatprep.mubr.bf16.mxu0 0
      %1293 = vmatmul.mubr.bf16.gmra.mxu0 %v1245
      %v1294 = vpop.f32.mrf.mxu0
      %v1295 = vadd.f32 0.0, %v1294
      %v1296 = vpop.f32.mrf.mxu0
      %v1297 = vpop.f32.mrf.mxu0
      %v1298 = vadd.f32 0.0, %v1297
      %v1299 = vpop.f32.mrf.mxu0
      %1300 = vmatprep.mubr.bf16.mxu0 0
      %1301 = vmatmul.mubr.bf16.gmra.mxu0 %v1246
      %v1302 = vpop.f32.mrf.mxu0
      %v1303 = vadd.f32 0.0, %v1302
      %v1304 = vpop.f32.mrf.mxu0
      %v1305 = vpop.f32.mrf.mxu0
      %v1306 = vadd.f32 0.0, %v1305
      %v1307 = vpop.f32.mrf.mxu0
      %1308 = vmatprep.mubr.bf16.mxu0 0
      %1309 = vmatmul.mubr.bf16.gmra.mxu0 %v1247
      %v1310 = vpop.f32.mrf.mxu0
      %v1311 = vadd.f32 0.0, %v1310
      %v1312 = vpop.f32.mrf.mxu0
      %v1313 = vpop.f32.mrf.mxu0
      %v1314 = vadd.f32 0.0, %v1313
      %v1315 = vpop.f32.mrf.mxu0
      %1316 = vmatprep.mubr.bf16.mxu0 0
      %1317 = vmatmul.mubr.bf16.gmra.mxu0 %v1248
      %v1318 = vpop.f32.mrf.mxu0
      %v1319 = vadd.f32 0.0, %v1318
      %v1320 = vpop.f32.mrf.mxu0
      %v1321 = vpop.f32.mrf.mxu0
      %v1322 = vadd.f32 0.0, %v1321
      %v1323 = vpop.f32.mrf.mxu0
      %1324 = vmatprep.mubr.bf16.mxu0 0
      %1325 = vmatmul.mubr.bf16.gmra.mxu0 %v1249
      %v1326 = vpop.f32.mrf.mxu0
      %v1327 = vadd.f32 0.0, %v1326
      %v1328 = vpop.f32.mrf.mxu0
      %v1329 = vpop.f32.mrf.mxu0
      %v1330 = vadd.f32 0.0, %v1329
      %v1331 = vpop.f32.mrf.mxu0
      %1332 = vmatprep.mubr.bf16.mxu0 0
      %1333 = vmatmul.mubr.bf16.gmra.mxu0 %v1250
      %v1334 = vpop.f32.mrf.mxu0
      %v1335 = vadd.f32 0.0, %v1334
      %v1336 = vpop.f32.mrf.mxu0
      %v1337 = vpop.f32.mrf.mxu0
      %v1338 = vadd.f32 0.0, %v1337
      %v1339 = vpop.f32.mrf.mxu0
      %1340 = vmatprep.mubr.bf16.mxu0 0
      %1341 = vmatmul.mubr.bf16.gmra.mxu0 %v1251
      %v1342 = vpop.f32.mrf.mxu0
      %v1343 = vadd.f32 0.0, %v1342
      %v1344 = vpop.f32.mrf.mxu0
      %v1345 = vpop.f32.mrf.mxu0
      %v1346 = vadd.f32 0.0, %v1345
      %v1347 = vpop.f32.mrf.mxu0
      %1348 = vdwg.mxu0
      %s1349 = scalar_lea.vmem %s236, 128
      %1350 = vst [vmem:[%s1349] sm:$0xff] %v1287
      %1351 = vst [vmem:[%s1349 + $0x8] sm:$0xff] %v1290
      %1352 = vst [vmem:[%s1349 + $0x10] sm:$0xff] %v1295
      %1353 = vst [vmem:[%s1349 + $0x18] sm:$0xff] %v1298
      %1354 = vst [vmem:[%s1349 + $0x20] sm:$0xff] %v1303
      %1355 = vst [vmem:[%s1349 + $0x28] sm:$0xff] %v1306
      %1356 = vst [vmem:[%s1349 + $0x30] sm:$0xff] %v1311
      %1357 = vst [vmem:[%s1349 + $0x38] sm:$0xff] %v1314
      %1358 = vst [vmem:[%s1349 + $0x40] sm:$0xff] %v1319
      %1359 = vst [vmem:[%s1349 + $0x48] sm:$0xff] %v1322
      %1360 = vst [vmem:[%s1349 + $0x50] sm:$0xff] %v1327
      %1361 = vst [vmem:[%s1349 + $0x58] sm:$0xff] %v1330
      %1362 = vst [vmem:[%s1349 + $0x60] sm:$0xff] %v1335
      %1363 = vst [vmem:[%s1349 + $0x68] sm:$0xff] %v1338
      %1364 = vst [vmem:[%s1349 + $0x70] sm:$0xff] %v1343
      %1365 = vst [vmem:[%s1349 + $0x78] sm:$0xff] %v1346
      %v1366 = vpack.c.bf16 %v823, %v819
      %v1367 = vpack.c.bf16 %v833, %v829
      %v1368 = vpack.c.bf16 %v843, %v839
      %v1369 = vpack.c.bf16 %v853, %v849
      %v1370 = vpack.c.bf16 %v863, %v859
      %v1371 = vpack.c.bf16 %v873, %v869
      %v1372 = vpack.c.bf16 %v883, %v879
      %v1373 = vpack.c.bf16 %v893, %v889
      %1374 = vmatprep.subr.bf16.mxu0 0
      %1375 = vmatpush1.bf16.xpose.msra.mxu0 %v286
      %1376 = vmatprep.subr.bf16.mxu0 0
      %1377 = vmatpush1.bf16.xpose.msra.mxu0 %v285
      %1378 = vmatprep.subr.bf16.mxu0 0
      %1379 = vmatpush1.bf16.xpose.msra.mxu0 %v284
      %1380 = vmatprep.subr.bf16.mxu0 0
      %1381 = vmatpush1.bf16.xpose.msra.mxu0 %v283
      %1382 = vmatprep.subr.bf16.mxu0 0
      %1383 = vmatpush1.bf16.xpose.msra.mxu0 %v282
      %1384 = vmatprep.subr.bf16.mxu0 0
      %1385 = vmatpush1.bf16.xpose.msra.mxu0 %v281
      %1386 = vmatprep.subr.bf16.mxu0 0
      %1387 = vmatpush1.bf16.xpose.msra.mxu0 %v280
      %1388 = vmatprep.subr.bf16.mxu0 0
      %1389 = vmatpush1.bf16.xpose.msra.mxu0 %v279
      %1390 = vmatprep.subr.bf16.mxu0 0
      %1391 = vmatpush2.bf16.xpose.msra.mxu0 0
      %1392 = vmatprep.subr.bf16.mxu0 0
      %1393 = vmatpush2.bf16.xpose.msra.mxu0 0
      %1394 = vmatprep.subr.bf16.mxu0 0
      %1395 = vmatpush2.bf16.xpose.msra.mxu0 0
      %1396 = vmatprep.subr.bf16.mxu0 0
      %1397 = vmatpush2.bf16.xpose.msra.mxu0 0
      %1398 = vmatprep.subr.bf16.mxu0 0
      %1399 = vmatpush2.bf16.xpose.msra.mxu0 0
      %1400 = vmatprep.subr.bf16.mxu0 0
      %1401 = vmatpush2.bf16.xpose.msra.mxu0 0
      %1402 = vmatprep.subr.bf16.mxu0 0
      %1403 = vmatpush2.bf16.xpose.msra.mxu0 0
      %1404 = vmatprep.subr.bf16.mxu0 0
      %1405 = vmatpush2.bf16.xpose.msra.mxu0 0
      %1406 = vmatprep.mubr.bf16.mxu0 0
      %1407 = vmatmul.mubr.bf16.gmra.mxu0 %v1366
      %v1408 = vpop.f32.mrf.mxu0
      %v1409 = vadd.f32 0.0, %v1408
      %v1410 = vpop.f32.mrf.mxu0
      %v1411 = vpop.f32.mrf.mxu0
      %v1412 = vadd.f32 0.0, %v1411
      %v1413 = vpop.f32.mrf.mxu0
      %1414 = vmatprep.mubr.bf16.mxu0 0
      %1415 = vmatmul.mubr.bf16.gmra.mxu0 %v1367
      %v1416 = vpop.f32.mrf.mxu0
      %v1417 = vadd.f32 0.0, %v1416
      %v1418 = vpop.f32.mrf.mxu0
      %v1419 = vpop.f32.mrf.mxu0
      %v1420 = vadd.f32 0.0, %v1419
      %v1421 = vpop.f32.mrf.mxu0
      %1422 = vmatprep.mubr.bf16.mxu0 0
      %1423 = vmatmul.mubr.bf16.gmra.mxu0 %v1368
      %v1424 = vpop.f32.mrf.mxu0
      %v1425 = vadd.f32 0.0, %v1424
      %v1426 = vpop.f32.mrf.mxu0
      %v1427 = vpop.f32.mrf.mxu0
      %v1428 = vadd.f32 0.0, %v1427
      %v1429 = vpop.f32.mrf.mxu0
      %1430 = vmatprep.mubr.bf16.mxu0 0
      %1431 = vmatmul.mubr.bf16.gmra.mxu0 %v1369
      %v1432 = vpop.f32.mrf.mxu0
      %v1433 = vadd.f32 0.0, %v1432
      %v1434 = vpop.f32.mrf.mxu0
      %v1435 = vpop.f32.mrf.mxu0
      %v1436 = vadd.f32 0.0, %v1435
      %v1437 = vpop.f32.mrf.mxu0
      %1438 = vmatprep.mubr.bf16.mxu0 0
      %1439 = vmatmul.mubr.bf16.gmra.mxu0 %v1370
      %v1440 = vpop.f32.mrf.mxu0
      %v1441 = vadd.f32 0.0, %v1440
      %v1442 = vpop.f32.mrf.mxu0
      %v1443 = vpop.f32.mrf.mxu0
      %v1444 = vadd.f32 0.0, %v1443
      %v1445 = vpop.f32.mrf.mxu0
      %1446 = vmatprep.mubr.bf16.mxu0 0
      %1447 = vmatmul.mubr.bf16.gmra.mxu0 %v1371
      %v1448 = vpop.f32.mrf.mxu0
      %v1449 = vadd.f32 0.0, %v1448
      %v1450 = vpop.f32.mrf.mxu0
      %v1451 = vpop.f32.mrf.mxu0
      %v1452 = vadd.f32 0.0, %v1451
      %v1453 = vpop.f32.mrf.mxu0
      %1454 = vmatprep.mubr.bf16.mxu0 0
      %1455 = vmatmul.mubr.bf16.gmra.mxu0 %v1372
      %v1456 = vpop.f32.mrf.mxu0
      %v1457 = vadd.f32 0.0, %v1456
      %v1458 = vpop.f32.mrf.mxu0
      %v1459 = vpop.f32.mrf.mxu0
      %v1460 = vadd.f32 0.0, %v1459
      %v1461 = vpop.f32.mrf.mxu0
      %1462 = vmatprep.mubr.bf16.mxu0 0
      %1463 = vmatmul.mubr.bf16.gmra.mxu0 %v1373
      %v1464 = vpop.f32.mrf.mxu0
      %v1465 = vadd.f32 0.0, %v1464
      %v1466 = vpop.f32.mrf.mxu0
      %v1467 = vpop.f32.mrf.mxu0
      %v1468 = vadd.f32 0.0, %v1467
      %v1469 = vpop.f32.mrf.mxu0
      %1470 = vdwg.mxu0
      %s1471 = scalar_lea.vmem %s236, 256
      %1472 = vst [vmem:[%s1471] sm:$0xff] %v1409
      %1473 = vst [vmem:[%s1471 + $0x8] sm:$0xff] %v1412
      %1474 = vst [vmem:[%s1471 + $0x10] sm:$0xff] %v1417
      %1475 = vst [vmem:[%s1471 + $0x18] sm:$0xff] %v1420
      %1476 = vst [vmem:[%s1471 + $0x20] sm:$0xff] %v1425
      %1477 = vst [vmem:[%s1471 + $0x28] sm:$0xff] %v1428
      %1478 = vst [vmem:[%s1471 + $0x30] sm:$0xff] %v1433
      %1479 = vst [vmem:[%s1471 + $0x38] sm:$0xff] %v1436
      %1480 = vst [vmem:[%s1471 + $0x40] sm:$0xff] %v1441
      %1481 = vst [vmem:[%s1471 + $0x48] sm:$0xff] %v1444
      %1482 = vst [vmem:[%s1471 + $0x50] sm:$0xff] %v1449
      %1483 = vst [vmem:[%s1471 + $0x58] sm:$0xff] %v1452
      %1484 = vst [vmem:[%s1471 + $0x60] sm:$0xff] %v1457
      %1485 = vst [vmem:[%s1471 + $0x68] sm:$0xff] %v1460
      %1486 = vst [vmem:[%s1471 + $0x70] sm:$0xff] %v1465
      %1487 = vst [vmem:[%s1471 + $0x78] sm:$0xff] %v1468
      %v1488 = vpack.c.bf16 %v825, %v821
      %v1489 = vpack.c.bf16 %v835, %v831
      %v1490 = vpack.c.bf16 %v845, %v841
      %v1491 = vpack.c.bf16 %v855, %v851
      %v1492 = vpack.c.bf16 %v865, %v861
      %v1493 = vpack.c.bf16 %v875, %v871
      %v1494 = vpack.c.bf16 %v885, %v881
      %v1495 = vpack.c.bf16 %v895, %v891
      %1496 = vmatprep.subr.bf16.mxu0 0
      %1497 = vmatpush1.bf16.xpose.msra.mxu0 %v286
      %1498 = vmatprep.subr.bf16.mxu0 0
      %1499 = vmatpush1.bf16.xpose.msra.mxu0 %v285
      %1500 = vmatprep.subr.bf16.mxu0 0
      %1501 = vmatpush1.bf16.xpose.msra.mxu0 %v284
      %1502 = vmatprep.subr.bf16.mxu0 0
      %1503 = vmatpush1.bf16.xpose.msra.mxu0 %v283
      %1504 = vmatprep.subr.bf16.mxu0 0
      %1505 = vmatpush1.bf16.xpose.msra.mxu0 %v282
      %1506 = vmatprep.subr.bf16.mxu0 0
      %1507 = vmatpush1.bf16.xpose.msra.mxu0 %v281
      %1508 = vmatprep.subr.bf16.mxu0 0
      %1509 = vmatpush1.bf16.xpose.msra.mxu0 %v280
      %1510 = vmatprep.subr.bf16.mxu0 0
      %1511 = vmatpush1.bf16.xpose.msra.mxu0 %v279
      %1512 = vmatprep.subr.bf16.mxu0 0
      %1513 = vmatpush2.bf16.xpose.msra.mxu0 0
      %1514 = vmatprep.subr.bf16.mxu0 0
      %1515 = vmatpush2.bf16.xpose.msra.mxu0 0
      %1516 = vmatprep.subr.bf16.mxu0 0
      %1517 = vmatpush2.bf16.xpose.msra.mxu0 0
      %1518 = vmatprep.subr.bf16.mxu0 0
      %1519 = vmatpush2.bf16.xpose.msra.mxu0 0
      %1520 = vmatprep.subr.bf16.mxu0 0
      %1521 = vmatpush2.bf16.xpose.msra.mxu0 0
      %1522 = vmatprep.subr.bf16.mxu0 0
      %1523 = vmatpush2.bf16.xpose.msra.mxu0 0
      %1524 = vmatprep.subr.bf16.mxu0 0
      %1525 = vmatpush2.bf16.xpose.msra.mxu0 0
      %1526 = vmatprep.subr.bf16.mxu0 0
      %1527 = vmatpush2.bf16.xpose.msra.mxu0 0
      %1528 = vmatprep.mubr.bf16.mxu0 0
      %1529 = vmatmul.mubr.bf16.gmra.mxu0 %v1488
      %v1530 = vpop.f32.mrf.mxu0
      %v1531 = vadd.f32 0.0, %v1530
      %v1532 = vpop.f32.mrf.mxu0
      %v1533 = vpop.f32.mrf.mxu0
      %v1534 = vadd.f32 0.0, %v1533
      %v1535 = vpop.f32.mrf.mxu0
      %1536 = vmatprep.mubr.bf16.mxu0 0
      %1537 = vmatmul.mubr.bf16.gmra.mxu0 %v1489
      %v1538 = vpop.f32.mrf.mxu0
      %v1539 = vadd.f32 0.0, %v1538
      %v1540 = vpop.f32.mrf.mxu0
      %v1541 = vpop.f32.mrf.mxu0
      %v1542 = vadd.f32 0.0, %v1541
      %v1543 = vpop.f32.mrf.mxu0
      %1544 = vmatprep.mubr.bf16.mxu0 0
      %1545 = vmatmul.mubr.bf16.gmra.mxu0 %v1490
      %v1546 = vpop.f32.mrf.mxu0
      %v1547 = vadd.f32 0.0, %v1546
      %v1548 = vpop.f32.mrf.mxu0
      %v1549 = vpop.f32.mrf.mxu0
      %v1550 = vadd.f32 0.0, %v1549
      %v1551 = vpop.f32.mrf.mxu0
      %1552 = vmatprep.mubr.bf16.mxu0 0
      %1553 = vmatmul.mubr.bf16.gmra.mxu0 %v1491
      %v1554 = vpop.f32.mrf.mxu0
      %v1555 = vadd.f32 0.0, %v1554
      %v1556 = vpop.f32.mrf.mxu0
      %v1557 = vpop.f32.mrf.mxu0
      %v1558 = vadd.f32 0.0, %v1557
      %v1559 = vpop.f32.mrf.mxu0
      %1560 = vmatprep.mubr.bf16.mxu0 0
      %1561 = vmatmul.mubr.bf16.gmra.mxu0 %v1492
      %v1562 = vpop.f32.mrf.mxu0
      %v1563 = vadd.f32 0.0, %v1562
      %v1564 = vpop.f32.mrf.mxu0
      %v1565 = vpop.f32.mrf.mxu0
      %v1566 = vadd.f32 0.0, %v1565
      %v1567 = vpop.f32.mrf.mxu0
      %1568 = vmatprep.mubr.bf16.mxu0 0
      %1569 = vmatmul.mubr.bf16.gmra.mxu0 %v1493
      %v1570 = vpop.f32.mrf.mxu0
      %v1571 = vadd.f32 0.0, %v1570
      %v1572 = vpop.f32.mrf.mxu0
      %v1573 = vpop.f32.mrf.mxu0
      %v1574 = vadd.f32 0.0, %v1573
      %v1575 = vpop.f32.mrf.mxu0
      %1576 = vmatprep.mubr.bf16.mxu0 0
      %1577 = vmatmul.mubr.bf16.gmra.mxu0 %v1494
      %v1578 = vpop.f32.mrf.mxu0
      %v1579 = vadd.f32 0.0, %v1578
      %v1580 = vpop.f32.mrf.mxu0
      %v1581 = vpop.f32.mrf.mxu0
      %v1582 = vadd.f32 0.0, %v1581
      %v1583 = vpop.f32.mrf.mxu0
      %1584 = vmatprep.mubr.bf16.mxu0 0
      %1585 = vmatmul.mubr.bf16.gmra.mxu0 %v1495
      %v1586 = vpop.f32.mrf.mxu0
      %v1587 = vadd.f32 0.0, %v1586
      %v1588 = vpop.f32.mrf.mxu0
      %v1589 = vpop.f32.mrf.mxu0
      %v1590 = vadd.f32 0.0, %v1589
      %v1591 = vpop.f32.mrf.mxu0
      %1592 = vdwg.mxu0
      %s1593 = scalar_lea.vmem %s236, 384
      %1594 = vst [vmem:[%s1593] sm:$0xff] %v1531
      %1595 = vst [vmem:[%s1593 + $0x8] sm:$0xff] %v1534
      %1596 = vst [vmem:[%s1593 + $0x10] sm:$0xff] %v1539
      %1597 = vst [vmem:[%s1593 + $0x18] sm:$0xff] %v1542
      %1598 = vst [vmem:[%s1593 + $0x20] sm:$0xff] %v1547
      %1599 = vst [vmem:[%s1593 + $0x28] sm:$0xff] %v1550
      %1600 = vst [vmem:[%s1593 + $0x30] sm:$0xff] %v1555
      %1601 = vst [vmem:[%s1593 + $0x38] sm:$0xff] %v1558
      %1602 = vst [vmem:[%s1593 + $0x40] sm:$0xff] %v1563
      %1603 = vst [vmem:[%s1593 + $0x48] sm:$0xff] %v1566
      %1604 = vst [vmem:[%s1593 + $0x50] sm:$0xff] %v1571
      %1605 = vst [vmem:[%s1593 + $0x58] sm:$0xff] %v1574
      %1606 = vst [vmem:[%s1593 + $0x60] sm:$0xff] %v1579
      %1607 = vst [vmem:[%s1593 + $0x68] sm:$0xff] %v1582
      %1608 = vst [vmem:[%s1593 + $0x70] sm:$0xff] %v1587
      %1609 = vst [vmem:[%s1593 + $0x78] sm:$0xff] %v1590
      %v1610 = vpack.c.bf16 %v936, %v932
      %v1611 = vpack.c.bf16 %v946, %v942
      %v1612 = vpack.c.bf16 %v956, %v952
      %v1613 = vpack.c.bf16 %v966, %v962
      %v1614 = vpack.c.bf16 %v976, %v972
      %v1615 = vpack.c.bf16 %v986, %v982
      %v1616 = vpack.c.bf16 %v996, %v992
      %v1617 = vpack.c.bf16 %v1006, %v1002
      %1618 = vmatprep.subr.bf16.mxu0 0
      %1619 = vmatpush1.bf16.xpose.msra.mxu0 %v286
      %1620 = vmatprep.subr.bf16.mxu0 0
      %1621 = vmatpush1.bf16.xpose.msra.mxu0 %v285
      %1622 = vmatprep.subr.bf16.mxu0 0
      %1623 = vmatpush1.bf16.xpose.msra.mxu0 %v284
      %1624 = vmatprep.subr.bf16.mxu0 0
      %1625 = vmatpush1.bf16.xpose.msra.mxu0 %v283
      %1626 = vmatprep.subr.bf16.mxu0 0
      %1627 = vmatpush1.bf16.xpose.msra.mxu0 %v282
      %1628 = vmatprep.subr.bf16.mxu0 0
      %1629 = vmatpush1.bf16.xpose.msra.mxu0 %v281
      %1630 = vmatprep.subr.bf16.mxu0 0
      %1631 = vmatpush1.bf16.xpose.msra.mxu0 %v280
      %1632 = vmatprep.subr.bf16.mxu0 0
      %1633 = vmatpush1.bf16.xpose.msra.mxu0 %v279
      %1634 = vmatprep.subr.bf16.mxu0 0
      %1635 = vmatpush2.bf16.xpose.msra.mxu0 0
      %1636 = vmatprep.subr.bf16.mxu0 0
      %1637 = vmatpush2.bf16.xpose.msra.mxu0 0
      %1638 = vmatprep.subr.bf16.mxu0 0
      %1639 = vmatpush2.bf16.xpose.msra.mxu0 0
      %1640 = vmatprep.subr.bf16.mxu0 0
      %1641 = vmatpush2.bf16.xpose.msra.mxu0 0
      %1642 = vmatprep.subr.bf16.mxu0 0
      %1643 = vmatpush2.bf16.xpose.msra.mxu0 0
      %1644 = vmatprep.subr.bf16.mxu0 0
      %1645 = vmatpush2.bf16.xpose.msra.mxu0 0
      %1646 = vmatprep.subr.bf16.mxu0 0
      %1647 = vmatpush2.bf16.xpose.msra.mxu0 0
      %1648 = vmatprep.subr.bf16.mxu0 0
      %1649 = vmatpush2.bf16.xpose.msra.mxu0 0
      %1650 = vmatprep.mubr.bf16.mxu0 0
      %1651 = vmatmul.mubr.bf16.gmra.mxu0 %v1610
      %v1652 = vpop.f32.mrf.mxu0
      %v1653 = vadd.f32 0.0, %v1652
      %v1654 = vpop.f32.mrf.mxu0
      %v1655 = vpop.f32.mrf.mxu0
      %v1656 = vadd.f32 0.0, %v1655
      %v1657 = vpop.f32.mrf.mxu0
      %1658 = vmatprep.mubr.bf16.mxu0 0
      %1659 = vmatmul.mubr.bf16.gmra.mxu0 %v1611
      %v1660 = vpop.f32.mrf.mxu0
      %v1661 = vadd.f32 0.0, %v1660
      %v1662 = vpop.f32.mrf.mxu0
      %v1663 = vpop.f32.mrf.mxu0
      %v1664 = vadd.f32 0.0, %v1663
      %v1665 = vpop.f32.mrf.mxu0
      %1666 = vmatprep.mubr.bf16.mxu0 0
      %1667 = vmatmul.mubr.bf16.gmra.mxu0 %v1612
      %v1668 = vpop.f32.mrf.mxu0
      %v1669 = vadd.f32 0.0, %v1668
      %v1670 = vpop.f32.mrf.mxu0
      %v1671 = vpop.f32.mrf.mxu0
      %v1672 = vadd.f32 0.0, %v1671
      %v1673 = vpop.f32.mrf.mxu0
      %1674 = vmatprep.mubr.bf16.mxu0 0
      %1675 = vmatmul.mubr.bf16.gmra.mxu0 %v1613
      %v1676 = vpop.f32.mrf.mxu0
      %v1677 = vadd.f32 0.0, %v1676
      %v1678 = vpop.f32.mrf.mxu0
      %v1679 = vpop.f32.mrf.mxu0
      %v1680 = vadd.f32 0.0, %v1679
      %v1681 = vpop.f32.mrf.mxu0
      %1682 = vmatprep.mubr.bf16.mxu0 0
      %1683 = vmatmul.mubr.bf16.gmra.mxu0 %v1614
      %v1684 = vpop.f32.mrf.mxu0
      %v1685 = vadd.f32 0.0, %v1684
      %v1686 = vpop.f32.mrf.mxu0
      %v1687 = vpop.f32.mrf.mxu0
      %v1688 = vadd.f32 0.0, %v1687
      %v1689 = vpop.f32.mrf.mxu0
      %1690 = vmatprep.mubr.bf16.mxu0 0
      %1691 = vmatmul.mubr.bf16.gmra.mxu0 %v1615
      %v1692 = vpop.f32.mrf.mxu0
      %v1693 = vadd.f32 0.0, %v1692
      %v1694 = vpop.f32.mrf.mxu0
      %v1695 = vpop.f32.mrf.mxu0
      %v1696 = vadd.f32 0.0, %v1695
      %v1697 = vpop.f32.mrf.mxu0
      %1698 = vmatprep.mubr.bf16.mxu0 0
      %1699 = vmatmul.mubr.bf16.gmra.mxu0 %v1616
      %v1700 = vpop.f32.mrf.mxu0
      %v1701 = vadd.f32 0.0, %v1700
      %v1702 = vpop.f32.mrf.mxu0
      %v1703 = vpop.f32.mrf.mxu0
      %v1704 = vadd.f32 0.0, %v1703
      %v1705 = vpop.f32.mrf.mxu0
      %1706 = vmatprep.mubr.bf16.mxu0 0
      %1707 = vmatmul.mubr.bf16.gmra.mxu0 %v1617
      %v1708 = vpop.f32.mrf.mxu0
      %v1709 = vadd.f32 0.0, %v1708
      %v1710 = vpop.f32.mrf.mxu0
      %v1711 = vpop.f32.mrf.mxu0
      %v1712 = vadd.f32 0.0, %v1711
      %v1713 = vpop.f32.mrf.mxu0
      %1714 = vdwg.mxu0
      %s1715 = scalar_lea.vmem %s236, 512
      %1716 = vst [vmem:[%s1715] sm:$0xff] %v1653
      %1717 = vst [vmem:[%s1715 + $0x8] sm:$0xff] %v1656
      %1718 = vst [vmem:[%s1715 + $0x10] sm:$0xff] %v1661
      %1719 = vst [vmem:[%s1715 + $0x18] sm:$0xff] %v1664
      %1720 = vst [vmem:[%s1715 + $0x20] sm:$0xff] %v1669
      %1721 = vst [vmem:[%s1715 + $0x28] sm:$0xff] %v1672
      %1722 = vst [vmem:[%s1715 + $0x30] sm:$0xff] %v1677
      %1723 = vst [vmem:[%s1715 + $0x38] sm:$0xff] %v1680
      %1724 = vst [vmem:[%s1715 + $0x40] sm:$0xff] %v1685
      %1725 = vst [vmem:[%s1715 + $0x48] sm:$0xff] %v1688
      %1726 = vst [vmem:[%s1715 + $0x50] sm:$0xff] %v1693
      %1727 = vst [vmem:[%s1715 + $0x58] sm:$0xff] %v1696
      %1728 = vst [vmem:[%s1715 + $0x60] sm:$0xff] %v1701
      %1729 = vst [vmem:[%s1715 + $0x68] sm:$0xff] %v1704
      %1730 = vst [vmem:[%s1715 + $0x70] sm:$0xff] %v1709
      %1731 = vst [vmem:[%s1715 + $0x78] sm:$0xff] %v1712
      %v1732 = vpack.c.bf16 %v938, %v934
      %v1733 = vpack.c.bf16 %v948, %v944
      %v1734 = vpack.c.bf16 %v958, %v954
      %v1735 = vpack.c.bf16 %v968, %v964
      %v1736 = vpack.c.bf16 %v978, %v974
      %v1737 = vpack.c.bf16 %v988, %v984
      %v1738 = vpack.c.bf16 %v998, %v994
      %v1739 = vpack.c.bf16 %v1008, %v1004
      %1740 = vmatprep.subr.bf16.mxu0 0
      %1741 = vmatpush1.bf16.xpose.msra.mxu0 %v286
      %1742 = vmatprep.subr.bf16.mxu0 0
      %1743 = vmatpush1.bf16.xpose.msra.mxu0 %v285
      %1744 = vmatprep.subr.bf16.mxu0 0
      %1745 = vmatpush1.bf16.xpose.msra.mxu0 %v284
      %1746 = vmatprep.subr.bf16.mxu0 0
      %1747 = vmatpush1.bf16.xpose.msra.mxu0 %v283
      %1748 = vmatprep.subr.bf16.mxu0 0
      %1749 = vmatpush1.bf16.xpose.msra.mxu0 %v282
      %1750 = vmatprep.subr.bf16.mxu0 0
      %1751 = vmatpush1.bf16.xpose.msra.mxu0 %v281
      %1752 = vmatprep.subr.bf16.mxu0 0
      %1753 = vmatpush1.bf16.xpose.msra.mxu0 %v280
      %1754 = vmatprep.subr.bf16.mxu0 0
      %1755 = vmatpush1.bf16.xpose.msra.mxu0 %v279
      %1756 = vmatprep.subr.bf16.mxu0 0
      %1757 = vmatpush2.bf16.xpose.msra.mxu0 0
      %1758 = vmatprep.subr.bf16.mxu0 0
      %1759 = vmatpush2.bf16.xpose.msra.mxu0 0
      %1760 = vmatprep.subr.bf16.mxu0 0
      %1761 = vmatpush2.bf16.xpose.msra.mxu0 0
      %1762 = vmatprep.subr.bf16.mxu0 0
      %1763 = vmatpush2.bf16.xpose.msra.mxu0 0
      %1764 = vmatprep.subr.bf16.mxu0 0
      %1765 = vmatpush2.bf16.xpose.msra.mxu0 0
      %1766 = vmatprep.subr.bf16.mxu0 0
      %1767 = vmatpush2.bf16.xpose.msra.mxu0 0
      %1768 = vmatprep.subr.bf16.mxu0 0
      %1769 = vmatpush2.bf16.xpose.msra.mxu0 0
      %1770 = vmatprep.subr.bf16.mxu0 0
      %1771 = vmatpush2.bf16.xpose.msra.mxu0 0
      %1772 = vmatprep.mubr.bf16.mxu0 0
      %1773 = vmatmul.mubr.bf16.gmra.mxu0 %v1732
      %v1774 = vpop.f32.mrf.mxu0
      %v1775 = vadd.f32 0.0, %v1774
      %v1776 = vpop.f32.mrf.mxu0
      %v1777 = vpop.f32.mrf.mxu0
      %v1778 = vadd.f32 0.0, %v1777
      %v1779 = vpop.f32.mrf.mxu0
      %1780 = vmatprep.mubr.bf16.mxu0 0
      %1781 = vmatmul.mubr.bf16.gmra.mxu0 %v1733
      %v1782 = vpop.f32.mrf.mxu0
      %v1783 = vadd.f32 0.0, %v1782
      %v1784 = vpop.f32.mrf.mxu0
      %v1785 = vpop.f32.mrf.mxu0
      %v1786 = vadd.f32 0.0, %v1785
      %v1787 = vpop.f32.mrf.mxu0
      %1788 = vmatprep.mubr.bf16.mxu0 0
      %1789 = vmatmul.mubr.bf16.gmra.mxu0 %v1734
      %v1790 = vpop.f32.mrf.mxu0
      %v1791 = vadd.f32 0.0, %v1790
      %v1792 = vpop.f32.mrf.mxu0
      %v1793 = vpop.f32.mrf.mxu0
      %v1794 = vadd.f32 0.0, %v1793
      %v1795 = vpop.f32.mrf.mxu0
      %1796 = vmatprep.mubr.bf16.mxu0 0
      %1797 = vmatmul.mubr.bf16.gmra.mxu0 %v1735
      %v1798 = vpop.f32.mrf.mxu0
      %v1799 = vadd.f32 0.0, %v1798
      %v1800 = vpop.f32.mrf.mxu0
      %v1801 = vpop.f32.mrf.mxu0
      %v1802 = vadd.f32 0.0, %v1801
      %v1803 = vpop.f32.mrf.mxu0
      %1804 = vmatprep.mubr.bf16.mxu0 0
      %1805 = vmatmul.mubr.bf16.gmra.mxu0 %v1736
      %v1806 = vpop.f32.mrf.mxu0
      %v1807 = vadd.f32 0.0, %v1806
      %v1808 = vpop.f32.mrf.mxu0
      %v1809 = vpop.f32.mrf.mxu0
      %v1810 = vadd.f32 0.0, %v1809
      %v1811 = vpop.f32.mrf.mxu0
      %1812 = vmatprep.mubr.bf16.mxu0 0
      %1813 = vmatmul.mubr.bf16.gmra.mxu0 %v1737
      %v1814 = vpop.f32.mrf.mxu0
      %v1815 = vadd.f32 0.0, %v1814
      %v1816 = vpop.f32.mrf.mxu0
      %v1817 = vpop.f32.mrf.mxu0
      %v1818 = vadd.f32 0.0, %v1817
      %v1819 = vpop.f32.mrf.mxu0
      %1820 = vmatprep.mubr.bf16.mxu0 0
      %1821 = vmatmul.mubr.bf16.gmra.mxu0 %v1738
      %v1822 = vpop.f32.mrf.mxu0
      %v1823 = vadd.f32 0.0, %v1822
      %v1824 = vpop.f32.mrf.mxu0
      %v1825 = vpop.f32.mrf.mxu0
      %v1826 = vadd.f32 0.0, %v1825
      %v1827 = vpop.f32.mrf.mxu0
      %1828 = vmatprep.mubr.bf16.mxu0 0
      %1829 = vmatmul.mubr.bf16.gmra.mxu0 %v1739
      %v1830 = vpop.f32.mrf.mxu0
      %v1831 = vadd.f32 0.0, %v1830
      %v1832 = vpop.f32.mrf.mxu0
      %v1833 = vpop.f32.mrf.mxu0
      %v1834 = vadd.f32 0.0, %v1833
      %v1835 = vpop.f32.mrf.mxu0
      %1836 = vdwg.mxu0
      %s1837 = scalar_lea.vmem %s236, 640
      %1838 = vst [vmem:[%s1837] sm:$0xff] %v1775
      %1839 = vst [vmem:[%s1837 + $0x8] sm:$0xff] %v1778
      %1840 = vst [vmem:[%s1837 + $0x10] sm:$0xff] %v1783
      %1841 = vst [vmem:[%s1837 + $0x18] sm:$0xff] %v1786
      %1842 = vst [vmem:[%s1837 + $0x20] sm:$0xff] %v1791
      %1843 = vst [vmem:[%s1837 + $0x28] sm:$0xff] %v1794
      %1844 = vst [vmem:[%s1837 + $0x30] sm:$0xff] %v1799
      %1845 = vst [vmem:[%s1837 + $0x38] sm:$0xff] %v1802
      %1846 = vst [vmem:[%s1837 + $0x40] sm:$0xff] %v1807
      %1847 = vst [vmem:[%s1837 + $0x48] sm:$0xff] %v1810
      %1848 = vst [vmem:[%s1837 + $0x50] sm:$0xff] %v1815
      %1849 = vst [vmem:[%s1837 + $0x58] sm:$0xff] %v1818
      %1850 = vst [vmem:[%s1837 + $0x60] sm:$0xff] %v1823
      %1851 = vst [vmem:[%s1837 + $0x68] sm:$0xff] %v1826
      %1852 = vst [vmem:[%s1837 + $0x70] sm:$0xff] %v1831
      %1853 = vst [vmem:[%s1837 + $0x78] sm:$0xff] %v1834
      %v1854 = vpack.c.bf16 %v1049, %v1045
      %v1855 = vpack.c.bf16 %v1059, %v1055
      %v1856 = vpack.c.bf16 %v1069, %v1065
      %v1857 = vpack.c.bf16 %v1079, %v1075
      %v1858 = vpack.c.bf16 %v1089, %v1085
      %v1859 = vpack.c.bf16 %v1099, %v1095
      %v1860 = vpack.c.bf16 %v1109, %v1105
      %v1861 = vpack.c.bf16 %v1119, %v1115
      %1862 = vmatprep.subr.bf16.mxu0 0
      %1863 = vmatpush1.bf16.xpose.msra.mxu0 %v286
      %1864 = vmatprep.subr.bf16.mxu0 0
      %1865 = vmatpush1.bf16.xpose.msra.mxu0 %v285
      %1866 = vmatprep.subr.bf16.mxu0 0
      %1867 = vmatpush1.bf16.xpose.msra.mxu0 %v284
      %1868 = vmatprep.subr.bf16.mxu0 0
      %1869 = vmatpush1.bf16.xpose.msra.mxu0 %v283
      %1870 = vmatprep.subr.bf16.mxu0 0
      %1871 = vmatpush1.bf16.xpose.msra.mxu0 %v282
      %1872 = vmatprep.subr.bf16.mxu0 0
      %1873 = vmatpush1.bf16.xpose.msra.mxu0 %v281
      %1874 = vmatprep.subr.bf16.mxu0 0
      %1875 = vmatpush1.bf16.xpose.msra.mxu0 %v280
      %1876 = vmatprep.subr.bf16.mxu0 0
      %1877 = vmatpush1.bf16.xpose.msra.mxu0 %v279
      %1878 = vmatprep.subr.bf16.mxu0 0
      %1879 = vmatpush2.bf16.xpose.msra.mxu0 0
      %1880 = vmatprep.subr.bf16.mxu0 0
      %1881 = vmatpush2.bf16.xpose.msra.mxu0 0
      %1882 = vmatprep.subr.bf16.mxu0 0
      %1883 = vmatpush2.bf16.xpose.msra.mxu0 0
      %1884 = vmatprep.subr.bf16.mxu0 0
      %1885 = vmatpush2.bf16.xpose.msra.mxu0 0
      %1886 = vmatprep.subr.bf16.mxu0 0
      %1887 = vmatpush2.bf16.xpose.msra.mxu0 0
      %1888 = vmatprep.subr.bf16.mxu0 0
      %1889 = vmatpush2.bf16.xpose.msra.mxu0 0
      %1890 = vmatprep.subr.bf16.mxu0 0
      %1891 = vmatpush2.bf16.xpose.msra.mxu0 0
      %1892 = vmatprep.subr.bf16.mxu0 0
      %1893 = vmatpush2.bf16.xpose.msra.mxu0 0
      %1894 = vmatprep.mubr.bf16.mxu0 0
      %1895 = vmatmul.mubr.bf16.gmra.mxu0 %v1854
      %v1896 = vpop.f32.mrf.mxu0
      %v1897 = vadd.f32 0.0, %v1896
      %v1898 = vpop.f32.mrf.mxu0
      %v1899 = vpop.f32.mrf.mxu0
      %v1900 = vadd.f32 0.0, %v1899
      %v1901 = vpop.f32.mrf.mxu0
      %1902 = vmatprep.mubr.bf16.mxu0 0
      %1903 = vmatmul.mubr.bf16.gmra.mxu0 %v1855
      %v1904 = vpop.f32.mrf.mxu0
      %v1905 = vadd.f32 0.0, %v1904
      %v1906 = vpop.f32.mrf.mxu0
      %v1907 = vpop.f32.mrf.mxu0
      %v1908 = vadd.f32 0.0, %v1907
      %v1909 = vpop.f32.mrf.mxu0
      %1910 = vmatprep.mubr.bf16.mxu0 0
      %1911 = vmatmul.mubr.bf16.gmra.mxu0 %v1856
      %v1912 = vpop.f32.mrf.mxu0
      %v1913 = vadd.f32 0.0, %v1912
      %v1914 = vpop.f32.mrf.mxu0
      %v1915 = vpop.f32.mrf.mxu0
      %v1916 = vadd.f32 0.0, %v1915
      %v1917 = vpop.f32.mrf.mxu0
      %1918 = vmatprep.mubr.bf16.mxu0 0
      %1919 = vmatmul.mubr.bf16.gmra.mxu0 %v1857
      %v1920 = vpop.f32.mrf.mxu0
      %v1921 = vadd.f32 0.0, %v1920
      %v1922 = vpop.f32.mrf.mxu0
      %v1923 = vpop.f32.mrf.mxu0
      %v1924 = vadd.f32 0.0, %v1923
      %v1925 = vpop.f32.mrf.mxu0
      %1926 = vmatprep.mubr.bf16.mxu0 0
      %1927 = vmatmul.mubr.bf16.gmra.mxu0 %v1858
      %v1928 = vpop.f32.mrf.mxu0
      %v1929 = vadd.f32 0.0, %v1928
      %v1930 = vpop.f32.mrf.mxu0
      %v1931 = vpop.f32.mrf.mxu0
      %v1932 = vadd.f32 0.0, %v1931
      %v1933 = vpop.f32.mrf.mxu0
      %1934 = vmatprep.mubr.bf16.mxu0 0
      %1935 = vmatmul.mubr.bf16.gmra.mxu0 %v1859
      %v1936 = vpop.f32.mrf.mxu0
      %v1937 = vadd.f32 0.0, %v1936
      %v1938 = vpop.f32.mrf.mxu0
      %v1939 = vpop.f32.mrf.mxu0
      %v1940 = vadd.f32 0.0, %v1939
      %v1941 = vpop.f32.mrf.mxu0
      %1942 = vmatprep.mubr.bf16.mxu0 0
      %1943 = vmatmul.mubr.bf16.gmra.mxu0 %v1860
      %v1944 = vpop.f32.mrf.mxu0
      %v1945 = vadd.f32 0.0, %v1944
      %v1946 = vpop.f32.mrf.mxu0
      %v1947 = vpop.f32.mrf.mxu0
      %v1948 = vadd.f32 0.0, %v1947
      %v1949 = vpop.f32.mrf.mxu0
      %1950 = vmatprep.mubr.bf16.mxu0 0
      %1951 = vmatmul.mubr.bf16.gmra.mxu0 %v1861
      %v1952 = vpop.f32.mrf.mxu0
      %v1953 = vadd.f32 0.0, %v1952
      %v1954 = vpop.f32.mrf.mxu0
      %v1955 = vpop.f32.mrf.mxu0
      %v1956 = vadd.f32 0.0, %v1955
      %v1957 = vpop.f32.mrf.mxu0
      %1958 = vdwg.mxu0
      %s1959 = scalar_lea.vmem %s236, 768
      %1960 = vst [vmem:[%s1959] sm:$0xff] %v1897
      %1961 = vst [vmem:[%s1959 + $0x8] sm:$0xff] %v1900
      %1962 = vst [vmem:[%s1959 + $0x10] sm:$0xff] %v1905
      %1963 = vst [vmem:[%s1959 + $0x18] sm:$0xff] %v1908
      %1964 = vst [vmem:[%s1959 + $0x20] sm:$0xff] %v1913
      %1965 = vst [vmem:[%s1959 + $0x28] sm:$0xff] %v1916
      %1966 = vst [vmem:[%s1959 + $0x30] sm:$0xff] %v1921
      %1967 = vst [vmem:[%s1959 + $0x38] sm:$0xff] %v1924
      %1968 = vst [vmem:[%s1959 + $0x40] sm:$0xff] %v1929
      %1969 = vst [vmem:[%s1959 + $0x48] sm:$0xff] %v1932
      %1970 = vst [vmem:[%s1959 + $0x50] sm:$0xff] %v1937
      %1971 = vst [vmem:[%s1959 + $0x58] sm:$0xff] %v1940
      %1972 = vst [vmem:[%s1959 + $0x60] sm:$0xff] %v1945
      %1973 = vst [vmem:[%s1959 + $0x68] sm:$0xff] %v1948
      %1974 = vst [vmem:[%s1959 + $0x70] sm:$0xff] %v1953
      %1975 = vst [vmem:[%s1959 + $0x78] sm:$0xff] %v1956
      %v1976 = vpack.c.bf16 %v1051, %v1047
      %v1977 = vpack.c.bf16 %v1061, %v1057
      %v1978 = vpack.c.bf16 %v1071, %v1067
      %v1979 = vpack.c.bf16 %v1081, %v1077
      %v1980 = vpack.c.bf16 %v1091, %v1087
      %v1981 = vpack.c.bf16 %v1101, %v1097
      %v1982 = vpack.c.bf16 %v1111, %v1107
      %v1983 = vpack.c.bf16 %v1121, %v1117
      %1984 = vmatprep.subr.bf16.mxu0 0
      %1985 = vmatpush1.bf16.xpose.msra.mxu0 %v286
      %1986 = vmatprep.subr.bf16.mxu0 0
      %1987 = vmatpush1.bf16.xpose.msra.mxu0 %v285
      %1988 = vmatprep.subr.bf16.mxu0 0
      %1989 = vmatpush1.bf16.xpose.msra.mxu0 %v284
      %1990 = vmatprep.subr.bf16.mxu0 0
      %1991 = vmatpush1.bf16.xpose.msra.mxu0 %v283
      %1992 = vmatprep.subr.bf16.mxu0 0
      %1993 = vmatpush1.bf16.xpose.msra.mxu0 %v282
      %1994 = vmatprep.subr.bf16.mxu0 0
      %1995 = vmatpush1.bf16.xpose.msra.mxu0 %v281
      %1996 = vmatprep.subr.bf16.mxu0 0
      %1997 = vmatpush1.bf16.xpose.msra.mxu0 %v280
      %1998 = vmatprep.subr.bf16.mxu0 0
      %1999 = vmatpush1.bf16.xpose.msra.mxu0 %v279
      %2000 = vmatprep.subr.bf16.mxu0 0
      %2001 = vmatpush2.bf16.xpose.msra.mxu0 0
      %2002 = vmatprep.subr.bf16.mxu0 0
      %2003 = vmatpush2.bf16.xpose.msra.mxu0 0
      %2004 = vmatprep.subr.bf16.mxu0 0
      %2005 = vmatpush2.bf16.xpose.msra.mxu0 0
      %2006 = vmatprep.subr.bf16.mxu0 0
      %2007 = vmatpush2.bf16.xpose.msra.mxu0 0
      %2008 = vmatprep.subr.bf16.mxu0 0
      %2009 = vmatpush2.bf16.xpose.msra.mxu0 0
      %2010 = vmatprep.subr.bf16.mxu0 0
      %2011 = vmatpush2.bf16.xpose.msra.mxu0 0
      %2012 = vmatprep.subr.bf16.mxu0 0
      %2013 = vmatpush2.bf16.xpose.msra.mxu0 0
      %2014 = vmatprep.subr.bf16.mxu0 0
      %2015 = vmatpush2.bf16.xpose.msra.mxu0 0
      %2016 = vmatprep.mubr.bf16.mxu0 0
      %2017 = vmatmul.mubr.bf16.gmra.mxu0 %v1976
      %v2018 = vpop.f32.mrf.mxu0
      %v2019 = vadd.f32 0.0, %v2018
      %v2020 = vpop.f32.mrf.mxu0
      %v2021 = vpop.f32.mrf.mxu0
      %v2022 = vadd.f32 0.0, %v2021
      %v2023 = vpop.f32.mrf.mxu0
      %2024 = vmatprep.mubr.bf16.mxu0 0
      %2025 = vmatmul.mubr.bf16.gmra.mxu0 %v1977
      %v2026 = vpop.f32.mrf.mxu0
      %v2027 = vadd.f32 0.0, %v2026
      %v2028 = vpop.f32.mrf.mxu0
      %v2029 = vpop.f32.mrf.mxu0
      %v2030 = vadd.f32 0.0, %v2029
      %v2031 = vpop.f32.mrf.mxu0
      %2032 = vmatprep.mubr.bf16.mxu0 0
      %2033 = vmatmul.mubr.bf16.gmra.mxu0 %v1978
      %v2034 = vpop.f32.mrf.mxu0
      %v2035 = vadd.f32 0.0, %v2034
      %v2036 = vpop.f32.mrf.mxu0
      %v2037 = vpop.f32.mrf.mxu0
      %v2038 = vadd.f32 0.0, %v2037
      %v2039 = vpop.f32.mrf.mxu0
      %2040 = vmatprep.mubr.bf16.mxu0 0
      %2041 = vmatmul.mubr.bf16.gmra.mxu0 %v1979
      %v2042 = vpop.f32.mrf.mxu0
      %v2043 = vadd.f32 0.0, %v2042
      %v2044 = vpop.f32.mrf.mxu0
      %v2045 = vpop.f32.mrf.mxu0
      %v2046 = vadd.f32 0.0, %v2045
      %v2047 = vpop.f32.mrf.mxu0
      %2048 = vmatprep.mubr.bf16.mxu0 0
      %2049 = vmatmul.mubr.bf16.gmra.mxu0 %v1980
      %v2050 = vpop.f32.mrf.mxu0
      %v2051 = vadd.f32 0.0, %v2050
      %v2052 = vpop.f32.mrf.mxu0
      %v2053 = vpop.f32.mrf.mxu0
      %v2054 = vadd.f32 0.0, %v2053
      %v2055 = vpop.f32.mrf.mxu0
      %2056 = vmatprep.mubr.bf16.mxu0 0
      %2057 = vmatmul.mubr.bf16.gmra.mxu0 %v1981
      %v2058 = vpop.f32.mrf.mxu0
      %v2059 = vadd.f32 0.0, %v2058
      %v2060 = vpop.f32.mrf.mxu0
      %v2061 = vpop.f32.mrf.mxu0
      %v2062 = vadd.f32 0.0, %v2061
      %v2063 = vpop.f32.mrf.mxu0
      %2064 = vmatprep.mubr.bf16.mxu0 0
      %2065 = vmatmul.mubr.bf16.gmra.mxu0 %v1982
      %v2066 = vpop.f32.mrf.mxu0
      %v2067 = vadd.f32 0.0, %v2066
      %v2068 = vpop.f32.mrf.mxu0
      %v2069 = vpop.f32.mrf.mxu0
      %v2070 = vadd.f32 0.0, %v2069
      %v2071 = vpop.f32.mrf.mxu0
      %2072 = vmatprep.mubr.bf16.mxu0 0
      %2073 = vmatmul.mubr.bf16.gmra.mxu0 %v1983
      %v2074 = vpop.f32.mrf.mxu0
      %v2075 = vadd.f32 0.0, %v2074
      %v2076 = vpop.f32.mrf.mxu0
      %v2077 = vpop.f32.mrf.mxu0
      %v2078 = vadd.f32 0.0, %v2077
      %v2079 = vpop.f32.mrf.mxu0
      %2080 = vdwg.mxu0
      %s2081 = scalar_lea.vmem %s236, 896
      %2082 = vst [vmem:[%s2081] sm:$0xff] %v2019
      %2083 = vst [vmem:[%s2081 + $0x8] sm:$0xff] %v2022
      %2084 = vst [vmem:[%s2081 + $0x10] sm:$0xff] %v2027
      %2085 = vst [vmem:[%s2081 + $0x18] sm:$0xff] %v2030
      %2086 = vst [vmem:[%s2081 + $0x20] sm:$0xff] %v2035
      %2087 = vst [vmem:[%s2081 + $0x28] sm:$0xff] %v2038
      %2088 = vst [vmem:[%s2081 + $0x30] sm:$0xff] %v2043
      %2089 = vst [vmem:[%s2081 + $0x38] sm:$0xff] %v2046
      %2090 = vst [vmem:[%s2081 + $0x40] sm:$0xff] %v2051
      %2091 = vst [vmem:[%s2081 + $0x48] sm:$0xff] %v2054
      %2092 = vst [vmem:[%s2081 + $0x50] sm:$0xff] %v2059
      %2093 = vst [vmem:[%s2081 + $0x58] sm:$0xff] %v2062
      %2094 = vst [vmem:[%s2081 + $0x60] sm:$0xff] %v2067
      %2095 = vst [vmem:[%s2081 + $0x68] sm:$0xff] %v2070
      %2096 = vst [vmem:[%s2081 + $0x70] sm:$0xff] %v2075
      %2097 = vst [vmem:[%s2081 + $0x78] sm:$0xff] %v2078
      %s2098 = smul.u32 8, %s19
      %p2099 = scmp.lt.s32.totalorder %s18, 1
      %s2100 = scalar_select %p2099, %s18, 1
      %p2101 = scmp.lt.s32.totalorder %s2098, 7
      %s2102 = scalar_select %p2101, %s2098, 7
      %s2103 = smul.addr %s2102, 16
      %s2104 = smul.addr %s2100, 128
      %s2105 = sadd.s32 %s2103, %s2104
      %s2106 = smul.addr %s2105, 8
      %s2107 = scalar_lea.vmem %s3, %s2106
      // Predicated region
      $region33: #{jparser_forward.8} parent=31 // pred_check
        %p2108 = pneg %p124
      $region34: #{jparser_forward.8} parent=31 // pred_check_branch
        %2110 = sbr.rel (%p2108) target = $region36
      $region35: #{jparser_forward.8} parent=31 // pred_region
        %s2111 = smul.u32 8, %s19
      $region36: #{jparser_forward.8} parent=31 // pred_fallthru
        _
    $region32: #{jparser_forward.8} parent=5 // pred_fallthru
      _
    %p2112 = scmp.le.s32.totalorder 2, %s9
    // Predicated region
    $region37: #{jparser_forward.8} parent=5 // pred_check
      %p2113 = pneg %p2112
    $region38: #{jparser_forward.8} parent=5 // pred_check_branch
      %2115 = sbr.rel (%p2113) target = $region40
    $region39: #{jparser_forward.8} parent=5 // pred_region
      %s2116 = ssub.s32 %s9, 2
      // Predicated region
      $region41: #{jparser_forward.8} parent=39 // pred_check
        %p2117 = pneg %p130
      $region42: #{jparser_forward.8} parent=39 // pred_check_branch
        %2119 = sbr.rel (%p2117) target = $region44
      $region43: #{jparser_forward.8} parent=39 // pred_region
        %s2120 = smul.u32 8, %s21
        %p2121 = scmp.lt.s32.totalorder %s20, 1
        %s2122 = scalar_select %p2121, %s20, 1
        %p2123 = scmp.lt.s32.totalorder %s2120, 7
        %s2124 = scalar_select %p2123, %s2120, 7
        %s2125 = smul.addr %s2124, 16
        %s2126 = smul.addr %s2122, 128
        %s2127 = sadd.s32 %s2125, %s2126
        %s2128 = smul.addr %s2127, 8
        %s2129 = scalar_lea.vmem %s3, %s2128
      $region44: #{jparser_forward.8} parent=39 // pred_fallthru
        _
    $region40: #{jparser_forward.8} parent=5 // pred_fallthru
      _
  $region6: #{jparser_forward.8} parent=0 // loop_footer
    %s13 = sadd.s32 1, %s9
  $region7: #{jparser_forward.8} parent=0 // loop_footer_branch
    %8 = sbr.rel target = $region3
  $region8: #{jparser_forward.8} parent=0 // loop_exit
    _

// kernel: jparser_forward.6
$region0: #{jparser_forward.6}
  #allocation0 [shape = 'u32[]', space=smem, size = 0x4, offset = 0x4, fixed_abs, tag = 'smem constant byte address 0x4 - core index']
  #allocation1 [shape = 'u32[144,128]{1,0:T(1,128)}', space=vmem, size = 0x12000, scoped, tag = 'internal scratch']
  #allocation2 [shape = 'f32[8,128]{1,0:T(8,128)}', space=vmem, size = 0x1000, scoped, tag = 'scratch operand']
  #allocation3 [shape = 'f32[8,128]{1,0:T(8,128)}', space=vmem, size = 0x1000, scoped, tag = 'scratch operand']
  #allocation4 [shape = 'f32[64,512]{1,0:T(8,128)}', space=vmem, size = 0x20000, scoped, tag = 'scratch operand']
  %s0 = inlined_call_operand.vmem [shape: f32[64,256], index: 0, kind: input, shape index: {}]
  %s1 = inlined_call_operand.vmem [shape: bf16[2,256,512], index: 1, kind: input, shape index: {}]
  %s2 = inlined_call_operand.hbm [shape: bf16[2,128,512], index: 2, kind: input, shape index: {}]
  %s3 = inlined_call_operand.vmem [shape: f32[2,1,512], index: 3, kind: input, shape index: {}]
  %s4 = inlined_call_operand.vmem [shape: s32[8,1], index: 4, kind: input, shape index: {}]
  %s5 = inlined_call_operand.vmem [shape: f32[64,256], index: 5, kind: output, shape index: {}]
  %s6 = sld [smem:[#allocation0]]
  $region95: #{jparser_forward.6} parent=0
    _
  %s8 = ssub.s32 1, %s6
  %s9 = scalar_select 0, %s8, %s6
  $region1: #{jparser_forward.6} parent=0
    #allocation5 [shape = 'u8[262144]{0}', space=vmem, size = 0x40000, scoped, tag = 'input window, operand 2']
    #allocation6 [shape = 's32[2]{0}', space=sflag, size = 0x8, scoped, tag = 'scoped memory for jparser_forward.6']
    #allocation7 [shape = 'u8[65536]{0}', space=vmem, size = 0x10000, scoped, tag = 'output window, operand 0']
    %10 = vsyncpa [#allocation6], 0
    %s11 = scalar_lea.sflag [#allocation6], 1
    %12 = vsyncpa %s11, 0
    loop: start=0, step=1, limit=4
    $region2: #{jparser_forward.6} parent=1 // loop_pre_header
      _
    $region3: #{jparser_forward.6} parent=1 // loop_header
      %s14 = sphi 0, %s18
      %p15 = scmp.ge.s32.totalorder %s14, 4
      %s21 = sphi 0, %s33
      %s22 = sphi 0, %s29
      %s23 = sphi 0, %s21
      %s24 = sphi 0, %s22
      %s25 = sphi 0, %s23
      %s26 = sphi 0, %s24
      %s42 = sphi 0, %s44
      %s45 = sphi 0, %s42
      %s46 = sphi 0, %s45
      %s62 = sphi 0, %s46
      %s68 = sphi 0, %s70
      %s71 = sphi 0, %s68
      %s72 = sphi 0, %s71
      %s88 = sphi 0, %s72
      %s94 = sphi 0, %s96
      %s97 = sphi 0, %s94
      %s98 = sphi 0, %s97
      %s114 = sphi 0, %s98
      %s120 = sphi 0, %s122
      %s123 = sphi 0, %s120
      %s124 = sphi 0, %s123
      %s140 = sphi 0, %s124
      %s144 = sphi 0, %s144
      %s146 = sphi 0, %s144
      %s147 = sphi 0, %s146
      %s161 = sphi 0, %s147
      %s175 = sphi 0, %s177
      %s178 = sphi 0, %s175
      %s179 = sphi 0, %s178
      %s195 = sphi 0, %s179
    $region4: #{jparser_forward.6} parent=1 // loop_header_branch
      %17 = sbr.rel (%p15) target = $region8
    $region5: #{jparser_forward.6} parent=1 // loop_body
      %s19 = ssub.s32 %s14, 1
      %s20 = ssub.s32 %s14, 2
      %s27 = sadd.s32 1, %s22
      %p28 = scmp.ge.s32.totalorder %s27, 1
      %s29 = scalar_select %p28, 0, %s27
      %s30 = sadd.s32 1, %s21
      %s31 = scalar_select %p28, %s30, %s21
      %p32 = scmp.ge.s32.totalorder %s31, 2
      %s33 = scalar_select %p32, 0, %s31
      %s34 = smul.u32 %s21, 2
      %s35 = ssub.s32 1, %s34
      %s36 = smul.u32 %s35, %s22
      %s37 = smul.u32 %s33, 2
      %s38 = ssub.s32 1, %s37
      %s39 = smul.u32 %s38, %s29
      %s40 = ssub.s32 %s36, %s39
      %p41 = scmp.eq.s32.totalorder %s40, 0
      %s43 = sadd.s32 %s42, 1
      %s44 = scalar_select %p41, %s42, %s43
      %p47 = pneg %p41
      %p48 = scmp.eq.s32.totalorder %s14, 1
      %p49 = por %p47, %p48
      %p50 = scmp.ne.s32.totalorder %s42, %s45
      %p51 = scmp.eq.s32.totalorder %s14, 0
      %p52 = por %p50, %p51
      %p53 = scmp.ne.s32.totalorder %s42, %s45
      %p54 = scmp.eq.s32.totalorder %s19, 1
      %p55 = por %p53, %p54
      %p56 = scmp.ne.s32.totalorder %s45, %s46
      %p57 = scmp.eq.s32.totalorder %s19, 0
      %p58 = por %p56, %p57
      %p59 = scmp.ne.s32.totalorder %s45, %s46
      %p60 = scmp.eq.s32.totalorder %s20, 1
      %p61 = por %p59, %p60
      %p63 = scmp.ne.s32.totalorder %s46, %s62
      %p64 = scmp.eq.s32.totalorder %s20, 0
      %p65 = por %p63, %p64
      %s66 = ssub.s32 %s21, %s33
      %p67 = scmp.eq.s32.totalorder %s66, 0
      %s69 = sadd.s32 %s68, 1
      %s70 = scalar_select %p67, %s68, %s69
      %p73 = pneg %p67
      %p74 = scmp.eq.s32.totalorder %s14, 1
      %p75 = por %p73, %p74
      %p76 = scmp.ne.s32.totalorder %s68, %s71
      %p77 = scmp.eq.s32.totalorder %s14, 0
      %p78 = por %p76, %p77
      %p79 = scmp.ne.s32.totalorder %s68, %s71
      %p80 = scmp.eq.s32.totalorder %s19, 1
      %p81 = por %p79, %p80
      %p82 = scmp.ne.s32.totalorder %s71, %s72
      %p83 = scmp.eq.s32.totalorder %s19, 0
      %p84 = por %p82, %p83
      %p85 = scmp.ne.s32.totalorder %s71, %s72
      %p86 = scmp.eq.s32.totalorder %s20, 1
      %p87 = por %p85, %p86
      %p89 = scmp.ne.s32.totalorder %s72, %s88
      %p90 = scmp.eq.s32.totalorder %s20, 0
      %p91 = por %p89, %p90
      %s92 = ssub.s32 %s21, %s33
      %p93 = scmp.eq.s32.totalorder %s92, 0
      %s95 = sadd.s32 %s94, 1
      %s96 = scalar_select %p93, %s94, %s95
      %p99 = pneg %p93
      %p100 = scmp.eq.s32.totalorder %s14, 1
      %p101 = por %p99, %p100
      %p102 = scmp.ne.s32.totalorder %s94, %s97
      %p103 = scmp.eq.s32.totalorder %s14, 0
      %p104 = por %p102, %p103
      %p105 = scmp.ne.s32.totalorder %s94, %s97
      %p106 = scmp.eq.s32.totalorder %s19, 1
      %p107 = por %p105, %p106
      %p108 = scmp.ne.s32.totalorder %s97, %s98
      %p109 = scmp.eq.s32.totalorder %s19, 0
      %p110 = por %p108, %p109
      %p111 = scmp.ne.s32.totalorder %s97, %s98
      %p112 = scmp.eq.s32.totalorder %s20, 1
      %p113 = por %p111, %p112
      %p115 = scmp.ne.s32.totalorder %s98, %s114
      %p116 = scmp.eq.s32.totalorder %s20, 0
      %p117 = por %p115, %p116
      %s118 = ssub.s32 %s21, %s33
      %p119 = scmp.eq.s32.totalorder %s118, 0
      %s121 = sadd.s32 %s120, 1
      %s122 = scalar_select %p119, %s120, %s121
      %p125 = pneg %p119
      %p126 = scmp.eq.s32.totalorder %s14, 1
      %p127 = por %p125, %p126
      %p128 = scmp.ne.s32.totalorder %s120, %s123
      %p129 = scmp.eq.s32.totalorder %s14, 0
      %p130 = por %p128, %p129
      %p131 = scmp.ne.s32.totalorder %s120, %s123
      %p132 = scmp.eq.s32.totalorder %s19, 1
      %p133 = por %p131, %p132
      %p134 = scmp.ne.s32.totalorder %s123, %s124
      %p135 = scmp.eq.s32.totalorder %s19, 0
      %p136 = por %p134, %p135
      %p137 = scmp.ne.s32.totalorder %s123, %s124
      %p138 = scmp.eq.s32.totalorder %s20, 1
      %p139 = por %p137, %p138
      %p141 = scmp.ne.s32.totalorder %s124, %s140
      %p142 = scmp.eq.s32.totalorder %s20, 0
      %p143 = por %p141, %p142
      %s145 = sadd.s32 %s144, 1
      %p148 = scmp.eq.s32.totalorder %s14, 1
      %p149 = scmp.ne.s32.totalorder %s144, %s146
      %p150 = scmp.eq.s32.totalorder %s14, 0
      %p151 = por %p149, %p150
      %p152 = scmp.ne.s32.totalorder %s144, %s146
      %p153 = scmp.eq.s32.totalorder %s19, 1
      %p154 = por %p152, %p153
      %p155 = scmp.ne.s32.totalorder %s146, %s147
      %p156 = scmp.eq.s32.totalorder %s19, 0
      %p157 = por %p155, %p156
      %p158 = scmp.ne.s32.totalorder %s146, %s147
      %p159 = scmp.eq.s32.totalorder %s20, 1
      %p160 = por %p158, %p159
      %p162 = scmp.ne.s32.totalorder %s147, %s161
      %p163 = scmp.eq.s32.totalorder %s20, 0
      %p164 = por %p162, %p163
      %s165 = smul.u32 %s21, 2
      %s166 = ssub.s32 1, %s165
      %s167 = smul.u32 %s166, %s22
      %s168 = smul.u32 %s33, 2
      %s169 = ssub.s32 1, %s168
      %s170 = smul.u32 %s169, %s29
      %s171 = ssub.s32 %s167, %s170
      %s172 = ssub.s32 %s21, %s33
      %s173 = sor.u32 %s171, %s172
      %p174 = scmp.eq.s32.totalorder %s173, 0
      %s176 = sadd.s32 %s175, 1
      %s177 = scalar_select %p174, %s175, %s176
      %p180 = pneg %p174
      %p181 = scmp.eq.s32.totalorder %s14, 1
      %p182 = por %p180, %p181
      %p183 = scmp.ne.s32.totalorder %s175, %s178
      %p184 = scmp.eq.s32.totalorder %s14, 0
      %p185 = por %p183, %p184
      %p186 = scmp.ne.s32.totalorder %s175, %s178
      %p187 = scmp.eq.s32.totalorder %s19, 1
      %p188 = por %p186, %p187
      %p189 = scmp.ne.s32.totalorder %s178, %s179
      %p190 = scmp.eq.s32.totalorder %s19, 0
      %p191 = por %p189, %p190
      %p192 = scmp.ne.s32.totalorder %s178, %s179
      %p193 = scmp.eq.s32.totalorder %s20, 1
      %p194 = por %p192, %p193
      %p196 = scmp.ne.s32.totalorder %s179, %s195
      %p197 = scmp.eq.s32.totalorder %s20, 0
      %p198 = por %p196, %p197
      %p199 = scmp.le.s32.totalorder 1, %s14
      %p200 = scmp.lt.s32.totalorder %s14, 3
      %p201 = pnand %p199, %p200
      %p202 = pneg %p201
      // Predicated region
      $region9: #{jparser_forward.6} parent=5 // pred_check
        _
      $region10: #{jparser_forward.6} parent=5 // pred_check_branch
        %204 = sbr.rel (%p201) target = $region12
      $region11: #{jparser_forward.6} parent=5 // pred_region
        %s205 = ssub.s32 %s14, 1
        // Predicated region
        $region13: #{jparser_forward.6} parent=11 // pred_check
          %p206 = pneg %p157
        $region14: #{jparser_forward.6} parent=11 // pred_check_branch
          %208 = sbr.rel (%p206) target = $region16
        $region15: #{jparser_forward.6} parent=11 // pred_region
          _
        $region16: #{jparser_forward.6} parent=11 // pred_fallthru
          _
      $region12: #{jparser_forward.6} parent=5 // pred_fallthru
        _
      %p209 = scmp.lt.s32.totalorder %s14, 2
      // Predicated region
      $region17: #{jparser_forward.6} parent=5 // pred_check
        %p210 = pneg %p209
      $region18: #{jparser_forward.6} parent=5 // pred_check_branch
        %212 = sbr.rel (%p210) target = $region20
      $region19: #{jparser_forward.6} parent=5 // pred_region
        // Predicated region
        $region21: #{jparser_forward.6} parent=19 // pred_check
          %p213 = pneg %p52
        $region22: #{jparser_forward.6} parent=19 // pred_check_branch
          %215 = sbr.rel (%p213) target = $region24
        $region23: #{jparser_forward.6} parent=19 // pred_region
          %s216 = smul.u32 %s21, 2
          %s217 = ssub.s32 1, %s216
          %s218 = smul.u32 %s217, %s22
          %s219 = smul.u32 8, %s218
          %p220 = scmp.lt.s32.totalorder %s219, 7
          %s221 = scalar_select %p220, %s219, 7
          %s222 = smul.addr %s221, 2
          %s223 = smul.addr %s222, 8
          %s224 = scalar_lea.vmem %s0, %s223
          %s225 = smul.u32 %s21, 2
          %s226 = ssub.s32 1, %s225
          %s227 = smul.u32 %s226, %s22
          %s228 = smul.u32 8, %s227
        $region24: #{jparser_forward.6} parent=19 // pred_fallthru
          _
        // Predicated region
        $region25: #{jparser_forward.6} parent=19 // pred_check
          %p229 = pneg %p78
        $region26: #{jparser_forward.6} parent=19 // pred_check_branch
          %231 = sbr.rel (%p229) target = $region28
        $region27: #{jparser_forward.6} parent=19 // pred_region
          %p232 = scmp.lt.s32.totalorder %s21, 1
          %s233 = scalar_select %p232, %s21, 1
          %s234 = smul.addr %s233, 128
          %s235 = smul.addr %s234, 4
          %s236 = scalar_lea.vmem %s1, %s235
        $region28: #{jparser_forward.6} parent=19 // pred_fallthru
          _
        // Predicated region
        $region29: #{jparser_forward.6} parent=19 // pred_check
          %p237 = pneg %p104
        $region30: #{jparser_forward.6} parent=19 // pred_check_branch
          %239 = sbr.rel (%p237) target = $region32
        $region31: #{jparser_forward.6} parent=19 // pred_region
          %s240 = sand.u32 %s94, 1
          %s241 = scalar_lea.sflag [#allocation6], %s240
          %s242 = sand.u32 %s94, 1
          %s243 = smul.addr %s242, 256
          %s244 = scalar_lea.vmem [#allocation5], %s243
          %s246 = ssub.s32 4096, 4096
          %247 = vsyncadd %s241, %s246
          %s248 = smul.addr %s21, 64
          %s249 = smul.addr %s248, 64
          %s250 = scalar_lea.hbm %s2, %s249
          %s251 = sshll.u32 %s244, 4
          %s252 = int_to_ptr.vmem [resolvable:$true] %s251
          %257 = dma.hbm_to_vmem [thread:$0]  %s250, 4096, %s252, %s241, 256, 256, 16
        $region32: #{jparser_forward.6} parent=19 // pred_fallthru
          _
        // Predicated region
        $region33: #{jparser_forward.6} parent=19 // pred_check
          %p258 = pneg %p130
        $region34: #{jparser_forward.6} parent=19 // pred_check_branch
          %260 = sbr.rel (%p258) target = $region36
        $region35: #{jparser_forward.6} parent=19 // pred_region
          %p261 = scmp.lt.s32.totalorder %s21, 1
          %s262 = scalar_select %p261, %s21, 1
          %s263 = smul.addr %s262, 4
          %s264 = scalar_lea.vmem %s3, %s263
        $region36: #{jparser_forward.6} parent=19 // pred_fallthru
          _
      $region20: #{jparser_forward.6} parent=5 // pred_fallthru
        _
      %p265 = scmp.le.s32.totalorder 1, %s14
      %p266 = scmp.lt.s32.totalorder %s14, 3
      %p267 = pnand %p265, %p266
      %p268 = pneg %p267
      // Predicated region
      $region37: #{jparser_forward.6} parent=5 // pred_check
        _
      $region38: #{jparser_forward.6} parent=5 // pred_check_branch
        %270 = sbr.rel (%p267) target = $region40
      $region39: #{jparser_forward.6} parent=5 // pred_region
        %s271 = ssub.s32 %s14, 1
        %s272 = sand.u32 %s97, 1
        %s273 = scalar_lea.sflag [#allocation6], %s272
        %s274 = sand.u32 %s97, 1
        %s275 = smul.addr %s274, 256
        %s276 = scalar_lea.vmem [#allocation5], %s275
        // Predicated region
        $region41: #{jparser_forward.6} parent=39 // pred_check
          %p277 = pneg %p110
        $region42: #{jparser_forward.6} parent=39 // pred_check_branch
          %279 = sbr.rel (%p277) target = $region44
        $region43: #{jparser_forward.6} parent=39 // pred_region
          %280 = dma.done %s273, 4096
        $region44: #{jparser_forward.6} parent=39 // pred_fallthru
          _
        %s281 = smul.u32 %s23, 2
        %s282 = ssub.s32 1, %s281
        %s283 = smul.u32 %s282, %s24
        %s284 = smul.u32 8, %s283
        %p285 = scmp.lt.s32.totalorder %s284, 7
        %s286 = scalar_select %p285, %s284, 7
        %s287 = smul.addr %s286, 2
        %s288 = smul.addr %s287, 8
        %s289 = scalar_lea.vmem %s0, %s288
        %p290 = pneg %p58
        %p291 = pneg %p55
        %p292 = scmp.lt.s32.totalorder %s23, 1
        %s293 = scalar_select %p292, %s23, 1
        %s294 = smul.addr %s293, 128
        %s295 = smul.addr %s294, 4
        %s296 = scalar_lea.vmem %s1, %s295
        %p297 = pneg %p84
        %p298 = pneg %p81
        %s299 = sand.u32 %s97, 1
        %s300 = scalar_lea.sflag [#allocation6], %s299
        %s301 = sand.u32 %s97, 1
        %s302 = smul.addr %s301, 256
        %s303 = scalar_lea.vmem [#allocation5], %s302
        %p304 = pneg %p110
        %p305 = pneg %p107
        %p306 = scmp.lt.s32.totalorder %s23, 1
        %s307 = scalar_select %p306, %s23, 1
        %s308 = smul.addr %s307, 4
        %s309 = scalar_lea.vmem %s3, %s308
        %p310 = pneg %p136
        %p311 = pneg %p133
        %p312 = pneg %p157
        %p313 = pneg %p154
        %p314 = pneg %p191
        %p315 = pneg %p188
        %s316 = sand.u32 %s178, 1
        %s317 = sand.u32 %s178, 1
        %s318 = smul.addr %s317, 64
        %s319 = scalar_lea.vmem [#allocation7], %s318
        %s320 = smul.u32 %s23, 2
        %s321 = ssub.s32 1, %s320
        %s322 = smul.u32 %s321, %s24
        %s323 = smul.u32 8, %s322
        %p324 = scmp.lt.s32.totalorder %s323, 7
        %s325 = scalar_select %p324, %s323, 7
        %s326 = smul.addr %s325, 2
        %s327 = smul.addr %s326, 8
        %s328 = scalar_lea.vmem %s0, %s327
        %s329 = smul.u32 %s23, 2
        %s330 = ssub.s32 1, %s329
        %s331 = smul.u32 %s330, %s24
        %s332 = smul.u32 8, %s331
        %p333 = scmp.lt.s32.totalorder %s23, 1
        %s334 = scalar_select %p333, %s23, 1
        %s335 = smul.addr %s334, 128
        %s336 = smul.addr %s335, 4
        %s337 = scalar_lea.vmem %s1, %s336
        %p338 = scmp.lt.s32.totalorder %s23, 1
        %s339 = scalar_select %p338, %s23, 1
        %s340 = smul.addr %s339, 4
        %s341 = scalar_lea.vmem %s3, %s340
        %s342 = smul.u32 %s23, 2
        %s343 = ssub.s32 1, %s342
        %s344 = smul.u32 %s343, %s24
        %s345 = smul.u32 8, %s344
        %p347 = scmp.eq.s32.totalorder %s24, 0
        // Predicated region
        $region45: #{jparser_forward.6} parent=39 // pred_check
          %p348 = pneg %p347
        $region46: #{jparser_forward.6} parent=39 // pred_check_branch
          %350 = sbr.rel (%p348) target = $region48
        $region47: #{jparser_forward.6} parent=39 // pred_region
          %351 = vst [vmem:[#allocation2] sm:$0xff] 0.0
          %352 = vst [vmem:[#allocation3] sm:$0xff] 0.0
        $region48: #{jparser_forward.6} parent=39 // pred_fallthru
          _
        %v353 = vld [vmem:[%s276] sm:$0xff]
        %v354 = vld [vmem:[%s276 + $0x8] sm:$0xff]
        %v355 = vld [vmem:[%s276 + $0x10] sm:$0xff]
        %v356 = vld [vmem:[%s276 + $0x18] sm:$0xff]
        %v357 = vld [vmem:[%s276 + $0x20] sm:$0xff]
        %v358 = vld [vmem:[%s276 + $0x28] sm:$0xff]
        %v359 = vld [vmem:[%s276 + $0x30] sm:$0xff]
        %v360 = vld [vmem:[%s276 + $0x38] sm:$0xff]
        %v361 = vld [vmem:[%s276 + $0x40] sm:$0xff]
        %v362 = vld [vmem:[%s276 + $0x48] sm:$0xff]
        %v363 = vld [vmem:[%s276 + $0x50] sm:$0xff]
        %v364 = vld [vmem:[%s276 + $0x58] sm:$0xff]
        %v365 = vld [vmem:[%s276 + $0x60] sm:$0xff]
        %v366 = vld [vmem:[%s276 + $0x68] sm:$0xff]
        %v367 = vld [vmem:[%s276 + $0x70] sm:$0xff]
        %v368 = vld [vmem:[%s276 + $0x78] sm:$0xff]
        %v369 = vld [vmem:[%s276 + $0x80] sm:$0xff]
        %v370 = vld [vmem:[%s276 + $0x88] sm:$0xff]
        %v371 = vld [vmem:[%s276 + $0x90] sm:$0xff]
        %v372 = vld [vmem:[%s276 + $0x98] sm:$0xff]
        %v373 = vld [vmem:[%s276 + $0xa0] sm:$0xff]
        %v374 = vld [vmem:[%s276 + $0xa8] sm:$0xff]
        %v375 = vld [vmem:[%s276 + $0xb0] sm:$0xff]
        %v376 = vld [vmem:[%s276 + $0xb8] sm:$0xff]
        %v377 = vld [vmem:[%s276 + $0xc0] sm:$0xff]
        %v378 = vld [vmem:[%s276 + $0xc8] sm:$0xff]
        %v379 = vld [vmem:[%s276 + $0xd0] sm:$0xff]
        %v380 = vld [vmem:[%s276 + $0xd8] sm:$0xff]
        %v381 = vld [vmem:[%s276 + $0xe0] sm:$0xff]
        %v382 = vld [vmem:[%s276 + $0xe8] sm:$0xff]
        %v383 = vld [vmem:[%s276 + $0xf0] sm:$0xff]
        %v384 = vld [vmem:[%s276 + $0xf8] sm:$0xff]
        %v385 = vld [vmem:[%s4] sm:$0xff]
        %v386 = vld [vmem:[%s328] sm:$0xff]
        %v387 = vld [vmem:[%s328 + $0x8] sm:$0xff]
        %v388 = vld [vmem:[%s328 + $0x10] sm:$0xff]
        %v389 = vld [vmem:[%s328 + $0x18] sm:$0xff]
        %v390 = vld [vmem:[%s328 + $0x20] sm:$0xff]
        %v391 = vld [vmem:[%s328 + $0x28] sm:$0xff]
        %v392 = vld [vmem:[%s328 + $0x30] sm:$0xff]
        %v393 = vld [vmem:[%s328 + $0x38] sm:$0xff]
        %v394 = vld [vmem:[%s328 + $0x40] sm:$0xff]
        %v395 = vld [vmem:[%s328 + $0x48] sm:$0xff]
        %v396 = vld [vmem:[%s328 + $0x50] sm:$0xff]
        %v397 = vld [vmem:[%s328 + $0x58] sm:$0xff]
        %v398 = vld [vmem:[%s328 + $0x60] sm:$0xff]
        %v399 = vld [vmem:[%s328 + $0x68] sm:$0xff]
        %v400 = vld [vmem:[%s328 + $0x70] sm:$0xff]
        %v401 = vld [vmem:[%s328 + $0x78] sm:$0xff]
        %v402 = vpack.c.bf16 %v388, %v386
        %v403 = vpack.c.bf16 %v389, %v387
        %v404 = vpack.c.bf16 %v392, %v390
        %v405 = vpack.c.bf16 %v393, %v391
        %v406 = vpack.c.bf16 %v396, %v394
        %v407 = vpack.c.bf16 %v397, %v395
        %v408 = vpack.c.bf16 %v400, %v398
        %v409 = vpack.c.bf16 %v401, %v399
        %v410 = vld [vmem:[%s337] sm:$0xff]
        %v411 = vld [vmem:[%s337 + $0x8] sm:$0xff]
        %v412 = vld [vmem:[%s337 + $0x10] sm:$0xff]
        %v413 = vld [vmem:[%s337 + $0x18] sm:$0xff]
        %v414 = vld [vmem:[%s337 + $0x20] sm:$0xff]
        %v415 = vld [vmem:[%s337 + $0x28] sm:$0xff]
        %v416 = vld [vmem:[%s337 + $0x30] sm:$0xff]
        %v417 = vld [vmem:[%s337 + $0x38] sm:$0xff]
        %v418 = vld [vmem:[%s337 + $0x40] sm:$0xff]
        %v419 = vld [vmem:[%s337 + $0x48] sm:$0xff]
        %v420 = vld [vmem:[%s337 + $0x50] sm:$0xff]
        %v421 = vld [vmem:[%s337 + $0x58] sm:$0xff]
        %v422 = vld [vmem:[%s337 + $0x60] sm:$0xff]
        %v423 = vld [vmem:[%s337 + $0x68] sm:$0xff]
        %v424 = vld [vmem:[%s337 + $0x70] sm:$0xff]
        %v425 = vld [vmem:[%s337 + $0x78] sm:$0xff]
        %v426 = vld [vmem:[%s337 + $0x80] sm:$0xff]
        %v427 = vld [vmem:[%s337 + $0x88] sm:$0xff]
        %v428 = vld [vmem:[%s337 + $0x90] sm:$0xff]
        %v429 = vld [vmem:[%s337 + $0x98] sm:$0xff]
        %v430 = vld [vmem:[%s337 + $0xa0] sm:$0xff]
        %v431 = vld [vmem:[%s337 + $0xa8] sm:$0xff]
        %v432 = vld [vmem:[%s337 + $0xb0] sm:$0xff]
        %v433 = vld [vmem:[%s337 + $0xb8] sm:$0xff]
        %v434 = vld [vmem:[%s337 + $0xc0] sm:$0xff]
        %v435 = vld [vmem:[%s337 + $0xc8] sm:$0xff]
        %v436 = vld [vmem:[%s337 + $0xd0] sm:$0xff]
        %v437 = vld [vmem:[%s337 + $0xd8] sm:$0xff]
        %v438 = vld [vmem:[%s337 + $0xe0] sm:$0xff]
        %v439 = vld [vmem:[%s337 + $0xe8] sm:$0xff]
        %v440 = vld [vmem:[%s337 + $0xf0] sm:$0xff]
        %v441 = vld [vmem:[%s337 + $0xf8] sm:$0xff]
        %v442 = vld [vmem:[%s337 + $0x100] sm:$0xff]
        %v443 = vld [vmem:[%s337 + $0x108] sm:$0xff]
        %v444 = vld [vmem:[%s337 + $0x110] sm:$0xff]
        %v445 = vld [vmem:[%s337 + $0x118] sm:$0xff]
        %v446 = vld [vmem:[%s337 + $0x120] sm:$0xff]
        %v447 = vld [vmem:[%s337 + $0x128] sm:$0xff]
        %v448 = vld [vmem:[%s337 + $0x130] sm:$0xff]
        %v449 = vld [vmem:[%s337 + $0x138] sm:$0xff]
        %v450 = vld [vmem:[%s337 + $0x140] sm:$0xff]
        %v451 = vld [vmem:[%s337 + $0x148] sm:$0xff]
        %v452 = vld [vmem:[%s337 + $0x150] sm:$0xff]
        %v453 = vld [vmem:[%s337 + $0x158] sm:$0xff]
        %v454 = vld [vmem:[%s337 + $0x160] sm:$0xff]
        %v455 = vld [vmem:[%s337 + $0x168] sm:$0xff]
        %v456 = vld [vmem:[%s337 + $0x170] sm:$0xff]
        %v457 = vld [vmem:[%s337 + $0x178] sm:$0xff]
        %v458 = vld [vmem:[%s337 + $0x180] sm:$0xff]
        %v459 = vld [vmem:[%s337 + $0x188] sm:$0xff]
        %v460 = vld [vmem:[%s337 + $0x190] sm:$0xff]
        %v461 = vld [vmem:[%s337 + $0x198] sm:$0xff]
        %v462 = vld [vmem:[%s337 + $0x1a0] sm:$0xff]
        %v463 = vld [vmem:[%s337 + $0x1a8] sm:$0xff]
        %v464 = vld [vmem:[%s337 + $0x1b0] sm:$0xff]
        %v465 = vld [vmem:[%s337 + $0x1b8] sm:$0xff]
        %v466 = vld [vmem:[%s337 + $0x1c0] sm:$0xff]
        %v467 = vld [vmem:[%s337 + $0x1c8] sm:$0xff]
        %v468 = vld [vmem:[%s337 + $0x1d0] sm:$0xff]
        %v469 = vld [vmem:[%s337 + $0x1d8] sm:$0xff]
        %v470 = vld [vmem:[%s337 + $0x1e0] sm:$0xff]
        %v471 = vld [vmem:[%s337 + $0x1e8] sm:$0xff]
        %v472 = vld [vmem:[%s337 + $0x1f0] sm:$0xff]
        %v473 = vld [vmem:[%s337 + $0x1f8] sm:$0xff]
        %v474 = vld [vmem:[%s341] sm:$0xf]
        %v476 = vlaneseq
        %v477 = vshrl.u32 %v476, 7
        %v478 = vsub.s32 0, %v477
        %v479 = vrot.slane %v474, %v478
        %v480 = vlaneseq
        %v481 = vshrl.u32 %v480, 7
        %v482 = vsub.s32 1, %v481
        %v483 = vrot.slane %v474, %v482
        %v484 = vlaneseq
        %v485 = vshrl.u32 %v484, 7
        %v486 = vsub.s32 2, %v485
        %v487 = vrot.slane %v474, %v486
        %v488 = vlaneseq
        %v489 = vshrl.u32 %v488, 7
        %v490 = vsub.s32 3, %v489
        %v491 = vrot.slane %v474, %v490
        %v560 = vunpack.c.l.b16 %v410
        %v561 = vunpack.c.h.b16 %v410
        %v562 = vunpack.c.l.b16 %v411
        %v563 = vunpack.c.h.b16 %v411
        %v564 = vunpack.c.l.b16 %v412
        %v565 = vunpack.c.h.b16 %v412
        %v566 = vunpack.c.l.b16 %v413
        %v567 = vunpack.c.h.b16 %v413
        %v568 = vunpack.c.l.b16 %v414
        %v569 = vunpack.c.h.b16 %v414
        %v570 = vunpack.c.l.b16 %v415
        %v571 = vunpack.c.h.b16 %v415
        %v572 = vunpack.c.l.b16 %v416
        %v573 = vunpack.c.h.b16 %v416
        %v574 = vunpack.c.l.b16 %v417
        %v575 = vunpack.c.h.b16 %v417
        %v576 = vunpack.c.l.b16 %v418
        %v577 = vunpack.c.h.b16 %v418
        %v578 = vunpack.c.l.b16 %v419
        %v579 = vunpack.c.h.b16 %v419
        %v580 = vunpack.c.l.b16 %v420
        %v581 = vunpack.c.h.b16 %v420
        %v582 = vunpack.c.l.b16 %v421
        %v583 = vunpack.c.h.b16 %v421
        %v584 = vunpack.c.l.b16 %v422
        %v585 = vunpack.c.h.b16 %v422
        %v586 = vunpack.c.l.b16 %v423
        %v587 = vunpack.c.h.b16 %v423
        %v588 = vunpack.c.l.b16 %v424
        %v589 = vunpack.c.h.b16 %v424
        %v590 = vunpack.c.l.b16 %v425
        %v591 = vunpack.c.h.b16 %v425
        %v592 = vunpack.c.l.b16 %v426
        %v593 = vunpack.c.h.b16 %v426
        %v594 = vunpack.c.l.b16 %v427
        %v595 = vunpack.c.h.b16 %v427
        %v596 = vunpack.c.l.b16 %v428
        %v597 = vunpack.c.h.b16 %v428
        %v598 = vunpack.c.l.b16 %v429
        %v599 = vunpack.c.h.b16 %v429
        %v600 = vunpack.c.l.b16 %v430
        %v601 = vunpack.c.h.b16 %v430
        %v602 = vunpack.c.l.b16 %v431
        %v603 = vunpack.c.h.b16 %v431
        %v604 = vunpack.c.l.b16 %v432
        %v605 = vunpack.c.h.b16 %v432
        %v606 = vunpack.c.l.b16 %v433
        %v607 = vunpack.c.h.b16 %v433
        %v608 = vunpack.c.l.b16 %v434
        %v609 = vunpack.c.h.b16 %v434
        %v610 = vunpack.c.l.b16 %v435
        %v611 = vunpack.c.h.b16 %v435
        %v612 = vunpack.c.l.b16 %v436
        %v613 = vunpack.c.h.b16 %v436
        %v614 = vunpack.c.l.b16 %v437
        %v615 = vunpack.c.h.b16 %v437
        %v616 = vunpack.c.l.b16 %v438
        %v617 = vunpack.c.h.b16 %v438
        %v618 = vunpack.c.l.b16 %v439
        %v619 = vunpack.c.h.b16 %v439
        %v620 = vunpack.c.l.b16 %v440
        %v621 = vunpack.c.h.b16 %v440
        %v622 = vunpack.c.l.b16 %v441
        %v623 = vunpack.c.h.b16 %v441
        %v624 = vunpack.c.l.b16 %v442
        %v625 = vunpack.c.h.b16 %v442
        %v626 = vunpack.c.l.b16 %v443
        %v627 = vunpack.c.h.b16 %v443
        %v628 = vunpack.c.l.b16 %v444
        %v629 = vunpack.c.h.b16 %v444
        %v630 = vunpack.c.l.b16 %v445
        %v631 = vunpack.c.h.b16 %v445
        %v632 = vunpack.c.l.b16 %v446
        %v633 = vunpack.c.h.b16 %v446
        %v634 = vunpack.c.l.b16 %v447
        %v635 = vunpack.c.h.b16 %v447
        %v636 = vunpack.c.l.b16 %v448
        %v637 = vunpack.c.h.b16 %v448
        %v638 = vunpack.c.l.b16 %v449
        %v639 = vunpack.c.h.b16 %v449
        %v640 = vunpack.c.l.b16 %v450
        %v641 = vunpack.c.h.b16 %v450
        %v642 = vunpack.c.l.b16 %v451
        %v643 = vunpack.c.h.b16 %v451
        %v644 = vunpack.c.l.b16 %v452
        %v645 = vunpack.c.h.b16 %v452
        %v646 = vunpack.c.l.b16 %v453
        %v647 = vunpack.c.h.b16 %v453
        %v648 = vunpack.c.l.b16 %v454
        %v649 = vunpack.c.h.b16 %v454
        %v650 = vunpack.c.l.b16 %v455
        %v651 = vunpack.c.h.b16 %v455
        %v652 = vunpack.c.l.b16 %v456
        %v653 = vunpack.c.h.b16 %v456
        %v654 = vunpack.c.l.b16 %v457
        %v655 = vunpack.c.h.b16 %v457
        %v656 = vunpack.c.l.b16 %v458
        %v657 = vunpack.c.h.b16 %v458
        %v658 = vunpack.c.l.b16 %v459
        %v659 = vunpack.c.h.b16 %v459
        %v660 = vunpack.c.l.b16 %v460
        %v661 = vunpack.c.h.b16 %v460
        %v662 = vunpack.c.l.b16 %v461
        %v663 = vunpack.c.h.b16 %v461
        %v664 = vunpack.c.l.b16 %v462
        %v665 = vunpack.c.h.b16 %v462
        %v666 = vunpack.c.l.b16 %v463
        %v667 = vunpack.c.h.b16 %v463
        %v668 = vunpack.c.l.b16 %v464
        %v669 = vunpack.c.h.b16 %v464
        %v670 = vunpack.c.l.b16 %v465
        %v671 = vunpack.c.h.b16 %v465
        %v672 = vunpack.c.l.b16 %v466
        %v673 = vunpack.c.h.b16 %v466
        %v674 = vunpack.c.l.b16 %v467
        %v675 = vunpack.c.h.b16 %v467
        %v676 = vunpack.c.l.b16 %v468
        %v677 = vunpack.c.h.b16 %v468
        %v678 = vunpack.c.l.b16 %v469
        %v679 = vunpack.c.h.b16 %v469
        %v680 = vunpack.c.l.b16 %v470
        %v681 = vunpack.c.h.b16 %v470
        %v682 = vunpack.c.l.b16 %v471
        %v683 = vunpack.c.h.b16 %v471
        %v684 = vunpack.c.l.b16 %v472
        %v685 = vunpack.c.h.b16 %v472
        %v686 = vunpack.c.l.b16 %v473
        %v687 = vunpack.c.h.b16 %v473
        %v688 = vpack.c.b16 %v564, %v560
        %v689 = vpack.c.b16 %v565, %v561
        %v690 = vpack.c.b16 %v566, %v562
        %v691 = vpack.c.b16 %v567, %v563
        %v692 = vpack.c.b16 %v572, %v568
        %v693 = vpack.c.b16 %v573, %v569
        %v694 = vpack.c.b16 %v574, %v570
        %v695 = vpack.c.b16 %v575, %v571
        %v696 = vpack.c.b16 %v580, %v576
        %v697 = vpack.c.b16 %v581, %v577
        %v698 = vpack.c.b16 %v582, %v578
        %v699 = vpack.c.b16 %v583, %v579
        %v700 = vpack.c.b16 %v588, %v584
        %v701 = vpack.c.b16 %v589, %v585
        %v702 = vpack.c.b16 %v590, %v586
        %v703 = vpack.c.b16 %v591, %v587
        %v704 = vpack.c.b16 %v596, %v592
        %v705 = vpack.c.b16 %v597, %v593
        %v706 = vpack.c.b16 %v598, %v594
        %v707 = vpack.c.b16 %v599, %v595
        %v708 = vpack.c.b16 %v604, %v600
        %v709 = vpack.c.b16 %v605, %v601
        %v710 = vpack.c.b16 %v606, %v602
        %v711 = vpack.c.b16 %v607, %v603
        %v712 = vpack.c.b16 %v612, %v608
        %v713 = vpack.c.b16 %v613, %v609
        %v714 = vpack.c.b16 %v614, %v610
        %v715 = vpack.c.b16 %v615, %v611
        %v716 = vpack.c.b16 %v620, %v616
        %v717 = vpack.c.b16 %v621, %v617
        %v718 = vpack.c.b16 %v622, %v618
        %v719 = vpack.c.b16 %v623, %v619
        %v720 = vpack.c.b16 %v628, %v624
        %v721 = vpack.c.b16 %v629, %v625
        %v722 = vpack.c.b16 %v630, %v626
        %v723 = vpack.c.b16 %v631, %v627
        %v724 = vpack.c.b16 %v636, %v632
        %v725 = vpack.c.b16 %v637, %v633
        %v726 = vpack.c.b16 %v638, %v634
        %v727 = vpack.c.b16 %v639, %v635
        %v728 = vpack.c.b16 %v644, %v640
        %v729 = vpack.c.b16 %v645, %v641
        %v730 = vpack.c.b16 %v646, %v642
        %v731 = vpack.c.b16 %v647, %v643
        %v732 = vpack.c.b16 %v652, %v648
        %v733 = vpack.c.b16 %v653, %v649
        %v734 = vpack.c.b16 %v654, %v650
        %v735 = vpack.c.b16 %v655, %v651
        %v736 = vpack.c.b16 %v660, %v656
        %v737 = vpack.c.b16 %v661, %v657
        %v738 = vpack.c.b16 %v662, %v658
        %v739 = vpack.c.b16 %v663, %v659
        %v740 = vpack.c.b16 %v668, %v664
        %v741 = vpack.c.b16 %v669, %v665
        %v742 = vpack.c.b16 %v670, %v666
        %v743 = vpack.c.b16 %v671, %v667
        %v744 = vpack.c.b16 %v676, %v672
        %v745 = vpack.c.b16 %v677, %v673
        %v746 = vpack.c.b16 %v678, %v674
        %v747 = vpack.c.b16 %v679, %v675
        %v748 = vpack.c.b16 %v684, %v680
        %v749 = vpack.c.b16 %v685, %v681
        %v750 = vpack.c.b16 %v686, %v682
        %v751 = vpack.c.b16 %v687, %v683
        %816 = vmatprep.subr.bf16.mxu0 %v717
        %817 = vmatpush1.bf16.msra.mxu0 %v716
        %818 = vmatprep.subr.bf16.mxu0 %v713
        %819 = vmatpush1.bf16.msra.mxu0 %v712
        %820 = vmatprep.subr.bf16.mxu0 %v709
        %821 = vmatpush1.bf16.msra.mxu0 %v708
        %822 = vmatprep.subr.bf16.mxu0 %v705
        %823 = vmatpush1.bf16.msra.mxu0 %v704
        %824 = vmatprep.subr.bf16.mxu0 %v701
        %825 = vmatpush1.bf16.msra.mxu0 %v700
        %826 = vmatprep.subr.bf16.mxu0 %v697
        %827 = vmatpush1.bf16.msra.mxu0 %v696
        %828 = vmatprep.subr.bf16.mxu0 %v693
        %829 = vmatpush1.bf16.msra.mxu0 %v692
        %830 = vmatprep.subr.bf16.mxu0 %v689
        %831 = vmatpush1.bf16.msra.mxu0 %v688
        %832 = vmatprep.subr.bf16.mxu0 %v749
        %833 = vmatpush2.bf16.msra.mxu0 %v748
        %834 = vmatprep.subr.bf16.mxu0 %v745
        %835 = vmatpush2.bf16.msra.mxu0 %v744
        %836 = vmatprep.subr.bf16.mxu0 %v741
        %837 = vmatpush2.bf16.msra.mxu0 %v740
        %838 = vmatprep.subr.bf16.mxu0 %v737
        %839 = vmatpush2.bf16.msra.mxu0 %v736
        %840 = vmatprep.subr.bf16.mxu0 %v733
        %841 = vmatpush2.bf16.msra.mxu0 %v732
        %842 = vmatprep.subr.bf16.mxu0 %v729
        %843 = vmatpush2.bf16.msra.mxu0 %v728
        %844 = vmatprep.subr.bf16.mxu0 %v725
        %845 = vmatpush2.bf16.msra.mxu0 %v724
        %846 = vmatprep.subr.bf16.mxu0 %v721
        %847 = vmatpush2.bf16.msra.mxu0 %v720
        %848 = vmatprep.mubr.bf16.mxu0 %v403
        %849 = vmatmul.mubr.bf16.gmra.mxu0 %v402
        %v850 = vpop.f32.mrf.mxu0
        %v851 = vadd.f32 %v479, %v850
        %v852 = vpop.f32.mrf.mxu0
        %v853 = vadd.f32 %v483, %v852
        %v854 = vpop.f32.mrf.mxu0
        %v855 = vadd.f32 %v479, %v854
        %v856 = vpop.f32.mrf.mxu0
        %v857 = vadd.f32 %v483, %v856
        %858 = vmatprep.mubr.bf16.mxu0 %v405
        %859 = vmatmul.mubr.bf16.gmra.mxu0 %v404
        %v860 = vpop.f32.mrf.mxu0
        %v861 = vadd.f32 %v479, %v860
        %v862 = vpop.f32.mrf.mxu0
        %v863 = vadd.f32 %v483, %v862
        %v864 = vpop.f32.mrf.mxu0
        %v865 = vadd.f32 %v479, %v864
        %v866 = vpop.f32.mrf.mxu0
        %v867 = vadd.f32 %v483, %v866
        %868 = vmatprep.mubr.bf16.mxu0 %v407
        %869 = vmatmul.mubr.bf16.gmra.mxu0 %v406
        %v870 = vpop.f32.mrf.mxu0
        %v871 = vadd.f32 %v479, %v870
        %v872 = vpop.f32.mrf.mxu0
        %v873 = vadd.f32 %v483, %v872
        %v874 = vpop.f32.mrf.mxu0
        %v875 = vadd.f32 %v479, %v874
        %v876 = vpop.f32.mrf.mxu0
        %v877 = vadd.f32 %v483, %v876
        %878 = vmatprep.mubr.bf16.mxu0 %v409
        %879 = vmatmul.mubr.bf16.gmra.mxu0 %v408
        %v880 = vpop.f32.mrf.mxu0
        %v881 = vadd.f32 %v479, %v880
        %v882 = vpop.f32.mrf.mxu0
        %v883 = vadd.f32 %v483, %v882
        %v884 = vpop.f32.mrf.mxu0
        %v885 = vadd.f32 %v479, %v884
        %v886 = vpop.f32.mrf.mxu0
        %v887 = vadd.f32 %v483, %v886
        %888 = vdwg.mxu0
        %889 = vmatprep.subr.bf16.mxu0 %v719
        %890 = vmatpush1.bf16.msra.mxu0 %v718
        %891 = vmatprep.subr.bf16.mxu0 %v715
        %892 = vmatpush1.bf16.msra.mxu0 %v714
        %893 = vmatprep.subr.bf16.mxu0 %v711
        %894 = vmatpush1.bf16.msra.mxu0 %v710
        %895 = vmatprep.subr.bf16.mxu0 %v707
        %896 = vmatpush1.bf16.msra.mxu0 %v706
        %897 = vmatprep.subr.bf16.mxu0 %v703
        %898 = vmatpush1.bf16.msra.mxu0 %v702
        %899 = vmatprep.subr.bf16.mxu0 %v699
        %900 = vmatpush1.bf16.msra.mxu0 %v698
        %901 = vmatprep.subr.bf16.mxu0 %v695
        %902 = vmatpush1.bf16.msra.mxu0 %v694
        %903 = vmatprep.subr.bf16.mxu0 %v691
        %904 = vmatpush1.bf16.msra.mxu0 %v690
        %905 = vmatprep.subr.bf16.mxu0 %v751
        %906 = vmatpush2.bf16.msra.mxu0 %v750
        %907 = vmatprep.subr.bf16.mxu0 %v747
        %908 = vmatpush2.bf16.msra.mxu0 %v746
        %909 = vmatprep.subr.bf16.mxu0 %v743
        %910 = vmatpush2.bf16.msra.mxu0 %v742
        %911 = vmatprep.subr.bf16.mxu0 %v739
        %912 = vmatpush2.bf16.msra.mxu0 %v738
        %913 = vmatprep.subr.bf16.mxu0 %v735
        %914 = vmatpush2.bf16.msra.mxu0 %v734
        %915 = vmatprep.subr.bf16.mxu0 %v731
        %916 = vmatpush2.bf16.msra.mxu0 %v730
        %917 = vmatprep.subr.bf16.mxu0 %v727
        %918 = vmatpush2.bf16.msra.mxu0 %v726
        %919 = vmatprep.subr.bf16.mxu0 %v723
        %920 = vmatpush2.bf16.msra.mxu0 %v722
        %921 = vmatprep.mubr.bf16.mxu0 %v403
        %922 = vmatmul.mubr.bf16.gmra.mxu0 %v402
        %v923 = vpop.f32.mrf.mxu0
        %v924 = vadd.f32 %v487, %v923
        %v925 = vpop.f32.mrf.mxu0
        %v926 = vadd.f32 %v491, %v925
        %v927 = vpop.f32.mrf.mxu0
        %v928 = vadd.f32 %v487, %v927
        %v929 = vpop.f32.mrf.mxu0
        %v930 = vadd.f32 %v491, %v929
        %931 = vmatprep.mubr.bf16.mxu0 %v405
        %932 = vmatmul.mubr.bf16.gmra.mxu0 %v404
        %v933 = vpop.f32.mrf.mxu0
        %v934 = vadd.f32 %v487, %v933
        %v935 = vpop.f32.mrf.mxu0
        %v936 = vadd.f32 %v491, %v935
        %v937 = vpop.f32.mrf.mxu0
        %v938 = vadd.f32 %v487, %v937
        %v939 = vpop.f32.mrf.mxu0
        %v940 = vadd.f32 %v491, %v939
        %941 = vmatprep.mubr.bf16.mxu0 %v407
        %942 = vmatmul.mubr.bf16.gmra.mxu0 %v406
        %v943 = vpop.f32.mrf.mxu0
        %v944 = vadd.f32 %v487, %v943
        %v945 = vpop.f32.mrf.mxu0
        %v946 = vadd.f32 %v491, %v945
        %v947 = vpop.f32.mrf.mxu0
        %v948 = vadd.f32 %v487, %v947
        %v949 = vpop.f32.mrf.mxu0
        %v950 = vadd.f32 %v491, %v949
        %951 = vmatprep.mubr.bf16.mxu0 %v409
        %952 = vmatmul.mubr.bf16.gmra.mxu0 %v408
        %v953 = vpop.f32.mrf.mxu0
        %v954 = vadd.f32 %v487, %v953
        %v955 = vpop.f32.mrf.mxu0
        %v956 = vadd.f32 %v491, %v955
        %v957 = vpop.f32.mrf.mxu0
        %v958 = vadd.f32 %v487, %v957
        %v959 = vpop.f32.mrf.mxu0
        %v960 = vadd.f32 %v491, %v959
        %961 = vdwg.mxu0
        %962 = vst [vmem:[#allocation4] sm:$0xff] %v851
        %963 = vst [vmem:[#allocation4 + $0x8] sm:$0xff] %v853
        %964 = vst [vmem:[#allocation4 + $0x10] sm:$0xff] %v924
        %965 = vst [vmem:[#allocation4 + $0x18] sm:$0xff] %v926
        %966 = vst [vmem:[#allocation4 + $0x20] sm:$0xff] %v855
        %967 = vst [vmem:[#allocation4 + $0x28] sm:$0xff] %v857
        %968 = vst [vmem:[#allocation4 + $0x30] sm:$0xff] %v928
        %969 = vst [vmem:[#allocation4 + $0x38] sm:$0xff] %v930
        %970 = vst [vmem:[#allocation4 + $0x40] sm:$0xff] %v861
        %971 = vst [vmem:[#allocation4 + $0x48] sm:$0xff] %v863
        %972 = vst [vmem:[#allocation4 + $0x50] sm:$0xff] %v934
        %973 = vst [vmem:[#allocation4 + $0x58] sm:$0xff] %v936
        %974 = vst [vmem:[#allocation4 + $0x60] sm:$0xff] %v865
        %975 = vst [vmem:[#allocation4 + $0x68] sm:$0xff] %v867
        %976 = vst [vmem:[#allocation4 + $0x70] sm:$0xff] %v938
        %977 = vst [vmem:[#allocation4 + $0x78] sm:$0xff] %v940
        %978 = vst [vmem:[#allocation4 + $0x80] sm:$0xff] %v871
        %979 = vst [vmem:[#allocation4 + $0x88] sm:$0xff] %v873
        %980 = vst [vmem:[#allocation4 + $0x90] sm:$0xff] %v944
        %981 = vst [vmem:[#allocation4 + $0x98] sm:$0xff] %v946
        %982 = vst [vmem:[#allocation4 + $0xa0] sm:$0xff] %v875
        %983 = vst [vmem:[#allocation4 + $0xa8] sm:$0xff] %v877
        %984 = vst [vmem:[#allocation4 + $0xb0] sm:$0xff] %v948
        %985 = vst [vmem:[#allocation4 + $0xb8] sm:$0xff] %v950
        %986 = vst [vmem:[#allocation4 + $0xc0] sm:$0xff] %v881
        %987 = vst [vmem:[#allocation4 + $0xc8] sm:$0xff] %v883
        %988 = vst [vmem:[#allocation4 + $0xd0] sm:$0xff] %v954
        %989 = vst [vmem:[#allocation4 + $0xd8] sm:$0xff] %v956
        %990 = vst [vmem:[#allocation4 + $0xe0] sm:$0xff] %v885
        %991 = vst [vmem:[#allocation4 + $0xe8] sm:$0xff] %v887
        %992 = vst [vmem:[#allocation4 + $0xf0] sm:$0xff] %v958
        %993 = vst [vmem:[#allocation4 + $0xf8] sm:$0xff] %v960
        %s994 = smul.u32 %s23, 2
        %s995 = ssub.s32 1, %s994
        %s996 = smul.u32 %s995, %s24
        %s997 = smul.u32 %s996, 8
        %v998 = vld [vmem:[#allocation2] sm:$0xff]
        %v999 = vld [vmem:[#allocation3] sm:$0xff]
        %p1000 = scmp.eq.s32.totalorder %s23, 1
        %s1001 = scalar_select %p1000, 7, 0
        %s1002 = smul.u32 %s1001, 8
        %s1003 = sshra.s32 %s1002, 3
        %s1004 = sand.u32 %s1002, 7
        %s1005 = smul.u32 %s1003, 4
        %s1006 = smul.addr %s1005, 8
        %s1007 = scalar_lea.vmem [#allocation4], %s1006
        %v1008 = vld [vmem:[%s1007] sm:$0xff]
        %v1009 = vld [vmem:[%s1007 + $0x8] sm:$0xff]
        %v1010 = vld [vmem:[%s1007 + $0x10] sm:$0xff]
        %v1011 = vld [vmem:[%s1007 + $0x18] sm:$0xff]
        %v1012 = vpack.c.bf16 %v998, %v998
        %v1045 = vunpack.c.l.b16 %v353
        %v1046 = vunpack.c.h.b16 %v353
        %v1047 = vunpack.c.l.b16 %v354
        %v1048 = vunpack.c.h.b16 %v354
        %v1049 = vunpack.c.l.b16 %v355
        %v1050 = vunpack.c.h.b16 %v355
        %v1051 = vunpack.c.l.b16 %v356
        %v1052 = vunpack.c.h.b16 %v356
        %v1053 = vunpack.c.l.b16 %v357
        %v1054 = vunpack.c.h.b16 %v357
        %v1055 = vunpack.c.l.b16 %v358
        %v1056 = vunpack.c.h.b16 %v358
        %v1057 = vunpack.c.l.b16 %v359
        %v1058 = vunpack.c.h.b16 %v359
        %v1059 = vunpack.c.l.b16 %v360
        %v1060 = vunpack.c.h.b16 %v360
        %v1061 = vunpack.c.l.b16 %v361
        %v1062 = vunpack.c.h.b16 %v361
        %v1063 = vunpack.c.l.b16 %v362
        %v1064 = vunpack.c.h.b16 %v362
        %v1065 = vunpack.c.l.b16 %v363
        %v1066 = vunpack.c.h.b16 %v363
        %v1067 = vunpack.c.l.b16 %v364
        %v1068 = vunpack.c.h.b16 %v364
        %v1069 = vunpack.c.l.b16 %v365
        %v1070 = vunpack.c.h.b16 %v365
        %v1071 = vunpack.c.l.b16 %v366
        %v1072 = vunpack.c.h.b16 %v366
        %v1073 = vunpack.c.l.b16 %v367
        %v1074 = vunpack.c.h.b16 %v367
        %v1075 = vunpack.c.l.b16 %v368
        %v1076 = vunpack.c.h.b16 %v368
        %v1077 = vunpack.c.l.b16 %v369
        %v1078 = vunpack.c.h.b16 %v369
        %v1079 = vunpack.c.l.b16 %v370
        %v1080 = vunpack.c.h.b16 %v370
        %v1081 = vunpack.c.l.b16 %v371
        %v1082 = vunpack.c.h.b16 %v371
        %v1083 = vunpack.c.l.b16 %v372
        %v1084 = vunpack.c.h.b16 %v372
        %v1085 = vunpack.c.l.b16 %v373
        %v1086 = vunpack.c.h.b16 %v373
        %v1087 = vunpack.c.l.b16 %v374
        %v1088 = vunpack.c.h.b16 %v374
        %v1089 = vunpack.c.l.b16 %v375
        %v1090 = vunpack.c.h.b16 %v375
        %v1091 = vunpack.c.l.b16 %v376
        %v1092 = vunpack.c.h.b16 %v376
        %v1093 = vunpack.c.l.b16 %v377
        %v1094 = vunpack.c.h.b16 %v377
        %v1095 = vunpack.c.l.b16 %v378
        %v1096 = vunpack.c.h.b16 %v378
        %v1097 = vunpack.c.l.b16 %v379
        %v1098 = vunpack.c.h.b16 %v379
        %v1099 = vunpack.c.l.b16 %v380
        %v1100 = vunpack.c.h.b16 %v380
        %v1101 = vunpack.c.l.b16 %v381
        %v1102 = vunpack.c.h.b16 %v381
        %v1103 = vunpack.c.l.b16 %v382
        %v1104 = vunpack.c.h.b16 %v382
        %v1105 = vunpack.c.l.b16 %v383
        %v1106 = vunpack.c.h.b16 %v383
        %v1107 = vunpack.c.l.b16 %v384
        %v1108 = vunpack.c.h.b16 %v384
        %v1109 = vpack.c.b16 %v1049, %v1045
        %v1110 = vpack.c.b16 %v1050, %v1046
        %v1111 = vpack.c.b16 %v1051, %v1047
        %v1112 = vpack.c.b16 %v1052, %v1048
        %v1113 = vpack.c.b16 %v1057, %v1053
        %v1114 = vpack.c.b16 %v1058, %v1054
        %v1115 = vpack.c.b16 %v1059, %v1055
        %v1116 = vpack.c.b16 %v1060, %v1056
        %v1117 = vpack.c.b16 %v1065, %v1061
        %v1118 = vpack.c.b16 %v1066, %v1062
        %v1119 = vpack.c.b16 %v1067, %v1063
        %v1120 = vpack.c.b16 %v1068, %v1064
        %v1121 = vpack.c.b16 %v1073, %v1069
        %v1122 = vpack.c.b16 %v1074, %v1070
        %v1123 = vpack.c.b16 %v1075, %v1071
        %v1124 = vpack.c.b16 %v1076, %v1072
        %v1125 = vpack.c.b16 %v1081, %v1077
        %v1126 = vpack.c.b16 %v1082, %v1078
        %v1127 = vpack.c.b16 %v1083, %v1079
        %v1128 = vpack.c.b16 %v1084, %v1080
        %v1129 = vpack.c.b16 %v1089, %v1085
        %v1130 = vpack.c.b16 %v1090, %v1086
        %v1131 = vpack.c.b16 %v1091, %v1087
        %v1132 = vpack.c.b16 %v1092, %v1088
        %v1133 = vpack.c.b16 %v1097, %v1093
        %v1134 = vpack.c.b16 %v1098, %v1094
        %v1135 = vpack.c.b16 %v1099, %v1095
        %v1136 = vpack.c.b16 %v1100, %v1096
        %v1137 = vpack.c.b16 %v1105, %v1101
        %v1138 = vpack.c.b16 %v1106, %v1102
        %v1139 = vpack.c.b16 %v1107, %v1103
        %v1140 = vpack.c.b16 %v1108, %v1104
        %1173 = vmatprep.subr.bf16.mxu0 %v1138
        %1174 = vmatpush1.bf16.msra.mxu0 %v1137
        %1175 = vmatprep.subr.bf16.mxu0 %v1134
        %1176 = vmatpush1.bf16.msra.mxu0 %v1133
        %1177 = vmatprep.subr.bf16.mxu0 %v1130
        %1178 = vmatpush1.bf16.msra.mxu0 %v1129
        %1179 = vmatprep.subr.bf16.mxu0 %v1126
        %1180 = vmatpush1.bf16.msra.mxu0 %v1125
        %1181 = vmatprep.subr.bf16.mxu0 %v1122
        %1182 = vmatpush1.bf16.msra.mxu0 %v1121
        %1183 = vmatprep.subr.bf16.mxu0 %v1118
        %1184 = vmatpush1.bf16.msra.mxu0 %v1117
        %1185 = vmatprep.subr.bf16.mxu0 %v1114
        %1186 = vmatpush1.bf16.msra.mxu0 %v1113
        %1187 = vmatprep.subr.bf16.mxu0 %v1110
        %1188 = vmatpush1.bf16.msra.mxu0 %v1109
        %1189 = vmatprep.subr.bf16.mxu0 0
        %1190 = vmatpush2.bf16.msra.mxu0 0
        %1191 = vmatprep.subr.bf16.mxu0 0
        %1192 = vmatpush2.bf16.msra.mxu0 0
        %1193 = vmatprep.subr.bf16.mxu0 0
        %1194 = vmatpush2.bf16.msra.mxu0 0
        %1195 = vmatprep.subr.bf16.mxu0 0
        %1196 = vmatpush2.bf16.msra.mxu0 0
        %1197 = vmatprep.subr.bf16.mxu0 0
        %1198 = vmatpush2.bf16.msra.mxu0 0
        %1199 = vmatprep.subr.bf16.mxu0 0
        %1200 = vmatpush2.bf16.msra.mxu0 0
        %1201 = vmatprep.subr.bf16.mxu0 0
        %1202 = vmatpush2.bf16.msra.mxu0 0
        %1203 = vmatprep.subr.bf16.mxu0 0
        %1204 = vmatpush2.bf16.msra.mxu0 0
        %1205 = vmatprep.mubr.bf16.mxu0 0
        %1206 = vmatmul.mubr.bf16.gmra.mxu0 %v1012
        %v1207 = vpop.f32.mrf.mxu0
        %v1208 = vadd.f32 0.0, %v1207
        %v1209 = vpop.f32.mrf.mxu0
        %v1210 = vadd.f32 0.0, %v1209
        %v1211 = vpop.f32.mrf.mxu0
        %v1212 = vpop.f32.mrf.mxu0
        %1213 = vdwg.mxu0
        %1214 = vmatprep.subr.bf16.mxu0 %v1140
        %1215 = vmatpush1.bf16.msra.mxu0 %v1139
        %1216 = vmatprep.subr.bf16.mxu0 %v1136
        %1217 = vmatpush1.bf16.msra.mxu0 %v1135
        %1218 = vmatprep.subr.bf16.mxu0 %v1132
        %1219 = vmatpush1.bf16.msra.mxu0 %v1131
        %1220 = vmatprep.subr.bf16.mxu0 %v1128
        %1221 = vmatpush1.bf16.msra.mxu0 %v1127
        %1222 = vmatprep.subr.bf16.mxu0 %v1124
        %1223 = vmatpush1.bf16.msra.mxu0 %v1123
        %1224 = vmatprep.subr.bf16.mxu0 %v1120
        %1225 = vmatpush1.bf16.msra.mxu0 %v1119
        %1226 = vmatprep.subr.bf16.mxu0 %v1116
        %1227 = vmatpush1.bf16.msra.mxu0 %v1115
        %1228 = vmatprep.subr.bf16.mxu0 %v1112
        %1229 = vmatpush1.bf16.msra.mxu0 %v1111
        %1230 = vmatprep.subr.bf16.mxu0 0
        %1231 = vmatpush2.bf16.msra.mxu0 0
        %1232 = vmatprep.subr.bf16.mxu0 0
        %1233 = vmatpush2.bf16.msra.mxu0 0
        %1234 = vmatprep.subr.bf16.mxu0 0
        %1235 = vmatpush2.bf16.msra.mxu0 0
        %1236 = vmatprep.subr.bf16.mxu0 0
        %1237 = vmatpush2.bf16.msra.mxu0 0
        %1238 = vmatprep.subr.bf16.mxu0 0
        %1239 = vmatpush2.bf16.msra.mxu0 0
        %1240 = vmatprep.subr.bf16.mxu0 0
        %1241 = vmatpush2.bf16.msra.mxu0 0
        %1242 = vmatprep.subr.bf16.mxu0 0
        %1243 = vmatpush2.bf16.msra.mxu0 0
        %1244 = vmatprep.subr.bf16.mxu0 0
        %1245 = vmatpush2.bf16.msra.mxu0 0
        %1246 = vmatprep.mubr.bf16.mxu0 0
        %1247 = vmatmul.mubr.bf16.gmra.mxu0 %v1012
        %v1248 = vpop.f32.mrf.mxu0
        %v1249 = vadd.f32 0.0, %v1248
        %v1250 = vpop.f32.mrf.mxu0
        %v1251 = vadd.f32 0.0, %v1250
        %v1252 = vpop.f32.mrf.mxu0
        %v1253 = vpop.f32.mrf.mxu0
        %1254 = vdwg.mxu0
        %v1255 = vadd.f32 %v1008, %v1208
        %v1256 = vadd.f32 %v1009, %v1210
        %v1257 = vadd.f32 %v1010, %v1249
        %v1258 = vadd.f32 %v1011, %v1251
        %v1259 = vxor.u32 %v1255, 2147483648
        %v1260 = vmul.f32 %v1259, 1.442695
        %v1261 = vpow.pop %v1260
        %v1262 = vadd.f32 %v1261, 1.0
        %v1263 = vrcp.pop %v1262
        %v1264 = vmul.f32 1.0, %v1263
        %v1265 = vxor.u32 %v1256, 2147483648
        %v1266 = vmul.f32 %v1265, 1.442695
        %v1267 = vpow.pop %v1266
        %v1268 = vadd.f32 %v1267, 1.0
        %v1269 = vrcp.pop %v1268
        %v1270 = vmul.f32 1.0, %v1269
        %v1271 = vtanh.pop %v1257
        %v1272 = vxor.u32 %v1258, 2147483648
        %v1273 = vmul.f32 %v1272, 1.442695
        %v1274 = vpow.pop %v1273
        %v1275 = vadd.f32 %v1274, 1.0
        %v1276 = vrcp.pop %v1275
        %v1277 = vmul.f32 1.0, %v1276
        %v1278 = vmul.f32 %v1270, %v999
        %v1279 = vmul.f32 %v1264, %v1271
        %v1280 = vadd.f32 %v1278, %v1279
        %v1281 = vtanh.pop %v1280
        %v1282 = vmul.f32 %v1277, %v1281
        %s1283 = sadd.s32 %s997, %s1001
        %v1284 = vstv %s1283
        %vm1285 = vcmp.gt.s32.totalorder %v385, %v1284
        %v1286 = vsel %vm1285, 1, 0
        %1287 = vset.pattern.permute.xlu0 0
        %1288 = vperm.xlu0 %1287, %v1286
        %v1289 = vpop.permute.xlu0 %1288
        %vm1290 = vcmp.eq.s32.totalorder %v1289, 1
        %v1291 = vsel %vm1290, %v1282, 0.0
        %s1292 = scalar_lea.vmem %s319, %s1002 [#allocation7]
        %1293 = vst [vmem:[%s1292] sm:$0xff] %v1291
        %v1294 = vsel %vm1290, %v1282, %v998
        %v1295 = vsel %vm1290, %v1280, %v999
        %s1296 = scalar_select %p1000, 6, 1
        %s1297 = smul.u32 %s1296, 8
        %s1298 = sshra.s32 %s1297, 3
        %s1299 = sand.u32 %s1297, 7
        %s1300 = smul.u32 %s1298, 4
        %s1301 = smul.addr %s1300, 8
        %s1302 = scalar_lea.vmem [#allocation4], %s1301
        %v1303 = vld [vmem:[%s1302] sm:$0xff]
        %v1304 = vld [vmem:[%s1302 + $0x8] sm:$0xff]
        %v1305 = vld [vmem:[%s1302 + $0x10] sm:$0xff]
        %v1306 = vld [vmem:[%s1302 + $0x18] sm:$0xff]
        %v1307 = vpack.c.bf16 %v1294, %v1294
        %1308 = vmatprep.subr.bf16.mxu0 %v1138
        %1309 = vmatpush1.bf16.msra.mxu0 %v1137
        %1310 = vmatprep.subr.bf16.mxu0 %v1134
        %1311 = vmatpush1.bf16.msra.mxu0 %v1133
        %1312 = vmatprep.subr.bf16.mxu0 %v1130
        %1313 = vmatpush1.bf16.msra.mxu0 %v1129
        %1314 = vmatprep.subr.bf16.mxu0 %v1126
        %1315 = vmatpush1.bf16.msra.mxu0 %v1125
        %1316 = vmatprep.subr.bf16.mxu0 %v1122
        %1317 = vmatpush1.bf16.msra.mxu0 %v1121
        %1318 = vmatprep.subr.bf16.mxu0 %v1118
        %1319 = vmatpush1.bf16.msra.mxu0 %v1117
        %1320 = vmatprep.subr.bf16.mxu0 %v1114
        %1321 = vmatpush1.bf16.msra.mxu0 %v1113
        %1322 = vmatprep.subr.bf16.mxu0 %v1110
        %1323 = vmatpush1.bf16.msra.mxu0 %v1109
        %1324 = vmatprep.subr.bf16.mxu0 0
        %1325 = vmatpush2.bf16.msra.mxu0 0
        %1326 = vmatprep.subr.bf16.mxu0 0
        %1327 = vmatpush2.bf16.msra.mxu0 0
        %1328 = vmatprep.subr.bf16.mxu0 0
        %1329 = vmatpush2.bf16.msra.mxu0 0
        %1330 = vmatprep.subr.bf16.mxu0 0
        %1331 = vmatpush2.bf16.msra.mxu0 0
        %1332 = vmatprep.subr.bf16.mxu0 0
        %1333 = vmatpush2.bf16.msra.mxu0 0
        %1334 = vmatprep.subr.bf16.mxu0 0
        %1335 = vmatpush2.bf16.msra.mxu0 0
        %1336 = vmatprep.subr.bf16.mxu0 0
        %1337 = vmatpush2.bf16.msra.mxu0 0
        %1338 = vmatprep.subr.bf16.mxu0 0
        %1339 = vmatpush2.bf16.msra.mxu0 0
        %1340 = vmatprep.mubr.bf16.mxu0 0
        %1341 = vmatmul.mubr.bf16.gmra.mxu0 %v1307
        %v1342 = vpop.f32.mrf.mxu0
        %v1343 = vadd.f32 0.0, %v1342
        %v1344 = vpop.f32.mrf.mxu0
        %v1345 = vadd.f32 0.0, %v1344
        %v1346 = vpop.f32.mrf.mxu0
        %v1347 = vpop.f32.mrf.mxu0
        %1348 = vdwg.mxu0
        %1349 = vmatprep.subr.bf16.mxu0 %v1140
        %1350 = vmatpush1.bf16.msra.mxu0 %v1139
        %1351 = vmatprep.subr.bf16.mxu0 %v1136
        %1352 = vmatpush1.bf16.msra.mxu0 %v1135
        %1353 = vmatprep.subr.bf16.mxu0 %v1132
        %1354 = vmatpush1.bf16.msra.mxu0 %v1131
        %1355 = vmatprep.subr.bf16.mxu0 %v1128
        %1356 = vmatpush1.bf16.msra.mxu0 %v1127
        %1357 = vmatprep.subr.bf16.mxu0 %v1124
        %1358 = vmatpush1.bf16.msra.mxu0 %v1123
        %1359 = vmatprep.subr.bf16.mxu0 %v1120
        %1360 = vmatpush1.bf16.msra.mxu0 %v1119
        %1361 = vmatprep.subr.bf16.mxu0 %v1116
        %1362 = vmatpush1.bf16.msra.mxu0 %v1115
        %1363 = vmatprep.subr.bf16.mxu0 %v1112
        %1364 = vmatpush1.bf16.msra.mxu0 %v1111
        %1365 = vmatprep.subr.bf16.mxu0 0
        %1366 = vmatpush2.bf16.msra.mxu0 0
        %1367 = vmatprep.subr.bf16.mxu0 0
        %1368 = vmatpush2.bf16.msra.mxu0 0
        %1369 = vmatprep.subr.bf16.mxu0 0
        %1370 = vmatpush2.bf16.msra.mxu0 0
        %1371 = vmatprep.subr.bf16.mxu0 0
        %1372 = vmatpush2.bf16.msra.mxu0 0
        %1373 = vmatprep.subr.bf16.mxu0 0
        %1374 = vmatpush2.bf16.msra.mxu0 0
        %1375 = vmatprep.subr.bf16.mxu0 0
        %1376 = vmatpush2.bf16.msra.mxu0 0
        %1377 = vmatprep.subr.bf16.mxu0 0
        %1378 = vmatpush2.bf16.msra.mxu0 0
        %1379 = vmatprep.subr.bf16.mxu0 0
        %1380 = vmatpush2.bf16.msra.mxu0 0
        %1381 = vmatprep.mubr.bf16.mxu0 0
        %1382 = vmatmul.mubr.bf16.gmra.mxu0 %v1307
        %v1383 = vpop.f32.mrf.mxu0
        %v1384 = vadd.f32 0.0, %v1383
        %v1385 = vpop.f32.mrf.mxu0
        %v1386 = vadd.f32 0.0, %v1385
        %v1387 = vpop.f32.mrf.mxu0
        %v1388 = vpop.f32.mrf.mxu0
        %1389 = vdwg.mxu0
        %v1390 = vadd.f32 %v1303, %v1343
        %v1391 = vadd.f32 %v1304, %v1345
        %v1392 = vadd.f32 %v1305, %v1384
        %v1393 = vadd.f32 %v1306, %v1386
        %v1394 = vxor.u32 %v1390, 2147483648
        %v1395 = vmul.f32 %v1394, 1.442695
        %v1396 = vpow.pop %v1395
        %v1397 = vadd.f32 %v1396, 1.0
        %v1398 = vrcp.pop %v1397
        %v1399 = vmul.f32 1.0, %v1398
        %v1400 = vxor.u32 %v1391, 2147483648
        %v1401 = vmul.f32 %v1400, 1.442695
        %v1402 = vpow.pop %v1401
        %v1403 = vadd.f32 %v1402, 1.0
        %v1404 = vrcp.pop %v1403
        %v1405 = vmul.f32 1.0, %v1404
        %v1406 = vtanh.pop %v1392
        %v1407 = vxor.u32 %v1393, 2147483648
        %v1408 = vmul.f32 %v1407, 1.442695
        %v1409 = vpow.pop %v1408
        %v1410 = vadd.f32 %v1409, 1.0
        %v1411 = vrcp.pop %v1410
        %v1412 = vmul.f32 1.0, %v1411
        %v1413 = vmul.f32 %v1405, %v1295
        %v1414 = vmul.f32 %v1399, %v1406
        %v1415 = vadd.f32 %v1413, %v1414
        %v1416 = vtanh.pop %v1415
        %v1417 = vmul.f32 %v1412, %v1416
        %s1418 = sadd.s32 %s997, %s1296
        %v1419 = vstv %s1418
        %vm1420 = vcmp.gt.s32.totalorder %v385, %v1419
        %v1421 = vsel %vm1420, 1, 0
        %1422 = vset.pattern.permute.xlu0 0
        %1423 = vperm.xlu0 %1422, %v1421
        %v1424 = vpop.permute.xlu0 %1423
        %vm1425 = vcmp.eq.s32.totalorder %v1424, 1
        %v1426 = vsel %vm1425, %v1417, 0.0
        %s1427 = scalar_lea.vmem %s319, %s1297 [#allocation7]
        %1428 = vst [vmem:[%s1427] sm:$0xff] %v1426
        %v1429 = vsel %vm1425, %v1417, %v1294
        %v1430 = vsel %vm1425, %v1415, %v1295
        %s1431 = scalar_select %p1000, 5, 2
        %s1432 = smul.u32 %s1431, 8
        %s1433 = sshra.s32 %s1432, 3
        %s1434 = sand.u32 %s1432, 7
        %s1435 = smul.u32 %s1433, 4
        %s1436 = smul.addr %s1435, 8
        %s1437 = scalar_lea.vmem [#allocation4], %s1436
        %v1438 = vld [vmem:[%s1437] sm:$0xff]
        %v1439 = vld [vmem:[%s1437 + $0x8] sm:$0xff]
        %v1440 = vld [vmem:[%s1437 + $0x10] sm:$0xff]
        %v1441 = vld [vmem:[%s1437 + $0x18] sm:$0xff]
        %v1442 = vpack.c.bf16 %v1429, %v1429
        %1443 = vmatprep.subr.bf16.mxu0 %v1138
        %1444 = vmatpush1.bf16.msra.mxu0 %v1137
        %1445 = vmatprep.subr.bf16.mxu0 %v1134
        %1446 = vmatpush1.bf16.msra.mxu0 %v1133
        %1447 = vmatprep.subr.bf16.mxu0 %v1130
        %1448 = vmatpush1.bf16.msra.mxu0 %v1129
        %1449 = vmatprep.subr.bf16.mxu0 %v1126
        %1450 = vmatpush1.bf16.msra.mxu0 %v1125
        %1451 = vmatprep.subr.bf16.mxu0 %v1122
        %1452 = vmatpush1.bf16.msra.mxu0 %v1121
        %1453 = vmatprep.subr.bf16.mxu0 %v1118
        %1454 = vmatpush1.bf16.msra.mxu0 %v1117
        %1455 = vmatprep.subr.bf16.mxu0 %v1114
        %1456 = vmatpush1.bf16.msra.mxu0 %v1113
        %1457 = vmatprep.subr.bf16.mxu0 %v1110
        %1458 = vmatpush1.bf16.msra.mxu0 %v1109
        %1459 = vmatprep.subr.bf16.mxu0 0
        %1460 = vmatpush2.bf16.msra.mxu0 0
        %1461 = vmatprep.subr.bf16.mxu0 0
        %1462 = vmatpush2.bf16.msra.mxu0 0
        %1463 = vmatprep.subr.bf16.mxu0 0
        %1464 = vmatpush2.bf16.msra.mxu0 0
        %1465 = vmatprep.subr.bf16.mxu0 0
        %1466 = vmatpush2.bf16.msra.mxu0 0
        %1467 = vmatprep.subr.bf16.mxu0 0
        %1468 = vmatpush2.bf16.msra.mxu0 0
        %1469 = vmatprep.subr.bf16.mxu0 0
        %1470 = vmatpush2.bf16.msra.mxu0 0
        %1471 = vmatprep.subr.bf16.mxu0 0
        %1472 = vmatpush2.bf16.msra.mxu0 0
        %1473 = vmatprep.subr.bf16.mxu0 0
        %1474 = vmatpush2.bf16.msra.mxu0 0
        %1475 = vmatprep.mubr.bf16.mxu0 0
        %1476 = vmatmul.mubr.bf16.gmra.mxu0 %v1442
        %v1477 = vpop.f32.mrf.mxu0
        %v1478 = vadd.f32 0.0, %v1477
        %v1479 = vpop.f32.mrf.mxu0
        %v1480 = vadd.f32 0.0, %v1479
        %v1481 = vpop.f32.mrf.mxu0
        %v1482 = vpop.f32.mrf.mxu0
        %1483 = vdwg.mxu0
        %1484 = vmatprep.subr.bf16.mxu0 %v1140
        %1485 = vmatpush1.bf16.msra.mxu0 %v1139
        %1486 = vmatprep.subr.bf16.mxu0 %v1136
        %1487 = vmatpush1.bf16.msra.mxu0 %v1135
        %1488 = vmatprep.subr.bf16.mxu0 %v1132
        %1489 = vmatpush1.bf16.msra.mxu0 %v1131
        %1490 = vmatprep.subr.bf16.mxu0 %v1128
        %1491 = vmatpush1.bf16.msra.mxu0 %v1127
        %1492 = vmatprep.subr.bf16.mxu0 %v1124
        %1493 = vmatpush1.bf16.msra.mxu0 %v1123
        %1494 = vmatprep.subr.bf16.mxu0 %v1120
        %1495 = vmatpush1.bf16.msra.mxu0 %v1119
        %1496 = vmatprep.subr.bf16.mxu0 %v1116
        %1497 = vmatpush1.bf16.msra.mxu0 %v1115
        %1498 = vmatprep.subr.bf16.mxu0 %v1112
        %1499 = vmatpush1.bf16.msra.mxu0 %v1111
        %1500 = vmatprep.subr.bf16.mxu0 0
        %1501 = vmatpush2.bf16.msra.mxu0 0
        %1502 = vmatprep.subr.bf16.mxu0 0
        %1503 = vmatpush2.bf16.msra.mxu0 0
        %1504 = vmatprep.subr.bf16.mxu0 0
        %1505 = vmatpush2.bf16.msra.mxu0 0
        %1506 = vmatprep.subr.bf16.mxu0 0
        %1507 = vmatpush2.bf16.msra.mxu0 0
        %1508 = vmatprep.subr.bf16.mxu0 0
        %1509 = vmatpush2.bf16.msra.mxu0 0
        %1510 = vmatprep.subr.bf16.mxu0 0
        %1511 = vmatpush2.bf16.msra.mxu0 0
        %1512 = vmatprep.subr.bf16.mxu0 0
        %1513 = vmatpush2.bf16.msra.mxu0 0
        %1514 = vmatprep.subr.bf16.mxu0 0
        %1515 = vmatpush2.bf16.msra.mxu0 0
        %1516 = vmatprep.mubr.bf16.mxu0 0
        %1517 = vmatmul.mubr.bf16.gmra.mxu0 %v1442
        %v1518 = vpop.f32.mrf.mxu0
        %v1519 = vadd.f32 0.0, %v1518
        %v1520 = vpop.f32.mrf.mxu0
        %v1521 = vadd.f32 0.0, %v1520
        %v1522 = vpop.f32.mrf.mxu0
        %v1523 = vpop.f32.mrf.mxu0
        %1524 = vdwg.mxu0
        %v1525 = vadd.f32 %v1438, %v1478
        %v1526 = vadd.f32 %v1439, %v1480
        %v1527 = vadd.f32 %v1440, %v1519
        %v1528 = vadd.f32 %v1441, %v1521
        %v1529 = vxor.u32 %v1525, 2147483648
        %v1530 = vmul.f32 %v1529, 1.442695
        %v1531 = vpow.pop %v1530
        %v1532 = vadd.f32 %v1531, 1.0
        %v1533 = vrcp.pop %v1532
        %v1534 = vmul.f32 1.0, %v1533
        %v1535 = vxor.u32 %v1526, 2147483648
        %v1536 = vmul.f32 %v1535, 1.442695
        %v1537 = vpow.pop %v1536
        %v1538 = vadd.f32 %v1537, 1.0
        %v1539 = vrcp.pop %v1538
        %v1540 = vmul.f32 1.0, %v1539
        %v1541 = vtanh.pop %v1527
        %v1542 = vxor.u32 %v1528, 2147483648
        %v1543 = vmul.f32 %v1542, 1.442695
        %v1544 = vpow.pop %v1543
        %v1545 = vadd.f32 %v1544, 1.0
        %v1546 = vrcp.pop %v1545
        %v1547 = vmul.f32 1.0, %v1546
        %v1548 = vmul.f32 %v1540, %v1430
        %v1549 = vmul.f32 %v1534, %v1541
        %v1550 = vadd.f32 %v1548, %v1549
        %v1551 = vtanh.pop %v1550
        %v1552 = vmul.f32 %v1547, %v1551
        %s1553 = sadd.s32 %s997, %s1431
        %v1554 = vstv %s1553
        %vm1555 = vcmp.gt.s32.totalorder %v385, %v1554
        %v1556 = vsel %vm1555, 1, 0
        %1557 = vset.pattern.permute.xlu0 0
        %1558 = vperm.xlu0 %1557, %v1556
        %v1559 = vpop.permute.xlu0 %1558
        %vm1560 = vcmp.eq.s32.totalorder %v1559, 1
        %v1561 = vsel %vm1560, %v1552, 0.0
        %s1562 = scalar_lea.vmem %s319, %s1432 [#allocation7]
        %1563 = vst [vmem:[%s1562] sm:$0xff] %v1561
        %v1564 = vsel %vm1560, %v1552, %v1429
        %v1565 = vsel %vm1560, %v1550, %v1430
        %s1566 = scalar_select %p1000, 4, 3
        %s1567 = smul.u32 %s1566, 8
        %s1568 = sshra.s32 %s1567, 3
        %s1569 = sand.u32 %s1567, 7
        %s1570 = smul.u32 %s1568, 4
        %s1571 = smul.addr %s1570, 8
        %s1572 = scalar_lea.vmem [#allocation4], %s1571
        %v1573 = vld [vmem:[%s1572] sm:$0xff]
        %v1574 = vld [vmem:[%s1572 + $0x8] sm:$0xff]
        %v1575 = vld [vmem:[%s1572 + $0x10] sm:$0xff]
        %v1576 = vld [vmem:[%s1572 + $0x18] sm:$0xff]
        %v1577 = vpack.c.bf16 %v1564, %v1564
        %1578 = vmatprep.subr.bf16.mxu0 %v1138
        %1579 = vmatpush1.bf16.msra.mxu0 %v1137
        %1580 = vmatprep.subr.bf16.mxu0 %v1134
        %1581 = vmatpush1.bf16.msra.mxu0 %v1133
        %1582 = vmatprep.subr.bf16.mxu0 %v1130
        %1583 = vmatpush1.bf16.msra.mxu0 %v1129
        %1584 = vmatprep.subr.bf16.mxu0 %v1126
        %1585 = vmatpush1.bf16.msra.mxu0 %v1125
        %1586 = vmatprep.subr.bf16.mxu0 %v1122
        %1587 = vmatpush1.bf16.msra.mxu0 %v1121
        %1588 = vmatprep.subr.bf16.mxu0 %v1118
        %1589 = vmatpush1.bf16.msra.mxu0 %v1117
        %1590 = vmatprep.subr.bf16.mxu0 %v1114
        %1591 = vmatpush1.bf16.msra.mxu0 %v1113
        %1592 = vmatprep.subr.bf16.mxu0 %v1110
        %1593 = vmatpush1.bf16.msra.mxu0 %v1109
        %1594 = vmatprep.subr.bf16.mxu0 0
        %1595 = vmatpush2.bf16.msra.mxu0 0
        %1596 = vmatprep.subr.bf16.mxu0 0
        %1597 = vmatpush2.bf16.msra.mxu0 0
        %1598 = vmatprep.subr.bf16.mxu0 0
        %1599 = vmatpush2.bf16.msra.mxu0 0
        %1600 = vmatprep.subr.bf16.mxu0 0
        %1601 = vmatpush2.bf16.msra.mxu0 0
        %1602 = vmatprep.subr.bf16.mxu0 0
        %1603 = vmatpush2.bf16.msra.mxu0 0
        %1604 = vmatprep.subr.bf16.mxu0 0
        %1605 = vmatpush2.bf16.msra.mxu0 0
        %1606 = vmatprep.subr.bf16.mxu0 0
        %1607 = vmatpush2.bf16.msra.mxu0 0
        %1608 = vmatprep.subr.bf16.mxu0 0
        %1609 = vmatpush2.bf16.msra.mxu0 0
        %1610 = vmatprep.mubr.bf16.mxu0 0
        %1611 = vmatmul.mubr.bf16.gmra.mxu0 %v1577
        %v1612 = vpop.f32.mrf.mxu0
        %v1613 = vadd.f32 0.0, %v1612
        %v1614 = vpop.f32.mrf.mxu0
        %v1615 = vadd.f32 0.0, %v1614
        %v1616 = vpop.f32.mrf.mxu0
        %v1617 = vpop.f32.mrf.mxu0
        %1618 = vdwg.mxu0
        %1619 = vmatprep.subr.bf16.mxu0 %v1140
        %1620 = vmatpush1.bf16.msra.mxu0 %v1139
        %1621 = vmatprep.subr.bf16.mxu0 %v1136
        %1622 = vmatpush1.bf16.msra.mxu0 %v1135
        %1623 = vmatprep.subr.bf16.mxu0 %v1132
        %1624 = vmatpush1.bf16.msra.mxu0 %v1131
        %1625 = vmatprep.subr.bf16.mxu0 %v1128
        %1626 = vmatpush1.bf16.msra.mxu0 %v1127
        %1627 = vmatprep.subr.bf16.mxu0 %v1124
        %1628 = vmatpush1.bf16.msra.mxu0 %v1123
        %1629 = vmatprep.subr.bf16.mxu0 %v1120
        %1630 = vmatpush1.bf16.msra.mxu0 %v1119
        %1631 = vmatprep.subr.bf16.mxu0 %v1116
        %1632 = vmatpush1.bf16.msra.mxu0 %v1115
        %1633 = vmatprep.subr.bf16.mxu0 %v1112
        %1634 = vmatpush1.bf16.msra.mxu0 %v1111
        %1635 = vmatprep.subr.bf16.mxu0 0
        %1636 = vmatpush2.bf16.msra.mxu0 0
        %1637 = vmatprep.subr.bf16.mxu0 0
        %1638 = vmatpush2.bf16.msra.mxu0 0
        %1639 = vmatprep.subr.bf16.mxu0 0
        %1640 = vmatpush2.bf16.msra.mxu0 0
        %1641 = vmatprep.subr.bf16.mxu0 0
        %1642 = vmatpush2.bf16.msra.mxu0 0
        %1643 = vmatprep.subr.bf16.mxu0 0
        %1644 = vmatpush2.bf16.msra.mxu0 0
        %1645 = vmatprep.subr.bf16.mxu0 0
        %1646 = vmatpush2.bf16.msra.mxu0 0
        %1647 = vmatprep.subr.bf16.mxu0 0
        %1648 = vmatpush2.bf16.msra.mxu0 0
        %1649 = vmatprep.subr.bf16.mxu0 0
        %1650 = vmatpush2.bf16.msra.mxu0 0
        %1651 = vmatprep.mubr.bf16.mxu0 0
        %1652 = vmatmul.mubr.bf16.gmra.mxu0 %v1577
        %v1653 = vpop.f32.mrf.mxu0
        %v1654 = vadd.f32 0.0, %v1653
        %v1655 = vpop.f32.mrf.mxu0
        %v1656 = vadd.f32 0.0, %v1655
        %v1657 = vpop.f32.mrf.mxu0
        %v1658 = vpop.f32.mrf.mxu0
        %1659 = vdwg.mxu0
        %v1660 = vadd.f32 %v1573, %v1613
        %v1661 = vadd.f32 %v1574, %v1615
        %v1662 = vadd.f32 %v1575, %v1654
        %v1663 = vadd.f32 %v1576, %v1656
        %v1664 = vxor.u32 %v1660, 2147483648
        %v1665 = vmul.f32 %v1664, 1.442695
        %v1666 = vpow.pop %v1665
        %v1667 = vadd.f32 %v1666, 1.0
        %v1668 = vrcp.pop %v1667
        %v1669 = vmul.f32 1.0, %v1668
        %v1670 = vxor.u32 %v1661, 2147483648
        %v1671 = vmul.f32 %v1670, 1.442695
        %v1672 = vpow.pop %v1671
        %v1673 = vadd.f32 %v1672, 1.0
        %v1674 = vrcp.pop %v1673
        %v1675 = vmul.f32 1.0, %v1674
        %v1676 = vtanh.pop %v1662
        %v1677 = vxor.u32 %v1663, 2147483648
        %v1678 = vmul.f32 %v1677, 1.442695
        %v1679 = vpow.pop %v1678
        %v1680 = vadd.f32 %v1679, 1.0
        %v1681 = vrcp.pop %v1680
        %v1682 = vmul.f32 1.0, %v1681
        %v1683 = vmul.f32 %v1675, %v1565
        %v1684 = vmul.f32 %v1669, %v1676
        %v1685 = vadd.f32 %v1683, %v1684
        %v1686 = vtanh.pop %v1685
        %v1687 = vmul.f32 %v1682, %v1686
        %s1688 = sadd.s32 %s997, %s1566
        %v1689 = vstv %s1688
        %vm1690 = vcmp.gt.s32.totalorder %v385, %v1689
        %v1691 = vsel %vm1690, 1, 0
        %1692 = vset.pattern.permute.xlu0 0
        %1693 = vperm.xlu0 %1692, %v1691
        %v1694 = vpop.permute.xlu0 %1693
        %vm1695 = vcmp.eq.s32.totalorder %v1694, 1
        %v1696 = vsel %vm1695, %v1687, 0.0
        %s1697 = scalar_lea.vmem %s319, %s1567 [#allocation7]
        %1698 = vst [vmem:[%s1697] sm:$0xff] %v1696
        %v1699 = vsel %vm1695, %v1687, %v1564
        %v1700 = vsel %vm1695, %v1685, %v1565
        %s1701 = scalar_select %p1000, 3, 4
        %s1702 = smul.u32 %s1701, 8
        %s1703 = sshra.s32 %s1702, 3
        %s1704 = sand.u32 %s1702, 7
        %s1705 = smul.u32 %s1703, 4
        %s1706 = smul.addr %s1705, 8
        %s1707 = scalar_lea.vmem [#allocation4], %s1706
        %v1708 = vld [vmem:[%s1707] sm:$0xff]
        %v1709 = vld [vmem:[%s1707 + $0x8] sm:$0xff]
        %v1710 = vld [vmem:[%s1707 + $0x10] sm:$0xff]
        %v1711 = vld [vmem:[%s1707 + $0x18] sm:$0xff]
        %v1712 = vpack.c.bf16 %v1699, %v1699
        %1713 = vmatprep.subr.bf16.mxu0 %v1138
        %1714 = vmatpush1.bf16.msra.mxu0 %v1137
        %1715 = vmatprep.subr.bf16.mxu0 %v1134
        %1716 = vmatpush1.bf16.msra.mxu0 %v1133
        %1717 = vmatprep.subr.bf16.mxu0 %v1130
        %1718 = vmatpush1.bf16.msra.mxu0 %v1129
        %1719 = vmatprep.subr.bf16.mxu0 %v1126
        %1720 = vmatpush1.bf16.msra.mxu0 %v1125
        %1721 = vmatprep.subr.bf16.mxu0 %v1122
        %1722 = vmatpush1.bf16.msra.mxu0 %v1121
        %1723 = vmatprep.subr.bf16.mxu0 %v1118
        %1724 = vmatpush1.bf16.msra.mxu0 %v1117
        %1725 = vmatprep.subr.bf16.mxu0 %v1114
        %1726 = vmatpush1.bf16.msra.mxu0 %v1113
        %1727 = vmatprep.subr.bf16.mxu0 %v1110
        %1728 = vmatpush1.bf16.msra.mxu0 %v1109
        %1729 = vmatprep.subr.bf16.mxu0 0
        %1730 = vmatpush2.bf16.msra.mxu0 0
        %1731 = vmatprep.subr.bf16.mxu0 0
        %1732 = vmatpush2.bf16.msra.mxu0 0
        %1733 = vmatprep.subr.bf16.mxu0 0
        %1734 = vmatpush2.bf16.msra.mxu0 0
        %1735 = vmatprep.subr.bf16.mxu0 0
        %1736 = vmatpush2.bf16.msra.mxu0 0
        %1737 = vmatprep.subr.bf16.mxu0 0
        %1738 = vmatpush2.bf16.msra.mxu0 0
        %1739 = vmatprep.subr.bf16.mxu0 0
        %1740 = vmatpush2.bf16.msra.mxu0 0
        %1741 = vmatprep.subr.bf16.mxu0 0
        %1742 = vmatpush2.bf16.msra.mxu0 0
        %1743 = vmatprep.subr.bf16.mxu0 0
        %1744 = vmatpush2.bf16.msra.mxu0 0
        %1745 = vmatprep.mubr.bf16.mxu0 0
        %1746 = vmatmul.mubr.bf16.gmra.mxu0 %v1712
        %v1747 = vpop.f32.mrf.mxu0
        %v1748 = vadd.f32 0.0, %v1747
        %v1749 = vpop.f32.mrf.mxu0
        %v1750 = vadd.f32 0.0, %v1749
        %v1751 = vpop.f32.mrf.mxu0
        %v1752 = vpop.f32.mrf.mxu0
        %1753 = vdwg.mxu0
        %1754 = vmatprep.subr.bf16.mxu0 %v1140
        %1755 = vmatpush1.bf16.msra.mxu0 %v1139
        %1756 = vmatprep.subr.bf16.mxu0 %v1136
        %1757 = vmatpush1.bf16.msra.mxu0 %v1135
        %1758 = vmatprep.subr.bf16.mxu0 %v1132
        %1759 = vmatpush1.bf16.msra.mxu0 %v1131
        %1760 = vmatprep.subr.bf16.mxu0 %v1128
        %1761 = vmatpush1.bf16.msra.mxu0 %v1127
        %1762 = vmatprep.subr.bf16.mxu0 %v1124
        %1763 = vmatpush1.bf16.msra.mxu0 %v1123
        %1764 = vmatprep.subr.bf16.mxu0 %v1120
        %1765 = vmatpush1.bf16.msra.mxu0 %v1119
        %1766 = vmatprep.subr.bf16.mxu0 %v1116
        %1767 = vmatpush1.bf16.msra.mxu0 %v1115
        %1768 = vmatprep.subr.bf16.mxu0 %v1112
        %1769 = vmatpush1.bf16.msra.mxu0 %v1111
        %1770 = vmatprep.subr.bf16.mxu0 0
        %1771 = vmatpush2.bf16.msra.mxu0 0
        %1772 = vmatprep.subr.bf16.mxu0 0
        %1773 = vmatpush2.bf16.msra.mxu0 0
        %1774 = vmatprep.subr.bf16.mxu0 0
        %1775 = vmatpush2.bf16.msra.mxu0 0
        %1776 = vmatprep.subr.bf16.mxu0 0
        %1777 = vmatpush2.bf16.msra.mxu0 0
        %1778 = vmatprep.subr.bf16.mxu0 0
        %1779 = vmatpush2.bf16.msra.mxu0 0
        %1780 = vmatprep.subr.bf16.mxu0 0
        %1781 = vmatpush2.bf16.msra.mxu0 0
        %1782 = vmatprep.subr.bf16.mxu0 0
        %1783 = vmatpush2.bf16.msra.mxu0 0
        %1784 = vmatprep.subr.bf16.mxu0 0
        %1785 = vmatpush2.bf16.msra.mxu0 0
        %1786 = vmatprep.mubr.bf16.mxu0 0
        %1787 = vmatmul.mubr.bf16.gmra.mxu0 %v1712
        %v1788 = vpop.f32.mrf.mxu0
        %v1789 = vadd.f32 0.0, %v1788
        %v1790 = vpop.f32.mrf.mxu0
        %v1791 = vadd.f32 0.0, %v1790
        %v1792 = vpop.f32.mrf.mxu0
        %v1793 = vpop.f32.mrf.mxu0
        %1794 = vdwg.mxu0
        %v1795 = vadd.f32 %v1708, %v1748
        %v1796 = vadd.f32 %v1709, %v1750
        %v1797 = vadd.f32 %v1710, %v1789
        %v1798 = vadd.f32 %v1711, %v1791
        %v1799 = vxor.u32 %v1795, 2147483648
        %v1800 = vmul.f32 %v1799, 1.442695
        %v1801 = vpow.pop %v1800
        %v1802 = vadd.f32 %v1801, 1.0
        %v1803 = vrcp.pop %v1802
        %v1804 = vmul.f32 1.0, %v1803
        %v1805 = vxor.u32 %v1796, 2147483648
        %v1806 = vmul.f32 %v1805, 1.442695
        %v1807 = vpow.pop %v1806
        %v1808 = vadd.f32 %v1807, 1.0
        %v1809 = vrcp.pop %v1808
        %v1810 = vmul.f32 1.0, %v1809
        %v1811 = vtanh.pop %v1797
        %v1812 = vxor.u32 %v1798, 2147483648
        %v1813 = vmul.f32 %v1812, 1.442695
        %v1814 = vpow.pop %v1813
        %v1815 = vadd.f32 %v1814, 1.0
        %v1816 = vrcp.pop %v1815
        %v1817 = vmul.f32 1.0, %v1816
        %v1818 = vmul.f32 %v1810, %v1700
        %v1819 = vmul.f32 %v1804, %v1811
        %v1820 = vadd.f32 %v1818, %v1819
        %v1821 = vtanh.pop %v1820
        %v1822 = vmul.f32 %v1817, %v1821
        %s1823 = sadd.s32 %s997, %s1701
        %v1824 = vstv %s1823
        %vm1825 = vcmp.gt.s32.totalorder %v385, %v1824
        %v1826 = vsel %vm1825, 1, 0
        %1827 = vset.pattern.permute.xlu0 0
        %1828 = vperm.xlu0 %1827, %v1826
        %v1829 = vpop.permute.xlu0 %1828
        %vm1830 = vcmp.eq.s32.totalorder %v1829, 1
        %v1831 = vsel %vm1830, %v1822, 0.0
        %s1832 = scalar_lea.vmem %s319, %s1702 [#allocation7]
        %1833 = vst [vmem:[%s1832] sm:$0xff] %v1831
        %v1834 = vsel %vm1830, %v1822, %v1699
        %v1835 = vsel %vm1830, %v1820, %v1700
        %s1836 = scalar_select %p1000, 2, 5
        %s1837 = smul.u32 %s1836, 8
        %s1838 = sshra.s32 %s1837, 3
        %s1839 = sand.u32 %s1837, 7
        %s1840 = smul.u32 %s1838, 4
        %s1841 = smul.addr %s1840, 8
        %s1842 = scalar_lea.vmem [#allocation4], %s1841
        %v1843 = vld [vmem:[%s1842] sm:$0xff]
        %v1844 = vld [vmem:[%s1842 + $0x8] sm:$0xff]
        %v1845 = vld [vmem:[%s1842 + $0x10] sm:$0xff]
        %v1846 = vld [vmem:[%s1842 + $0x18] sm:$0xff]
        %v1847 = vpack.c.bf16 %v1834, %v1834
        %1848 = vmatprep.subr.bf16.mxu0 %v1138
        %1849 = vmatpush1.bf16.msra.mxu0 %v1137
        %1850 = vmatprep.subr.bf16.mxu0 %v1134
        %1851 = vmatpush1.bf16.msra.mxu0 %v1133
        %1852 = vmatprep.subr.bf16.mxu0 %v1130
        %1853 = vmatpush1.bf16.msra.mxu0 %v1129
        %1854 = vmatprep.subr.bf16.mxu0 %v1126
        %1855 = vmatpush1.bf16.msra.mxu0 %v1125
        %1856 = vmatprep.subr.bf16.mxu0 %v1122
        %1857 = vmatpush1.bf16.msra.mxu0 %v1121
        %1858 = vmatprep.subr.bf16.mxu0 %v1118
        %1859 = vmatpush1.bf16.msra.mxu0 %v1117
        %1860 = vmatprep.subr.bf16.mxu0 %v1114
        %1861 = vmatpush1.bf16.msra.mxu0 %v1113
        %1862 = vmatprep.subr.bf16.mxu0 %v1110
        %1863 = vmatpush1.bf16.msra.mxu0 %v1109
        %1864 = vmatprep.subr.bf16.mxu0 0
        %1865 = vmatpush2.bf16.msra.mxu0 0
        %1866 = vmatprep.subr.bf16.mxu0 0
        %1867 = vmatpush2.bf16.msra.mxu0 0
        %1868 = vmatprep.subr.bf16.mxu0 0
        %1869 = vmatpush2.bf16.msra.mxu0 0
        %1870 = vmatprep.subr.bf16.mxu0 0
        %1871 = vmatpush2.bf16.msra.mxu0 0
        %1872 = vmatprep.subr.bf16.mxu0 0
        %1873 = vmatpush2.bf16.msra.mxu0 0
        %1874 = vmatprep.subr.bf16.mxu0 0
        %1875 = vmatpush2.bf16.msra.mxu0 0
        %1876 = vmatprep.subr.bf16.mxu0 0
        %1877 = vmatpush2.bf16.msra.mxu0 0
        %1878 = vmatprep.subr.bf16.mxu0 0
        %1879 = vmatpush2.bf16.msra.mxu0 0
        %1880 = vmatprep.mubr.bf16.mxu0 0
        %1881 = vmatmul.mubr.bf16.gmra.mxu0 %v1847
        %v1882 = vpop.f32.mrf.mxu0
        %v1883 = vadd.f32 0.0, %v1882
        %v1884 = vpop.f32.mrf.mxu0
        %v1885 = vadd.f32 0.0, %v1884
        %v1886 = vpop.f32.mrf.mxu0
        %v1887 = vpop.f32.mrf.mxu0
        %1888 = vdwg.mxu0
        %1889 = vmatprep.subr.bf16.mxu0 %v1140
        %1890 = vmatpush1.bf16.msra.mxu0 %v1139
        %1891 = vmatprep.subr.bf16.mxu0 %v1136
        %1892 = vmatpush1.bf16.msra.mxu0 %v1135
        %1893 = vmatprep.subr.bf16.mxu0 %v1132
        %1894 = vmatpush1.bf16.msra.mxu0 %v1131
        %1895 = vmatprep.subr.bf16.mxu0 %v1128
        %1896 = vmatpush1.bf16.msra.mxu0 %v1127
        %1897 = vmatprep.subr.bf16.mxu0 %v1124
        %1898 = vmatpush1.bf16.msra.mxu0 %v1123
        %1899 = vmatprep.subr.bf16.mxu0 %v1120
        %1900 = vmatpush1.bf16.msra.mxu0 %v1119
        %1901 = vmatprep.subr.bf16.mxu0 %v1116
        %1902 = vmatpush1.bf16.msra.mxu0 %v1115
        %1903 = vmatprep.subr.bf16.mxu0 %v1112
        %1904 = vmatpush1.bf16.msra.mxu0 %v1111
        %1905 = vmatprep.subr.bf16.mxu0 0
        %1906 = vmatpush2.bf16.msra.mxu0 0
        %1907 = vmatprep.subr.bf16.mxu0 0
        %1908 = vmatpush2.bf16.msra.mxu0 0
        %1909 = vmatprep.subr.bf16.mxu0 0
        %1910 = vmatpush2.bf16.msra.mxu0 0
        %1911 = vmatprep.subr.bf16.mxu0 0
        %1912 = vmatpush2.bf16.msra.mxu0 0
        %1913 = vmatprep.subr.bf16.mxu0 0
        %1914 = vmatpush2.bf16.msra.mxu0 0
        %1915 = vmatprep.subr.bf16.mxu0 0
        %1916 = vmatpush2.bf16.msra.mxu0 0
        %1917 = vmatprep.subr.bf16.mxu0 0
        %1918 = vmatpush2.bf16.msra.mxu0 0
        %1919 = vmatprep.subr.bf16.mxu0 0
        %1920 = vmatpush2.bf16.msra.mxu0 0
        %1921 = vmatprep.mubr.bf16.mxu0 0
        %1922 = vmatmul.mubr.bf16.gmra.mxu0 %v1847
        %v1923 = vpop.f32.mrf.mxu0
        %v1924 = vadd.f32 0.0, %v1923
        %v1925 = vpop.f32.mrf.mxu0
        %v1926 = vadd.f32 0.0, %v1925
        %v1927 = vpop.f32.mrf.mxu0
        %v1928 = vpop.f32.mrf.mxu0
        %1929 = vdwg.mxu0
        %v1930 = vadd.f32 %v1843, %v1883
        %v1931 = vadd.f32 %v1844, %v1885
        %v1932 = vadd.f32 %v1845, %v1924
        %v1933 = vadd.f32 %v1846, %v1926
        %v1934 = vxor.u32 %v1930, 2147483648
        %v1935 = vmul.f32 %v1934, 1.442695
        %v1936 = vpow.pop %v1935
        %v1937 = vadd.f32 %v1936, 1.0
        %v1938 = vrcp.pop %v1937
        %v1939 = vmul.f32 1.0, %v1938
        %v1940 = vxor.u32 %v1931, 2147483648
        %v1941 = vmul.f32 %v1940, 1.442695
        %v1942 = vpow.pop %v1941
        %v1943 = vadd.f32 %v1942, 1.0
        %v1944 = vrcp.pop %v1943
        %v1945 = vmul.f32 1.0, %v1944
        %v1946 = vtanh.pop %v1932
        %v1947 = vxor.u32 %v1933, 2147483648
        %v1948 = vmul.f32 %v1947, 1.442695
        %v1949 = vpow.pop %v1948
        %v1950 = vadd.f32 %v1949, 1.0
        %v1951 = vrcp.pop %v1950
        %v1952 = vmul.f32 1.0, %v1951
        %v1953 = vmul.f32 %v1945, %v1835
        %v1954 = vmul.f32 %v1939, %v1946
        %v1955 = vadd.f32 %v1953, %v1954
        %v1956 = vtanh.pop %v1955
        %v1957 = vmul.f32 %v1952, %v1956
        %s1958 = sadd.s32 %s997, %s1836
        %v1959 = vstv %s1958
        %vm1960 = vcmp.gt.s32.totalorder %v385, %v1959
        %v1961 = vsel %vm1960, 1, 0
        %1962 = vset.pattern.permute.xlu0 0
        %1963 = vperm.xlu0 %1962, %v1961
        %v1964 = vpop.permute.xlu0 %1963
        %vm1965 = vcmp.eq.s32.totalorder %v1964, 1
        %v1966 = vsel %vm1965, %v1957, 0.0
        %s1967 = scalar_lea.vmem %s319, %s1837 [#allocation7]
        %1968 = vst [vmem:[%s1967] sm:$0xff] %v1966
        %v1969 = vsel %vm1965, %v1957, %v1834
        %v1970 = vsel %vm1965, %v1955, %v1835
        %s1971 = scalar_select %p1000, 1, 6
        %s1972 = smul.u32 %s1971, 8
        %s1973 = sshra.s32 %s1972, 3
        %s1974 = sand.u32 %s1972, 7
        %s1975 = smul.u32 %s1973, 4
        %s1976 = smul.addr %s1975, 8
        %s1977 = scalar_lea.vmem [#allocation4], %s1976
        %v1978 = vld [vmem:[%s1977] sm:$0xff]
        %v1979 = vld [vmem:[%s1977 + $0x8] sm:$0xff]
        %v1980 = vld [vmem:[%s1977 + $0x10] sm:$0xff]
        %v1981 = vld [vmem:[%s1977 + $0x18] sm:$0xff]
        %v1982 = vpack.c.bf16 %v1969, %v1969
        %1983 = vmatprep.subr.bf16.mxu0 %v1138
        %1984 = vmatpush1.bf16.msra.mxu0 %v1137
        %1985 = vmatprep.subr.bf16.mxu0 %v1134
        %1986 = vmatpush1.bf16.msra.mxu0 %v1133
        %1987 = vmatprep.subr.bf16.mxu0 %v1130
        %1988 = vmatpush1.bf16.msra.mxu0 %v1129
        %1989 = vmatprep.subr.bf16.mxu0 %v1126
        %1990 = vmatpush1.bf16.msra.mxu0 %v1125
        %1991 = vmatprep.subr.bf16.mxu0 %v1122
        %1992 = vmatpush1.bf16.msra.mxu0 %v1121
        %1993 = vmatprep.subr.bf16.mxu0 %v1118
        %1994 = vmatpush1.bf16.msra.mxu0 %v1117
        %1995 = vmatprep.subr.bf16.mxu0 %v1114
        %1996 = vmatpush1.bf16.msra.mxu0 %v1113
        %1997 = vmatprep.subr.bf16.mxu0 %v1110
        %1998 = vmatpush1.bf16.msra.mxu0 %v1109
        %1999 = vmatprep.subr.bf16.mxu0 0
        %2000 = vmatpush2.bf16.msra.mxu0 0
        %2001 = vmatprep.subr.bf16.mxu0 0
        %2002 = vmatpush2.bf16.msra.mxu0 0
        %2003 = vmatprep.subr.bf16.mxu0 0
        %2004 = vmatpush2.bf16.msra.mxu0 0
        %2005 = vmatprep.subr.bf16.mxu0 0
        %2006 = vmatpush2.bf16.msra.mxu0 0
        %2007 = vmatprep.subr.bf16.mxu0 0
        %2008 = vmatpush2.bf16.msra.mxu0 0
        %2009 = vmatprep.subr.bf16.mxu0 0
        %2010 = vmatpush2.bf16.msra.mxu0 0
        %2011 = vmatprep.subr.bf16.mxu0 0
        %2012 = vmatpush2.bf16.msra.mxu0 0
        %2013 = vmatprep.subr.bf16.mxu0 0
        %2014 = vmatpush2.bf16.msra.mxu0 0
        %2015 = vmatprep.mubr.bf16.mxu0 0
        %2016 = vmatmul.mubr.bf16.gmra.mxu0 %v1982
        %v2017 = vpop.f32.mrf.mxu0
        %v2018 = vadd.f32 0.0, %v2017
        %v2019 = vpop.f32.mrf.mxu0
        %v2020 = vadd.f32 0.0, %v2019
        %v2021 = vpop.f32.mrf.mxu0
        %v2022 = vpop.f32.mrf.mxu0
        %2023 = vdwg.mxu0
        %2024 = vmatprep.subr.bf16.mxu0 %v1140
        %2025 = vmatpush1.bf16.msra.mxu0 %v1139
        %2026 = vmatprep.subr.bf16.mxu0 %v1136
        %2027 = vmatpush1.bf16.msra.mxu0 %v1135
        %2028 = vmatprep.subr.bf16.mxu0 %v1132
        %2029 = vmatpush1.bf16.msra.mxu0 %v1131
        %2030 = vmatprep.subr.bf16.mxu0 %v1128
        %2031 = vmatpush1.bf16.msra.mxu0 %v1127
        %2032 = vmatprep.subr.bf16.mxu0 %v1124
        %2033 = vmatpush1.bf16.msra.mxu0 %v1123
        %2034 = vmatprep.subr.bf16.mxu0 %v1120
        %2035 = vmatpush1.bf16.msra.mxu0 %v1119
        %2036 = vmatprep.subr.bf16.mxu0 %v1116
        %2037 = vmatpush1.bf16.msra.mxu0 %v1115
        %2038 = vmatprep.subr.bf16.mxu0 %v1112
        %2039 = vmatpush1.bf16.msra.mxu0 %v1111
        %2040 = vmatprep.subr.bf16.mxu0 0
        %2041 = vmatpush2.bf16.msra.mxu0 0
        %2042 = vmatprep.subr.bf16.mxu0 0
        %2043 = vmatpush2.bf16.msra.mxu0 0
        %2044 = vmatprep.subr.bf16.mxu0 0
        %2045 = vmatpush2.bf16.msra.mxu0 0
        %2046 = vmatprep.subr.bf16.mxu0 0
        %2047 = vmatpush2.bf16.msra.mxu0 0
        %2048 = vmatprep.subr.bf16.mxu0 0
        %2049 = vmatpush2.bf16.msra.mxu0 0
        %2050 = vmatprep.subr.bf16.mxu0 0
        %2051 = vmatpush2.bf16.msra.mxu0 0
        %2052 = vmatprep.subr.bf16.mxu0 0
        %2053 = vmatpush2.bf16.msra.mxu0 0
        %2054 = vmatprep.subr.bf16.mxu0 0
        %2055 = vmatpush2.bf16.msra.mxu0 0
        %2056 = vmatprep.mubr.bf16.mxu0 0
        %2057 = vmatmul.mubr.bf16.gmra.mxu0 %v1982
        %v2058 = vpop.f32.mrf.mxu0
        %v2059 = vadd.f32 0.0, %v2058
        %v2060 = vpop.f32.mrf.mxu0
        %v2061 = vadd.f32 0.0, %v2060
        %v2062 = vpop.f32.mrf.mxu0
        %v2063 = vpop.f32.mrf.mxu0
        %2064 = vdwg.mxu0
        %v2065 = vadd.f32 %v1978, %v2018
        %v2066 = vadd.f32 %v1979, %v2020
        %v2067 = vadd.f32 %v1980, %v2059
        %v2068 = vadd.f32 %v1981, %v2061
        %v2069 = vxor.u32 %v2065, 2147483648
        %v2070 = vmul.f32 %v2069, 1.442695
        %v2071 = vpow.pop %v2070
        %v2072 = vadd.f32 %v2071, 1.0
        %v2073 = vrcp.pop %v2072
        %v2074 = vmul.f32 1.0, %v2073
        %v2075 = vxor.u32 %v2066, 2147483648
        %v2076 = vmul.f32 %v2075, 1.442695
        %v2077 = vpow.pop %v2076
        %v2078 = vadd.f32 %v2077, 1.0
        %v2079 = vrcp.pop %v2078
        %v2080 = vmul.f32 1.0, %v2079
        %v2081 = vtanh.pop %v2067
        %v2082 = vxor.u32 %v2068, 2147483648
        %v2083 = vmul.f32 %v2082, 1.442695
        %v2084 = vpow.pop %v2083
        %v2085 = vadd.f32 %v2084, 1.0
        %v2086 = vrcp.pop %v2085
        %v2087 = vmul.f32 1.0, %v2086
        %v2088 = vmul.f32 %v2080, %v1970
        %v2089 = vmul.f32 %v2074, %v2081
        %v2090 = vadd.f32 %v2088, %v2089
        %v2091 = vtanh.pop %v2090
        %v2092 = vmul.f32 %v2087, %v2091
        %s2093 = sadd.s32 %s997, %s1971
        %v2094 = vstv %s2093
        %vm2095 = vcmp.gt.s32.totalorder %v385, %v2094
        %v2096 = vsel %vm2095, 1, 0
        %2097 = vset.pattern.permute.xlu0 0
        %2098 = vperm.xlu0 %2097, %v2096
        %v2099 = vpop.permute.xlu0 %2098
        %vm2100 = vcmp.eq.s32.totalorder %v2099, 1
        %v2101 = vsel %vm2100, %v2092, 0.0
        %s2102 = scalar_lea.vmem %s319, %s1972 [#allocation7]
        %2103 = vst [vmem:[%s2102] sm:$0xff] %v2101
        %v2104 = vsel %vm2100, %v2092, %v1969
        %v2105 = vsel %vm2100, %v2090, %v1970
        %s2106 = scalar_select %p1000, 0, 7
        %s2107 = smul.u32 %s2106, 8
        %s2108 = sshra.s32 %s2107, 3
        %s2109 = sand.u32 %s2107, 7
        %s2110 = smul.u32 %s2108, 4
        %s2111 = smul.addr %s2110, 8
        %s2112 = scalar_lea.vmem [#allocation4], %s2111
        %v2113 = vld [vmem:[%s2112] sm:$0xff]
        %v2114 = vld [vmem:[%s2112 + $0x8] sm:$0xff]
        %v2115 = vld [vmem:[%s2112 + $0x10] sm:$0xff]
        %v2116 = vld [vmem:[%s2112 + $0x18] sm:$0xff]
        %v2117 = vpack.c.bf16 %v2104, %v2104
        %2118 = vmatprep.subr.bf16.mxu0 %v1138
        %2119 = vmatpush1.bf16.msra.mxu0 %v1137
        %2120 = vmatprep.subr.bf16.mxu0 %v1134
        %2121 = vmatpush1.bf16.msra.mxu0 %v1133
        %2122 = vmatprep.subr.bf16.mxu0 %v1130
        %2123 = vmatpush1.bf16.msra.mxu0 %v1129
        %2124 = vmatprep.subr.bf16.mxu0 %v1126
        %2125 = vmatpush1.bf16.msra.mxu0 %v1125
        %2126 = vmatprep.subr.bf16.mxu0 %v1122
        %2127 = vmatpush1.bf16.msra.mxu0 %v1121
        %2128 = vmatprep.subr.bf16.mxu0 %v1118
        %2129 = vmatpush1.bf16.msra.mxu0 %v1117
        %2130 = vmatprep.subr.bf16.mxu0 %v1114
        %2131 = vmatpush1.bf16.msra.mxu0 %v1113
        %2132 = vmatprep.subr.bf16.mxu0 %v1110
        %2133 = vmatpush1.bf16.msra.mxu0 %v1109
        %2134 = vmatprep.subr.bf16.mxu0 0
        %2135 = vmatpush2.bf16.msra.mxu0 0
        %2136 = vmatprep.subr.bf16.mxu0 0
        %2137 = vmatpush2.bf16.msra.mxu0 0
        %2138 = vmatprep.subr.bf16.mxu0 0
        %2139 = vmatpush2.bf16.msra.mxu0 0
        %2140 = vmatprep.subr.bf16.mxu0 0
        %2141 = vmatpush2.bf16.msra.mxu0 0
        %2142 = vmatprep.subr.bf16.mxu0 0
        %2143 = vmatpush2.bf16.msra.mxu0 0
        %2144 = vmatprep.subr.bf16.mxu0 0
        %2145 = vmatpush2.bf16.msra.mxu0 0
        %2146 = vmatprep.subr.bf16.mxu0 0
        %2147 = vmatpush2.bf16.msra.mxu0 0
        %2148 = vmatprep.subr.bf16.mxu0 0
        %2149 = vmatpush2.bf16.msra.mxu0 0
        %2150 = vmatprep.mubr.bf16.mxu0 0
        %2151 = vmatmul.mubr.bf16.gmra.mxu0 %v2117
        %v2152 = vpop.f32.mrf.mxu0
        %v2153 = vadd.f32 0.0, %v2152
        %v2154 = vpop.f32.mrf.mxu0
        %v2155 = vadd.f32 0.0, %v2154
        %v2156 = vpop.f32.mrf.mxu0
        %v2157 = vpop.f32.mrf.mxu0
        %2158 = vdwg.mxu0
        %2159 = vmatprep.subr.bf16.mxu0 %v1140
        %2160 = vmatpush1.bf16.msra.mxu0 %v1139
        %2161 = vmatprep.subr.bf16.mxu0 %v1136
        %2162 = vmatpush1.bf16.msra.mxu0 %v1135
        %2163 = vmatprep.subr.bf16.mxu0 %v1132
        %2164 = vmatpush1.bf16.msra.mxu0 %v1131
        %2165 = vmatprep.subr.bf16.mxu0 %v1128
        %2166 = vmatpush1.bf16.msra.mxu0 %v1127
        %2167 = vmatprep.subr.bf16.mxu0 %v1124
        %2168 = vmatpush1.bf16.msra.mxu0 %v1123
        %2169 = vmatprep.subr.bf16.mxu0 %v1120
        %2170 = vmatpush1.bf16.msra.mxu0 %v1119
        %2171 = vmatprep.subr.bf16.mxu0 %v1116
        %2172 = vmatpush1.bf16.msra.mxu0 %v1115
        %2173 = vmatprep.subr.bf16.mxu0 %v1112
        %2174 = vmatpush1.bf16.msra.mxu0 %v1111
        %2175 = vmatprep.subr.bf16.mxu0 0
        %2176 = vmatpush2.bf16.msra.mxu0 0
        %2177 = vmatprep.subr.bf16.mxu0 0
        %2178 = vmatpush2.bf16.msra.mxu0 0
        %2179 = vmatprep.subr.bf16.mxu0 0
        %2180 = vmatpush2.bf16.msra.mxu0 0
        %2181 = vmatprep.subr.bf16.mxu0 0
        %2182 = vmatpush2.bf16.msra.mxu0 0
        %2183 = vmatprep.subr.bf16.mxu0 0
        %2184 = vmatpush2.bf16.msra.mxu0 0
        %2185 = vmatprep.subr.bf16.mxu0 0
        %2186 = vmatpush2.bf16.msra.mxu0 0
        %2187 = vmatprep.subr.bf16.mxu0 0
        %2188 = vmatpush2.bf16.msra.mxu0 0
        %2189 = vmatprep.subr.bf16.mxu0 0
        %2190 = vmatpush2.bf16.msra.mxu0 0
        %2191 = vmatprep.mubr.bf16.mxu0 0
        %2192 = vmatmul.mubr.bf16.gmra.mxu0 %v2117
        %v2193 = vpop.f32.mrf.mxu0
        %v2194 = vadd.f32 0.0, %v2193
        %v2195 = vpop.f32.mrf.mxu0
        %v2196 = vadd.f32 0.0, %v2195
        %v2197 = vpop.f32.mrf.mxu0
        %v2198 = vpop.f32.mrf.mxu0
        %2199 = vdwg.mxu0
        %v2200 = vadd.f32 %v2113, %v2153
        %v2201 = vadd.f32 %v2114, %v2155
        %v2202 = vadd.f32 %v2115, %v2194
        %v2203 = vadd.f32 %v2116, %v2196
        %v2204 = vxor.u32 %v2200, 2147483648
        %v2205 = vmul.f32 %v2204, 1.442695
        %v2206 = vpow.pop %v2205
        %v2207 = vadd.f32 %v2206, 1.0
        %v2208 = vrcp.pop %v2207
        %v2209 = vmul.f32 1.0, %v2208
        %v2210 = vxor.u32 %v2201, 2147483648
        %v2211 = vmul.f32 %v2210, 1.442695
        %v2212 = vpow.pop %v2211
        %v2213 = vadd.f32 %v2212, 1.0
        %v2214 = vrcp.pop %v2213
        %v2215 = vmul.f32 1.0, %v2214
        %v2216 = vtanh.pop %v2202
        %v2217 = vxor.u32 %v2203, 2147483648
        %v2218 = vmul.f32 %v2217, 1.442695
        %v2219 = vpow.pop %v2218
        %v2220 = vadd.f32 %v2219, 1.0
        %v2221 = vrcp.pop %v2220
        %v2222 = vmul.f32 1.0, %v2221
        %v2223 = vmul.f32 %v2215, %v2105
        %v2224 = vmul.f32 %v2209, %v2216
        %v2225 = vadd.f32 %v2223, %v2224
        %v2226 = vtanh.pop %v2225
        %v2227 = vmul.f32 %v2222, %v2226
        %s2228 = sadd.s32 %s997, %s2106
        %v2229 = vstv %s2228
        %vm2230 = vcmp.gt.s32.totalorder %v385, %v2229
        %v2231 = vsel %vm2230, 1, 0
        %2232 = vset.pattern.permute.xlu0 0
        %2233 = vperm.xlu0 %2232, %v2231
        %v2234 = vpop.permute.xlu0 %2233
        %vm2235 = vcmp.eq.s32.totalorder %v2234, 1
        %v2236 = vsel %vm2235, %v2227, 0.0
        %s2237 = scalar_lea.vmem %s319, %s2107 [#allocation7]
        %2238 = vst [vmem:[%s2237] sm:$0xff] %v2236
        %v2239 = vsel %vm2235, %v2227, %v2104
        %v2240 = vsel %vm2235, %v2225, %v2105
        %2241 = vst [vmem:[#allocation2] sm:$0xff] %v2239
        %2242 = vst [vmem:[#allocation3] sm:$0xff] %v2240
        %s2243 = sand.u32 %s178, 1
        %s2244 = sand.u32 %s178, 1
        %s2245 = smul.addr %s2244, 64
        %s2246 = scalar_lea.vmem [#allocation7], %s2245
        // Predicated region
        $region49: #{jparser_forward.6} parent=39 // pred_check
          %p2247 = pneg %p188
        $region50: #{jparser_forward.6} parent=39 // pred_check_branch
          %2249 = sbr.rel (%p2247) target = $region52
        $region51: #{jparser_forward.6} parent=39 // pred_region
          %s2250 = smul.u32 %s23, 2
          %s2251 = ssub.s32 1, %s2250
          %s2252 = smul.u32 %s2251, %s24
          %s2253 = smul.u32 8, %s2252
          %s2254 = smul.addr %s2253, 2
          %s2255 = sadd.s32 %s23, %s2254
          %s2256 = smul.addr %s2255, 8
          %s2257 = scalar_lea.vmem %s5, %s2256
          // Predicated region
          $region53: #{jparser_forward.6} parent=51 // pred_check
            _
          $region54: #{jparser_forward.6} parent=51 // pred_check_branch
            %2259 = sbr.rel (0) target = $region56
          $region55: #{jparser_forward.6} parent=51 // pred_region
            // Predicated region
            $region57: #{jparser_forward.6} parent=55 // pred_check
              _
            $region58: #{jparser_forward.6} parent=55 // pred_check_branch
              %2261 = sbr.rel (0) target = $region60
            $region59: #{jparser_forward.6} parent=55 // pred_region
              // Predicated region
              $region72: #{jparser_forward.6} parent=59 // pred_check
                _
              $region73: #{jparser_forward.6} parent=59 // pred_check_branch
                %2291 = sbr.rel (0) target = $region75
              $region74: #{jparser_forward.6} parent=59 // pred_region
                loop: start=0, step=1, limit=1
                $region76: #{jparser_forward.6} parent=74 // loop_pre_header
                  _
                $region77: #{jparser_forward.6} parent=74 // loop_header
                  %s2293 = sphi 0, %s2297
                  %p2294 = scmp.ge.s32.totalorder %s2293, 1
                  %s2298 = sphi %s2246, %s2246
                  %s2299 = sphi %s2257, %s2257
                $region78: #{jparser_forward.6} parent=74 // loop_header_branch
                  %2296 = sbr.rel (%p2294) target = $region82
                $region79: #{jparser_forward.6} parent=74 // loop_body
                  %v2300 = vld [vmem:[%s2298] sm:$0xff]
                  %2301 = vst [vmem:[%s2299] sm:$0xff] %v2300
                  %v2302 = vld [vmem:[%s2298 + $0x8] sm:$0xff]
                  %2303 = vst [vmem:[%s2299 + $0x10] sm:$0xff] %v2302
                  %v2304 = vld [vmem:[%s2298 + $0x10] sm:$0xff]
                  %2305 = vst [vmem:[%s2299 + $0x20] sm:$0xff] %v2304
                  %v2306 = vld [vmem:[%s2298 + $0x18] sm:$0xff]
                  %2307 = vst [vmem:[%s2299 + $0x30] sm:$0xff] %v2306
                  %v2308 = vld [vmem:[%s2298 + $0x20] sm:$0xff]
                  %2309 = vst [vmem:[%s2299 + $0x40] sm:$0xff] %v2308
                  %v2310 = vld [vmem:[%s2298 + $0x28] sm:$0xff]
                  %2311 = vst [vmem:[%s2299 + $0x50] sm:$0xff] %v2310
                  %v2312 = vld [vmem:[%s2298 + $0x30] sm:$0xff]
                  %2313 = vst [vmem:[%s2299 + $0x60] sm:$0xff] %v2312
                  %v2314 = vld [vmem:[%s2298 + $0x38] sm:$0xff]
                  %2315 = vst [vmem:[%s2299 + $0x70] sm:$0xff] %v2314
                $region80: #{jparser_forward.6} parent=74 // loop_footer
                  %s2297 = sadd.s32 1, %s2293
                $region81: #{jparser_forward.6} parent=74 // loop_footer_branch
                  %2292 = sbr.rel target = $region77
                $region82: #{jparser_forward.6} parent=74 // loop_exit
                  _
              $region75: #{jparser_forward.6} parent=59 // pred_fallthru
                _
              // Predicated region
              $region83: #{jparser_forward.6} parent=59 // pred_check
                _
              $region84: #{jparser_forward.6} parent=59 // pred_check_branch
                %2317 = sbr.rel target = $region86
              $region85: #{jparser_forward.6} parent=59 // pred_region
                _
              $region86: #{jparser_forward.6} parent=59 // pred_fallthru
                _
            $region60: #{jparser_forward.6} parent=55 // pred_fallthru
              _
            // Predicated region
            $region61: #{jparser_forward.6} parent=55 // pred_check
              _
            $region62: #{jparser_forward.6} parent=55 // pred_check_branch
              %2263 = sbr.rel target = $region64
            $region63: #{jparser_forward.6} parent=55 // pred_region
              %s2265 = ssub.s32 256, 1
              loop: start=0, step=1, limit=1
              $region65: #{jparser_forward.6} parent=63 // loop_pre_header
                _
              $region66: #{jparser_forward.6} parent=63 // loop_header
                %s2267 = sphi 0, %s2271
                %p2268 = scmp.ge.s32.totalorder %s2267, 1
                %s2272 = sphi %s2246, %s2246
                %s2273 = sphi %s2257, %s2257
              $region67: #{jparser_forward.6} parent=63 // loop_header_branch
                %2270 = sbr.rel (%p2268) target = $region71
              $region68: #{jparser_forward.6} parent=63 // loop_body
                %v2274 = vld [vmem:[%s2272] sm:%s2265]
                %2275 = vst [vmem:[%s2273] sm:%s2265] %v2274
                %v2276 = vld [vmem:[%s2272 + $0x8] sm:%s2265]
                %2277 = vst [vmem:[%s2273 + $0x10] sm:%s2265] %v2276
                %v2278 = vld [vmem:[%s2272 + $0x10] sm:%s2265]
                %2279 = vst [vmem:[%s2273 + $0x20] sm:%s2265] %v2278
                %v2280 = vld [vmem:[%s2272 + $0x18] sm:%s2265]
                %2281 = vst [vmem:[%s2273 + $0x30] sm:%s2265] %v2280
                %v2282 = vld [vmem:[%s2272 + $0x20] sm:%s2265]
                %2283 = vst [vmem:[%s2273 + $0x40] sm:%s2265] %v2282
                %v2284 = vld [vmem:[%s2272 + $0x28] sm:%s2265]
                %2285 = vst [vmem:[%s2273 + $0x50] sm:%s2265] %v2284
                %v2286 = vld [vmem:[%s2272 + $0x30] sm:%s2265]
                %2287 = vst [vmem:[%s2273 + $0x60] sm:%s2265] %v2286
                %v2288 = vld [vmem:[%s2272 + $0x38] sm:%s2265]
                %2289 = vst [vmem:[%s2273 + $0x70] sm:%s2265] %v2288
              $region69: #{jparser_forward.6} parent=63 // loop_footer
                %s2271 = sadd.s32 1, %s2267
              $region70: #{jparser_forward.6} parent=63 // loop_footer_branch
                %2266 = sbr.rel target = $region66
              $region71: #{jparser_forward.6} parent=63 // loop_exit
                _
            $region64: #{jparser_forward.6} parent=55 // pred_fallthru
              _
          $region56: #{jparser_forward.6} parent=51 // pred_fallthru
            _
          %2318 = vnop
        $region52: #{jparser_forward.6} parent=39 // pred_fallthru
          _
      $region40: #{jparser_forward.6} parent=5 // pred_fallthru
        _
      %p2319 = scmp.le.s32.totalorder 2, %s14
      // Predicated region
      $region87: #{jparser_forward.6} parent=5 // pred_check
        %p2320 = pneg %p2319
      $region88: #{jparser_forward.6} parent=5 // pred_check_branch
        %2322 = sbr.rel (%p2320) target = $region90
      $region89: #{jparser_forward.6} parent=5 // pred_region
        %s2323 = ssub.s32 %s14, 2
        // Predicated region
        $region91: #{jparser_forward.6} parent=89 // pred_check
          %p2324 = pneg %p194
        $region92: #{jparser_forward.6} parent=89 // pred_check_branch
          %2326 = sbr.rel (%p2324) target = $region94
        $region93: #{jparser_forward.6} parent=89 // pred_region
          %s2327 = sand.u32 %s179, 1
          %s2328 = sand.u32 %s179, 1
          %s2329 = smul.addr %s2328, 64
          %s2330 = scalar_lea.vmem [#allocation7], %s2329
        $region94: #{jparser_forward.6} parent=89 // pred_fallthru
          _
      $region90: #{jparser_forward.6} parent=5 // pred_fallthru
        _
    $region6: #{jparser_forward.6} parent=1 // loop_footer
      %s18 = sadd.s32 1, %s14
    $region7: #{jparser_forward.6} parent=1 // loop_footer_branch
      %13 = sbr.rel target = $region3
    $region8: #{jparser_forward.6} parent=1 // loop_exit
      _
    %2331 = vsyncpa [#allocation6], 1
    %s2332 = scalar_lea.sflag [#allocation6], 1
    %2333 = vsyncpa %s2332, 1

</llo_original>
